<compile_context>
chip_gen: v6e
topology: v6e:2x2x1
jax: 0.10.0
libtpu: 0.0.40
codegen_flags: <defaults>
</compile_context>

<pallas_src>
import functools

import jax
import jax.numpy as jnp
from jax import lax
from jax.experimental import pallas as pl
from jax.experimental.pallas import tpu as pltpu

P_DROPOUT = 0.2   # identity in eval mode
BN_EPS = 1e-5

# Padded feature sizes (multiples of 128 lanes).
K1 = 3968         # 3873 -> 31*128  (hidden1 input)
N1 = 2048         # 2000 -> 16*128  (hidden1 output / hidden2 input)
N2 = 512          # 500  -> 4*128   (hidden2 output / hidden3 input)
TILE_N1 = 512     # bf16 weight tile: 3968*512*2B = 4.06 MB, double-buffered ~8.1 MB


# ---------------------------------------------------------------------------
# Pallas kernels
# ---------------------------------------------------------------------------
def _h1_kernel(x_ref, w_ref, b_ref, o_ref):
    # relu(x @ w + b); bf16 operands, f32 accumulate, bf16 output.
    acc = jnp.dot(x_ref[...], w_ref[...], preferred_element_type=jnp.float32)
    acc = acc + b_ref[...]
    o_ref[...] = jnp.maximum(acc, 0.0).astype(o_ref.dtype)


def hidden1(x_bf16, w1_blocked, b1):
    """relu(x @ W1 + b1) with block-contiguous bf16 weights, N-tiled."""
    M = x_bf16.shape[0]
    n_blocks = w1_blocked.shape[0]
    return pl.pallas_call(
        _h1_kernel,
        out_shape=jax.ShapeDtypeStruct((M, N1), jnp.bfloat16),
        grid=(n_blocks,),
        in_specs=[
            pl.BlockSpec((M, K1), lambda j: (0, 0)),                  # x resident
            pl.BlockSpec((None, K1, TILE_N1), lambda j: (j, 0, 0)),   # contiguous slab
            pl.BlockSpec((1, TILE_N1), lambda j: (0, j)),
        ],
        out_specs=pl.BlockSpec((M, TILE_N1), lambda j: (0, j)),
        compiler_params=pltpu.CompilerParams(dimension_semantics=("parallel",)),
    )(x_bf16, w1_blocked, b1)


def _tail_kernel(h1_ref, w2_ref, b2_ref, w3_ref, b3_ref, o_ref):
    # hidden2 (relu) -> hidden3 -> softmax, fused; intermediates stay in VMEM.
    h2 = jnp.dot(h1_ref[...], w2_ref[...], preferred_element_type=jnp.float32)
    h2 = jnp.maximum(h2 + b2_ref[...], 0.0)
    z = jnp.dot(h2, w3_ref[...], preferred_element_type=jnp.float32) + b3_ref[...]
    z = z - jnp.max(z, axis=-1, keepdims=True)
    e = jnp.exp(z)
    o_ref[...] = e / jnp.sum(e, axis=-1, keepdims=True)


def tail(h1_out, w2, b2, w3, b3):
    """softmax(relu(h1 @ W2 + b2) @ W3 + b3) in a single Pallas kernel."""
    M = h1_out.shape[0]
    return pl.pallas_call(
        _tail_kernel,
        out_shape=jax.ShapeDtypeStruct((M, 3), jnp.float32),
        grid=(1,),
        in_specs=[
            pl.BlockSpec((M, N1), lambda j: (0, 0)),
            pl.BlockSpec((N1, N2), lambda j: (0, 0)),
            pl.BlockSpec((1, N2), lambda j: (0, 0)),
            pl.BlockSpec((N2, 3), lambda j: (0, 0)),
            pl.BlockSpec((1, 3), lambda j: (0, 0)),
        ],
        out_specs=pl.BlockSpec((M, 3), lambda j: (0, 0)),
    )(h1_out, w2, b2, w3, b3)


# ---------------------------------------------------------------------------
# Glue (plain JAX / XLA): convs, parameter construction, one-time weight prep
# ---------------------------------------------------------------------------
def _conv(x_nhwc, w_hwio):
    return lax.conv_general_dilated(
        x_nhwc, w_hwio, window_strides=(1, 1), padding=((1, 1), (1, 1)),
        dimension_numbers=("NHWC", "HWIO", "NHWC"))


def conv_relu_bn(x_nhwc, w_hwio, scale, shift):
    # conv -> relu -> folded eval-BatchNorm affine (per channel, last axis)
    y = jnp.maximum(_conv(x_nhwc, w_hwio), 0.0)
    return y * scale + shift


def conv_relu(x_nhwc, w_hwio):
    return jnp.maximum(_conv(x_nhwc, w_hwio), 0.0)


def init_raw_params(key):
    ks = jax.random.split(key, 17)

    def nrm(k, shape, s=0.05):
        return s * jax.random.normal(k, shape, dtype=jnp.float32)

    return {
        # conv weights in PyTorch layout (Cout, Cin, kh, kw), bias=False
        "conv1_w": nrm(ks[0], (8, 2, 2, 2)),
        "conv2_w": nrm(ks[1], (16, 8, 2, 2)),
        "conv3_w": nrm(ks[2], (32, 16, 2, 2)),
        # BatchNorm (eval / running stats)
        "bn1_gamma": 1.0 + nrm(ks[3], (8,), 0.1),
        "bn1_beta": nrm(ks[4], (8,), 0.1),
        "bn1_mean": nrm(ks[5], (8,), 0.1),
        "bn1_var": 1.0 + 0.1 * jax.random.uniform(ks[6], (8,), dtype=jnp.float32),
        "bn2_gamma": 1.0 + nrm(ks[7], (16,), 0.1),
        "bn2_beta": nrm(ks[8], (16,), 0.1),
        "bn2_mean": nrm(ks[9], (16,), 0.1),
        "bn2_var": 1.0 + 0.1 * jax.random.uniform(ks[10], (16,), dtype=jnp.float32),
        # Linear layers (PyTorch layout: (out_features, in_features))
        "h1_w": nrm(ks[11], (2000, 3873), 0.02),
        "h1_b": nrm(ks[12], (2000,), 0.02),
        "h2_w": nrm(ks[13], (500, 2000), 0.02),
        "h2_b": nrm(ks[14], (500,), 0.02),
        "h3_w": nrm(ks[15], (3, 500), 0.05),
        "h3_b": nrm(ks[16], (3,), 0.05),
    }


def prepare_params(raw):
    """One-time re-layout: transpose, zero-pad, bf16-cast, block-pack weights."""
    def fold_bn(g, b, m, v):
        s = g / jnp.sqrt(v + BN_EPS)
        return s, b - m * s

    s1, t1 = fold_bn(raw["bn1_gamma"], raw["bn1_beta"], raw["bn1_mean"], raw["bn1_var"])
    s2, t2 = fold_bn(raw["bn2_gamma"], raw["bn2_beta"], raw["bn2_mean"], raw["bn2_var"])

    # hidden1: (2000, 3873) -> (3873, 2000) -> pad (3968, 2048) -> bf16
    # -> block-contiguous (N1//TILE_N1, K1, TILE_N1) so each grid step is one DMA slab.
    w1 = jnp.transpose(raw["h1_w"])
    w1 = jnp.pad(w1, ((0, K1 - w1.shape[0]), (0, N1 - w1.shape[1]))).astype(jnp.bfloat16)
    w1_blocked = w1.reshape(K1, N1 // TILE_N1, TILE_N1).transpose(1, 0, 2)
    b1 = jnp.pad(raw["h1_b"], (0, N1 - raw["h1_b"].shape[0])).reshape(1, N1)

    # hidden2: pad (2048, 512), bf16. Padded rows/cols are zero -> math exact.
    w2 = jnp.transpose(raw["h2_w"])
    w2 = jnp.pad(w2, ((0, N1 - w2.shape[0]), (0, N2 - w2.shape[1]))).astype(jnp.bfloat16)
    b2 = jnp.pad(raw["h2_b"], (0, N2 - raw["h2_b"].shape[0])).reshape(1, N2)

    # hidden3: pad K only (N stays 3 so the in-kernel softmax sees no padding).
    w3 = jnp.pad(jnp.transpose(raw["h3_w"]), ((0, N2 - 500), (0, 0)))
    b3 = raw["h3_b"].reshape(1, 3)

    def oihw_to_hwio(w):
        return jnp.transpose(w, (2, 3, 1, 0))

    return {
        "conv1_w": oihw_to_hwio(raw["conv1_w"]),
        "conv2_w": oihw_to_hwio(raw["conv2_w"]),
        "conv3_w": oihw_to_hwio(raw["conv3_w"]),
        "bn1_s": s1, "bn1_t": t1, "bn2_s": s2, "bn2_t": t2,
        "w1": w1_blocked, "b1": b1,
        "w2": w2, "b2": b2,
        "w3": w3, "b3": b3,
    }


# ---------------------------------------------------------------------------
# Forward pass (matches PyTorch Model.forward in eval mode)
# ---------------------------------------------------------------------------
def forward(prep, x_nchw, player_on_turn, *, h1_fn, tail_fn):
    B = x_nchw.shape[0]
    x = jnp.transpose(x_nchw, (0, 2, 3, 1)).astype(jnp.float32)     # NCHW -> NHWC

    # convs in XLA (sub-MXU sized; see header comment). dropout2d = identity (eval).
    x = conv_relu_bn(x, prep["conv1_w"], prep["bn1_s"], prep["bn1_t"])   # (B, 9, 9, 8)
    x = conv_relu_bn(x, prep["conv2_w"], prep["bn2_s"], prep["bn2_t"])   # (B,10,10,16)
    x = conv_relu(x, prep["conv3_w"])                                    # (B,11,11,32)

    # flatten in PyTorch NCHW order, concat player_on_turn, pad to 128-lane multiple
    flat = jnp.transpose(x, (0, 3, 1, 2)).reshape(B, -1)                 # (B, 3872)
    feat = jnp.concatenate([flat, player_on_turn.astype(jnp.float32)], axis=-1)
    feat = jnp.pad(feat, ((0, 0), (0, K1 - feat.shape[1]))).astype(jnp.bfloat16)

    h1 = h1_fn(feat, prep["w1"], prep["b1"])                             # (B, 2048) bf16
    return tail_fn(h1, prep["w2"], prep["b2"], prep["w3"], prep["b3"])   # (B, 3) f32


# pure-jnp reference path (same conv glue, plain matmuls) for correctness check
def _ref_h1(x_bf16, w1_blocked, b1):
    w1 = w1_blocked.transpose(1, 0, 2).reshape(K1, N1)
    acc = jnp.dot(x_bf16, w1, preferred_element_type=jnp.float32) + b1
    return jnp.maximum(acc, 0.0).astype(jnp.bfloat16)


def _ref_tail(h1, w2, b2, w3, b3):
    h2 = jnp.maximum(jnp.dot(h1, w2, preferred_element_type=jnp.float32) + b2, 0.0)
    z = jnp.dot(h2, w3, preferred_element_type=jnp.float32) + b3
    return jax.nn.softmax(z, axis=-1)


if __name__ == "__main__":
    key = jax.random.PRNGKey(0)
    kp, kx = jax.random.split(key)
    raw = init_raw_params(kp)
    prep = prepare_params(raw)          # one-time weight re-layout, outside the jit

    B = 2
    x = jax.random.normal(kx, (B, 2, 8, 8), dtype=jnp.float32)       # NCHW, 8x8 board
    player_on_turn = jnp.array([[1.0], [0.0]], dtype=jnp.float32)    # (B, 1)

    fwd = jax.jit(functools.partial(forward, h1_fn=hidden1, tail_fn=tail))
    out = jax.block_until_ready(fwd(prep, x, player_on_turn))

    ref = forward(prep, x, player_on_turn, h1_fn=_ref_h1, tail_fn=_ref_tail)

    assert out.shape == (B, 3), out.shape
    assert bool(jnp.allclose(jnp.sum(out, axis=-1), 1.0, atol=1e-5))
    assert bool(jnp.allclose(out, ref, atol=2e-3, rtol=2e-3))
    print("KERNEL_OK")
</pallas_src>

<mosaic_0001>
module attributes {stable_mosaic.version = 11 : i64} {
  func.func @_h1_kernel(%arg0: i32, %arg1: memref<2x3968xbf16, #tpu.memory_space<vmem>>, %arg2: memref<1x3968x512xbf16, #tpu.memory_space<vmem>>, %arg3: memref<1x512xf32, #tpu.memory_space<vmem>>, %arg4: memref<2x512xbf16, #tpu.memory_space<vmem>>) attributes {dimension_semantics = [#tpu.dimension_semantics<parallel>], iteration_bounds = array<i64: 4>, scalar_prefetch = 0 : i64, scratch_operands = 0 : i64, tpu.core_type = #tpu.core_type<tc>, window_params = [{pipeline_mode = #tpu.pipeline_mode<synchronous>, transform_indices = @transform_0, window_bounds = array<i64: 2, 3968>}, {transform_indices = @transform_1, window_bounds = array<i64: 1, 3968, 512>}, {transform_indices = @transform_2, window_bounds = array<i64: 1, 512>}, {transform_indices = @transform_3, window_bounds = array<i64: 2, 512>}]} {
    %c0 = arith.constant 0 : index
    %c0_0 = arith.constant 0 : index
    %0 = vector.load %arg1[%c0, %c0_0] : memref<2x3968xbf16, #tpu.memory_space<vmem>>, vector<2x3968xbf16>
    %c0_1 = arith.constant 0 : index
    %c0_2 = arith.constant 0 : index
    %c0_3 = arith.constant 0 : index
    %1 = vector.load %arg2[%c0_1, %c0_2, %c0_3] : memref<1x3968x512xbf16, #tpu.memory_space<vmem>>, vector<1x3968x512xbf16>
    %2 = vector.shape_cast %1 : vector<1x3968x512xbf16> to vector<3968x512xbf16>
    %cst = arith.constant dense<0.000000e+00> : vector<2x512xf32>
    %3 = tpu.matmul %0, %2, %cst {dimension_numbers = #tpu.dot_dimension_numbers<[1], [0], [0], [1], [0, 0, 1, 1], [], []>} : vector<2x3968xbf16>, vector<3968x512xbf16>, vector<2x512xf32> -> vector<2x512xf32>
    %c0_4 = arith.constant 0 : index
    %c0_5 = arith.constant 0 : index
    %4 = vector.load %arg3[%c0_4, %c0_5] : memref<1x512xf32, #tpu.memory_space<vmem>>, vector<1x512xf32>
    %5 = vector.broadcast %4 : vector<1x512xf32> to vector<2x512xf32>
    %6 = arith.addf %3, %5 : vector<2x512xf32>
    %cst_6 = arith.constant 0.000000e+00 : f32
    %7 = vector.broadcast %cst_6 : f32 to vector<2x512xf32>
    %8 = arith.maximumf %6, %7 : vector<2x512xf32>
    %9 = arith.truncf %8 : vector<2x512xf32> to vector<2x512xbf16>
    %c0_7 = arith.constant 0 : index
    %c0_8 = arith.constant 0 : index
    %10 = vector.load %arg4[%c0_7, %c0_8] : memref<2x512xbf16, #tpu.memory_space<vmem>>, vector<2x512xbf16>
    tpu.vector_store %arg4[%c0_7, %c0_8], %9 {strides = array<i32>} : memref<2x512xbf16, #tpu.memory_space<vmem>>, vector<2x512xbf16>,
    return
  }
  func.func @transform_0(%arg0: i32) -> (i32, i32) {
    %c0_i32 = arith.constant 0 : i32
    %c0_i32_0 = arith.constant 0 : i32
    %c0_i32_1 = arith.constant 0 : i32
    return %c0_i32, %c0_i32_0 : i32, i32
  }
  func.func @transform_1(%arg0: i32) -> (i32, i32, i32) {
    %c0_i32 = arith.constant 0 : i32
    %c0_i32_0 = arith.constant 0 : i32
    %c0_i32_1 = arith.constant 0 : i32
    return %arg0, %c0_i32, %c0_i32_0 : i32, i32, i32
  }
  func.func @transform_2(%arg0: i32) -> (i32, i32) {
    %c0_i32 = arith.constant 0 : i32
    %c0_i32_0 = arith.constant 0 : i32
    return %c0_i32, %arg0 : i32, i32
  }
  func.func @transform_3(%arg0: i32) -> (i32, i32) {
    %c0_i32 = arith.constant 0 : i32
    %c0_i32_0 = arith.constant 0 : i32
    return %c0_i32, %arg0 : i32, i32
  }
}

module attributes {stable_mosaic.version = 11 : i64} {
  func.func @_tail_kernel(%arg0: i32, %arg1: memref<2x2048xbf16, #tpu.memory_space<vmem>>, %arg2: memref<2048x512xbf16, #tpu.memory_space<vmem>>, %arg3: memref<1x512xf32, #tpu.memory_space<vmem>>, %arg4: memref<512x3xf32, #tpu.memory_space<vmem>>, %arg5: memref<1x3xf32, #tpu.memory_space<vmem>>, %arg6: memref<2x3xf32, #tpu.memory_space<vmem>>) attributes {dimension_semantics = [#tpu.dimension_semantics<arbitrary>], iteration_bounds = array<i64: 1>, scalar_prefetch = 0 : i64, scratch_operands = 0 : i64, tpu.core_type = #tpu.core_type<tc>, window_params = [{pipeline_mode = #tpu.pipeline_mode<synchronous>, transform_indices = @transform_0, window_bounds = array<i64: 2, 2048>}, {pipeline_mode = #tpu.pipeline_mode<synchronous>, transform_indices = @transform_1, window_bounds = array<i64: 2048, 512>}, {pipeline_mode = #tpu.pipeline_mode<synchronous>, transform_indices = @transform_2, window_bounds = array<i64: 1, 512>}, {pipeline_mode = #tpu.pipeline_mode<synchronous>, transform_indices = @transform_3, window_bounds = array<i64: 512, 3>}, {pipeline_mode = #tpu.pipeline_mode<synchronous>, transform_indices = @transform_4, window_bounds = array<i64: 1, 3>}, {pipeline_mode = #tpu.pipeline_mode<synchronous>, transform_indices = @transform_5, window_bounds = array<i64: 2, 3>}]} {
    %c0 = arith.constant 0 : index
    %c0_0 = arith.constant 0 : index
    %0 = vector.load %arg1[%c0, %c0_0] : memref<2x2048xbf16, #tpu.memory_space<vmem>>, vector<2x2048xbf16>
    %c0_1 = arith.constant 0 : index
    %c0_2 = arith.constant 0 : index
    %1 = vector.load %arg2[%c0_1, %c0_2] : memref<2048x512xbf16, #tpu.memory_space<vmem>>, vector<2048x512xbf16>
    %cst = arith.constant dense<0.000000e+00> : vector<2x512xf32>
    %2 = tpu.matmul %0, %1, %cst {dimension_numbers = #tpu.dot_dimension_numbers<[1], [0], [0], [1], [0, 0, 1, 1], [], []>} : vector<2x2048xbf16>, vector<2048x512xbf16>, vector<2x512xf32> -> vector<2x512xf32>
    %c0_3 = arith.constant 0 : index
    %c0_4 = arith.constant 0 : index
    %3 = vector.load %arg3[%c0_3, %c0_4] : memref<1x512xf32, #tpu.memory_space<vmem>>, vector<1x512xf32>
    %4 = vector.broadcast %3 : vector<1x512xf32> to vector<2x512xf32>
    %5 = arith.addf %2, %4 : vector<2x512xf32>
    %cst_5 = arith.constant 0.000000e+00 : f32
    %6 = vector.broadcast %cst_5 : f32 to vector<2x512xf32>
    %7 = arith.maximumf %5, %6 : vector<2x512xf32>
    %c0_6 = arith.constant 0 : index
    %c0_7 = arith.constant 0 : index
    %8 = vector.load %arg4[%c0_6, %c0_7] : memref<512x3xf32, #tpu.memory_space<vmem>>, vector<512x3xf32>
    %cst_8 = arith.constant dense<0.000000e+00> : vector<2x3xf32>
    %9 = tpu.matmul %7, %8, %cst_8 {dimension_numbers = #tpu.dot_dimension_numbers<[1], [0], [0], [1], [0, 0, 1, 1], [], []>} : vector<2x512xf32>, vector<512x3xf32>, vector<2x3xf32> -> vector<2x3xf32>
    %c0_9 = arith.constant 0 : index
    %c0_10 = arith.constant 0 : index
    %10 = vector.load %arg5[%c0_9, %c0_10] : memref<1x3xf32, #tpu.memory_space<vmem>>, vector<1x3xf32>
    %11 = vector.broadcast %10 : vector<1x3xf32> to vector<2x3xf32>
    %12 = arith.addf %9, %11 : vector<2x3xf32>
    %cst_11 = arith.constant dense<0xFF800000> : vector<2xf32>
    %13 = vector.multi_reduction <maximumf>, %12, %cst_11 [1] : vector<2x3xf32> to vector<2xf32>
    %14 = vector.shape_cast %13 : vector<2xf32> to vector<2x1xf32>
    %15 = vector.broadcast %14 : vector<2x1xf32> to vector<2x3xf32>
    %16 = arith.subf %12, %15 : vector<2x3xf32>
    %17 = math.exp %16 : vector<2x3xf32>
    %cst_12 = arith.constant dense<0.000000e+00> : vector<2xf32>
    %18 = vector.multi_reduction <add>, %17, %cst_12 [1] : vector<2x3xf32> to vector<2xf32>
    %19 = vector.shape_cast %18 : vector<2xf32> to vector<2x1xf32>
    %20 = vector.broadcast %19 : vector<2x1xf32> to vector<2x3xf32>
    %21 = arith.divf %17, %20 : vector<2x3xf32>
    %c0_13 = arith.constant 0 : index
    %c0_14 = arith.constant 0 : index
    %22 = vector.load %arg6[%c0_13, %c0_14] : memref<2x3xf32, #tpu.memory_space<vmem>>, vector<2x3xf32>
    tpu.vector_store %arg6[%c0_13, %c0_14], %21 {strides = array<i32>} : memref<2x3xf32, #tpu.memory_space<vmem>>, vector<2x3xf32>,
    return
  }
  func.func @transform_0(%arg0: i32) -> (i32, i32) {
    %c0_i32 = arith.constant 0 : i32
    %c0_i32_0 = arith.constant 0 : i32
    %c0_i32_1 = arith.constant 0 : i32
    return %c0_i32, %c0_i32_0 : i32, i32
  }
  func.func @transform_1(%arg0: i32) -> (i32, i32) {
    %c0_i32 = arith.constant 0 : i32
    %c0_i32_0 = arith.constant 0 : i32
    %c0_i32_1 = arith.constant 0 : i32
    return %c0_i32, %c0_i32_0 : i32, i32
  }
  func.func @transform_2(%arg0: i32) -> (i32, i32) {
    %c0_i32 = arith.constant 0 : i32
    %c0_i32_0 = arith.constant 0 : i32
    %c0_i32_1 = arith.constant 0 : i32
    return %c0_i32, %c0_i32_0 : i32, i32
  }
  func.func @transform_3(%arg0: i32) -> (i32, i32) {
    %c0_i32 = arith.constant 0 : i32
    %c0_i32_0 = arith.constant 0 : i32
    %c0_i32_1 = arith.constant 0 : i32
    return %c0_i32, %c0_i32_0 : i32, i32
  }
  func.func @transform_4(%arg0: i32) -> (i32, i32) {
    %c0_i32 = arith.constant 0 : i32
    %c0_i32_0 = arith.constant 0 : i32
    %c0_i32_1 = arith.constant 0 : i32
    return %c0_i32, %c0_i32_0 : i32, i32
  }
  func.func @transform_5(%arg0: i32) -> (i32, i32) {
    %c0_i32 = arith.constant 0 : i32
    %c0_i32_0 = arith.constant 0 : i32
    %c0_i32_1 = arith.constant 0 : i32
    return %c0_i32, %c0_i32_0 : i32, i32
  }
}

</mosaic_0001>

<llo_original>
// kernel: forward.3
$region0: #{forward.3}
  #allocation0 [shape = 'u32[]', space=smem, size = 0x4, offset = 0x4, fixed_abs, tag = 'smem constant byte address 0x4 - core index']
  #allocation1 [shape = 'u32[144,128]{1,0:T(1,128)}', space=vmem, size = 0x12000, scoped, tag = 'internal scratch']
  %s0 = inlined_call_operand.vmem [shape: bf16[2,2048], index: 0, kind: input, shape index: {}]
  %s1 = inlined_call_operand.vmem [shape: bf16[2048,512], index: 1, kind: input, shape index: {}]
  %s2 = inlined_call_operand.vmem [shape: f32[1,512], index: 2, kind: input, shape index: {}]
  %s3 = inlined_call_operand.vmem [shape: f32[512,3], index: 3, kind: input, shape index: {}]
  %s4 = inlined_call_operand.vmem [shape: f32[1,3], index: 4, kind: input, shape index: {}]
  %s5 = inlined_call_operand.hbm [shape: f32[2,3], index: 5, kind: output, shape index: {}]
  %s6 = sld [smem:[#allocation0]]
  $region30: #{forward.3} parent=0
    _
  %s8 = ssub.s32 1, %s6
  %s9 = scalar_select 0, %s8, %s6
  $region1: #{forward.3} parent=0
    #allocation2 [shape = 'u8[1024]{0}', space=vmem, size = 0x400, scoped, tag = 'output window, operand 0, single buffered']
    #allocation3 [shape = 's32[1]{0}', space=sflag, size = 0x4, scoped, tag = 'scoped memory for forward.3']
    %10 = vsyncpa [#allocation3], 0
    // Predicated region
    $region2: #{forward.3} parent=1 // pred_check
      _
    $region3: #{forward.3} parent=1 // pred_check_branch
      %12 = sbr.rel (0) target = $region5
    $region4: #{forward.3} parent=1 // pred_region
      _
    $region5: #{forward.3} parent=1 // pred_fallthru
      _
    // Predicated region
    $region6: #{forward.3} parent=1 // pred_check
      _
    $region7: #{forward.3} parent=1 // pred_check_branch
      %14 = sbr.rel (0) target = $region9
    $region8: #{forward.3} parent=1 // pred_region
      _
    $region9: #{forward.3} parent=1 // pred_fallthru
      _
    // Predicated region
    $region10: #{forward.3} parent=1 // pred_check
      _
    $region11: #{forward.3} parent=1 // pred_check_branch
      %16 = sbr.rel (0) target = $region13
    $region12: #{forward.3} parent=1 // pred_region
      _
    $region13: #{forward.3} parent=1 // pred_fallthru
      _
    // Predicated region
    $region14: #{forward.3} parent=1 // pred_check
      _
    $region15: #{forward.3} parent=1 // pred_check_branch
      %18 = sbr.rel (0) target = $region17
    $region16: #{forward.3} parent=1 // pred_region
      _
    $region17: #{forward.3} parent=1 // pred_fallthru
      _
    // Predicated region
    $region18: #{forward.3} parent=1 // pred_check
      _
    $region19: #{forward.3} parent=1 // pred_check_branch
      %20 = sbr.rel (0) target = $region21
    $region20: #{forward.3} parent=1 // pred_region
      _
    $region21: #{forward.3} parent=1 // pred_fallthru
      _
    %v21 = vld [vmem:[%s0] sm:$0xff]
    %v22 = vld [vmem:[%s0 + $0x8] sm:$0xff]
    %v23 = vld [vmem:[%s1] sm:$0xff]
    %v24 = vld [vmem:[%s1 + $0x8] sm:$0xff]
    %v25 = vld [vmem:[%s1 + $0x10] sm:$0xff]
    %v26 = vld [vmem:[%s1 + $0x18] sm:$0xff]
    %v27 = vld [vmem:[%s1 + $0x20] sm:$0xff]
    %v28 = vld [vmem:[%s1 + $0x28] sm:$0xff]
    %v29 = vld [vmem:[%s1 + $0x30] sm:$0xff]
    %v30 = vld [vmem:[%s1 + $0x38] sm:$0xff]
    %v31 = vld [vmem:[%s1 + $0x40] sm:$0xff]
    %v32 = vld [vmem:[%s1 + $0x48] sm:$0xff]
    %v33 = vld [vmem:[%s1 + $0x50] sm:$0xff]
    %v34 = vld [vmem:[%s1 + $0x58] sm:$0xff]
    %v35 = vld [vmem:[%s1 + $0x60] sm:$0xff]
    %v36 = vld [vmem:[%s1 + $0x68] sm:$0xff]
    %v37 = vld [vmem:[%s1 + $0x70] sm:$0xff]
    %v38 = vld [vmem:[%s1 + $0x78] sm:$0xff]
    %v39 = vld [vmem:[%s1 + $0x80] sm:$0xff]
    %v40 = vld [vmem:[%s1 + $0x88] sm:$0xff]
    %v41 = vld [vmem:[%s1 + $0x90] sm:$0xff]
    %v42 = vld [vmem:[%s1 + $0x98] sm:$0xff]
    %v43 = vld [vmem:[%s1 + $0xa0] sm:$0xff]
    %v44 = vld [vmem:[%s1 + $0xa8] sm:$0xff]
    %v45 = vld [vmem:[%s1 + $0xb0] sm:$0xff]
    %v46 = vld [vmem:[%s1 + $0xb8] sm:$0xff]
    %v47 = vld [vmem:[%s1 + $0xc0] sm:$0xff]
    %v48 = vld [vmem:[%s1 + $0xc8] sm:$0xff]
    %v49 = vld [vmem:[%s1 + $0xd0] sm:$0xff]
    %v50 = vld [vmem:[%s1 + $0xd8] sm:$0xff]
    %v51 = vld [vmem:[%s1 + $0xe0] sm:$0xff]
    %v52 = vld [vmem:[%s1 + $0xe8] sm:$0xff]
    %v53 = vld [vmem:[%s1 + $0xf0] sm:$0xff]
    %v54 = vld [vmem:[%s1 + $0xf8] sm:$0xff]
    %v55 = vld [vmem:[%s1 + $0x100] sm:$0xff]
    %v56 = vld [vmem:[%s1 + $0x108] sm:$0xff]
    %v57 = vld [vmem:[%s1 + $0x110] sm:$0xff]
    %v58 = vld [vmem:[%s1 + $0x118] sm:$0xff]
    %v59 = vld [vmem:[%s1 + $0x120] sm:$0xff]
    %v60 = vld [vmem:[%s1 + $0x128] sm:$0xff]
    %v61 = vld [vmem:[%s1 + $0x130] sm:$0xff]
    %v62 = vld [vmem:[%s1 + $0x138] sm:$0xff]
    %v63 = vld [vmem:[%s1 + $0x140] sm:$0xff]
    %v64 = vld [vmem:[%s1 + $0x148] sm:$0xff]
    %v65 = vld [vmem:[%s1 + $0x150] sm:$0xff]
    %v66 = vld [vmem:[%s1 + $0x158] sm:$0xff]
    %v67 = vld [vmem:[%s1 + $0x160] sm:$0xff]
    %v68 = vld [vmem:[%s1 + $0x168] sm:$0xff]
    %v69 = vld [vmem:[%s1 + $0x170] sm:$0xff]
    %v70 = vld [vmem:[%s1 + $0x178] sm:$0xff]
    %v71 = vld [vmem:[%s1 + $0x180] sm:$0xff]
    %v72 = vld [vmem:[%s1 + $0x188] sm:$0xff]
    %v73 = vld [vmem:[%s1 + $0x190] sm:$0xff]
    %v74 = vld [vmem:[%s1 + $0x198] sm:$0xff]
    %v75 = vld [vmem:[%s1 + $0x1a0] sm:$0xff]
    %v76 = vld [vmem:[%s1 + $0x1a8] sm:$0xff]
    %v77 = vld [vmem:[%s1 + $0x1b0] sm:$0xff]
    %v78 = vld [vmem:[%s1 + $0x1b8] sm:$0xff]
    %v79 = vld [vmem:[%s1 + $0x1c0] sm:$0xff]
    %v80 = vld [vmem:[%s1 + $0x1c8] sm:$0xff]
    %v81 = vld [vmem:[%s1 + $0x1d0] sm:$0xff]
    %v82 = vld [vmem:[%s1 + $0x1d8] sm:$0xff]
    %v83 = vld [vmem:[%s1 + $0x1e0] sm:$0xff]
    %v84 = vld [vmem:[%s1 + $0x1e8] sm:$0xff]
    %v85 = vld [vmem:[%s1 + $0x1f0] sm:$0xff]
    %v86 = vld [vmem:[%s1 + $0x1f8] sm:$0xff]
    %v87 = vld [vmem:[%s1 + $0x200] sm:$0xff]
    %v88 = vld [vmem:[%s1 + $0x208] sm:$0xff]
    %v89 = vld [vmem:[%s1 + $0x210] sm:$0xff]
    %v90 = vld [vmem:[%s1 + $0x218] sm:$0xff]
    %v91 = vld [vmem:[%s1 + $0x220] sm:$0xff]
    %v92 = vld [vmem:[%s1 + $0x228] sm:$0xff]
    %v93 = vld [vmem:[%s1 + $0x230] sm:$0xff]
    %v94 = vld [vmem:[%s1 + $0x238] sm:$0xff]
    %v95 = vld [vmem:[%s1 + $0x240] sm:$0xff]
    %v96 = vld [vmem:[%s1 + $0x248] sm:$0xff]
    %v97 = vld [vmem:[%s1 + $0x250] sm:$0xff]
    %v98 = vld [vmem:[%s1 + $0x258] sm:$0xff]
    %v99 = vld [vmem:[%s1 + $0x260] sm:$0xff]
    %v100 = vld [vmem:[%s1 + $0x268] sm:$0xff]
    %v101 = vld [vmem:[%s1 + $0x270] sm:$0xff]
    %v102 = vld [vmem:[%s1 + $0x278] sm:$0xff]
    %v103 = vld [vmem:[%s1 + $0x280] sm:$0xff]
    %v104 = vld [vmem:[%s1 + $0x288] sm:$0xff]
    %v105 = vld [vmem:[%s1 + $0x290] sm:$0xff]
    %v106 = vld [vmem:[%s1 + $0x298] sm:$0xff]
    %v107 = vld [vmem:[%s1 + $0x2a0] sm:$0xff]
    %v108 = vld [vmem:[%s1 + $0x2a8] sm:$0xff]
    %v109 = vld [vmem:[%s1 + $0x2b0] sm:$0xff]
    %v110 = vld [vmem:[%s1 + $0x2b8] sm:$0xff]
    %v111 = vld [vmem:[%s1 + $0x2c0] sm:$0xff]
    %v112 = vld [vmem:[%s1 + $0x2c8] sm:$0xff]
    %v113 = vld [vmem:[%s1 + $0x2d0] sm:$0xff]
    %v114 = vld [vmem:[%s1 + $0x2d8] sm:$0xff]
    %v115 = vld [vmem:[%s1 + $0x2e0] sm:$0xff]
    %v116 = vld [vmem:[%s1 + $0x2e8] sm:$0xff]
    %v117 = vld [vmem:[%s1 + $0x2f0] sm:$0xff]
    %v118 = vld [vmem:[%s1 + $0x2f8] sm:$0xff]
    %v119 = vld [vmem:[%s1 + $0x300] sm:$0xff]
    %v120 = vld [vmem:[%s1 + $0x308] sm:$0xff]
    %v121 = vld [vmem:[%s1 + $0x310] sm:$0xff]
    %v122 = vld [vmem:[%s1 + $0x318] sm:$0xff]
    %v123 = vld [vmem:[%s1 + $0x320] sm:$0xff]
    %v124 = vld [vmem:[%s1 + $0x328] sm:$0xff]
    %v125 = vld [vmem:[%s1 + $0x330] sm:$0xff]
    %v126 = vld [vmem:[%s1 + $0x338] sm:$0xff]
    %v127 = vld [vmem:[%s1 + $0x340] sm:$0xff]
    %v128 = vld [vmem:[%s1 + $0x348] sm:$0xff]
    %v129 = vld [vmem:[%s1 + $0x350] sm:$0xff]
    %v130 = vld [vmem:[%s1 + $0x358] sm:$0xff]
    %v131 = vld [vmem:[%s1 + $0x360] sm:$0xff]
    %v132 = vld [vmem:[%s1 + $0x368] sm:$0xff]
    %v133 = vld [vmem:[%s1 + $0x370] sm:$0xff]
    %v134 = vld [vmem:[%s1 + $0x378] sm:$0xff]
    %v135 = vld [vmem:[%s1 + $0x380] sm:$0xff]
    %v136 = vld [vmem:[%s1 + $0x388] sm:$0xff]
    %v137 = vld [vmem:[%s1 + $0x390] sm:$0xff]
    %v138 = vld [vmem:[%s1 + $0x398] sm:$0xff]
    %v139 = vld [vmem:[%s1 + $0x3a0] sm:$0xff]
    %v140 = vld [vmem:[%s1 + $0x3a8] sm:$0xff]
    %v141 = vld [vmem:[%s1 + $0x3b0] sm:$0xff]
    %v142 = vld [vmem:[%s1 + $0x3b8] sm:$0xff]
    %v143 = vld [vmem:[%s1 + $0x3c0] sm:$0xff]
    %v144 = vld [vmem:[%s1 + $0x3c8] sm:$0xff]
    %v145 = vld [vmem:[%s1 + $0x3d0] sm:$0xff]
    %v146 = vld [vmem:[%s1 + $0x3d8] sm:$0xff]
    %v147 = vld [vmem:[%s1 + $0x3e0] sm:$0xff]
    %v148 = vld [vmem:[%s1 + $0x3e8] sm:$0xff]
    %v149 = vld [vmem:[%s1 + $0x3f0] sm:$0xff]
    %v150 = vld [vmem:[%s1 + $0x3f8] sm:$0xff]
    %v151 = vld [vmem:[%s1 + $0x400] sm:$0xff]
    %v152 = vld [vmem:[%s1 + $0x408] sm:$0xff]
    %v153 = vld [vmem:[%s1 + $0x410] sm:$0xff]
    %v154 = vld [vmem:[%s1 + $0x418] sm:$0xff]
    %v155 = vld [vmem:[%s1 + $0x420] sm:$0xff]
    %v156 = vld [vmem:[%s1 + $0x428] sm:$0xff]
    %v157 = vld [vmem:[%s1 + $0x430] sm:$0xff]
    %v158 = vld [vmem:[%s1 + $0x438] sm:$0xff]
    %v159 = vld [vmem:[%s1 + $0x440] sm:$0xff]
    %v160 = vld [vmem:[%s1 + $0x448] sm:$0xff]
    %v161 = vld [vmem:[%s1 + $0x450] sm:$0xff]
    %v162 = vld [vmem:[%s1 + $0x458] sm:$0xff]
    %v163 = vld [vmem:[%s1 + $0x460] sm:$0xff]
    %v164 = vld [vmem:[%s1 + $0x468] sm:$0xff]
    %v165 = vld [vmem:[%s1 + $0x470] sm:$0xff]
    %v166 = vld [vmem:[%s1 + $0x478] sm:$0xff]
    %v167 = vld [vmem:[%s1 + $0x480] sm:$0xff]
    %v168 = vld [vmem:[%s1 + $0x488] sm:$0xff]
    %v169 = vld [vmem:[%s1 + $0x490] sm:$0xff]
    %v170 = vld [vmem:[%s1 + $0x498] sm:$0xff]
    %v171 = vld [vmem:[%s1 + $0x4a0] sm:$0xff]
    %v172 = vld [vmem:[%s1 + $0x4a8] sm:$0xff]
    %v173 = vld [vmem:[%s1 + $0x4b0] sm:$0xff]
    %v174 = vld [vmem:[%s1 + $0x4b8] sm:$0xff]
    %v175 = vld [vmem:[%s1 + $0x4c0] sm:$0xff]
    %v176 = vld [vmem:[%s1 + $0x4c8] sm:$0xff]
    %v177 = vld [vmem:[%s1 + $0x4d0] sm:$0xff]
    %v178 = vld [vmem:[%s1 + $0x4d8] sm:$0xff]
    %v179 = vld [vmem:[%s1 + $0x4e0] sm:$0xff]
    %v180 = vld [vmem:[%s1 + $0x4e8] sm:$0xff]
    %v181 = vld [vmem:[%s1 + $0x4f0] sm:$0xff]
    %v182 = vld [vmem:[%s1 + $0x4f8] sm:$0xff]
    %v183 = vld [vmem:[%s1 + $0x500] sm:$0xff]
    %v184 = vld [vmem:[%s1 + $0x508] sm:$0xff]
    %v185 = vld [vmem:[%s1 + $0x510] sm:$0xff]
    %v186 = vld [vmem:[%s1 + $0x518] sm:$0xff]
    %v187 = vld [vmem:[%s1 + $0x520] sm:$0xff]
    %v188 = vld [vmem:[%s1 + $0x528] sm:$0xff]
    %v189 = vld [vmem:[%s1 + $0x530] sm:$0xff]
    %v190 = vld [vmem:[%s1 + $0x538] sm:$0xff]
    %v191 = vld [vmem:[%s1 + $0x540] sm:$0xff]
    %v192 = vld [vmem:[%s1 + $0x548] sm:$0xff]
    %v193 = vld [vmem:[%s1 + $0x550] sm:$0xff]
    %v194 = vld [vmem:[%s1 + $0x558] sm:$0xff]
    %v195 = vld [vmem:[%s1 + $0x560] sm:$0xff]
    %v196 = vld [vmem:[%s1 + $0x568] sm:$0xff]
    %v197 = vld [vmem:[%s1 + $0x570] sm:$0xff]
    %v198 = vld [vmem:[%s1 + $0x578] sm:$0xff]
    %v199 = vld [vmem:[%s1 + $0x580] sm:$0xff]
    %v200 = vld [vmem:[%s1 + $0x588] sm:$0xff]
    %v201 = vld [vmem:[%s1 + $0x590] sm:$0xff]
    %v202 = vld [vmem:[%s1 + $0x598] sm:$0xff]
    %v203 = vld [vmem:[%s1 + $0x5a0] sm:$0xff]
    %v204 = vld [vmem:[%s1 + $0x5a8] sm:$0xff]
    %v205 = vld [vmem:[%s1 + $0x5b0] sm:$0xff]
    %v206 = vld [vmem:[%s1 + $0x5b8] sm:$0xff]
    %v207 = vld [vmem:[%s1 + $0x5c0] sm:$0xff]
    %v208 = vld [vmem:[%s1 + $0x5c8] sm:$0xff]
    %v209 = vld [vmem:[%s1 + $0x5d0] sm:$0xff]
    %v210 = vld [vmem:[%s1 + $0x5d8] sm:$0xff]
    %v211 = vld [vmem:[%s1 + $0x5e0] sm:$0xff]
    %v212 = vld [vmem:[%s1 + $0x5e8] sm:$0xff]
    %v213 = vld [vmem:[%s1 + $0x5f0] sm:$0xff]
    %v214 = vld [vmem:[%s1 + $0x5f8] sm:$0xff]
    %v215 = vld [vmem:[%s1 + $0x600] sm:$0xff]
    %v216 = vld [vmem:[%s1 + $0x608] sm:$0xff]
    %v217 = vld [vmem:[%s1 + $0x610] sm:$0xff]
    %v218 = vld [vmem:[%s1 + $0x618] sm:$0xff]
    %v219 = vld [vmem:[%s1 + $0x620] sm:$0xff]
    %v220 = vld [vmem:[%s1 + $0x628] sm:$0xff]
    %v221 = vld [vmem:[%s1 + $0x630] sm:$0xff]
    %v222 = vld [vmem:[%s1 + $0x638] sm:$0xff]
    %v223 = vld [vmem:[%s1 + $0x640] sm:$0xff]
    %v224 = vld [vmem:[%s1 + $0x648] sm:$0xff]
    %v225 = vld [vmem:[%s1 + $0x650] sm:$0xff]
    %v226 = vld [vmem:[%s1 + $0x658] sm:$0xff]
    %v227 = vld [vmem:[%s1 + $0x660] sm:$0xff]
    %v228 = vld [vmem:[%s1 + $0x668] sm:$0xff]
    %v229 = vld [vmem:[%s1 + $0x670] sm:$0xff]
    %v230 = vld [vmem:[%s1 + $0x678] sm:$0xff]
    %v231 = vld [vmem:[%s1 + $0x680] sm:$0xff]
    %v232 = vld [vmem:[%s1 + $0x688] sm:$0xff]
    %v233 = vld [vmem:[%s1 + $0x690] sm:$0xff]
    %v234 = vld [vmem:[%s1 + $0x698] sm:$0xff]
    %v235 = vld [vmem:[%s1 + $0x6a0] sm:$0xff]
    %v236 = vld [vmem:[%s1 + $0x6a8] sm:$0xff]
    %v237 = vld [vmem:[%s1 + $0x6b0] sm:$0xff]
    %v238 = vld [vmem:[%s1 + $0x6b8] sm:$0xff]
    %v239 = vld [vmem:[%s1 + $0x6c0] sm:$0xff]
    %v240 = vld [vmem:[%s1 + $0x6c8] sm:$0xff]
    %v241 = vld [vmem:[%s1 + $0x6d0] sm:$0xff]
    %v242 = vld [vmem:[%s1 + $0x6d8] sm:$0xff]
    %v243 = vld [vmem:[%s1 + $0x6e0] sm:$0xff]
    %v244 = vld [vmem:[%s1 + $0x6e8] sm:$0xff]
    %v245 = vld [vmem:[%s1 + $0x6f0] sm:$0xff]
    %v246 = vld [vmem:[%s1 + $0x6f8] sm:$0xff]
    %v247 = vld [vmem:[%s1 + $0x700] sm:$0xff]
    %v248 = vld [vmem:[%s1 + $0x708] sm:$0xff]
    %v249 = vld [vmem:[%s1 + $0x710] sm:$0xff]
    %v250 = vld [vmem:[%s1 + $0x718] sm:$0xff]
    %v251 = vld [vmem:[%s1 + $0x720] sm:$0xff]
    %v252 = vld [vmem:[%s1 + $0x728] sm:$0xff]
    %v253 = vld [vmem:[%s1 + $0x730] sm:$0xff]
    %v254 = vld [vmem:[%s1 + $0x738] sm:$0xff]
    %v255 = vld [vmem:[%s1 + $0x740] sm:$0xff]
    %v256 = vld [vmem:[%s1 + $0x748] sm:$0xff]
    %v257 = vld [vmem:[%s1 + $0x750] sm:$0xff]
    %v258 = vld [vmem:[%s1 + $0x758] sm:$0xff]
    %v259 = vld [vmem:[%s1 + $0x760] sm:$0xff]
    %v260 = vld [vmem:[%s1 + $0x768] sm:$0xff]
    %v261 = vld [vmem:[%s1 + $0x770] sm:$0xff]
    %v262 = vld [vmem:[%s1 + $0x778] sm:$0xff]
    %v263 = vld [vmem:[%s1 + $0x780] sm:$0xff]
    %v264 = vld [vmem:[%s1 + $0x788] sm:$0xff]
    %v265 = vld [vmem:[%s1 + $0x790] sm:$0xff]
    %v266 = vld [vmem:[%s1 + $0x798] sm:$0xff]
    %v267 = vld [vmem:[%s1 + $0x7a0] sm:$0xff]
    %v268 = vld [vmem:[%s1 + $0x7a8] sm:$0xff]
    %v269 = vld [vmem:[%s1 + $0x7b0] sm:$0xff]
    %v270 = vld [vmem:[%s1 + $0x7b8] sm:$0xff]
    %v271 = vld [vmem:[%s1 + $0x7c0] sm:$0xff]
    %v272 = vld [vmem:[%s1 + $0x7c8] sm:$0xff]
    %v273 = vld [vmem:[%s1 + $0x7d0] sm:$0xff]
    %v274 = vld [vmem:[%s1 + $0x7d8] sm:$0xff]
    %v275 = vld [vmem:[%s1 + $0x7e0] sm:$0xff]
    %v276 = vld [vmem:[%s1 + $0x7e8] sm:$0xff]
    %v277 = vld [vmem:[%s1 + $0x7f0] sm:$0xff]
    %v278 = vld [vmem:[%s1 + $0x7f8] sm:$0xff]
    %v279 = vld [vmem:[%s1 + $0x800] sm:$0xff]
    %v280 = vld [vmem:[%s1 + $0x808] sm:$0xff]
    %v281 = vld [vmem:[%s1 + $0x810] sm:$0xff]
    %v282 = vld [vmem:[%s1 + $0x818] sm:$0xff]
    %v283 = vld [vmem:[%s1 + $0x820] sm:$0xff]
    %v284 = vld [vmem:[%s1 + $0x828] sm:$0xff]
    %v285 = vld [vmem:[%s1 + $0x830] sm:$0xff]
    %v286 = vld [vmem:[%s1 + $0x838] sm:$0xff]
    %v287 = vld [vmem:[%s1 + $0x840] sm:$0xff]
    %v288 = vld [vmem:[%s1 + $0x848] sm:$0xff]
    %v289 = vld [vmem:[%s1 + $0x850] sm:$0xff]
    %v290 = vld [vmem:[%s1 + $0x858] sm:$0xff]
    %v291 = vld [vmem:[%s1 + $0x860] sm:$0xff]
    %v292 = vld [vmem:[%s1 + $0x868] sm:$0xff]
    %v293 = vld [vmem:[%s1 + $0x870] sm:$0xff]
    %v294 = vld [vmem:[%s1 + $0x878] sm:$0xff]
    %v295 = vld [vmem:[%s1 + $0x880] sm:$0xff]
    %v296 = vld [vmem:[%s1 + $0x888] sm:$0xff]
    %v297 = vld [vmem:[%s1 + $0x890] sm:$0xff]
    %v298 = vld [vmem:[%s1 + $0x898] sm:$0xff]
    %v299 = vld [vmem:[%s1 + $0x8a0] sm:$0xff]
    %v300 = vld [vmem:[%s1 + $0x8a8] sm:$0xff]
    %v301 = vld [vmem:[%s1 + $0x8b0] sm:$0xff]
    %v302 = vld [vmem:[%s1 + $0x8b8] sm:$0xff]
    %v303 = vld [vmem:[%s1 + $0x8c0] sm:$0xff]
    %v304 = vld [vmem:[%s1 + $0x8c8] sm:$0xff]
    %v305 = vld [vmem:[%s1 + $0x8d0] sm:$0xff]
    %v306 = vld [vmem:[%s1 + $0x8d8] sm:$0xff]
    %v307 = vld [vmem:[%s1 + $0x8e0] sm:$0xff]
    %v308 = vld [vmem:[%s1 + $0x8e8] sm:$0xff]
    %v309 = vld [vmem:[%s1 + $0x8f0] sm:$0xff]
    %v310 = vld [vmem:[%s1 + $0x8f8] sm:$0xff]
    %v311 = vld [vmem:[%s1 + $0x900] sm:$0xff]
    %v312 = vld [vmem:[%s1 + $0x908] sm:$0xff]
    %v313 = vld [vmem:[%s1 + $0x910] sm:$0xff]
    %v314 = vld [vmem:[%s1 + $0x918] sm:$0xff]
    %v315 = vld [vmem:[%s1 + $0x920] sm:$0xff]
    %v316 = vld [vmem:[%s1 + $0x928] sm:$0xff]
    %v317 = vld [vmem:[%s1 + $0x930] sm:$0xff]
    %v318 = vld [vmem:[%s1 + $0x938] sm:$0xff]
    %v319 = vld [vmem:[%s1 + $0x940] sm:$0xff]
    %v320 = vld [vmem:[%s1 + $0x948] sm:$0xff]
    %v321 = vld [vmem:[%s1 + $0x950] sm:$0xff]
    %v322 = vld [vmem:[%s1 + $0x958] sm:$0xff]
    %v323 = vld [vmem:[%s1 + $0x960] sm:$0xff]
    %v324 = vld [vmem:[%s1 + $0x968] sm:$0xff]
    %v325 = vld [vmem:[%s1 + $0x970] sm:$0xff]
    %v326 = vld [vmem:[%s1 + $0x978] sm:$0xff]
    %v327 = vld [vmem:[%s1 + $0x980] sm:$0xff]
    %v328 = vld [vmem:[%s1 + $0x988] sm:$0xff]
    %v329 = vld [vmem:[%s1 + $0x990] sm:$0xff]
    %v330 = vld [vmem:[%s1 + $0x998] sm:$0xff]
    %v331 = vld [vmem:[%s1 + $0x9a0] sm:$0xff]
    %v332 = vld [vmem:[%s1 + $0x9a8] sm:$0xff]
    %v333 = vld [vmem:[%s1 + $0x9b0] sm:$0xff]
    %v334 = vld [vmem:[%s1 + $0x9b8] sm:$0xff]
    %v335 = vld [vmem:[%s1 + $0x9c0] sm:$0xff]
    %v336 = vld [vmem:[%s1 + $0x9c8] sm:$0xff]
    %v337 = vld [vmem:[%s1 + $0x9d0] sm:$0xff]
    %v338 = vld [vmem:[%s1 + $0x9d8] sm:$0xff]
    %v339 = vld [vmem:[%s1 + $0x9e0] sm:$0xff]
    %v340 = vld [vmem:[%s1 + $0x9e8] sm:$0xff]
    %v341 = vld [vmem:[%s1 + $0x9f0] sm:$0xff]
    %v342 = vld [vmem:[%s1 + $0x9f8] sm:$0xff]
    %v343 = vld [vmem:[%s1 + $0xa00] sm:$0xff]
    %v344 = vld [vmem:[%s1 + $0xa08] sm:$0xff]
    %v345 = vld [vmem:[%s1 + $0xa10] sm:$0xff]
    %v346 = vld [vmem:[%s1 + $0xa18] sm:$0xff]
    %v347 = vld [vmem:[%s1 + $0xa20] sm:$0xff]
    %v348 = vld [vmem:[%s1 + $0xa28] sm:$0xff]
    %v349 = vld [vmem:[%s1 + $0xa30] sm:$0xff]
    %v350 = vld [vmem:[%s1 + $0xa38] sm:$0xff]
    %v351 = vld [vmem:[%s1 + $0xa40] sm:$0xff]
    %v352 = vld [vmem:[%s1 + $0xa48] sm:$0xff]
    %v353 = vld [vmem:[%s1 + $0xa50] sm:$0xff]
    %v354 = vld [vmem:[%s1 + $0xa58] sm:$0xff]
    %v355 = vld [vmem:[%s1 + $0xa60] sm:$0xff]
    %v356 = vld [vmem:[%s1 + $0xa68] sm:$0xff]
    %v357 = vld [vmem:[%s1 + $0xa70] sm:$0xff]
    %v358 = vld [vmem:[%s1 + $0xa78] sm:$0xff]
    %v359 = vld [vmem:[%s1 + $0xa80] sm:$0xff]
    %v360 = vld [vmem:[%s1 + $0xa88] sm:$0xff]
    %v361 = vld [vmem:[%s1 + $0xa90] sm:$0xff]
    %v362 = vld [vmem:[%s1 + $0xa98] sm:$0xff]
    %v363 = vld [vmem:[%s1 + $0xaa0] sm:$0xff]
    %v364 = vld [vmem:[%s1 + $0xaa8] sm:$0xff]
    %v365 = vld [vmem:[%s1 + $0xab0] sm:$0xff]
    %v366 = vld [vmem:[%s1 + $0xab8] sm:$0xff]
    %v367 = vld [vmem:[%s1 + $0xac0] sm:$0xff]
    %v368 = vld [vmem:[%s1 + $0xac8] sm:$0xff]
    %v369 = vld [vmem:[%s1 + $0xad0] sm:$0xff]
    %v370 = vld [vmem:[%s1 + $0xad8] sm:$0xff]
    %v371 = vld [vmem:[%s1 + $0xae0] sm:$0xff]
    %v372 = vld [vmem:[%s1 + $0xae8] sm:$0xff]
    %v373 = vld [vmem:[%s1 + $0xaf0] sm:$0xff]
    %v374 = vld [vmem:[%s1 + $0xaf8] sm:$0xff]
    %v375 = vld [vmem:[%s1 + $0xb00] sm:$0xff]
    %v376 = vld [vmem:[%s1 + $0xb08] sm:$0xff]
    %v377 = vld [vmem:[%s1 + $0xb10] sm:$0xff]
    %v378 = vld [vmem:[%s1 + $0xb18] sm:$0xff]
    %v379 = vld [vmem:[%s1 + $0xb20] sm:$0xff]
    %v380 = vld [vmem:[%s1 + $0xb28] sm:$0xff]
    %v381 = vld [vmem:[%s1 + $0xb30] sm:$0xff]
    %v382 = vld [vmem:[%s1 + $0xb38] sm:$0xff]
    %v383 = vld [vmem:[%s1 + $0xb40] sm:$0xff]
    %v384 = vld [vmem:[%s1 + $0xb48] sm:$0xff]
    %v385 = vld [vmem:[%s1 + $0xb50] sm:$0xff]
    %v386 = vld [vmem:[%s1 + $0xb58] sm:$0xff]
    %v387 = vld [vmem:[%s1 + $0xb60] sm:$0xff]
    %v388 = vld [vmem:[%s1 + $0xb68] sm:$0xff]
    %v389 = vld [vmem:[%s1 + $0xb70] sm:$0xff]
    %v390 = vld [vmem:[%s1 + $0xb78] sm:$0xff]
    %v391 = vld [vmem:[%s1 + $0xb80] sm:$0xff]
    %v392 = vld [vmem:[%s1 + $0xb88] sm:$0xff]
    %v393 = vld [vmem:[%s1 + $0xb90] sm:$0xff]
    %v394 = vld [vmem:[%s1 + $0xb98] sm:$0xff]
    %v395 = vld [vmem:[%s1 + $0xba0] sm:$0xff]
    %v396 = vld [vmem:[%s1 + $0xba8] sm:$0xff]
    %v397 = vld [vmem:[%s1 + $0xbb0] sm:$0xff]
    %v398 = vld [vmem:[%s1 + $0xbb8] sm:$0xff]
    %v399 = vld [vmem:[%s1 + $0xbc0] sm:$0xff]
    %v400 = vld [vmem:[%s1 + $0xbc8] sm:$0xff]
    %v401 = vld [vmem:[%s1 + $0xbd0] sm:$0xff]
    %v402 = vld [vmem:[%s1 + $0xbd8] sm:$0xff]
    %v403 = vld [vmem:[%s1 + $0xbe0] sm:$0xff]
    %v404 = vld [vmem:[%s1 + $0xbe8] sm:$0xff]
    %v405 = vld [vmem:[%s1 + $0xbf0] sm:$0xff]
    %v406 = vld [vmem:[%s1 + $0xbf8] sm:$0xff]
    %v407 = vld [vmem:[%s1 + $0xc00] sm:$0xff]
    %v408 = vld [vmem:[%s1 + $0xc08] sm:$0xff]
    %v409 = vld [vmem:[%s1 + $0xc10] sm:$0xff]
    %v410 = vld [vmem:[%s1 + $0xc18] sm:$0xff]
    %v411 = vld [vmem:[%s1 + $0xc20] sm:$0xff]
    %v412 = vld [vmem:[%s1 + $0xc28] sm:$0xff]
    %v413 = vld [vmem:[%s1 + $0xc30] sm:$0xff]
    %v414 = vld [vmem:[%s1 + $0xc38] sm:$0xff]
    %v415 = vld [vmem:[%s1 + $0xc40] sm:$0xff]
    %v416 = vld [vmem:[%s1 + $0xc48] sm:$0xff]
    %v417 = vld [vmem:[%s1 + $0xc50] sm:$0xff]
    %v418 = vld [vmem:[%s1 + $0xc58] sm:$0xff]
    %v419 = vld [vmem:[%s1 + $0xc60] sm:$0xff]
    %v420 = vld [vmem:[%s1 + $0xc68] sm:$0xff]
    %v421 = vld [vmem:[%s1 + $0xc70] sm:$0xff]
    %v422 = vld [vmem:[%s1 + $0xc78] sm:$0xff]
    %v423 = vld [vmem:[%s1 + $0xc80] sm:$0xff]
    %v424 = vld [vmem:[%s1 + $0xc88] sm:$0xff]
    %v425 = vld [vmem:[%s1 + $0xc90] sm:$0xff]
    %v426 = vld [vmem:[%s1 + $0xc98] sm:$0xff]
    %v427 = vld [vmem:[%s1 + $0xca0] sm:$0xff]
    %v428 = vld [vmem:[%s1 + $0xca8] sm:$0xff]
    %v429 = vld [vmem:[%s1 + $0xcb0] sm:$0xff]
    %v430 = vld [vmem:[%s1 + $0xcb8] sm:$0xff]
    %v431 = vld [vmem:[%s1 + $0xcc0] sm:$0xff]
    %v432 = vld [vmem:[%s1 + $0xcc8] sm:$0xff]
    %v433 = vld [vmem:[%s1 + $0xcd0] sm:$0xff]
    %v434 = vld [vmem:[%s1 + $0xcd8] sm:$0xff]
    %v435 = vld [vmem:[%s1 + $0xce0] sm:$0xff]
    %v436 = vld [vmem:[%s1 + $0xce8] sm:$0xff]
    %v437 = vld [vmem:[%s1 + $0xcf0] sm:$0xff]
    %v438 = vld [vmem:[%s1 + $0xcf8] sm:$0xff]
    %v439 = vld [vmem:[%s1 + $0xd00] sm:$0xff]
    %v440 = vld [vmem:[%s1 + $0xd08] sm:$0xff]
    %v441 = vld [vmem:[%s1 + $0xd10] sm:$0xff]
    %v442 = vld [vmem:[%s1 + $0xd18] sm:$0xff]
    %v443 = vld [vmem:[%s1 + $0xd20] sm:$0xff]
    %v444 = vld [vmem:[%s1 + $0xd28] sm:$0xff]
    %v445 = vld [vmem:[%s1 + $0xd30] sm:$0xff]
    %v446 = vld [vmem:[%s1 + $0xd38] sm:$0xff]
    %v447 = vld [vmem:[%s1 + $0xd40] sm:$0xff]
    %v448 = vld [vmem:[%s1 + $0xd48] sm:$0xff]
    %v449 = vld [vmem:[%s1 + $0xd50] sm:$0xff]
    %v450 = vld [vmem:[%s1 + $0xd58] sm:$0xff]
    %v451 = vld [vmem:[%s1 + $0xd60] sm:$0xff]
    %v452 = vld [vmem:[%s1 + $0xd68] sm:$0xff]
    %v453 = vld [vmem:[%s1 + $0xd70] sm:$0xff]
    %v454 = vld [vmem:[%s1 + $0xd78] sm:$0xff]
    %v455 = vld [vmem:[%s1 + $0xd80] sm:$0xff]
    %v456 = vld [vmem:[%s1 + $0xd88] sm:$0xff]
    %v457 = vld [vmem:[%s1 + $0xd90] sm:$0xff]
    %v458 = vld [vmem:[%s1 + $0xd98] sm:$0xff]
    %v459 = vld [vmem:[%s1 + $0xda0] sm:$0xff]
    %v460 = vld [vmem:[%s1 + $0xda8] sm:$0xff]
    %v461 = vld [vmem:[%s1 + $0xdb0] sm:$0xff]
    %v462 = vld [vmem:[%s1 + $0xdb8] sm:$0xff]
    %v463 = vld [vmem:[%s1 + $0xdc0] sm:$0xff]
    %v464 = vld [vmem:[%s1 + $0xdc8] sm:$0xff]
    %v465 = vld [vmem:[%s1 + $0xdd0] sm:$0xff]
    %v466 = vld [vmem:[%s1 + $0xdd8] sm:$0xff]
    %v467 = vld [vmem:[%s1 + $0xde0] sm:$0xff]
    %v468 = vld [vmem:[%s1 + $0xde8] sm:$0xff]
    %v469 = vld [vmem:[%s1 + $0xdf0] sm:$0xff]
    %v470 = vld [vmem:[%s1 + $0xdf8] sm:$0xff]
    %v471 = vld [vmem:[%s1 + $0xe00] sm:$0xff]
    %v472 = vld [vmem:[%s1 + $0xe08] sm:$0xff]
    %v473 = vld [vmem:[%s1 + $0xe10] sm:$0xff]
    %v474 = vld [vmem:[%s1 + $0xe18] sm:$0xff]
    %v475 = vld [vmem:[%s1 + $0xe20] sm:$0xff]
    %v476 = vld [vmem:[%s1 + $0xe28] sm:$0xff]
    %v477 = vld [vmem:[%s1 + $0xe30] sm:$0xff]
    %v478 = vld [vmem:[%s1 + $0xe38] sm:$0xff]
    %v479 = vld [vmem:[%s1 + $0xe40] sm:$0xff]
    %v480 = vld [vmem:[%s1 + $0xe48] sm:$0xff]
    %v481 = vld [vmem:[%s1 + $0xe50] sm:$0xff]
    %v482 = vld [vmem:[%s1 + $0xe58] sm:$0xff]
    %v483 = vld [vmem:[%s1 + $0xe60] sm:$0xff]
    %v484 = vld [vmem:[%s1 + $0xe68] sm:$0xff]
    %v485 = vld [vmem:[%s1 + $0xe70] sm:$0xff]
    %v486 = vld [vmem:[%s1 + $0xe78] sm:$0xff]
    %v487 = vld [vmem:[%s1 + $0xe80] sm:$0xff]
    %v488 = vld [vmem:[%s1 + $0xe88] sm:$0xff]
    %v489 = vld [vmem:[%s1 + $0xe90] sm:$0xff]
    %v490 = vld [vmem:[%s1 + $0xe98] sm:$0xff]
    %v491 = vld [vmem:[%s1 + $0xea0] sm:$0xff]
    %v492 = vld [vmem:[%s1 + $0xea8] sm:$0xff]
    %v493 = vld [vmem:[%s1 + $0xeb0] sm:$0xff]
    %v494 = vld [vmem:[%s1 + $0xeb8] sm:$0xff]
    %v495 = vld [vmem:[%s1 + $0xec0] sm:$0xff]
    %v496 = vld [vmem:[%s1 + $0xec8] sm:$0xff]
    %v497 = vld [vmem:[%s1 + $0xed0] sm:$0xff]
    %v498 = vld [vmem:[%s1 + $0xed8] sm:$0xff]
    %v499 = vld [vmem:[%s1 + $0xee0] sm:$0xff]
    %v500 = vld [vmem:[%s1 + $0xee8] sm:$0xff]
    %v501 = vld [vmem:[%s1 + $0xef0] sm:$0xff]
    %v502 = vld [vmem:[%s1 + $0xef8] sm:$0xff]
    %v503 = vld [vmem:[%s1 + $0xf00] sm:$0xff]
    %v504 = vld [vmem:[%s1 + $0xf08] sm:$0xff]
    %v505 = vld [vmem:[%s1 + $0xf10] sm:$0xff]
    %v506 = vld [vmem:[%s1 + $0xf18] sm:$0xff]
    %v507 = vld [vmem:[%s1 + $0xf20] sm:$0xff]
    %v508 = vld [vmem:[%s1 + $0xf28] sm:$0xff]
    %v509 = vld [vmem:[%s1 + $0xf30] sm:$0xff]
    %v510 = vld [vmem:[%s1 + $0xf38] sm:$0xff]
    %v511 = vld [vmem:[%s1 + $0xf40] sm:$0xff]
    %v512 = vld [vmem:[%s1 + $0xf48] sm:$0xff]
    %v513 = vld [vmem:[%s1 + $0xf50] sm:$0xff]
    %v514 = vld [vmem:[%s1 + $0xf58] sm:$0xff]
    %v515 = vld [vmem:[%s1 + $0xf60] sm:$0xff]
    %v516 = vld [vmem:[%s1 + $0xf68] sm:$0xff]
    %v517 = vld [vmem:[%s1 + $0xf70] sm:$0xff]
    %v518 = vld [vmem:[%s1 + $0xf78] sm:$0xff]
    %v519 = vld [vmem:[%s1 + $0xf80] sm:$0xff]
    %v520 = vld [vmem:[%s1 + $0xf88] sm:$0xff]
    %v521 = vld [vmem:[%s1 + $0xf90] sm:$0xff]
    %v522 = vld [vmem:[%s1 + $0xf98] sm:$0xff]
    %v523 = vld [vmem:[%s1 + $0xfa0] sm:$0xff]
    %v524 = vld [vmem:[%s1 + $0xfa8] sm:$0xff]
    %v525 = vld [vmem:[%s1 + $0xfb0] sm:$0xff]
    %v526 = vld [vmem:[%s1 + $0xfb8] sm:$0xff]
    %v527 = vld [vmem:[%s1 + $0xfc0] sm:$0xff]
    %v528 = vld [vmem:[%s1 + $0xfc8] sm:$0xff]
    %v529 = vld [vmem:[%s1 + $0xfd0] sm:$0xff]
    %v530 = vld [vmem:[%s1 + $0xfd8] sm:$0xff]
    %v531 = vld [vmem:[%s1 + $0xfe0] sm:$0xff]
    %v532 = vld [vmem:[%s1 + $0xfe8] sm:$0xff]
    %v533 = vld [vmem:[%s1 + $0xff0] sm:$0xff]
    %v534 = vld [vmem:[%s1 + $0xff8] sm:$0xff]
    %v535 = vld [vmem:[%s2] sm:$0xf]
    %v537 = vlaneseq
    %v538 = vshrl.u32 %v537, 7
    %v539 = vsub.s32 0, %v538
    %v540 = vrot.slane %v535, %v539
    %v541 = vlaneseq
    %v542 = vshrl.u32 %v541, 7
    %v543 = vsub.s32 1, %v542
    %v544 = vrot.slane %v535, %v543
    %v545 = vlaneseq
    %v546 = vshrl.u32 %v545, 7
    %v547 = vsub.s32 2, %v546
    %v548 = vrot.slane %v535, %v547
    %v549 = vlaneseq
    %v550 = vshrl.u32 %v549, 7
    %v551 = vsub.s32 3, %v550
    %v552 = vrot.slane %v535, %v551
    %v559 = vcombine.high %v21, %v21
    %v561 = vunpack.c.l.s4 1966171168
    %v562 = vunpack.c.0.s8 %v561
    %v563 = vlaneseq
    %v564 = vshrl.u32 %v563, 7
    %v565 = vsub.s32 %v562, %v564
    %v566 = vrot.slane %v21, %v565
    %v568 = vunpack.c.l.s4 1966171168
    %v569 = vunpack.c.0.s8 %v568
    %v570 = vlaneseq
    %v571 = vshrl.u32 %v570, 7
    %v572 = vsub.s32 %v569, %v571
    %v573 = vrot.slane %v559, %v572
    %v574 = vcombine.high %v566, %v566
    %v575 = vcombine.high %v573, %v573
    %v577 = vunpack.c.l.s4 1966171168
    %v578 = vunpack.c.0.s8 %v577
    %v579 = vlaneseq
    %v580 = vshrl.u32 %v579, 7
    %v581 = vsub.s32 %v578, %v580
    %v582 = vrot.slane %v566, %v581
    %v584 = vunpack.c.l.s4 1966171168
    %v585 = vunpack.c.0.s8 %v584
    %v586 = vlaneseq
    %v587 = vshrl.u32 %v586, 7
    %v588 = vsub.s32 %v585, %v587
    %v589 = vrot.slane %v573, %v588
    %v591 = vunpack.c.l.s4 1966171168
    %v592 = vunpack.c.0.s8 %v591
    %v593 = vlaneseq
    %v594 = vshrl.u32 %v593, 7
    %v595 = vsub.s32 %v592, %v594
    %v596 = vrot.slane %v574, %v595
    %v598 = vunpack.c.l.s4 1966171168
    %v599 = vunpack.c.0.s8 %v598
    %v600 = vlaneseq
    %v601 = vshrl.u32 %v600, 7
    %v602 = vsub.s32 %v599, %v601
    %v603 = vrot.slane %v575, %v602
    %v604 = vcombine.high %v582, %v582
    %v605 = vcombine.high %v589, %v589
    %v606 = vcombine.high %v596, %v596
    %v607 = vcombine.high %v603, %v603
    %v608 = vcombine.high %v22, %v22
    %v610 = vunpack.c.l.s4 1966171168
    %v611 = vunpack.c.0.s8 %v610
    %v612 = vlaneseq
    %v613 = vshrl.u32 %v612, 7
    %v614 = vsub.s32 %v611, %v613
    %v615 = vrot.slane %v22, %v614
    %v617 = vunpack.c.l.s4 1966171168
    %v618 = vunpack.c.0.s8 %v617
    %v619 = vlaneseq
    %v620 = vshrl.u32 %v619, 7
    %v621 = vsub.s32 %v618, %v620
    %v622 = vrot.slane %v608, %v621
    %v623 = vcombine.high %v615, %v615
    %v624 = vcombine.high %v622, %v622
    %v626 = vunpack.c.l.s4 1966171168
    %v627 = vunpack.c.0.s8 %v626
    %v628 = vlaneseq
    %v629 = vshrl.u32 %v628, 7
    %v630 = vsub.s32 %v627, %v629
    %v631 = vrot.slane %v615, %v630
    %v633 = vunpack.c.l.s4 1966171168
    %v634 = vunpack.c.0.s8 %v633
    %v635 = vlaneseq
    %v636 = vshrl.u32 %v635, 7
    %v637 = vsub.s32 %v634, %v636
    %v638 = vrot.slane %v622, %v637
    %v640 = vunpack.c.l.s4 1966171168
    %v641 = vunpack.c.0.s8 %v640
    %v642 = vlaneseq
    %v643 = vshrl.u32 %v642, 7
    %v644 = vsub.s32 %v641, %v643
    %v645 = vrot.slane %v623, %v644
    %v647 = vunpack.c.l.s4 1966171168
    %v648 = vunpack.c.0.s8 %v647
    %v649 = vlaneseq
    %v650 = vshrl.u32 %v649, 7
    %v651 = vsub.s32 %v648, %v650
    %v652 = vrot.slane %v624, %v651
    %v653 = vcombine.high %v631, %v631
    %v654 = vcombine.high %v638, %v638
    %v655 = vcombine.high %v645, %v645
    %v656 = vcombine.high %v652, %v652
    %v1185 = vunpack.c.l.b16 %v23
    %v1186 = vunpack.c.h.b16 %v23
    %v1187 = vunpack.c.l.b16 %v24
    %v1188 = vunpack.c.h.b16 %v24
    %v1189 = vunpack.c.l.b16 %v25
    %v1190 = vunpack.c.h.b16 %v25
    %v1191 = vunpack.c.l.b16 %v26
    %v1192 = vunpack.c.h.b16 %v26
    %v1193 = vunpack.c.l.b16 %v27
    %v1194 = vunpack.c.h.b16 %v27
    %v1195 = vunpack.c.l.b16 %v28
    %v1196 = vunpack.c.h.b16 %v28
    %v1197 = vunpack.c.l.b16 %v29
    %v1198 = vunpack.c.h.b16 %v29
    %v1199 = vunpack.c.l.b16 %v30
    %v1200 = vunpack.c.h.b16 %v30
    %v1201 = vunpack.c.l.b16 %v31
    %v1202 = vunpack.c.h.b16 %v31
    %v1203 = vunpack.c.l.b16 %v32
    %v1204 = vunpack.c.h.b16 %v32
    %v1205 = vunpack.c.l.b16 %v33
    %v1206 = vunpack.c.h.b16 %v33
    %v1207 = vunpack.c.l.b16 %v34
    %v1208 = vunpack.c.h.b16 %v34
    %v1209 = vunpack.c.l.b16 %v35
    %v1210 = vunpack.c.h.b16 %v35
    %v1211 = vunpack.c.l.b16 %v36
    %v1212 = vunpack.c.h.b16 %v36
    %v1213 = vunpack.c.l.b16 %v37
    %v1214 = vunpack.c.h.b16 %v37
    %v1215 = vunpack.c.l.b16 %v38
    %v1216 = vunpack.c.h.b16 %v38
    %v1217 = vunpack.c.l.b16 %v39
    %v1218 = vunpack.c.h.b16 %v39
    %v1219 = vunpack.c.l.b16 %v40
    %v1220 = vunpack.c.h.b16 %v40
    %v1221 = vunpack.c.l.b16 %v41
    %v1222 = vunpack.c.h.b16 %v41
    %v1223 = vunpack.c.l.b16 %v42
    %v1224 = vunpack.c.h.b16 %v42
    %v1225 = vunpack.c.l.b16 %v43
    %v1226 = vunpack.c.h.b16 %v43
    %v1227 = vunpack.c.l.b16 %v44
    %v1228 = vunpack.c.h.b16 %v44
    %v1229 = vunpack.c.l.b16 %v45
    %v1230 = vunpack.c.h.b16 %v45
    %v1231 = vunpack.c.l.b16 %v46
    %v1232 = vunpack.c.h.b16 %v46
    %v1233 = vunpack.c.l.b16 %v47
    %v1234 = vunpack.c.h.b16 %v47
    %v1235 = vunpack.c.l.b16 %v48
    %v1236 = vunpack.c.h.b16 %v48
    %v1237 = vunpack.c.l.b16 %v49
    %v1238 = vunpack.c.h.b16 %v49
    %v1239 = vunpack.c.l.b16 %v50
    %v1240 = vunpack.c.h.b16 %v50
    %v1241 = vunpack.c.l.b16 %v51
    %v1242 = vunpack.c.h.b16 %v51
    %v1243 = vunpack.c.l.b16 %v52
    %v1244 = vunpack.c.h.b16 %v52
    %v1245 = vunpack.c.l.b16 %v53
    %v1246 = vunpack.c.h.b16 %v53
    %v1247 = vunpack.c.l.b16 %v54
    %v1248 = vunpack.c.h.b16 %v54
    %v1249 = vunpack.c.l.b16 %v55
    %v1250 = vunpack.c.h.b16 %v55
    %v1251 = vunpack.c.l.b16 %v56
    %v1252 = vunpack.c.h.b16 %v56
    %v1253 = vunpack.c.l.b16 %v57
    %v1254 = vunpack.c.h.b16 %v57
    %v1255 = vunpack.c.l.b16 %v58
    %v1256 = vunpack.c.h.b16 %v58
    %v1257 = vunpack.c.l.b16 %v59
    %v1258 = vunpack.c.h.b16 %v59
    %v1259 = vunpack.c.l.b16 %v60
    %v1260 = vunpack.c.h.b16 %v60
    %v1261 = vunpack.c.l.b16 %v61
    %v1262 = vunpack.c.h.b16 %v61
    %v1263 = vunpack.c.l.b16 %v62
    %v1264 = vunpack.c.h.b16 %v62
    %v1265 = vunpack.c.l.b16 %v63
    %v1266 = vunpack.c.h.b16 %v63
    %v1267 = vunpack.c.l.b16 %v64
    %v1268 = vunpack.c.h.b16 %v64
    %v1269 = vunpack.c.l.b16 %v65
    %v1270 = vunpack.c.h.b16 %v65
    %v1271 = vunpack.c.l.b16 %v66
    %v1272 = vunpack.c.h.b16 %v66
    %v1273 = vunpack.c.l.b16 %v67
    %v1274 = vunpack.c.h.b16 %v67
    %v1275 = vunpack.c.l.b16 %v68
    %v1276 = vunpack.c.h.b16 %v68
    %v1277 = vunpack.c.l.b16 %v69
    %v1278 = vunpack.c.h.b16 %v69
    %v1279 = vunpack.c.l.b16 %v70
    %v1280 = vunpack.c.h.b16 %v70
    %v1281 = vunpack.c.l.b16 %v71
    %v1282 = vunpack.c.h.b16 %v71
    %v1283 = vunpack.c.l.b16 %v72
    %v1284 = vunpack.c.h.b16 %v72
    %v1285 = vunpack.c.l.b16 %v73
    %v1286 = vunpack.c.h.b16 %v73
    %v1287 = vunpack.c.l.b16 %v74
    %v1288 = vunpack.c.h.b16 %v74
    %v1289 = vunpack.c.l.b16 %v75
    %v1290 = vunpack.c.h.b16 %v75
    %v1291 = vunpack.c.l.b16 %v76
    %v1292 = vunpack.c.h.b16 %v76
    %v1293 = vunpack.c.l.b16 %v77
    %v1294 = vunpack.c.h.b16 %v77
    %v1295 = vunpack.c.l.b16 %v78
    %v1296 = vunpack.c.h.b16 %v78
    %v1297 = vunpack.c.l.b16 %v79
    %v1298 = vunpack.c.h.b16 %v79
    %v1299 = vunpack.c.l.b16 %v80
    %v1300 = vunpack.c.h.b16 %v80
    %v1301 = vunpack.c.l.b16 %v81
    %v1302 = vunpack.c.h.b16 %v81
    %v1303 = vunpack.c.l.b16 %v82
    %v1304 = vunpack.c.h.b16 %v82
    %v1305 = vunpack.c.l.b16 %v83
    %v1306 = vunpack.c.h.b16 %v83
    %v1307 = vunpack.c.l.b16 %v84
    %v1308 = vunpack.c.h.b16 %v84
    %v1309 = vunpack.c.l.b16 %v85
    %v1310 = vunpack.c.h.b16 %v85
    %v1311 = vunpack.c.l.b16 %v86
    %v1312 = vunpack.c.h.b16 %v86
    %v1313 = vunpack.c.l.b16 %v87
    %v1314 = vunpack.c.h.b16 %v87
    %v1315 = vunpack.c.l.b16 %v88
    %v1316 = vunpack.c.h.b16 %v88
    %v1317 = vunpack.c.l.b16 %v89
    %v1318 = vunpack.c.h.b16 %v89
    %v1319 = vunpack.c.l.b16 %v90
    %v1320 = vunpack.c.h.b16 %v90
    %v1321 = vunpack.c.l.b16 %v91
    %v1322 = vunpack.c.h.b16 %v91
    %v1323 = vunpack.c.l.b16 %v92
    %v1324 = vunpack.c.h.b16 %v92
    %v1325 = vunpack.c.l.b16 %v93
    %v1326 = vunpack.c.h.b16 %v93
    %v1327 = vunpack.c.l.b16 %v94
    %v1328 = vunpack.c.h.b16 %v94
    %v1329 = vunpack.c.l.b16 %v95
    %v1330 = vunpack.c.h.b16 %v95
    %v1331 = vunpack.c.l.b16 %v96
    %v1332 = vunpack.c.h.b16 %v96
    %v1333 = vunpack.c.l.b16 %v97
    %v1334 = vunpack.c.h.b16 %v97
    %v1335 = vunpack.c.l.b16 %v98
    %v1336 = vunpack.c.h.b16 %v98
    %v1337 = vunpack.c.l.b16 %v99
    %v1338 = vunpack.c.h.b16 %v99
    %v1339 = vunpack.c.l.b16 %v100
    %v1340 = vunpack.c.h.b16 %v100
    %v1341 = vunpack.c.l.b16 %v101
    %v1342 = vunpack.c.h.b16 %v101
    %v1343 = vunpack.c.l.b16 %v102
    %v1344 = vunpack.c.h.b16 %v102
    %v1345 = vunpack.c.l.b16 %v103
    %v1346 = vunpack.c.h.b16 %v103
    %v1347 = vunpack.c.l.b16 %v104
    %v1348 = vunpack.c.h.b16 %v104
    %v1349 = vunpack.c.l.b16 %v105
    %v1350 = vunpack.c.h.b16 %v105
    %v1351 = vunpack.c.l.b16 %v106
    %v1352 = vunpack.c.h.b16 %v106
    %v1353 = vunpack.c.l.b16 %v107
    %v1354 = vunpack.c.h.b16 %v107
    %v1355 = vunpack.c.l.b16 %v108
    %v1356 = vunpack.c.h.b16 %v108
    %v1357 = vunpack.c.l.b16 %v109
    %v1358 = vunpack.c.h.b16 %v109
    %v1359 = vunpack.c.l.b16 %v110
    %v1360 = vunpack.c.h.b16 %v110
    %v1361 = vunpack.c.l.b16 %v111
    %v1362 = vunpack.c.h.b16 %v111
    %v1363 = vunpack.c.l.b16 %v112
    %v1364 = vunpack.c.h.b16 %v112
    %v1365 = vunpack.c.l.b16 %v113
    %v1366 = vunpack.c.h.b16 %v113
    %v1367 = vunpack.c.l.b16 %v114
    %v1368 = vunpack.c.h.b16 %v114
    %v1369 = vunpack.c.l.b16 %v115
    %v1370 = vunpack.c.h.b16 %v115
    %v1371 = vunpack.c.l.b16 %v116
    %v1372 = vunpack.c.h.b16 %v116
    %v1373 = vunpack.c.l.b16 %v117
    %v1374 = vunpack.c.h.b16 %v117
    %v1375 = vunpack.c.l.b16 %v118
    %v1376 = vunpack.c.h.b16 %v118
    %v1377 = vunpack.c.l.b16 %v119
    %v1378 = vunpack.c.h.b16 %v119
    %v1379 = vunpack.c.l.b16 %v120
    %v1380 = vunpack.c.h.b16 %v120
    %v1381 = vunpack.c.l.b16 %v121
    %v1382 = vunpack.c.h.b16 %v121
    %v1383 = vunpack.c.l.b16 %v122
    %v1384 = vunpack.c.h.b16 %v122
    %v1385 = vunpack.c.l.b16 %v123
    %v1386 = vunpack.c.h.b16 %v123
    %v1387 = vunpack.c.l.b16 %v124
    %v1388 = vunpack.c.h.b16 %v124
    %v1389 = vunpack.c.l.b16 %v125
    %v1390 = vunpack.c.h.b16 %v125
    %v1391 = vunpack.c.l.b16 %v126
    %v1392 = vunpack.c.h.b16 %v126
    %v1393 = vunpack.c.l.b16 %v127
    %v1394 = vunpack.c.h.b16 %v127
    %v1395 = vunpack.c.l.b16 %v128
    %v1396 = vunpack.c.h.b16 %v128
    %v1397 = vunpack.c.l.b16 %v129
    %v1398 = vunpack.c.h.b16 %v129
    %v1399 = vunpack.c.l.b16 %v130
    %v1400 = vunpack.c.h.b16 %v130
    %v1401 = vunpack.c.l.b16 %v131
    %v1402 = vunpack.c.h.b16 %v131
    %v1403 = vunpack.c.l.b16 %v132
    %v1404 = vunpack.c.h.b16 %v132
    %v1405 = vunpack.c.l.b16 %v133
    %v1406 = vunpack.c.h.b16 %v133
    %v1407 = vunpack.c.l.b16 %v134
    %v1408 = vunpack.c.h.b16 %v134
    %v1409 = vunpack.c.l.b16 %v135
    %v1410 = vunpack.c.h.b16 %v135
    %v1411 = vunpack.c.l.b16 %v136
    %v1412 = vunpack.c.h.b16 %v136
    %v1413 = vunpack.c.l.b16 %v137
    %v1414 = vunpack.c.h.b16 %v137
    %v1415 = vunpack.c.l.b16 %v138
    %v1416 = vunpack.c.h.b16 %v138
    %v1417 = vunpack.c.l.b16 %v139
    %v1418 = vunpack.c.h.b16 %v139
    %v1419 = vunpack.c.l.b16 %v140
    %v1420 = vunpack.c.h.b16 %v140
    %v1421 = vunpack.c.l.b16 %v141
    %v1422 = vunpack.c.h.b16 %v141
    %v1423 = vunpack.c.l.b16 %v142
    %v1424 = vunpack.c.h.b16 %v142
    %v1425 = vunpack.c.l.b16 %v143
    %v1426 = vunpack.c.h.b16 %v143
    %v1427 = vunpack.c.l.b16 %v144
    %v1428 = vunpack.c.h.b16 %v144
    %v1429 = vunpack.c.l.b16 %v145
    %v1430 = vunpack.c.h.b16 %v145
    %v1431 = vunpack.c.l.b16 %v146
    %v1432 = vunpack.c.h.b16 %v146
    %v1433 = vunpack.c.l.b16 %v147
    %v1434 = vunpack.c.h.b16 %v147
    %v1435 = vunpack.c.l.b16 %v148
    %v1436 = vunpack.c.h.b16 %v148
    %v1437 = vunpack.c.l.b16 %v149
    %v1438 = vunpack.c.h.b16 %v149
    %v1439 = vunpack.c.l.b16 %v150
    %v1440 = vunpack.c.h.b16 %v150
    %v1441 = vunpack.c.l.b16 %v151
    %v1442 = vunpack.c.h.b16 %v151
    %v1443 = vunpack.c.l.b16 %v152
    %v1444 = vunpack.c.h.b16 %v152
    %v1445 = vunpack.c.l.b16 %v153
    %v1446 = vunpack.c.h.b16 %v153
    %v1447 = vunpack.c.l.b16 %v154
    %v1448 = vunpack.c.h.b16 %v154
    %v1449 = vunpack.c.l.b16 %v155
    %v1450 = vunpack.c.h.b16 %v155
    %v1451 = vunpack.c.l.b16 %v156
    %v1452 = vunpack.c.h.b16 %v156
    %v1453 = vunpack.c.l.b16 %v157
    %v1454 = vunpack.c.h.b16 %v157
    %v1455 = vunpack.c.l.b16 %v158
    %v1456 = vunpack.c.h.b16 %v158
    %v1457 = vunpack.c.l.b16 %v159
    %v1458 = vunpack.c.h.b16 %v159
    %v1459 = vunpack.c.l.b16 %v160
    %v1460 = vunpack.c.h.b16 %v160
    %v1461 = vunpack.c.l.b16 %v161
    %v1462 = vunpack.c.h.b16 %v161
    %v1463 = vunpack.c.l.b16 %v162
    %v1464 = vunpack.c.h.b16 %v162
    %v1465 = vunpack.c.l.b16 %v163
    %v1466 = vunpack.c.h.b16 %v163
    %v1467 = vunpack.c.l.b16 %v164
    %v1468 = vunpack.c.h.b16 %v164
    %v1469 = vunpack.c.l.b16 %v165
    %v1470 = vunpack.c.h.b16 %v165
    %v1471 = vunpack.c.l.b16 %v166
    %v1472 = vunpack.c.h.b16 %v166
    %v1473 = vunpack.c.l.b16 %v167
    %v1474 = vunpack.c.h.b16 %v167
    %v1475 = vunpack.c.l.b16 %v168
    %v1476 = vunpack.c.h.b16 %v168
    %v1477 = vunpack.c.l.b16 %v169
    %v1478 = vunpack.c.h.b16 %v169
    %v1479 = vunpack.c.l.b16 %v170
    %v1480 = vunpack.c.h.b16 %v170
    %v1481 = vunpack.c.l.b16 %v171
    %v1482 = vunpack.c.h.b16 %v171
    %v1483 = vunpack.c.l.b16 %v172
    %v1484 = vunpack.c.h.b16 %v172
    %v1485 = vunpack.c.l.b16 %v173
    %v1486 = vunpack.c.h.b16 %v173
    %v1487 = vunpack.c.l.b16 %v174
    %v1488 = vunpack.c.h.b16 %v174
    %v1489 = vunpack.c.l.b16 %v175
    %v1490 = vunpack.c.h.b16 %v175
    %v1491 = vunpack.c.l.b16 %v176
    %v1492 = vunpack.c.h.b16 %v176
    %v1493 = vunpack.c.l.b16 %v177
    %v1494 = vunpack.c.h.b16 %v177
    %v1495 = vunpack.c.l.b16 %v178
    %v1496 = vunpack.c.h.b16 %v178
    %v1497 = vunpack.c.l.b16 %v179
    %v1498 = vunpack.c.h.b16 %v179
    %v1499 = vunpack.c.l.b16 %v180
    %v1500 = vunpack.c.h.b16 %v180
    %v1501 = vunpack.c.l.b16 %v181
    %v1502 = vunpack.c.h.b16 %v181
    %v1503 = vunpack.c.l.b16 %v182
    %v1504 = vunpack.c.h.b16 %v182
    %v1505 = vunpack.c.l.b16 %v183
    %v1506 = vunpack.c.h.b16 %v183
    %v1507 = vunpack.c.l.b16 %v184
    %v1508 = vunpack.c.h.b16 %v184
    %v1509 = vunpack.c.l.b16 %v185
    %v1510 = vunpack.c.h.b16 %v185
    %v1511 = vunpack.c.l.b16 %v186
    %v1512 = vunpack.c.h.b16 %v186
    %v1513 = vunpack.c.l.b16 %v187
    %v1514 = vunpack.c.h.b16 %v187
    %v1515 = vunpack.c.l.b16 %v188
    %v1516 = vunpack.c.h.b16 %v188
    %v1517 = vunpack.c.l.b16 %v189
    %v1518 = vunpack.c.h.b16 %v189
    %v1519 = vunpack.c.l.b16 %v190
    %v1520 = vunpack.c.h.b16 %v190
    %v1521 = vunpack.c.l.b16 %v191
    %v1522 = vunpack.c.h.b16 %v191
    %v1523 = vunpack.c.l.b16 %v192
    %v1524 = vunpack.c.h.b16 %v192
    %v1525 = vunpack.c.l.b16 %v193
    %v1526 = vunpack.c.h.b16 %v193
    %v1527 = vunpack.c.l.b16 %v194
    %v1528 = vunpack.c.h.b16 %v194
    %v1529 = vunpack.c.l.b16 %v195
    %v1530 = vunpack.c.h.b16 %v195
    %v1531 = vunpack.c.l.b16 %v196
    %v1532 = vunpack.c.h.b16 %v196
    %v1533 = vunpack.c.l.b16 %v197
    %v1534 = vunpack.c.h.b16 %v197
    %v1535 = vunpack.c.l.b16 %v198
    %v1536 = vunpack.c.h.b16 %v198
    %v1537 = vunpack.c.l.b16 %v199
    %v1538 = vunpack.c.h.b16 %v199
    %v1539 = vunpack.c.l.b16 %v200
    %v1540 = vunpack.c.h.b16 %v200
    %v1541 = vunpack.c.l.b16 %v201
    %v1542 = vunpack.c.h.b16 %v201
    %v1543 = vunpack.c.l.b16 %v202
    %v1544 = vunpack.c.h.b16 %v202
    %v1545 = vunpack.c.l.b16 %v203
    %v1546 = vunpack.c.h.b16 %v203
    %v1547 = vunpack.c.l.b16 %v204
    %v1548 = vunpack.c.h.b16 %v204
    %v1549 = vunpack.c.l.b16 %v205
    %v1550 = vunpack.c.h.b16 %v205
    %v1551 = vunpack.c.l.b16 %v206
    %v1552 = vunpack.c.h.b16 %v206
    %v1553 = vunpack.c.l.b16 %v207
    %v1554 = vunpack.c.h.b16 %v207
    %v1555 = vunpack.c.l.b16 %v208
    %v1556 = vunpack.c.h.b16 %v208
    %v1557 = vunpack.c.l.b16 %v209
    %v1558 = vunpack.c.h.b16 %v209
    %v1559 = vunpack.c.l.b16 %v210
    %v1560 = vunpack.c.h.b16 %v210
    %v1561 = vunpack.c.l.b16 %v211
    %v1562 = vunpack.c.h.b16 %v211
    %v1563 = vunpack.c.l.b16 %v212
    %v1564 = vunpack.c.h.b16 %v212
    %v1565 = vunpack.c.l.b16 %v213
    %v1566 = vunpack.c.h.b16 %v213
    %v1567 = vunpack.c.l.b16 %v214
    %v1568 = vunpack.c.h.b16 %v214
    %v1569 = vunpack.c.l.b16 %v215
    %v1570 = vunpack.c.h.b16 %v215
    %v1571 = vunpack.c.l.b16 %v216
    %v1572 = vunpack.c.h.b16 %v216
    %v1573 = vunpack.c.l.b16 %v217
    %v1574 = vunpack.c.h.b16 %v217
    %v1575 = vunpack.c.l.b16 %v218
    %v1576 = vunpack.c.h.b16 %v218
    %v1577 = vunpack.c.l.b16 %v219
    %v1578 = vunpack.c.h.b16 %v219
    %v1579 = vunpack.c.l.b16 %v220
    %v1580 = vunpack.c.h.b16 %v220
    %v1581 = vunpack.c.l.b16 %v221
    %v1582 = vunpack.c.h.b16 %v221
    %v1583 = vunpack.c.l.b16 %v222
    %v1584 = vunpack.c.h.b16 %v222
    %v1585 = vunpack.c.l.b16 %v223
    %v1586 = vunpack.c.h.b16 %v223
    %v1587 = vunpack.c.l.b16 %v224
    %v1588 = vunpack.c.h.b16 %v224
    %v1589 = vunpack.c.l.b16 %v225
    %v1590 = vunpack.c.h.b16 %v225
    %v1591 = vunpack.c.l.b16 %v226
    %v1592 = vunpack.c.h.b16 %v226
    %v1593 = vunpack.c.l.b16 %v227
    %v1594 = vunpack.c.h.b16 %v227
    %v1595 = vunpack.c.l.b16 %v228
    %v1596 = vunpack.c.h.b16 %v228
    %v1597 = vunpack.c.l.b16 %v229
    %v1598 = vunpack.c.h.b16 %v229
    %v1599 = vunpack.c.l.b16 %v230
    %v1600 = vunpack.c.h.b16 %v230
    %v1601 = vunpack.c.l.b16 %v231
    %v1602 = vunpack.c.h.b16 %v231
    %v1603 = vunpack.c.l.b16 %v232
    %v1604 = vunpack.c.h.b16 %v232
    %v1605 = vunpack.c.l.b16 %v233
    %v1606 = vunpack.c.h.b16 %v233
    %v1607 = vunpack.c.l.b16 %v234
    %v1608 = vunpack.c.h.b16 %v234
    %v1609 = vunpack.c.l.b16 %v235
    %v1610 = vunpack.c.h.b16 %v235
    %v1611 = vunpack.c.l.b16 %v236
    %v1612 = vunpack.c.h.b16 %v236
    %v1613 = vunpack.c.l.b16 %v237
    %v1614 = vunpack.c.h.b16 %v237
    %v1615 = vunpack.c.l.b16 %v238
    %v1616 = vunpack.c.h.b16 %v238
    %v1617 = vunpack.c.l.b16 %v239
    %v1618 = vunpack.c.h.b16 %v239
    %v1619 = vunpack.c.l.b16 %v240
    %v1620 = vunpack.c.h.b16 %v240
    %v1621 = vunpack.c.l.b16 %v241
    %v1622 = vunpack.c.h.b16 %v241
    %v1623 = vunpack.c.l.b16 %v242
    %v1624 = vunpack.c.h.b16 %v242
    %v1625 = vunpack.c.l.b16 %v243
    %v1626 = vunpack.c.h.b16 %v243
    %v1627 = vunpack.c.l.b16 %v244
    %v1628 = vunpack.c.h.b16 %v244
    %v1629 = vunpack.c.l.b16 %v245
    %v1630 = vunpack.c.h.b16 %v245
    %v1631 = vunpack.c.l.b16 %v246
    %v1632 = vunpack.c.h.b16 %v246
    %v1633 = vunpack.c.l.b16 %v247
    %v1634 = vunpack.c.h.b16 %v247
    %v1635 = vunpack.c.l.b16 %v248
    %v1636 = vunpack.c.h.b16 %v248
    %v1637 = vunpack.c.l.b16 %v249
    %v1638 = vunpack.c.h.b16 %v249
    %v1639 = vunpack.c.l.b16 %v250
    %v1640 = vunpack.c.h.b16 %v250
    %v1641 = vunpack.c.l.b16 %v251
    %v1642 = vunpack.c.h.b16 %v251
    %v1643 = vunpack.c.l.b16 %v252
    %v1644 = vunpack.c.h.b16 %v252
    %v1645 = vunpack.c.l.b16 %v253
    %v1646 = vunpack.c.h.b16 %v253
    %v1647 = vunpack.c.l.b16 %v254
    %v1648 = vunpack.c.h.b16 %v254
    %v1649 = vunpack.c.l.b16 %v255
    %v1650 = vunpack.c.h.b16 %v255
    %v1651 = vunpack.c.l.b16 %v256
    %v1652 = vunpack.c.h.b16 %v256
    %v1653 = vunpack.c.l.b16 %v257
    %v1654 = vunpack.c.h.b16 %v257
    %v1655 = vunpack.c.l.b16 %v258
    %v1656 = vunpack.c.h.b16 %v258
    %v1657 = vunpack.c.l.b16 %v259
    %v1658 = vunpack.c.h.b16 %v259
    %v1659 = vunpack.c.l.b16 %v260
    %v1660 = vunpack.c.h.b16 %v260
    %v1661 = vunpack.c.l.b16 %v261
    %v1662 = vunpack.c.h.b16 %v261
    %v1663 = vunpack.c.l.b16 %v262
    %v1664 = vunpack.c.h.b16 %v262
    %v1665 = vunpack.c.l.b16 %v263
    %v1666 = vunpack.c.h.b16 %v263
    %v1667 = vunpack.c.l.b16 %v264
    %v1668 = vunpack.c.h.b16 %v264
    %v1669 = vunpack.c.l.b16 %v265
    %v1670 = vunpack.c.h.b16 %v265
    %v1671 = vunpack.c.l.b16 %v266
    %v1672 = vunpack.c.h.b16 %v266
    %v1673 = vunpack.c.l.b16 %v267
    %v1674 = vunpack.c.h.b16 %v267
    %v1675 = vunpack.c.l.b16 %v268
    %v1676 = vunpack.c.h.b16 %v268
    %v1677 = vunpack.c.l.b16 %v269
    %v1678 = vunpack.c.h.b16 %v269
    %v1679 = vunpack.c.l.b16 %v270
    %v1680 = vunpack.c.h.b16 %v270
    %v1681 = vunpack.c.l.b16 %v271
    %v1682 = vunpack.c.h.b16 %v271
    %v1683 = vunpack.c.l.b16 %v272
    %v1684 = vunpack.c.h.b16 %v272
    %v1685 = vunpack.c.l.b16 %v273
    %v1686 = vunpack.c.h.b16 %v273
    %v1687 = vunpack.c.l.b16 %v274
    %v1688 = vunpack.c.h.b16 %v274
    %v1689 = vunpack.c.l.b16 %v275
    %v1690 = vunpack.c.h.b16 %v275
    %v1691 = vunpack.c.l.b16 %v276
    %v1692 = vunpack.c.h.b16 %v276
    %v1693 = vunpack.c.l.b16 %v277
    %v1694 = vunpack.c.h.b16 %v277
    %v1695 = vunpack.c.l.b16 %v278
    %v1696 = vunpack.c.h.b16 %v278
    %v1697 = vunpack.c.l.b16 %v279
    %v1698 = vunpack.c.h.b16 %v279
    %v1699 = vunpack.c.l.b16 %v280
    %v1700 = vunpack.c.h.b16 %v280
    %v1701 = vunpack.c.l.b16 %v281
    %v1702 = vunpack.c.h.b16 %v281
    %v1703 = vunpack.c.l.b16 %v282
    %v1704 = vunpack.c.h.b16 %v282
    %v1705 = vunpack.c.l.b16 %v283
    %v1706 = vunpack.c.h.b16 %v283
    %v1707 = vunpack.c.l.b16 %v284
    %v1708 = vunpack.c.h.b16 %v284
    %v1709 = vunpack.c.l.b16 %v285
    %v1710 = vunpack.c.h.b16 %v285
    %v1711 = vunpack.c.l.b16 %v286
    %v1712 = vunpack.c.h.b16 %v286
    %v1713 = vunpack.c.l.b16 %v287
    %v1714 = vunpack.c.h.b16 %v287
    %v1715 = vunpack.c.l.b16 %v288
    %v1716 = vunpack.c.h.b16 %v288
    %v1717 = vunpack.c.l.b16 %v289
    %v1718 = vunpack.c.h.b16 %v289
    %v1719 = vunpack.c.l.b16 %v290
    %v1720 = vunpack.c.h.b16 %v290
    %v1721 = vunpack.c.l.b16 %v291
    %v1722 = vunpack.c.h.b16 %v291
    %v1723 = vunpack.c.l.b16 %v292
    %v1724 = vunpack.c.h.b16 %v292
    %v1725 = vunpack.c.l.b16 %v293
    %v1726 = vunpack.c.h.b16 %v293
    %v1727 = vunpack.c.l.b16 %v294
    %v1728 = vunpack.c.h.b16 %v294
    %v1729 = vunpack.c.l.b16 %v295
    %v1730 = vunpack.c.h.b16 %v295
    %v1731 = vunpack.c.l.b16 %v296
    %v1732 = vunpack.c.h.b16 %v296
    %v1733 = vunpack.c.l.b16 %v297
    %v1734 = vunpack.c.h.b16 %v297
    %v1735 = vunpack.c.l.b16 %v298
    %v1736 = vunpack.c.h.b16 %v298
    %v1737 = vunpack.c.l.b16 %v299
    %v1738 = vunpack.c.h.b16 %v299
    %v1739 = vunpack.c.l.b16 %v300
    %v1740 = vunpack.c.h.b16 %v300
    %v1741 = vunpack.c.l.b16 %v301
    %v1742 = vunpack.c.h.b16 %v301
    %v1743 = vunpack.c.l.b16 %v302
    %v1744 = vunpack.c.h.b16 %v302
    %v1745 = vunpack.c.l.b16 %v303
    %v1746 = vunpack.c.h.b16 %v303
    %v1747 = vunpack.c.l.b16 %v304
    %v1748 = vunpack.c.h.b16 %v304
    %v1749 = vunpack.c.l.b16 %v305
    %v1750 = vunpack.c.h.b16 %v305
    %v1751 = vunpack.c.l.b16 %v306
    %v1752 = vunpack.c.h.b16 %v306
    %v1753 = vunpack.c.l.b16 %v307
    %v1754 = vunpack.c.h.b16 %v307
    %v1755 = vunpack.c.l.b16 %v308
    %v1756 = vunpack.c.h.b16 %v308
    %v1757 = vunpack.c.l.b16 %v309
    %v1758 = vunpack.c.h.b16 %v309
    %v1759 = vunpack.c.l.b16 %v310
    %v1760 = vunpack.c.h.b16 %v310
    %v1761 = vunpack.c.l.b16 %v311
    %v1762 = vunpack.c.h.b16 %v311
    %v1763 = vunpack.c.l.b16 %v312
    %v1764 = vunpack.c.h.b16 %v312
    %v1765 = vunpack.c.l.b16 %v313
    %v1766 = vunpack.c.h.b16 %v313
    %v1767 = vunpack.c.l.b16 %v314
    %v1768 = vunpack.c.h.b16 %v314
    %v1769 = vunpack.c.l.b16 %v315
    %v1770 = vunpack.c.h.b16 %v315
    %v1771 = vunpack.c.l.b16 %v316
    %v1772 = vunpack.c.h.b16 %v316
    %v1773 = vunpack.c.l.b16 %v317
    %v1774 = vunpack.c.h.b16 %v317
    %v1775 = vunpack.c.l.b16 %v318
    %v1776 = vunpack.c.h.b16 %v318
    %v1777 = vunpack.c.l.b16 %v319
    %v1778 = vunpack.c.h.b16 %v319
    %v1779 = vunpack.c.l.b16 %v320
    %v1780 = vunpack.c.h.b16 %v320
    %v1781 = vunpack.c.l.b16 %v321
    %v1782 = vunpack.c.h.b16 %v321
    %v1783 = vunpack.c.l.b16 %v322
    %v1784 = vunpack.c.h.b16 %v322
    %v1785 = vunpack.c.l.b16 %v323
    %v1786 = vunpack.c.h.b16 %v323
    %v1787 = vunpack.c.l.b16 %v324
    %v1788 = vunpack.c.h.b16 %v324
    %v1789 = vunpack.c.l.b16 %v325
    %v1790 = vunpack.c.h.b16 %v325
    %v1791 = vunpack.c.l.b16 %v326
    %v1792 = vunpack.c.h.b16 %v326
    %v1793 = vunpack.c.l.b16 %v327
    %v1794 = vunpack.c.h.b16 %v327
    %v1795 = vunpack.c.l.b16 %v328
    %v1796 = vunpack.c.h.b16 %v328
    %v1797 = vunpack.c.l.b16 %v329
    %v1798 = vunpack.c.h.b16 %v329
    %v1799 = vunpack.c.l.b16 %v330
    %v1800 = vunpack.c.h.b16 %v330
    %v1801 = vunpack.c.l.b16 %v331
    %v1802 = vunpack.c.h.b16 %v331
    %v1803 = vunpack.c.l.b16 %v332
    %v1804 = vunpack.c.h.b16 %v332
    %v1805 = vunpack.c.l.b16 %v333
    %v1806 = vunpack.c.h.b16 %v333
    %v1807 = vunpack.c.l.b16 %v334
    %v1808 = vunpack.c.h.b16 %v334
    %v1809 = vunpack.c.l.b16 %v335
    %v1810 = vunpack.c.h.b16 %v335
    %v1811 = vunpack.c.l.b16 %v336
    %v1812 = vunpack.c.h.b16 %v336
    %v1813 = vunpack.c.l.b16 %v337
    %v1814 = vunpack.c.h.b16 %v337
    %v1815 = vunpack.c.l.b16 %v338
    %v1816 = vunpack.c.h.b16 %v338
    %v1817 = vunpack.c.l.b16 %v339
    %v1818 = vunpack.c.h.b16 %v339
    %v1819 = vunpack.c.l.b16 %v340
    %v1820 = vunpack.c.h.b16 %v340
    %v1821 = vunpack.c.l.b16 %v341
    %v1822 = vunpack.c.h.b16 %v341
    %v1823 = vunpack.c.l.b16 %v342
    %v1824 = vunpack.c.h.b16 %v342
    %v1825 = vunpack.c.l.b16 %v343
    %v1826 = vunpack.c.h.b16 %v343
    %v1827 = vunpack.c.l.b16 %v344
    %v1828 = vunpack.c.h.b16 %v344
    %v1829 = vunpack.c.l.b16 %v345
    %v1830 = vunpack.c.h.b16 %v345
    %v1831 = vunpack.c.l.b16 %v346
    %v1832 = vunpack.c.h.b16 %v346
    %v1833 = vunpack.c.l.b16 %v347
    %v1834 = vunpack.c.h.b16 %v347
    %v1835 = vunpack.c.l.b16 %v348
    %v1836 = vunpack.c.h.b16 %v348
    %v1837 = vunpack.c.l.b16 %v349
    %v1838 = vunpack.c.h.b16 %v349
    %v1839 = vunpack.c.l.b16 %v350
    %v1840 = vunpack.c.h.b16 %v350
    %v1841 = vunpack.c.l.b16 %v351
    %v1842 = vunpack.c.h.b16 %v351
    %v1843 = vunpack.c.l.b16 %v352
    %v1844 = vunpack.c.h.b16 %v352
    %v1845 = vunpack.c.l.b16 %v353
    %v1846 = vunpack.c.h.b16 %v353
    %v1847 = vunpack.c.l.b16 %v354
    %v1848 = vunpack.c.h.b16 %v354
    %v1849 = vunpack.c.l.b16 %v355
    %v1850 = vunpack.c.h.b16 %v355
    %v1851 = vunpack.c.l.b16 %v356
    %v1852 = vunpack.c.h.b16 %v356
    %v1853 = vunpack.c.l.b16 %v357
    %v1854 = vunpack.c.h.b16 %v357
    %v1855 = vunpack.c.l.b16 %v358
    %v1856 = vunpack.c.h.b16 %v358
    %v1857 = vunpack.c.l.b16 %v359
    %v1858 = vunpack.c.h.b16 %v359
    %v1859 = vunpack.c.l.b16 %v360
    %v1860 = vunpack.c.h.b16 %v360
    %v1861 = vunpack.c.l.b16 %v361
    %v1862 = vunpack.c.h.b16 %v361
    %v1863 = vunpack.c.l.b16 %v362
    %v1864 = vunpack.c.h.b16 %v362
    %v1865 = vunpack.c.l.b16 %v363
    %v1866 = vunpack.c.h.b16 %v363
    %v1867 = vunpack.c.l.b16 %v364
    %v1868 = vunpack.c.h.b16 %v364
    %v1869 = vunpack.c.l.b16 %v365
    %v1870 = vunpack.c.h.b16 %v365
    %v1871 = vunpack.c.l.b16 %v366
    %v1872 = vunpack.c.h.b16 %v366
    %v1873 = vunpack.c.l.b16 %v367
    %v1874 = vunpack.c.h.b16 %v367
    %v1875 = vunpack.c.l.b16 %v368
    %v1876 = vunpack.c.h.b16 %v368
    %v1877 = vunpack.c.l.b16 %v369
    %v1878 = vunpack.c.h.b16 %v369
    %v1879 = vunpack.c.l.b16 %v370
    %v1880 = vunpack.c.h.b16 %v370
    %v1881 = vunpack.c.l.b16 %v371
    %v1882 = vunpack.c.h.b16 %v371
    %v1883 = vunpack.c.l.b16 %v372
    %v1884 = vunpack.c.h.b16 %v372
    %v1885 = vunpack.c.l.b16 %v373
    %v1886 = vunpack.c.h.b16 %v373
    %v1887 = vunpack.c.l.b16 %v374
    %v1888 = vunpack.c.h.b16 %v374
    %v1889 = vunpack.c.l.b16 %v375
    %v1890 = vunpack.c.h.b16 %v375
    %v1891 = vunpack.c.l.b16 %v376
    %v1892 = vunpack.c.h.b16 %v376
    %v1893 = vunpack.c.l.b16 %v377
    %v1894 = vunpack.c.h.b16 %v377
    %v1895 = vunpack.c.l.b16 %v378
    %v1896 = vunpack.c.h.b16 %v378
    %v1897 = vunpack.c.l.b16 %v379
    %v1898 = vunpack.c.h.b16 %v379
    %v1899 = vunpack.c.l.b16 %v380
    %v1900 = vunpack.c.h.b16 %v380
    %v1901 = vunpack.c.l.b16 %v381
    %v1902 = vunpack.c.h.b16 %v381
    %v1903 = vunpack.c.l.b16 %v382
    %v1904 = vunpack.c.h.b16 %v382
    %v1905 = vunpack.c.l.b16 %v383
    %v1906 = vunpack.c.h.b16 %v383
    %v1907 = vunpack.c.l.b16 %v384
    %v1908 = vunpack.c.h.b16 %v384
    %v1909 = vunpack.c.l.b16 %v385
    %v1910 = vunpack.c.h.b16 %v385
    %v1911 = vunpack.c.l.b16 %v386
    %v1912 = vunpack.c.h.b16 %v386
    %v1913 = vunpack.c.l.b16 %v387
    %v1914 = vunpack.c.h.b16 %v387
    %v1915 = vunpack.c.l.b16 %v388
    %v1916 = vunpack.c.h.b16 %v388
    %v1917 = vunpack.c.l.b16 %v389
    %v1918 = vunpack.c.h.b16 %v389
    %v1919 = vunpack.c.l.b16 %v390
    %v1920 = vunpack.c.h.b16 %v390
    %v1921 = vunpack.c.l.b16 %v391
    %v1922 = vunpack.c.h.b16 %v391
    %v1923 = vunpack.c.l.b16 %v392
    %v1924 = vunpack.c.h.b16 %v392
    %v1925 = vunpack.c.l.b16 %v393
    %v1926 = vunpack.c.h.b16 %v393
    %v1927 = vunpack.c.l.b16 %v394
    %v1928 = vunpack.c.h.b16 %v394
    %v1929 = vunpack.c.l.b16 %v395
    %v1930 = vunpack.c.h.b16 %v395
    %v1931 = vunpack.c.l.b16 %v396
    %v1932 = vunpack.c.h.b16 %v396
    %v1933 = vunpack.c.l.b16 %v397
    %v1934 = vunpack.c.h.b16 %v397
    %v1935 = vunpack.c.l.b16 %v398
    %v1936 = vunpack.c.h.b16 %v398
    %v1937 = vunpack.c.l.b16 %v399
    %v1938 = vunpack.c.h.b16 %v399
    %v1939 = vunpack.c.l.b16 %v400
    %v1940 = vunpack.c.h.b16 %v400
    %v1941 = vunpack.c.l.b16 %v401
    %v1942 = vunpack.c.h.b16 %v401
    %v1943 = vunpack.c.l.b16 %v402
    %v1944 = vunpack.c.h.b16 %v402
    %v1945 = vunpack.c.l.b16 %v403
    %v1946 = vunpack.c.h.b16 %v403
    %v1947 = vunpack.c.l.b16 %v404
    %v1948 = vunpack.c.h.b16 %v404
    %v1949 = vunpack.c.l.b16 %v405
    %v1950 = vunpack.c.h.b16 %v405
    %v1951 = vunpack.c.l.b16 %v406
    %v1952 = vunpack.c.h.b16 %v406
    %v1953 = vunpack.c.l.b16 %v407
    %v1954 = vunpack.c.h.b16 %v407
    %v1955 = vunpack.c.l.b16 %v408
    %v1956 = vunpack.c.h.b16 %v408
    %v1957 = vunpack.c.l.b16 %v409
    %v1958 = vunpack.c.h.b16 %v409
    %v1959 = vunpack.c.l.b16 %v410
    %v1960 = vunpack.c.h.b16 %v410
    %v1961 = vunpack.c.l.b16 %v411
    %v1962 = vunpack.c.h.b16 %v411
    %v1963 = vunpack.c.l.b16 %v412
    %v1964 = vunpack.c.h.b16 %v412
    %v1965 = vunpack.c.l.b16 %v413
    %v1966 = vunpack.c.h.b16 %v413
    %v1967 = vunpack.c.l.b16 %v414
    %v1968 = vunpack.c.h.b16 %v414
    %v1969 = vunpack.c.l.b16 %v415
    %v1970 = vunpack.c.h.b16 %v415
    %v1971 = vunpack.c.l.b16 %v416
    %v1972 = vunpack.c.h.b16 %v416
    %v1973 = vunpack.c.l.b16 %v417
    %v1974 = vunpack.c.h.b16 %v417
    %v1975 = vunpack.c.l.b16 %v418
    %v1976 = vunpack.c.h.b16 %v418
    %v1977 = vunpack.c.l.b16 %v419
    %v1978 = vunpack.c.h.b16 %v419
    %v1979 = vunpack.c.l.b16 %v420
    %v1980 = vunpack.c.h.b16 %v420
    %v1981 = vunpack.c.l.b16 %v421
    %v1982 = vunpack.c.h.b16 %v421
    %v1983 = vunpack.c.l.b16 %v422
    %v1984 = vunpack.c.h.b16 %v422
    %v1985 = vunpack.c.l.b16 %v423
    %v1986 = vunpack.c.h.b16 %v423
    %v1987 = vunpack.c.l.b16 %v424
    %v1988 = vunpack.c.h.b16 %v424
    %v1989 = vunpack.c.l.b16 %v425
    %v1990 = vunpack.c.h.b16 %v425
    %v1991 = vunpack.c.l.b16 %v426
    %v1992 = vunpack.c.h.b16 %v426
    %v1993 = vunpack.c.l.b16 %v427
    %v1994 = vunpack.c.h.b16 %v427
    %v1995 = vunpack.c.l.b16 %v428
    %v1996 = vunpack.c.h.b16 %v428
    %v1997 = vunpack.c.l.b16 %v429
    %v1998 = vunpack.c.h.b16 %v429
    %v1999 = vunpack.c.l.b16 %v430
    %v2000 = vunpack.c.h.b16 %v430
    %v2001 = vunpack.c.l.b16 %v431
    %v2002 = vunpack.c.h.b16 %v431
    %v2003 = vunpack.c.l.b16 %v432
    %v2004 = vunpack.c.h.b16 %v432
    %v2005 = vunpack.c.l.b16 %v433
    %v2006 = vunpack.c.h.b16 %v433
    %v2007 = vunpack.c.l.b16 %v434
    %v2008 = vunpack.c.h.b16 %v434
    %v2009 = vunpack.c.l.b16 %v435
    %v2010 = vunpack.c.h.b16 %v435
    %v2011 = vunpack.c.l.b16 %v436
    %v2012 = vunpack.c.h.b16 %v436
    %v2013 = vunpack.c.l.b16 %v437
    %v2014 = vunpack.c.h.b16 %v437
    %v2015 = vunpack.c.l.b16 %v438
    %v2016 = vunpack.c.h.b16 %v438
    %v2017 = vunpack.c.l.b16 %v439
    %v2018 = vunpack.c.h.b16 %v439
    %v2019 = vunpack.c.l.b16 %v440
    %v2020 = vunpack.c.h.b16 %v440
    %v2021 = vunpack.c.l.b16 %v441
    %v2022 = vunpack.c.h.b16 %v441
    %v2023 = vunpack.c.l.b16 %v442
    %v2024 = vunpack.c.h.b16 %v442
    %v2025 = vunpack.c.l.b16 %v443
    %v2026 = vunpack.c.h.b16 %v443
    %v2027 = vunpack.c.l.b16 %v444
    %v2028 = vunpack.c.h.b16 %v444
    %v2029 = vunpack.c.l.b16 %v445
    %v2030 = vunpack.c.h.b16 %v445
    %v2031 = vunpack.c.l.b16 %v446
    %v2032 = vunpack.c.h.b16 %v446
    %v2033 = vunpack.c.l.b16 %v447
    %v2034 = vunpack.c.h.b16 %v447
    %v2035 = vunpack.c.l.b16 %v448
    %v2036 = vunpack.c.h.b16 %v448
    %v2037 = vunpack.c.l.b16 %v449
    %v2038 = vunpack.c.h.b16 %v449
    %v2039 = vunpack.c.l.b16 %v450
    %v2040 = vunpack.c.h.b16 %v450
    %v2041 = vunpack.c.l.b16 %v451
    %v2042 = vunpack.c.h.b16 %v451
    %v2043 = vunpack.c.l.b16 %v452
    %v2044 = vunpack.c.h.b16 %v452
    %v2045 = vunpack.c.l.b16 %v453
    %v2046 = vunpack.c.h.b16 %v453
    %v2047 = vunpack.c.l.b16 %v454
    %v2048 = vunpack.c.h.b16 %v454
    %v2049 = vunpack.c.l.b16 %v455
    %v2050 = vunpack.c.h.b16 %v455
    %v2051 = vunpack.c.l.b16 %v456
    %v2052 = vunpack.c.h.b16 %v456
    %v2053 = vunpack.c.l.b16 %v457
    %v2054 = vunpack.c.h.b16 %v457
    %v2055 = vunpack.c.l.b16 %v458
    %v2056 = vunpack.c.h.b16 %v458
    %v2057 = vunpack.c.l.b16 %v459
    %v2058 = vunpack.c.h.b16 %v459
    %v2059 = vunpack.c.l.b16 %v460
    %v2060 = vunpack.c.h.b16 %v460
    %v2061 = vunpack.c.l.b16 %v461
    %v2062 = vunpack.c.h.b16 %v461
    %v2063 = vunpack.c.l.b16 %v462
    %v2064 = vunpack.c.h.b16 %v462
    %v2065 = vunpack.c.l.b16 %v463
    %v2066 = vunpack.c.h.b16 %v463
    %v2067 = vunpack.c.l.b16 %v464
    %v2068 = vunpack.c.h.b16 %v464
    %v2069 = vunpack.c.l.b16 %v465
    %v2070 = vunpack.c.h.b16 %v465
    %v2071 = vunpack.c.l.b16 %v466
    %v2072 = vunpack.c.h.b16 %v466
    %v2073 = vunpack.c.l.b16 %v467
    %v2074 = vunpack.c.h.b16 %v467
    %v2075 = vunpack.c.l.b16 %v468
    %v2076 = vunpack.c.h.b16 %v468
    %v2077 = vunpack.c.l.b16 %v469
    %v2078 = vunpack.c.h.b16 %v469
    %v2079 = vunpack.c.l.b16 %v470
    %v2080 = vunpack.c.h.b16 %v470
    %v2081 = vunpack.c.l.b16 %v471
    %v2082 = vunpack.c.h.b16 %v471
    %v2083 = vunpack.c.l.b16 %v472
    %v2084 = vunpack.c.h.b16 %v472
    %v2085 = vunpack.c.l.b16 %v473
    %v2086 = vunpack.c.h.b16 %v473
    %v2087 = vunpack.c.l.b16 %v474
    %v2088 = vunpack.c.h.b16 %v474
    %v2089 = vunpack.c.l.b16 %v475
    %v2090 = vunpack.c.h.b16 %v475
    %v2091 = vunpack.c.l.b16 %v476
    %v2092 = vunpack.c.h.b16 %v476
    %v2093 = vunpack.c.l.b16 %v477
    %v2094 = vunpack.c.h.b16 %v477
    %v2095 = vunpack.c.l.b16 %v478
    %v2096 = vunpack.c.h.b16 %v478
    %v2097 = vunpack.c.l.b16 %v479
    %v2098 = vunpack.c.h.b16 %v479
    %v2099 = vunpack.c.l.b16 %v480
    %v2100 = vunpack.c.h.b16 %v480
    %v2101 = vunpack.c.l.b16 %v481
    %v2102 = vunpack.c.h.b16 %v481
    %v2103 = vunpack.c.l.b16 %v482
    %v2104 = vunpack.c.h.b16 %v482
    %v2105 = vunpack.c.l.b16 %v483
    %v2106 = vunpack.c.h.b16 %v483
    %v2107 = vunpack.c.l.b16 %v484
    %v2108 = vunpack.c.h.b16 %v484
    %v2109 = vunpack.c.l.b16 %v485
    %v2110 = vunpack.c.h.b16 %v485
    %v2111 = vunpack.c.l.b16 %v486
    %v2112 = vunpack.c.h.b16 %v486
    %v2113 = vunpack.c.l.b16 %v487
    %v2114 = vunpack.c.h.b16 %v487
    %v2115 = vunpack.c.l.b16 %v488
    %v2116 = vunpack.c.h.b16 %v488
    %v2117 = vunpack.c.l.b16 %v489
    %v2118 = vunpack.c.h.b16 %v489
    %v2119 = vunpack.c.l.b16 %v490
    %v2120 = vunpack.c.h.b16 %v490
    %v2121 = vunpack.c.l.b16 %v491
    %v2122 = vunpack.c.h.b16 %v491
    %v2123 = vunpack.c.l.b16 %v492
    %v2124 = vunpack.c.h.b16 %v492
    %v2125 = vunpack.c.l.b16 %v493
    %v2126 = vunpack.c.h.b16 %v493
    %v2127 = vunpack.c.l.b16 %v494
    %v2128 = vunpack.c.h.b16 %v494
    %v2129 = vunpack.c.l.b16 %v495
    %v2130 = vunpack.c.h.b16 %v495
    %v2131 = vunpack.c.l.b16 %v496
    %v2132 = vunpack.c.h.b16 %v496
    %v2133 = vunpack.c.l.b16 %v497
    %v2134 = vunpack.c.h.b16 %v497
    %v2135 = vunpack.c.l.b16 %v498
    %v2136 = vunpack.c.h.b16 %v498
    %v2137 = vunpack.c.l.b16 %v499
    %v2138 = vunpack.c.h.b16 %v499
    %v2139 = vunpack.c.l.b16 %v500
    %v2140 = vunpack.c.h.b16 %v500
    %v2141 = vunpack.c.l.b16 %v501
    %v2142 = vunpack.c.h.b16 %v501
    %v2143 = vunpack.c.l.b16 %v502
    %v2144 = vunpack.c.h.b16 %v502
    %v2145 = vunpack.c.l.b16 %v503
    %v2146 = vunpack.c.h.b16 %v503
    %v2147 = vunpack.c.l.b16 %v504
    %v2148 = vunpack.c.h.b16 %v504
    %v2149 = vunpack.c.l.b16 %v505
    %v2150 = vunpack.c.h.b16 %v505
    %v2151 = vunpack.c.l.b16 %v506
    %v2152 = vunpack.c.h.b16 %v506
    %v2153 = vunpack.c.l.b16 %v507
    %v2154 = vunpack.c.h.b16 %v507
    %v2155 = vunpack.c.l.b16 %v508
    %v2156 = vunpack.c.h.b16 %v508
    %v2157 = vunpack.c.l.b16 %v509
    %v2158 = vunpack.c.h.b16 %v509
    %v2159 = vunpack.c.l.b16 %v510
    %v2160 = vunpack.c.h.b16 %v510
    %v2161 = vunpack.c.l.b16 %v511
    %v2162 = vunpack.c.h.b16 %v511
    %v2163 = vunpack.c.l.b16 %v512
    %v2164 = vunpack.c.h.b16 %v512
    %v2165 = vunpack.c.l.b16 %v513
    %v2166 = vunpack.c.h.b16 %v513
    %v2167 = vunpack.c.l.b16 %v514
    %v2168 = vunpack.c.h.b16 %v514
    %v2169 = vunpack.c.l.b16 %v515
    %v2170 = vunpack.c.h.b16 %v515
    %v2171 = vunpack.c.l.b16 %v516
    %v2172 = vunpack.c.h.b16 %v516
    %v2173 = vunpack.c.l.b16 %v517
    %v2174 = vunpack.c.h.b16 %v517
    %v2175 = vunpack.c.l.b16 %v518
    %v2176 = vunpack.c.h.b16 %v518
    %v2177 = vunpack.c.l.b16 %v519
    %v2178 = vunpack.c.h.b16 %v519
    %v2179 = vunpack.c.l.b16 %v520
    %v2180 = vunpack.c.h.b16 %v520
    %v2181 = vunpack.c.l.b16 %v521
    %v2182 = vunpack.c.h.b16 %v521
    %v2183 = vunpack.c.l.b16 %v522
    %v2184 = vunpack.c.h.b16 %v522
    %v2185 = vunpack.c.l.b16 %v523
    %v2186 = vunpack.c.h.b16 %v523
    %v2187 = vunpack.c.l.b16 %v524
    %v2188 = vunpack.c.h.b16 %v524
    %v2189 = vunpack.c.l.b16 %v525
    %v2190 = vunpack.c.h.b16 %v525
    %v2191 = vunpack.c.l.b16 %v526
    %v2192 = vunpack.c.h.b16 %v526
    %v2193 = vunpack.c.l.b16 %v527
    %v2194 = vunpack.c.h.b16 %v527
    %v2195 = vunpack.c.l.b16 %v528
    %v2196 = vunpack.c.h.b16 %v528
    %v2197 = vunpack.c.l.b16 %v529
    %v2198 = vunpack.c.h.b16 %v529
    %v2199 = vunpack.c.l.b16 %v530
    %v2200 = vunpack.c.h.b16 %v530
    %v2201 = vunpack.c.l.b16 %v531
    %v2202 = vunpack.c.h.b16 %v531
    %v2203 = vunpack.c.l.b16 %v532
    %v2204 = vunpack.c.h.b16 %v532
    %v2205 = vunpack.c.l.b16 %v533
    %v2206 = vunpack.c.h.b16 %v533
    %v2207 = vunpack.c.l.b16 %v534
    %v2208 = vunpack.c.h.b16 %v534
    %v2209 = vpack.c.b16 %v1189, %v1185
    %v2210 = vpack.c.b16 %v1190, %v1186
    %v2211 = vpack.c.b16 %v1191, %v1187
    %v2212 = vpack.c.b16 %v1192, %v1188
    %v2213 = vpack.c.b16 %v1197, %v1193
    %v2214 = vpack.c.b16 %v1198, %v1194
    %v2215 = vpack.c.b16 %v1199, %v1195
    %v2216 = vpack.c.b16 %v1200, %v1196
    %v2217 = vpack.c.b16 %v1205, %v1201
    %v2218 = vpack.c.b16 %v1206, %v1202
    %v2219 = vpack.c.b16 %v1207, %v1203
    %v2220 = vpack.c.b16 %v1208, %v1204
    %v2221 = vpack.c.b16 %v1213, %v1209
    %v2222 = vpack.c.b16 %v1214, %v1210
    %v2223 = vpack.c.b16 %v1215, %v1211
    %v2224 = vpack.c.b16 %v1216, %v1212
    %v2225 = vpack.c.b16 %v1221, %v1217
    %v2226 = vpack.c.b16 %v1222, %v1218
    %v2227 = vpack.c.b16 %v1223, %v1219
    %v2228 = vpack.c.b16 %v1224, %v1220
    %v2229 = vpack.c.b16 %v1229, %v1225
    %v2230 = vpack.c.b16 %v1230, %v1226
    %v2231 = vpack.c.b16 %v1231, %v1227
    %v2232 = vpack.c.b16 %v1232, %v1228
    %v2233 = vpack.c.b16 %v1237, %v1233
    %v2234 = vpack.c.b16 %v1238, %v1234
    %v2235 = vpack.c.b16 %v1239, %v1235
    %v2236 = vpack.c.b16 %v1240, %v1236
    %v2237 = vpack.c.b16 %v1245, %v1241
    %v2238 = vpack.c.b16 %v1246, %v1242
    %v2239 = vpack.c.b16 %v1247, %v1243
    %v2240 = vpack.c.b16 %v1248, %v1244
    %v2241 = vpack.c.b16 %v1253, %v1249
    %v2242 = vpack.c.b16 %v1254, %v1250
    %v2243 = vpack.c.b16 %v1255, %v1251
    %v2244 = vpack.c.b16 %v1256, %v1252
    %v2245 = vpack.c.b16 %v1261, %v1257
    %v2246 = vpack.c.b16 %v1262, %v1258
    %v2247 = vpack.c.b16 %v1263, %v1259
    %v2248 = vpack.c.b16 %v1264, %v1260
    %v2249 = vpack.c.b16 %v1269, %v1265
    %v2250 = vpack.c.b16 %v1270, %v1266
    %v2251 = vpack.c.b16 %v1271, %v1267
    %v2252 = vpack.c.b16 %v1272, %v1268
    %v2253 = vpack.c.b16 %v1277, %v1273
    %v2254 = vpack.c.b16 %v1278, %v1274
    %v2255 = vpack.c.b16 %v1279, %v1275
    %v2256 = vpack.c.b16 %v1280, %v1276
    %v2257 = vpack.c.b16 %v1285, %v1281
    %v2258 = vpack.c.b16 %v1286, %v1282
    %v2259 = vpack.c.b16 %v1287, %v1283
    %v2260 = vpack.c.b16 %v1288, %v1284
    %v2261 = vpack.c.b16 %v1293, %v1289
    %v2262 = vpack.c.b16 %v1294, %v1290
    %v2263 = vpack.c.b16 %v1295, %v1291
    %v2264 = vpack.c.b16 %v1296, %v1292
    %v2265 = vpack.c.b16 %v1301, %v1297
    %v2266 = vpack.c.b16 %v1302, %v1298
    %v2267 = vpack.c.b16 %v1303, %v1299
    %v2268 = vpack.c.b16 %v1304, %v1300
    %v2269 = vpack.c.b16 %v1309, %v1305
    %v2270 = vpack.c.b16 %v1310, %v1306
    %v2271 = vpack.c.b16 %v1311, %v1307
    %v2272 = vpack.c.b16 %v1312, %v1308
    %v2273 = vpack.c.b16 %v1317, %v1313
    %v2274 = vpack.c.b16 %v1318, %v1314
    %v2275 = vpack.c.b16 %v1319, %v1315
    %v2276 = vpack.c.b16 %v1320, %v1316
    %v2277 = vpack.c.b16 %v1325, %v1321
    %v2278 = vpack.c.b16 %v1326, %v1322
    %v2279 = vpack.c.b16 %v1327, %v1323
    %v2280 = vpack.c.b16 %v1328, %v1324
    %v2281 = vpack.c.b16 %v1333, %v1329
    %v2282 = vpack.c.b16 %v1334, %v1330
    %v2283 = vpack.c.b16 %v1335, %v1331
    %v2284 = vpack.c.b16 %v1336, %v1332
    %v2285 = vpack.c.b16 %v1341, %v1337
    %v2286 = vpack.c.b16 %v1342, %v1338
    %v2287 = vpack.c.b16 %v1343, %v1339
    %v2288 = vpack.c.b16 %v1344, %v1340
    %v2289 = vpack.c.b16 %v1349, %v1345
    %v2290 = vpack.c.b16 %v1350, %v1346
    %v2291 = vpack.c.b16 %v1351, %v1347
    %v2292 = vpack.c.b16 %v1352, %v1348
    %v2293 = vpack.c.b16 %v1357, %v1353
    %v2294 = vpack.c.b16 %v1358, %v1354
    %v2295 = vpack.c.b16 %v1359, %v1355
    %v2296 = vpack.c.b16 %v1360, %v1356
    %v2297 = vpack.c.b16 %v1365, %v1361
    %v2298 = vpack.c.b16 %v1366, %v1362
    %v2299 = vpack.c.b16 %v1367, %v1363
    %v2300 = vpack.c.b16 %v1368, %v1364
    %v2301 = vpack.c.b16 %v1373, %v1369
    %v2302 = vpack.c.b16 %v1374, %v1370
    %v2303 = vpack.c.b16 %v1375, %v1371
    %v2304 = vpack.c.b16 %v1376, %v1372
    %v2305 = vpack.c.b16 %v1381, %v1377
    %v2306 = vpack.c.b16 %v1382, %v1378
    %v2307 = vpack.c.b16 %v1383, %v1379
    %v2308 = vpack.c.b16 %v1384, %v1380
    %v2309 = vpack.c.b16 %v1389, %v1385
    %v2310 = vpack.c.b16 %v1390, %v1386
    %v2311 = vpack.c.b16 %v1391, %v1387
    %v2312 = vpack.c.b16 %v1392, %v1388
    %v2313 = vpack.c.b16 %v1397, %v1393
    %v2314 = vpack.c.b16 %v1398, %v1394
    %v2315 = vpack.c.b16 %v1399, %v1395
    %v2316 = vpack.c.b16 %v1400, %v1396
    %v2317 = vpack.c.b16 %v1405, %v1401
    %v2318 = vpack.c.b16 %v1406, %v1402
    %v2319 = vpack.c.b16 %v1407, %v1403
    %v2320 = vpack.c.b16 %v1408, %v1404
    %v2321 = vpack.c.b16 %v1413, %v1409
    %v2322 = vpack.c.b16 %v1414, %v1410
    %v2323 = vpack.c.b16 %v1415, %v1411
    %v2324 = vpack.c.b16 %v1416, %v1412
    %v2325 = vpack.c.b16 %v1421, %v1417
    %v2326 = vpack.c.b16 %v1422, %v1418
    %v2327 = vpack.c.b16 %v1423, %v1419
    %v2328 = vpack.c.b16 %v1424, %v1420
    %v2329 = vpack.c.b16 %v1429, %v1425
    %v2330 = vpack.c.b16 %v1430, %v1426
    %v2331 = vpack.c.b16 %v1431, %v1427
    %v2332 = vpack.c.b16 %v1432, %v1428
    %v2333 = vpack.c.b16 %v1437, %v1433
    %v2334 = vpack.c.b16 %v1438, %v1434
    %v2335 = vpack.c.b16 %v1439, %v1435
    %v2336 = vpack.c.b16 %v1440, %v1436
    %v2337 = vpack.c.b16 %v1445, %v1441
    %v2338 = vpack.c.b16 %v1446, %v1442
    %v2339 = vpack.c.b16 %v1447, %v1443
    %v2340 = vpack.c.b16 %v1448, %v1444
    %v2341 = vpack.c.b16 %v1453, %v1449
    %v2342 = vpack.c.b16 %v1454, %v1450
    %v2343 = vpack.c.b16 %v1455, %v1451
    %v2344 = vpack.c.b16 %v1456, %v1452
    %v2345 = vpack.c.b16 %v1461, %v1457
    %v2346 = vpack.c.b16 %v1462, %v1458
    %v2347 = vpack.c.b16 %v1463, %v1459
    %v2348 = vpack.c.b16 %v1464, %v1460
    %v2349 = vpack.c.b16 %v1469, %v1465
    %v2350 = vpack.c.b16 %v1470, %v1466
    %v2351 = vpack.c.b16 %v1471, %v1467
    %v2352 = vpack.c.b16 %v1472, %v1468
    %v2353 = vpack.c.b16 %v1477, %v1473
    %v2354 = vpack.c.b16 %v1478, %v1474
    %v2355 = vpack.c.b16 %v1479, %v1475
    %v2356 = vpack.c.b16 %v1480, %v1476
    %v2357 = vpack.c.b16 %v1485, %v1481
    %v2358 = vpack.c.b16 %v1486, %v1482
    %v2359 = vpack.c.b16 %v1487, %v1483
    %v2360 = vpack.c.b16 %v1488, %v1484
    %v2361 = vpack.c.b16 %v1493, %v1489
    %v2362 = vpack.c.b16 %v1494, %v1490
    %v2363 = vpack.c.b16 %v1495, %v1491
    %v2364 = vpack.c.b16 %v1496, %v1492
    %v2365 = vpack.c.b16 %v1501, %v1497
    %v2366 = vpack.c.b16 %v1502, %v1498
    %v2367 = vpack.c.b16 %v1503, %v1499
    %v2368 = vpack.c.b16 %v1504, %v1500
    %v2369 = vpack.c.b16 %v1509, %v1505
    %v2370 = vpack.c.b16 %v1510, %v1506
    %v2371 = vpack.c.b16 %v1511, %v1507
    %v2372 = vpack.c.b16 %v1512, %v1508
    %v2373 = vpack.c.b16 %v1517, %v1513
    %v2374 = vpack.c.b16 %v1518, %v1514
    %v2375 = vpack.c.b16 %v1519, %v1515
    %v2376 = vpack.c.b16 %v1520, %v1516
    %v2377 = vpack.c.b16 %v1525, %v1521
    %v2378 = vpack.c.b16 %v1526, %v1522
    %v2379 = vpack.c.b16 %v1527, %v1523
    %v2380 = vpack.c.b16 %v1528, %v1524
    %v2381 = vpack.c.b16 %v1533, %v1529
    %v2382 = vpack.c.b16 %v1534, %v1530
    %v2383 = vpack.c.b16 %v1535, %v1531
    %v2384 = vpack.c.b16 %v1536, %v1532
    %v2385 = vpack.c.b16 %v1541, %v1537
    %v2386 = vpack.c.b16 %v1542, %v1538
    %v2387 = vpack.c.b16 %v1543, %v1539
    %v2388 = vpack.c.b16 %v1544, %v1540
    %v2389 = vpack.c.b16 %v1549, %v1545
    %v2390 = vpack.c.b16 %v1550, %v1546
    %v2391 = vpack.c.b16 %v1551, %v1547
    %v2392 = vpack.c.b16 %v1552, %v1548
    %v2393 = vpack.c.b16 %v1557, %v1553
    %v2394 = vpack.c.b16 %v1558, %v1554
    %v2395 = vpack.c.b16 %v1559, %v1555
    %v2396 = vpack.c.b16 %v1560, %v1556
    %v2397 = vpack.c.b16 %v1565, %v1561
    %v2398 = vpack.c.b16 %v1566, %v1562
    %v2399 = vpack.c.b16 %v1567, %v1563
    %v2400 = vpack.c.b16 %v1568, %v1564
    %v2401 = vpack.c.b16 %v1573, %v1569
    %v2402 = vpack.c.b16 %v1574, %v1570
    %v2403 = vpack.c.b16 %v1575, %v1571
    %v2404 = vpack.c.b16 %v1576, %v1572
    %v2405 = vpack.c.b16 %v1581, %v1577
    %v2406 = vpack.c.b16 %v1582, %v1578
    %v2407 = vpack.c.b16 %v1583, %v1579
    %v2408 = vpack.c.b16 %v1584, %v1580
    %v2409 = vpack.c.b16 %v1589, %v1585
    %v2410 = vpack.c.b16 %v1590, %v1586
    %v2411 = vpack.c.b16 %v1591, %v1587
    %v2412 = vpack.c.b16 %v1592, %v1588
    %v2413 = vpack.c.b16 %v1597, %v1593
    %v2414 = vpack.c.b16 %v1598, %v1594
    %v2415 = vpack.c.b16 %v1599, %v1595
    %v2416 = vpack.c.b16 %v1600, %v1596
    %v2417 = vpack.c.b16 %v1605, %v1601
    %v2418 = vpack.c.b16 %v1606, %v1602
    %v2419 = vpack.c.b16 %v1607, %v1603
    %v2420 = vpack.c.b16 %v1608, %v1604
    %v2421 = vpack.c.b16 %v1613, %v1609
    %v2422 = vpack.c.b16 %v1614, %v1610
    %v2423 = vpack.c.b16 %v1615, %v1611
    %v2424 = vpack.c.b16 %v1616, %v1612
    %v2425 = vpack.c.b16 %v1621, %v1617
    %v2426 = vpack.c.b16 %v1622, %v1618
    %v2427 = vpack.c.b16 %v1623, %v1619
    %v2428 = vpack.c.b16 %v1624, %v1620
    %v2429 = vpack.c.b16 %v1629, %v1625
    %v2430 = vpack.c.b16 %v1630, %v1626
    %v2431 = vpack.c.b16 %v1631, %v1627
    %v2432 = vpack.c.b16 %v1632, %v1628
    %v2433 = vpack.c.b16 %v1637, %v1633
    %v2434 = vpack.c.b16 %v1638, %v1634
    %v2435 = vpack.c.b16 %v1639, %v1635
    %v2436 = vpack.c.b16 %v1640, %v1636
    %v2437 = vpack.c.b16 %v1645, %v1641
    %v2438 = vpack.c.b16 %v1646, %v1642
    %v2439 = vpack.c.b16 %v1647, %v1643
    %v2440 = vpack.c.b16 %v1648, %v1644
    %v2441 = vpack.c.b16 %v1653, %v1649
    %v2442 = vpack.c.b16 %v1654, %v1650
    %v2443 = vpack.c.b16 %v1655, %v1651
    %v2444 = vpack.c.b16 %v1656, %v1652
    %v2445 = vpack.c.b16 %v1661, %v1657
    %v2446 = vpack.c.b16 %v1662, %v1658
    %v2447 = vpack.c.b16 %v1663, %v1659
    %v2448 = vpack.c.b16 %v1664, %v1660
    %v2449 = vpack.c.b16 %v1669, %v1665
    %v2450 = vpack.c.b16 %v1670, %v1666
    %v2451 = vpack.c.b16 %v1671, %v1667
    %v2452 = vpack.c.b16 %v1672, %v1668
    %v2453 = vpack.c.b16 %v1677, %v1673
    %v2454 = vpack.c.b16 %v1678, %v1674
    %v2455 = vpack.c.b16 %v1679, %v1675
    %v2456 = vpack.c.b16 %v1680, %v1676
    %v2457 = vpack.c.b16 %v1685, %v1681
    %v2458 = vpack.c.b16 %v1686, %v1682
    %v2459 = vpack.c.b16 %v1687, %v1683
    %v2460 = vpack.c.b16 %v1688, %v1684
    %v2461 = vpack.c.b16 %v1693, %v1689
    %v2462 = vpack.c.b16 %v1694, %v1690
    %v2463 = vpack.c.b16 %v1695, %v1691
    %v2464 = vpack.c.b16 %v1696, %v1692
    %v2465 = vpack.c.b16 %v1701, %v1697
    %v2466 = vpack.c.b16 %v1702, %v1698
    %v2467 = vpack.c.b16 %v1703, %v1699
    %v2468 = vpack.c.b16 %v1704, %v1700
    %v2469 = vpack.c.b16 %v1709, %v1705
    %v2470 = vpack.c.b16 %v1710, %v1706
    %v2471 = vpack.c.b16 %v1711, %v1707
    %v2472 = vpack.c.b16 %v1712, %v1708
    %v2473 = vpack.c.b16 %v1717, %v1713
    %v2474 = vpack.c.b16 %v1718, %v1714
    %v2475 = vpack.c.b16 %v1719, %v1715
    %v2476 = vpack.c.b16 %v1720, %v1716
    %v2477 = vpack.c.b16 %v1725, %v1721
    %v2478 = vpack.c.b16 %v1726, %v1722
    %v2479 = vpack.c.b16 %v1727, %v1723
    %v2480 = vpack.c.b16 %v1728, %v1724
    %v2481 = vpack.c.b16 %v1733, %v1729
    %v2482 = vpack.c.b16 %v1734, %v1730
    %v2483 = vpack.c.b16 %v1735, %v1731
    %v2484 = vpack.c.b16 %v1736, %v1732
    %v2485 = vpack.c.b16 %v1741, %v1737
    %v2486 = vpack.c.b16 %v1742, %v1738
    %v2487 = vpack.c.b16 %v1743, %v1739
    %v2488 = vpack.c.b16 %v1744, %v1740
    %v2489 = vpack.c.b16 %v1749, %v1745
    %v2490 = vpack.c.b16 %v1750, %v1746
    %v2491 = vpack.c.b16 %v1751, %v1747
    %v2492 = vpack.c.b16 %v1752, %v1748
    %v2493 = vpack.c.b16 %v1757, %v1753
    %v2494 = vpack.c.b16 %v1758, %v1754
    %v2495 = vpack.c.b16 %v1759, %v1755
    %v2496 = vpack.c.b16 %v1760, %v1756
    %v2497 = vpack.c.b16 %v1765, %v1761
    %v2498 = vpack.c.b16 %v1766, %v1762
    %v2499 = vpack.c.b16 %v1767, %v1763
    %v2500 = vpack.c.b16 %v1768, %v1764
    %v2501 = vpack.c.b16 %v1773, %v1769
    %v2502 = vpack.c.b16 %v1774, %v1770
    %v2503 = vpack.c.b16 %v1775, %v1771
    %v2504 = vpack.c.b16 %v1776, %v1772
    %v2505 = vpack.c.b16 %v1781, %v1777
    %v2506 = vpack.c.b16 %v1782, %v1778
    %v2507 = vpack.c.b16 %v1783, %v1779
    %v2508 = vpack.c.b16 %v1784, %v1780
    %v2509 = vpack.c.b16 %v1789, %v1785
    %v2510 = vpack.c.b16 %v1790, %v1786
    %v2511 = vpack.c.b16 %v1791, %v1787
    %v2512 = vpack.c.b16 %v1792, %v1788
    %v2513 = vpack.c.b16 %v1797, %v1793
    %v2514 = vpack.c.b16 %v1798, %v1794
    %v2515 = vpack.c.b16 %v1799, %v1795
    %v2516 = vpack.c.b16 %v1800, %v1796
    %v2517 = vpack.c.b16 %v1805, %v1801
    %v2518 = vpack.c.b16 %v1806, %v1802
    %v2519 = vpack.c.b16 %v1807, %v1803
    %v2520 = vpack.c.b16 %v1808, %v1804
    %v2521 = vpack.c.b16 %v1813, %v1809
    %v2522 = vpack.c.b16 %v1814, %v1810
    %v2523 = vpack.c.b16 %v1815, %v1811
    %v2524 = vpack.c.b16 %v1816, %v1812
    %v2525 = vpack.c.b16 %v1821, %v1817
    %v2526 = vpack.c.b16 %v1822, %v1818
    %v2527 = vpack.c.b16 %v1823, %v1819
    %v2528 = vpack.c.b16 %v1824, %v1820
    %v2529 = vpack.c.b16 %v1829, %v1825
    %v2530 = vpack.c.b16 %v1830, %v1826
    %v2531 = vpack.c.b16 %v1831, %v1827
    %v2532 = vpack.c.b16 %v1832, %v1828
    %v2533 = vpack.c.b16 %v1837, %v1833
    %v2534 = vpack.c.b16 %v1838, %v1834
    %v2535 = vpack.c.b16 %v1839, %v1835
    %v2536 = vpack.c.b16 %v1840, %v1836
    %v2537 = vpack.c.b16 %v1845, %v1841
    %v2538 = vpack.c.b16 %v1846, %v1842
    %v2539 = vpack.c.b16 %v1847, %v1843
    %v2540 = vpack.c.b16 %v1848, %v1844
    %v2541 = vpack.c.b16 %v1853, %v1849
    %v2542 = vpack.c.b16 %v1854, %v1850
    %v2543 = vpack.c.b16 %v1855, %v1851
    %v2544 = vpack.c.b16 %v1856, %v1852
    %v2545 = vpack.c.b16 %v1861, %v1857
    %v2546 = vpack.c.b16 %v1862, %v1858
    %v2547 = vpack.c.b16 %v1863, %v1859
    %v2548 = vpack.c.b16 %v1864, %v1860
    %v2549 = vpack.c.b16 %v1869, %v1865
    %v2550 = vpack.c.b16 %v1870, %v1866
    %v2551 = vpack.c.b16 %v1871, %v1867
    %v2552 = vpack.c.b16 %v1872, %v1868
    %v2553 = vpack.c.b16 %v1877, %v1873
    %v2554 = vpack.c.b16 %v1878, %v1874
    %v2555 = vpack.c.b16 %v1879, %v1875
    %v2556 = vpack.c.b16 %v1880, %v1876
    %v2557 = vpack.c.b16 %v1885, %v1881
    %v2558 = vpack.c.b16 %v1886, %v1882
    %v2559 = vpack.c.b16 %v1887, %v1883
    %v2560 = vpack.c.b16 %v1888, %v1884
    %v2561 = vpack.c.b16 %v1893, %v1889
    %v2562 = vpack.c.b16 %v1894, %v1890
    %v2563 = vpack.c.b16 %v1895, %v1891
    %v2564 = vpack.c.b16 %v1896, %v1892
    %v2565 = vpack.c.b16 %v1901, %v1897
    %v2566 = vpack.c.b16 %v1902, %v1898
    %v2567 = vpack.c.b16 %v1903, %v1899
    %v2568 = vpack.c.b16 %v1904, %v1900
    %v2569 = vpack.c.b16 %v1909, %v1905
    %v2570 = vpack.c.b16 %v1910, %v1906
    %v2571 = vpack.c.b16 %v1911, %v1907
    %v2572 = vpack.c.b16 %v1912, %v1908
    %v2573 = vpack.c.b16 %v1917, %v1913
    %v2574 = vpack.c.b16 %v1918, %v1914
    %v2575 = vpack.c.b16 %v1919, %v1915
    %v2576 = vpack.c.b16 %v1920, %v1916
    %v2577 = vpack.c.b16 %v1925, %v1921
    %v2578 = vpack.c.b16 %v1926, %v1922
    %v2579 = vpack.c.b16 %v1927, %v1923
    %v2580 = vpack.c.b16 %v1928, %v1924
    %v2581 = vpack.c.b16 %v1933, %v1929
    %v2582 = vpack.c.b16 %v1934, %v1930
    %v2583 = vpack.c.b16 %v1935, %v1931
    %v2584 = vpack.c.b16 %v1936, %v1932
    %v2585 = vpack.c.b16 %v1941, %v1937
    %v2586 = vpack.c.b16 %v1942, %v1938
    %v2587 = vpack.c.b16 %v1943, %v1939
    %v2588 = vpack.c.b16 %v1944, %v1940
    %v2589 = vpack.c.b16 %v1949, %v1945
    %v2590 = vpack.c.b16 %v1950, %v1946
    %v2591 = vpack.c.b16 %v1951, %v1947
    %v2592 = vpack.c.b16 %v1952, %v1948
    %v2593 = vpack.c.b16 %v1957, %v1953
    %v2594 = vpack.c.b16 %v1958, %v1954
    %v2595 = vpack.c.b16 %v1959, %v1955
    %v2596 = vpack.c.b16 %v1960, %v1956
    %v2597 = vpack.c.b16 %v1965, %v1961
    %v2598 = vpack.c.b16 %v1966, %v1962
    %v2599 = vpack.c.b16 %v1967, %v1963
    %v2600 = vpack.c.b16 %v1968, %v1964
    %v2601 = vpack.c.b16 %v1973, %v1969
    %v2602 = vpack.c.b16 %v1974, %v1970
    %v2603 = vpack.c.b16 %v1975, %v1971
    %v2604 = vpack.c.b16 %v1976, %v1972
    %v2605 = vpack.c.b16 %v1981, %v1977
    %v2606 = vpack.c.b16 %v1982, %v1978
    %v2607 = vpack.c.b16 %v1983, %v1979
    %v2608 = vpack.c.b16 %v1984, %v1980
    %v2609 = vpack.c.b16 %v1989, %v1985
    %v2610 = vpack.c.b16 %v1990, %v1986
    %v2611 = vpack.c.b16 %v1991, %v1987
    %v2612 = vpack.c.b16 %v1992, %v1988
    %v2613 = vpack.c.b16 %v1997, %v1993
    %v2614 = vpack.c.b16 %v1998, %v1994
    %v2615 = vpack.c.b16 %v1999, %v1995
    %v2616 = vpack.c.b16 %v2000, %v1996
    %v2617 = vpack.c.b16 %v2005, %v2001
    %v2618 = vpack.c.b16 %v2006, %v2002
    %v2619 = vpack.c.b16 %v2007, %v2003
    %v2620 = vpack.c.b16 %v2008, %v2004
    %v2621 = vpack.c.b16 %v2013, %v2009
    %v2622 = vpack.c.b16 %v2014, %v2010
    %v2623 = vpack.c.b16 %v2015, %v2011
    %v2624 = vpack.c.b16 %v2016, %v2012
    %v2625 = vpack.c.b16 %v2021, %v2017
    %v2626 = vpack.c.b16 %v2022, %v2018
    %v2627 = vpack.c.b16 %v2023, %v2019
    %v2628 = vpack.c.b16 %v2024, %v2020
    %v2629 = vpack.c.b16 %v2029, %v2025
    %v2630 = vpack.c.b16 %v2030, %v2026
    %v2631 = vpack.c.b16 %v2031, %v2027
    %v2632 = vpack.c.b16 %v2032, %v2028
    %v2633 = vpack.c.b16 %v2037, %v2033
    %v2634 = vpack.c.b16 %v2038, %v2034
    %v2635 = vpack.c.b16 %v2039, %v2035
    %v2636 = vpack.c.b16 %v2040, %v2036
    %v2637 = vpack.c.b16 %v2045, %v2041
    %v2638 = vpack.c.b16 %v2046, %v2042
    %v2639 = vpack.c.b16 %v2047, %v2043
    %v2640 = vpack.c.b16 %v2048, %v2044
    %v2641 = vpack.c.b16 %v2053, %v2049
    %v2642 = vpack.c.b16 %v2054, %v2050
    %v2643 = vpack.c.b16 %v2055, %v2051
    %v2644 = vpack.c.b16 %v2056, %v2052
    %v2645 = vpack.c.b16 %v2061, %v2057
    %v2646 = vpack.c.b16 %v2062, %v2058
    %v2647 = vpack.c.b16 %v2063, %v2059
    %v2648 = vpack.c.b16 %v2064, %v2060
    %v2649 = vpack.c.b16 %v2069, %v2065
    %v2650 = vpack.c.b16 %v2070, %v2066
    %v2651 = vpack.c.b16 %v2071, %v2067
    %v2652 = vpack.c.b16 %v2072, %v2068
    %v2653 = vpack.c.b16 %v2077, %v2073
    %v2654 = vpack.c.b16 %v2078, %v2074
    %v2655 = vpack.c.b16 %v2079, %v2075
    %v2656 = vpack.c.b16 %v2080, %v2076
    %v2657 = vpack.c.b16 %v2085, %v2081
    %v2658 = vpack.c.b16 %v2086, %v2082
    %v2659 = vpack.c.b16 %v2087, %v2083
    %v2660 = vpack.c.b16 %v2088, %v2084
    %v2661 = vpack.c.b16 %v2093, %v2089
    %v2662 = vpack.c.b16 %v2094, %v2090
    %v2663 = vpack.c.b16 %v2095, %v2091
    %v2664 = vpack.c.b16 %v2096, %v2092
    %v2665 = vpack.c.b16 %v2101, %v2097
    %v2666 = vpack.c.b16 %v2102, %v2098
    %v2667 = vpack.c.b16 %v2103, %v2099
    %v2668 = vpack.c.b16 %v2104, %v2100
    %v2669 = vpack.c.b16 %v2109, %v2105
    %v2670 = vpack.c.b16 %v2110, %v2106
    %v2671 = vpack.c.b16 %v2111, %v2107
    %v2672 = vpack.c.b16 %v2112, %v2108
    %v2673 = vpack.c.b16 %v2117, %v2113
    %v2674 = vpack.c.b16 %v2118, %v2114
    %v2675 = vpack.c.b16 %v2119, %v2115
    %v2676 = vpack.c.b16 %v2120, %v2116
    %v2677 = vpack.c.b16 %v2125, %v2121
    %v2678 = vpack.c.b16 %v2126, %v2122
    %v2679 = vpack.c.b16 %v2127, %v2123
    %v2680 = vpack.c.b16 %v2128, %v2124
    %v2681 = vpack.c.b16 %v2133, %v2129
    %v2682 = vpack.c.b16 %v2134, %v2130
    %v2683 = vpack.c.b16 %v2135, %v2131
    %v2684 = vpack.c.b16 %v2136, %v2132
    %v2685 = vpack.c.b16 %v2141, %v2137
    %v2686 = vpack.c.b16 %v2142, %v2138
    %v2687 = vpack.c.b16 %v2143, %v2139
    %v2688 = vpack.c.b16 %v2144, %v2140
    %v2689 = vpack.c.b16 %v2149, %v2145
    %v2690 = vpack.c.b16 %v2150, %v2146
    %v2691 = vpack.c.b16 %v2151, %v2147
    %v2692 = vpack.c.b16 %v2152, %v2148
    %v2693 = vpack.c.b16 %v2157, %v2153
    %v2694 = vpack.c.b16 %v2158, %v2154
    %v2695 = vpack.c.b16 %v2159, %v2155
    %v2696 = vpack.c.b16 %v2160, %v2156
    %v2697 = vpack.c.b16 %v2165, %v2161
    %v2698 = vpack.c.b16 %v2166, %v2162
    %v2699 = vpack.c.b16 %v2167, %v2163
    %v2700 = vpack.c.b16 %v2168, %v2164
    %v2701 = vpack.c.b16 %v2173, %v2169
    %v2702 = vpack.c.b16 %v2174, %v2170
    %v2703 = vpack.c.b16 %v2175, %v2171
    %v2704 = vpack.c.b16 %v2176, %v2172
    %v2705 = vpack.c.b16 %v2181, %v2177
    %v2706 = vpack.c.b16 %v2182, %v2178
    %v2707 = vpack.c.b16 %v2183, %v2179
    %v2708 = vpack.c.b16 %v2184, %v2180
    %v2709 = vpack.c.b16 %v2189, %v2185
    %v2710 = vpack.c.b16 %v2190, %v2186
    %v2711 = vpack.c.b16 %v2191, %v2187
    %v2712 = vpack.c.b16 %v2192, %v2188
    %v2713 = vpack.c.b16 %v2197, %v2193
    %v2714 = vpack.c.b16 %v2198, %v2194
    %v2715 = vpack.c.b16 %v2199, %v2195
    %v2716 = vpack.c.b16 %v2200, %v2196
    %v2717 = vpack.c.b16 %v2205, %v2201
    %v2718 = vpack.c.b16 %v2206, %v2202
    %v2719 = vpack.c.b16 %v2207, %v2203
    %v2720 = vpack.c.b16 %v2208, %v2204
    %3233 = vmatprep.subr.bf16.mxu0 %v2238
    %3234 = vmatpush1.bf16.msra.mxu0 %v2237
    %3235 = vmatprep.subr.bf16.mxu0 %v2234
    %3236 = vmatpush1.bf16.msra.mxu0 %v2233
    %3237 = vmatprep.subr.bf16.mxu0 %v2230
    %3238 = vmatpush1.bf16.msra.mxu0 %v2229
    %3239 = vmatprep.subr.bf16.mxu0 %v2226
    %3240 = vmatpush1.bf16.msra.mxu0 %v2225
    %3241 = vmatprep.subr.bf16.mxu0 %v2222
    %3242 = vmatpush1.bf16.msra.mxu0 %v2221
    %3243 = vmatprep.subr.bf16.mxu0 %v2218
    %3244 = vmatpush1.bf16.msra.mxu0 %v2217
    %3245 = vmatprep.subr.bf16.mxu0 %v2214
    %3246 = vmatpush1.bf16.msra.mxu0 %v2213
    %3247 = vmatprep.subr.bf16.mxu0 %v2210
    %3248 = vmatpush1.bf16.msra.mxu0 %v2209
    %3249 = vmatprep.subr.bf16.mxu0 %v2270
    %3250 = vmatpush2.bf16.msra.mxu0 %v2269
    %3251 = vmatprep.subr.bf16.mxu0 %v2266
    %3252 = vmatpush2.bf16.msra.mxu0 %v2265
    %3253 = vmatprep.subr.bf16.mxu0 %v2262
    %3254 = vmatpush2.bf16.msra.mxu0 %v2261
    %3255 = vmatprep.subr.bf16.mxu0 %v2258
    %3256 = vmatpush2.bf16.msra.mxu0 %v2257
    %3257 = vmatprep.subr.bf16.mxu0 %v2254
    %3258 = vmatpush2.bf16.msra.mxu0 %v2253
    %3259 = vmatprep.subr.bf16.mxu0 %v2250
    %3260 = vmatpush2.bf16.msra.mxu0 %v2249
    %3261 = vmatprep.subr.bf16.mxu0 %v2246
    %3262 = vmatpush2.bf16.msra.mxu0 %v2245
    %3263 = vmatprep.subr.bf16.mxu0 %v2242
    %3264 = vmatpush2.bf16.msra.mxu0 %v2241
    %3265 = vmatprep.mubr.bf16.mxu0 %v596
    %3266 = vmatmul.mubr.bf16.gmra.mxu0 %v582
    %v3267 = vpop.f32.mrf.mxu0
    %v3268 = vadd.f32 %v540, %v3267
    %v3269 = vpop.f32.mrf.mxu0
    %v3270 = vadd.f32 %v544, %v3269
    %v3271 = vpop.f32.mrf.mxu0
    %v3272 = vpop.f32.mrf.mxu0
    %3273 = vdwg.mxu0
    %3274 = vmatprep.subr.bf16.mxu0 %v2302
    %3275 = vmatpush1.bf16.msra.mxu0 %v2301
    %3276 = vmatprep.subr.bf16.mxu0 %v2298
    %3277 = vmatpush1.bf16.msra.mxu0 %v2297
    %3278 = vmatprep.subr.bf16.mxu0 %v2294
    %3279 = vmatpush1.bf16.msra.mxu0 %v2293
    %3280 = vmatprep.subr.bf16.mxu0 %v2290
    %3281 = vmatpush1.bf16.msra.mxu0 %v2289
    %3282 = vmatprep.subr.bf16.mxu0 %v2286
    %3283 = vmatpush1.bf16.msra.mxu0 %v2285
    %3284 = vmatprep.subr.bf16.mxu0 %v2282
    %3285 = vmatpush1.bf16.msra.mxu0 %v2281
    %3286 = vmatprep.subr.bf16.mxu0 %v2278
    %3287 = vmatpush1.bf16.msra.mxu0 %v2277
    %3288 = vmatprep.subr.bf16.mxu0 %v2274
    %3289 = vmatpush1.bf16.msra.mxu0 %v2273
    %3290 = vmatprep.subr.bf16.mxu0 %v2334
    %3291 = vmatpush2.bf16.msra.mxu0 %v2333
    %3292 = vmatprep.subr.bf16.mxu0 %v2330
    %3293 = vmatpush2.bf16.msra.mxu0 %v2329
    %3294 = vmatprep.subr.bf16.mxu0 %v2326
    %3295 = vmatpush2.bf16.msra.mxu0 %v2325
    %3296 = vmatprep.subr.bf16.mxu0 %v2322
    %3297 = vmatpush2.bf16.msra.mxu0 %v2321
    %3298 = vmatprep.subr.bf16.mxu0 %v2318
    %3299 = vmatpush2.bf16.msra.mxu0 %v2317
    %3300 = vmatprep.subr.bf16.mxu0 %v2314
    %3301 = vmatpush2.bf16.msra.mxu0 %v2313
    %3302 = vmatprep.subr.bf16.mxu0 %v2310
    %3303 = vmatpush2.bf16.msra.mxu0 %v2309
    %3304 = vmatprep.subr.bf16.mxu0 %v2306
    %3305 = vmatpush2.bf16.msra.mxu0 %v2305
    %3306 = vmatprep.mubr.bf16.mxu0 %v606
    %3307 = vmatmul.mubr.bf16.gmra.mxu0 %v604
    %v3308 = vpop.f32.mrf.mxu0
    %v3309 = vadd.f32 %v3268, %v3308
    %v3310 = vpop.f32.mrf.mxu0
    %v3311 = vadd.f32 %v3270, %v3310
    %v3312 = vpop.f32.mrf.mxu0
    %v3313 = vpop.f32.mrf.mxu0
    %3314 = vdwg.mxu0
    %3315 = vmatprep.subr.bf16.mxu0 %v2366
    %3316 = vmatpush1.bf16.msra.mxu0 %v2365
    %3317 = vmatprep.subr.bf16.mxu0 %v2362
    %3318 = vmatpush1.bf16.msra.mxu0 %v2361
    %3319 = vmatprep.subr.bf16.mxu0 %v2358
    %3320 = vmatpush1.bf16.msra.mxu0 %v2357
    %3321 = vmatprep.subr.bf16.mxu0 %v2354
    %3322 = vmatpush1.bf16.msra.mxu0 %v2353
    %3323 = vmatprep.subr.bf16.mxu0 %v2350
    %3324 = vmatpush1.bf16.msra.mxu0 %v2349
    %3325 = vmatprep.subr.bf16.mxu0 %v2346
    %3326 = vmatpush1.bf16.msra.mxu0 %v2345
    %3327 = vmatprep.subr.bf16.mxu0 %v2342
    %3328 = vmatpush1.bf16.msra.mxu0 %v2341
    %3329 = vmatprep.subr.bf16.mxu0 %v2338
    %3330 = vmatpush1.bf16.msra.mxu0 %v2337
    %3331 = vmatprep.subr.bf16.mxu0 %v2398
    %3332 = vmatpush2.bf16.msra.mxu0 %v2397
    %3333 = vmatprep.subr.bf16.mxu0 %v2394
    %3334 = vmatpush2.bf16.msra.mxu0 %v2393
    %3335 = vmatprep.subr.bf16.mxu0 %v2390
    %3336 = vmatpush2.bf16.msra.mxu0 %v2389
    %3337 = vmatprep.subr.bf16.mxu0 %v2386
    %3338 = vmatpush2.bf16.msra.mxu0 %v2385
    %3339 = vmatprep.subr.bf16.mxu0 %v2382
    %3340 = vmatpush2.bf16.msra.mxu0 %v2381
    %3341 = vmatprep.subr.bf16.mxu0 %v2378
    %3342 = vmatpush2.bf16.msra.mxu0 %v2377
    %3343 = vmatprep.subr.bf16.mxu0 %v2374
    %3344 = vmatpush2.bf16.msra.mxu0 %v2373
    %3345 = vmatprep.subr.bf16.mxu0 %v2370
    %3346 = vmatpush2.bf16.msra.mxu0 %v2369
    %3347 = vmatprep.mubr.bf16.mxu0 %v603
    %3348 = vmatmul.mubr.bf16.gmra.mxu0 %v589
    %v3349 = vpop.f32.mrf.mxu0
    %v3350 = vadd.f32 %v3309, %v3349
    %v3351 = vpop.f32.mrf.mxu0
    %v3352 = vadd.f32 %v3311, %v3351
    %v3353 = vpop.f32.mrf.mxu0
    %v3354 = vpop.f32.mrf.mxu0
    %3355 = vdwg.mxu0
    %3356 = vmatprep.subr.bf16.mxu0 %v2430
    %3357 = vmatpush1.bf16.msra.mxu0 %v2429
    %3358 = vmatprep.subr.bf16.mxu0 %v2426
    %3359 = vmatpush1.bf16.msra.mxu0 %v2425
    %3360 = vmatprep.subr.bf16.mxu0 %v2422
    %3361 = vmatpush1.bf16.msra.mxu0 %v2421
    %3362 = vmatprep.subr.bf16.mxu0 %v2418
    %3363 = vmatpush1.bf16.msra.mxu0 %v2417
    %3364 = vmatprep.subr.bf16.mxu0 %v2414
    %3365 = vmatpush1.bf16.msra.mxu0 %v2413
    %3366 = vmatprep.subr.bf16.mxu0 %v2410
    %3367 = vmatpush1.bf16.msra.mxu0 %v2409
    %3368 = vmatprep.subr.bf16.mxu0 %v2406
    %3369 = vmatpush1.bf16.msra.mxu0 %v2405
    %3370 = vmatprep.subr.bf16.mxu0 %v2402
    %3371 = vmatpush1.bf16.msra.mxu0 %v2401
    %3372 = vmatprep.subr.bf16.mxu0 %v2462
    %3373 = vmatpush2.bf16.msra.mxu0 %v2461
    %3374 = vmatprep.subr.bf16.mxu0 %v2458
    %3375 = vmatpush2.bf16.msra.mxu0 %v2457
    %3376 = vmatprep.subr.bf16.mxu0 %v2454
    %3377 = vmatpush2.bf16.msra.mxu0 %v2453
    %3378 = vmatprep.subr.bf16.mxu0 %v2450
    %3379 = vmatpush2.bf16.msra.mxu0 %v2449
    %3380 = vmatprep.subr.bf16.mxu0 %v2446
    %3381 = vmatpush2.bf16.msra.mxu0 %v2445
    %3382 = vmatprep.subr.bf16.mxu0 %v2442
    %3383 = vmatpush2.bf16.msra.mxu0 %v2441
    %3384 = vmatprep.subr.bf16.mxu0 %v2438
    %3385 = vmatpush2.bf16.msra.mxu0 %v2437
    %3386 = vmatprep.subr.bf16.mxu0 %v2434
    %3387 = vmatpush2.bf16.msra.mxu0 %v2433
    %3388 = vmatprep.mubr.bf16.mxu0 %v607
    %3389 = vmatmul.mubr.bf16.gmra.mxu0 %v605
    %v3390 = vpop.f32.mrf.mxu0
    %v3391 = vadd.f32 %v3350, %v3390
    %v3392 = vpop.f32.mrf.mxu0
    %v3393 = vadd.f32 %v3352, %v3392
    %v3394 = vpop.f32.mrf.mxu0
    %v3395 = vpop.f32.mrf.mxu0
    %3396 = vdwg.mxu0
    %3397 = vmatprep.subr.bf16.mxu0 %v2494
    %3398 = vmatpush1.bf16.msra.mxu0 %v2493
    %3399 = vmatprep.subr.bf16.mxu0 %v2490
    %3400 = vmatpush1.bf16.msra.mxu0 %v2489
    %3401 = vmatprep.subr.bf16.mxu0 %v2486
    %3402 = vmatpush1.bf16.msra.mxu0 %v2485
    %3403 = vmatprep.subr.bf16.mxu0 %v2482
    %3404 = vmatpush1.bf16.msra.mxu0 %v2481
    %3405 = vmatprep.subr.bf16.mxu0 %v2478
    %3406 = vmatpush1.bf16.msra.mxu0 %v2477
    %3407 = vmatprep.subr.bf16.mxu0 %v2474
    %3408 = vmatpush1.bf16.msra.mxu0 %v2473
    %3409 = vmatprep.subr.bf16.mxu0 %v2470
    %3410 = vmatpush1.bf16.msra.mxu0 %v2469
    %3411 = vmatprep.subr.bf16.mxu0 %v2466
    %3412 = vmatpush1.bf16.msra.mxu0 %v2465
    %3413 = vmatprep.subr.bf16.mxu0 %v2526
    %3414 = vmatpush2.bf16.msra.mxu0 %v2525
    %3415 = vmatprep.subr.bf16.mxu0 %v2522
    %3416 = vmatpush2.bf16.msra.mxu0 %v2521
    %3417 = vmatprep.subr.bf16.mxu0 %v2518
    %3418 = vmatpush2.bf16.msra.mxu0 %v2517
    %3419 = vmatprep.subr.bf16.mxu0 %v2514
    %3420 = vmatpush2.bf16.msra.mxu0 %v2513
    %3421 = vmatprep.subr.bf16.mxu0 %v2510
    %3422 = vmatpush2.bf16.msra.mxu0 %v2509
    %3423 = vmatprep.subr.bf16.mxu0 %v2506
    %3424 = vmatpush2.bf16.msra.mxu0 %v2505
    %3425 = vmatprep.subr.bf16.mxu0 %v2502
    %3426 = vmatpush2.bf16.msra.mxu0 %v2501
    %3427 = vmatprep.subr.bf16.mxu0 %v2498
    %3428 = vmatpush2.bf16.msra.mxu0 %v2497
    %3429 = vmatprep.mubr.bf16.mxu0 %v645
    %3430 = vmatmul.mubr.bf16.gmra.mxu0 %v631
    %v3431 = vpop.f32.mrf.mxu0
    %v3432 = vadd.f32 %v3391, %v3431
    %v3433 = vpop.f32.mrf.mxu0
    %v3434 = vadd.f32 %v3393, %v3433
    %v3435 = vpop.f32.mrf.mxu0
    %v3436 = vpop.f32.mrf.mxu0
    %3437 = vdwg.mxu0
    %3438 = vmatprep.subr.bf16.mxu0 %v2558
    %3439 = vmatpush1.bf16.msra.mxu0 %v2557
    %3440 = vmatprep.subr.bf16.mxu0 %v2554
    %3441 = vmatpush1.bf16.msra.mxu0 %v2553
    %3442 = vmatprep.subr.bf16.mxu0 %v2550
    %3443 = vmatpush1.bf16.msra.mxu0 %v2549
    %3444 = vmatprep.subr.bf16.mxu0 %v2546
    %3445 = vmatpush1.bf16.msra.mxu0 %v2545
    %3446 = vmatprep.subr.bf16.mxu0 %v2542
    %3447 = vmatpush1.bf16.msra.mxu0 %v2541
    %3448 = vmatprep.subr.bf16.mxu0 %v2538
    %3449 = vmatpush1.bf16.msra.mxu0 %v2537
    %3450 = vmatprep.subr.bf16.mxu0 %v2534
    %3451 = vmatpush1.bf16.msra.mxu0 %v2533
    %3452 = vmatprep.subr.bf16.mxu0 %v2530
    %3453 = vmatpush1.bf16.msra.mxu0 %v2529
    %3454 = vmatprep.subr.bf16.mxu0 %v2590
    %3455 = vmatpush2.bf16.msra.mxu0 %v2589
    %3456 = vmatprep.subr.bf16.mxu0 %v2586
    %3457 = vmatpush2.bf16.msra.mxu0 %v2585
    %3458 = vmatprep.subr.bf16.mxu0 %v2582
    %3459 = vmatpush2.bf16.msra.mxu0 %v2581
    %3460 = vmatprep.subr.bf16.mxu0 %v2578
    %3461 = vmatpush2.bf16.msra.mxu0 %v2577
    %3462 = vmatprep.subr.bf16.mxu0 %v2574
    %3463 = vmatpush2.bf16.msra.mxu0 %v2573
    %3464 = vmatprep.subr.bf16.mxu0 %v2570
    %3465 = vmatpush2.bf16.msra.mxu0 %v2569
    %3466 = vmatprep.subr.bf16.mxu0 %v2566
    %3467 = vmatpush2.bf16.msra.mxu0 %v2565
    %3468 = vmatprep.subr.bf16.mxu0 %v2562
    %3469 = vmatpush2.bf16.msra.mxu0 %v2561
    %3470 = vmatprep.mubr.bf16.mxu0 %v655
    %3471 = vmatmul.mubr.bf16.gmra.mxu0 %v653
    %v3472 = vpop.f32.mrf.mxu0
    %v3473 = vadd.f32 %v3432, %v3472
    %v3474 = vpop.f32.mrf.mxu0
    %v3475 = vadd.f32 %v3434, %v3474
    %v3476 = vpop.f32.mrf.mxu0
    %v3477 = vpop.f32.mrf.mxu0
    %3478 = vdwg.mxu0
    %3479 = vmatprep.subr.bf16.mxu0 %v2622
    %3480 = vmatpush1.bf16.msra.mxu0 %v2621
    %3481 = vmatprep.subr.bf16.mxu0 %v2618
    %3482 = vmatpush1.bf16.msra.mxu0 %v2617
    %3483 = vmatprep.subr.bf16.mxu0 %v2614
    %3484 = vmatpush1.bf16.msra.mxu0 %v2613
    %3485 = vmatprep.subr.bf16.mxu0 %v2610
    %3486 = vmatpush1.bf16.msra.mxu0 %v2609
    %3487 = vmatprep.subr.bf16.mxu0 %v2606
    %3488 = vmatpush1.bf16.msra.mxu0 %v2605
    %3489 = vmatprep.subr.bf16.mxu0 %v2602
    %3490 = vmatpush1.bf16.msra.mxu0 %v2601
    %3491 = vmatprep.subr.bf16.mxu0 %v2598
    %3492 = vmatpush1.bf16.msra.mxu0 %v2597
    %3493 = vmatprep.subr.bf16.mxu0 %v2594
    %3494 = vmatpush1.bf16.msra.mxu0 %v2593
    %3495 = vmatprep.subr.bf16.mxu0 %v2654
    %3496 = vmatpush2.bf16.msra.mxu0 %v2653
    %3497 = vmatprep.subr.bf16.mxu0 %v2650
    %3498 = vmatpush2.bf16.msra.mxu0 %v2649
    %3499 = vmatprep.subr.bf16.mxu0 %v2646
    %3500 = vmatpush2.bf16.msra.mxu0 %v2645
    %3501 = vmatprep.subr.bf16.mxu0 %v2642
    %3502 = vmatpush2.bf16.msra.mxu0 %v2641
    %3503 = vmatprep.subr.bf16.mxu0 %v2638
    %3504 = vmatpush2.bf16.msra.mxu0 %v2637
    %3505 = vmatprep.subr.bf16.mxu0 %v2634
    %3506 = vmatpush2.bf16.msra.mxu0 %v2633
    %3507 = vmatprep.subr.bf16.mxu0 %v2630
    %3508 = vmatpush2.bf16.msra.mxu0 %v2629
    %3509 = vmatprep.subr.bf16.mxu0 %v2626
    %3510 = vmatpush2.bf16.msra.mxu0 %v2625
    %3511 = vmatprep.mubr.bf16.mxu0 %v652
    %3512 = vmatmul.mubr.bf16.gmra.mxu0 %v638
    %v3513 = vpop.f32.mrf.mxu0
    %v3514 = vadd.f32 %v3473, %v3513
    %v3515 = vpop.f32.mrf.mxu0
    %v3516 = vadd.f32 %v3475, %v3515
    %v3517 = vpop.f32.mrf.mxu0
    %v3518 = vpop.f32.mrf.mxu0
    %3519 = vdwg.mxu0
    %3520 = vmatprep.subr.bf16.mxu0 %v2686
    %3521 = vmatpush1.bf16.msra.mxu0 %v2685
    %3522 = vmatprep.subr.bf16.mxu0 %v2682
    %3523 = vmatpush1.bf16.msra.mxu0 %v2681
    %3524 = vmatprep.subr.bf16.mxu0 %v2678
    %3525 = vmatpush1.bf16.msra.mxu0 %v2677
    %3526 = vmatprep.subr.bf16.mxu0 %v2674
    %3527 = vmatpush1.bf16.msra.mxu0 %v2673
    %3528 = vmatprep.subr.bf16.mxu0 %v2670
    %3529 = vmatpush1.bf16.msra.mxu0 %v2669
    %3530 = vmatprep.subr.bf16.mxu0 %v2666
    %3531 = vmatpush1.bf16.msra.mxu0 %v2665
    %3532 = vmatprep.subr.bf16.mxu0 %v2662
    %3533 = vmatpush1.bf16.msra.mxu0 %v2661
    %3534 = vmatprep.subr.bf16.mxu0 %v2658
    %3535 = vmatpush1.bf16.msra.mxu0 %v2657
    %3536 = vmatprep.subr.bf16.mxu0 %v2718
    %3537 = vmatpush2.bf16.msra.mxu0 %v2717
    %3538 = vmatprep.subr.bf16.mxu0 %v2714
    %3539 = vmatpush2.bf16.msra.mxu0 %v2713
    %3540 = vmatprep.subr.bf16.mxu0 %v2710
    %3541 = vmatpush2.bf16.msra.mxu0 %v2709
    %3542 = vmatprep.subr.bf16.mxu0 %v2706
    %3543 = vmatpush2.bf16.msra.mxu0 %v2705
    %3544 = vmatprep.subr.bf16.mxu0 %v2702
    %3545 = vmatpush2.bf16.msra.mxu0 %v2701
    %3546 = vmatprep.subr.bf16.mxu0 %v2698
    %3547 = vmatpush2.bf16.msra.mxu0 %v2697
    %3548 = vmatprep.subr.bf16.mxu0 %v2694
    %3549 = vmatpush2.bf16.msra.mxu0 %v2693
    %3550 = vmatprep.subr.bf16.mxu0 %v2690
    %3551 = vmatpush2.bf16.msra.mxu0 %v2689
    %3552 = vmatprep.mubr.bf16.mxu0 %v656
    %3553 = vmatmul.mubr.bf16.gmra.mxu0 %v654
    %v3554 = vpop.f32.mrf.mxu0
    %v3555 = vadd.f32 %v3514, %v3554
    %v3556 = vpop.f32.mrf.mxu0
    %v3557 = vadd.f32 %v3516, %v3556
    %v3558 = vpop.f32.mrf.mxu0
    %v3559 = vpop.f32.mrf.mxu0
    %3560 = vdwg.mxu0
    %3561 = vmatprep.subr.bf16.mxu0 %v2240
    %3562 = vmatpush1.bf16.msra.mxu0 %v2239
    %3563 = vmatprep.subr.bf16.mxu0 %v2236
    %3564 = vmatpush1.bf16.msra.mxu0 %v2235
    %3565 = vmatprep.subr.bf16.mxu0 %v2232
    %3566 = vmatpush1.bf16.msra.mxu0 %v2231
    %3567 = vmatprep.subr.bf16.mxu0 %v2228
    %3568 = vmatpush1.bf16.msra.mxu0 %v2227
    %3569 = vmatprep.subr.bf16.mxu0 %v2224
    %3570 = vmatpush1.bf16.msra.mxu0 %v2223
    %3571 = vmatprep.subr.bf16.mxu0 %v2220
    %3572 = vmatpush1.bf16.msra.mxu0 %v2219
    %3573 = vmatprep.subr.bf16.mxu0 %v2216
    %3574 = vmatpush1.bf16.msra.mxu0 %v2215
    %3575 = vmatprep.subr.bf16.mxu0 %v2212
    %3576 = vmatpush1.bf16.msra.mxu0 %v2211
    %3577 = vmatprep.subr.bf16.mxu0 %v2272
    %3578 = vmatpush2.bf16.msra.mxu0 %v2271
    %3579 = vmatprep.subr.bf16.mxu0 %v2268
    %3580 = vmatpush2.bf16.msra.mxu0 %v2267
    %3581 = vmatprep.subr.bf16.mxu0 %v2264
    %3582 = vmatpush2.bf16.msra.mxu0 %v2263
    %3583 = vmatprep.subr.bf16.mxu0 %v2260
    %3584 = vmatpush2.bf16.msra.mxu0 %v2259
    %3585 = vmatprep.subr.bf16.mxu0 %v2256
    %3586 = vmatpush2.bf16.msra.mxu0 %v2255
    %3587 = vmatprep.subr.bf16.mxu0 %v2252
    %3588 = vmatpush2.bf16.msra.mxu0 %v2251
    %3589 = vmatprep.subr.bf16.mxu0 %v2248
    %3590 = vmatpush2.bf16.msra.mxu0 %v2247
    %3591 = vmatprep.subr.bf16.mxu0 %v2244
    %3592 = vmatpush2.bf16.msra.mxu0 %v2243
    %3593 = vmatprep.mubr.bf16.mxu0 %v596
    %3594 = vmatmul.mubr.bf16.gmra.mxu0 %v582
    %v3595 = vpop.f32.mrf.mxu0
    %v3596 = vadd.f32 %v548, %v3595
    %v3597 = vpop.f32.mrf.mxu0
    %v3598 = vadd.f32 %v552, %v3597
    %v3599 = vpop.f32.mrf.mxu0
    %v3600 = vpop.f32.mrf.mxu0
    %3601 = vdwg.mxu0
    %3602 = vmatprep.subr.bf16.mxu0 %v2304
    %3603 = vmatpush1.bf16.msra.mxu0 %v2303
    %3604 = vmatprep.subr.bf16.mxu0 %v2300
    %3605 = vmatpush1.bf16.msra.mxu0 %v2299
    %3606 = vmatprep.subr.bf16.mxu0 %v2296
    %3607 = vmatpush1.bf16.msra.mxu0 %v2295
    %3608 = vmatprep.subr.bf16.mxu0 %v2292
    %3609 = vmatpush1.bf16.msra.mxu0 %v2291
    %3610 = vmatprep.subr.bf16.mxu0 %v2288
    %3611 = vmatpush1.bf16.msra.mxu0 %v2287
    %3612 = vmatprep.subr.bf16.mxu0 %v2284
    %3613 = vmatpush1.bf16.msra.mxu0 %v2283
    %3614 = vmatprep.subr.bf16.mxu0 %v2280
    %3615 = vmatpush1.bf16.msra.mxu0 %v2279
    %3616 = vmatprep.subr.bf16.mxu0 %v2276
    %3617 = vmatpush1.bf16.msra.mxu0 %v2275
    %3618 = vmatprep.subr.bf16.mxu0 %v2336
    %3619 = vmatpush2.bf16.msra.mxu0 %v2335
    %3620 = vmatprep.subr.bf16.mxu0 %v2332
    %3621 = vmatpush2.bf16.msra.mxu0 %v2331
    %3622 = vmatprep.subr.bf16.mxu0 %v2328
    %3623 = vmatpush2.bf16.msra.mxu0 %v2327
    %3624 = vmatprep.subr.bf16.mxu0 %v2324
    %3625 = vmatpush2.bf16.msra.mxu0 %v2323
    %3626 = vmatprep.subr.bf16.mxu0 %v2320
    %3627 = vmatpush2.bf16.msra.mxu0 %v2319
    %3628 = vmatprep.subr.bf16.mxu0 %v2316
    %3629 = vmatpush2.bf16.msra.mxu0 %v2315
    %3630 = vmatprep.subr.bf16.mxu0 %v2312
    %3631 = vmatpush2.bf16.msra.mxu0 %v2311
    %3632 = vmatprep.subr.bf16.mxu0 %v2308
    %3633 = vmatpush2.bf16.msra.mxu0 %v2307
    %3634 = vmatprep.mubr.bf16.mxu0 %v606
    %3635 = vmatmul.mubr.bf16.gmra.mxu0 %v604
    %v3636 = vpop.f32.mrf.mxu0
    %v3637 = vadd.f32 %v3596, %v3636
    %v3638 = vpop.f32.mrf.mxu0
    %v3639 = vadd.f32 %v3598, %v3638
    %v3640 = vpop.f32.mrf.mxu0
    %v3641 = vpop.f32.mrf.mxu0
    %3642 = vdwg.mxu0
    %3643 = vmatprep.subr.bf16.mxu0 %v2368
    %3644 = vmatpush1.bf16.msra.mxu0 %v2367
    %3645 = vmatprep.subr.bf16.mxu0 %v2364
    %3646 = vmatpush1.bf16.msra.mxu0 %v2363
    %3647 = vmatprep.subr.bf16.mxu0 %v2360
    %3648 = vmatpush1.bf16.msra.mxu0 %v2359
    %3649 = vmatprep.subr.bf16.mxu0 %v2356
    %3650 = vmatpush1.bf16.msra.mxu0 %v2355
    %3651 = vmatprep.subr.bf16.mxu0 %v2352
    %3652 = vmatpush1.bf16.msra.mxu0 %v2351
    %3653 = vmatprep.subr.bf16.mxu0 %v2348
    %3654 = vmatpush1.bf16.msra.mxu0 %v2347
    %3655 = vmatprep.subr.bf16.mxu0 %v2344
    %3656 = vmatpush1.bf16.msra.mxu0 %v2343
    %3657 = vmatprep.subr.bf16.mxu0 %v2340
    %3658 = vmatpush1.bf16.msra.mxu0 %v2339
    %3659 = vmatprep.subr.bf16.mxu0 %v2400
    %3660 = vmatpush2.bf16.msra.mxu0 %v2399
    %3661 = vmatprep.subr.bf16.mxu0 %v2396
    %3662 = vmatpush2.bf16.msra.mxu0 %v2395
    %3663 = vmatprep.subr.bf16.mxu0 %v2392
    %3664 = vmatpush2.bf16.msra.mxu0 %v2391
    %3665 = vmatprep.subr.bf16.mxu0 %v2388
    %3666 = vmatpush2.bf16.msra.mxu0 %v2387
    %3667 = vmatprep.subr.bf16.mxu0 %v2384
    %3668 = vmatpush2.bf16.msra.mxu0 %v2383
    %3669 = vmatprep.subr.bf16.mxu0 %v2380
    %3670 = vmatpush2.bf16.msra.mxu0 %v2379
    %3671 = vmatprep.subr.bf16.mxu0 %v2376
    %3672 = vmatpush2.bf16.msra.mxu0 %v2375
    %3673 = vmatprep.subr.bf16.mxu0 %v2372
    %3674 = vmatpush2.bf16.msra.mxu0 %v2371
    %3675 = vmatprep.mubr.bf16.mxu0 %v603
    %3676 = vmatmul.mubr.bf16.gmra.mxu0 %v589
    %v3677 = vpop.f32.mrf.mxu0
    %v3678 = vadd.f32 %v3637, %v3677
    %v3679 = vpop.f32.mrf.mxu0
    %v3680 = vadd.f32 %v3639, %v3679
    %v3681 = vpop.f32.mrf.mxu0
    %v3682 = vpop.f32.mrf.mxu0
    %3683 = vdwg.mxu0
    %3684 = vmatprep.subr.bf16.mxu0 %v2432
    %3685 = vmatpush1.bf16.msra.mxu0 %v2431
    %3686 = vmatprep.subr.bf16.mxu0 %v2428
    %3687 = vmatpush1.bf16.msra.mxu0 %v2427
    %3688 = vmatprep.subr.bf16.mxu0 %v2424
    %3689 = vmatpush1.bf16.msra.mxu0 %v2423
    %3690 = vmatprep.subr.bf16.mxu0 %v2420
    %3691 = vmatpush1.bf16.msra.mxu0 %v2419
    %3692 = vmatprep.subr.bf16.mxu0 %v2416
    %3693 = vmatpush1.bf16.msra.mxu0 %v2415
    %3694 = vmatprep.subr.bf16.mxu0 %v2412
    %3695 = vmatpush1.bf16.msra.mxu0 %v2411
    %3696 = vmatprep.subr.bf16.mxu0 %v2408
    %3697 = vmatpush1.bf16.msra.mxu0 %v2407
    %3698 = vmatprep.subr.bf16.mxu0 %v2404
    %3699 = vmatpush1.bf16.msra.mxu0 %v2403
    %3700 = vmatprep.subr.bf16.mxu0 %v2464
    %3701 = vmatpush2.bf16.msra.mxu0 %v2463
    %3702 = vmatprep.subr.bf16.mxu0 %v2460
    %3703 = vmatpush2.bf16.msra.mxu0 %v2459
    %3704 = vmatprep.subr.bf16.mxu0 %v2456
    %3705 = vmatpush2.bf16.msra.mxu0 %v2455
    %3706 = vmatprep.subr.bf16.mxu0 %v2452
    %3707 = vmatpush2.bf16.msra.mxu0 %v2451
    %3708 = vmatprep.subr.bf16.mxu0 %v2448
    %3709 = vmatpush2.bf16.msra.mxu0 %v2447
    %3710 = vmatprep.subr.bf16.mxu0 %v2444
    %3711 = vmatpush2.bf16.msra.mxu0 %v2443
    %3712 = vmatprep.subr.bf16.mxu0 %v2440
    %3713 = vmatpush2.bf16.msra.mxu0 %v2439
    %3714 = vmatprep.subr.bf16.mxu0 %v2436
    %3715 = vmatpush2.bf16.msra.mxu0 %v2435
    %3716 = vmatprep.mubr.bf16.mxu0 %v607
    %3717 = vmatmul.mubr.bf16.gmra.mxu0 %v605
    %v3718 = vpop.f32.mrf.mxu0
    %v3719 = vadd.f32 %v3678, %v3718
    %v3720 = vpop.f32.mrf.mxu0
    %v3721 = vadd.f32 %v3680, %v3720
    %v3722 = vpop.f32.mrf.mxu0
    %v3723 = vpop.f32.mrf.mxu0
    %3724 = vdwg.mxu0
    %3725 = vmatprep.subr.bf16.mxu0 %v2496
    %3726 = vmatpush1.bf16.msra.mxu0 %v2495
    %3727 = vmatprep.subr.bf16.mxu0 %v2492
    %3728 = vmatpush1.bf16.msra.mxu0 %v2491
    %3729 = vmatprep.subr.bf16.mxu0 %v2488
    %3730 = vmatpush1.bf16.msra.mxu0 %v2487
    %3731 = vmatprep.subr.bf16.mxu0 %v2484
    %3732 = vmatpush1.bf16.msra.mxu0 %v2483
    %3733 = vmatprep.subr.bf16.mxu0 %v2480
    %3734 = vmatpush1.bf16.msra.mxu0 %v2479
    %3735 = vmatprep.subr.bf16.mxu0 %v2476
    %3736 = vmatpush1.bf16.msra.mxu0 %v2475
    %3737 = vmatprep.subr.bf16.mxu0 %v2472
    %3738 = vmatpush1.bf16.msra.mxu0 %v2471
    %3739 = vmatprep.subr.bf16.mxu0 %v2468
    %3740 = vmatpush1.bf16.msra.mxu0 %v2467
    %3741 = vmatprep.subr.bf16.mxu0 %v2528
    %3742 = vmatpush2.bf16.msra.mxu0 %v2527
    %3743 = vmatprep.subr.bf16.mxu0 %v2524
    %3744 = vmatpush2.bf16.msra.mxu0 %v2523
    %3745 = vmatprep.subr.bf16.mxu0 %v2520
    %3746 = vmatpush2.bf16.msra.mxu0 %v2519
    %3747 = vmatprep.subr.bf16.mxu0 %v2516
    %3748 = vmatpush2.bf16.msra.mxu0 %v2515
    %3749 = vmatprep.subr.bf16.mxu0 %v2512
    %3750 = vmatpush2.bf16.msra.mxu0 %v2511
    %3751 = vmatprep.subr.bf16.mxu0 %v2508
    %3752 = vmatpush2.bf16.msra.mxu0 %v2507
    %3753 = vmatprep.subr.bf16.mxu0 %v2504
    %3754 = vmatpush2.bf16.msra.mxu0 %v2503
    %3755 = vmatprep.subr.bf16.mxu0 %v2500
    %3756 = vmatpush2.bf16.msra.mxu0 %v2499
    %3757 = vmatprep.mubr.bf16.mxu0 %v645
    %3758 = vmatmul.mubr.bf16.gmra.mxu0 %v631
    %v3759 = vpop.f32.mrf.mxu0
    %v3760 = vadd.f32 %v3719, %v3759
    %v3761 = vpop.f32.mrf.mxu0
    %v3762 = vadd.f32 %v3721, %v3761
    %v3763 = vpop.f32.mrf.mxu0
    %v3764 = vpop.f32.mrf.mxu0
    %3765 = vdwg.mxu0
    %3766 = vmatprep.subr.bf16.mxu0 %v2560
    %3767 = vmatpush1.bf16.msra.mxu0 %v2559
    %3768 = vmatprep.subr.bf16.mxu0 %v2556
    %3769 = vmatpush1.bf16.msra.mxu0 %v2555
    %3770 = vmatprep.subr.bf16.mxu0 %v2552
    %3771 = vmatpush1.bf16.msra.mxu0 %v2551
    %3772 = vmatprep.subr.bf16.mxu0 %v2548
    %3773 = vmatpush1.bf16.msra.mxu0 %v2547
    %3774 = vmatprep.subr.bf16.mxu0 %v2544
    %3775 = vmatpush1.bf16.msra.mxu0 %v2543
    %3776 = vmatprep.subr.bf16.mxu0 %v2540
    %3777 = vmatpush1.bf16.msra.mxu0 %v2539
    %3778 = vmatprep.subr.bf16.mxu0 %v2536
    %3779 = vmatpush1.bf16.msra.mxu0 %v2535
    %3780 = vmatprep.subr.bf16.mxu0 %v2532
    %3781 = vmatpush1.bf16.msra.mxu0 %v2531
    %3782 = vmatprep.subr.bf16.mxu0 %v2592
    %3783 = vmatpush2.bf16.msra.mxu0 %v2591
    %3784 = vmatprep.subr.bf16.mxu0 %v2588
    %3785 = vmatpush2.bf16.msra.mxu0 %v2587
    %3786 = vmatprep.subr.bf16.mxu0 %v2584
    %3787 = vmatpush2.bf16.msra.mxu0 %v2583
    %3788 = vmatprep.subr.bf16.mxu0 %v2580
    %3789 = vmatpush2.bf16.msra.mxu0 %v2579
    %3790 = vmatprep.subr.bf16.mxu0 %v2576
    %3791 = vmatpush2.bf16.msra.mxu0 %v2575
    %3792 = vmatprep.subr.bf16.mxu0 %v2572
    %3793 = vmatpush2.bf16.msra.mxu0 %v2571
    %3794 = vmatprep.subr.bf16.mxu0 %v2568
    %3795 = vmatpush2.bf16.msra.mxu0 %v2567
    %3796 = vmatprep.subr.bf16.mxu0 %v2564
    %3797 = vmatpush2.bf16.msra.mxu0 %v2563
    %3798 = vmatprep.mubr.bf16.mxu0 %v655
    %3799 = vmatmul.mubr.bf16.gmra.mxu0 %v653
    %v3800 = vpop.f32.mrf.mxu0
    %v3801 = vadd.f32 %v3760, %v3800
    %v3802 = vpop.f32.mrf.mxu0
    %v3803 = vadd.f32 %v3762, %v3802
    %v3804 = vpop.f32.mrf.mxu0
    %v3805 = vpop.f32.mrf.mxu0
    %3806 = vdwg.mxu0
    %3807 = vmatprep.subr.bf16.mxu0 %v2624
    %3808 = vmatpush1.bf16.msra.mxu0 %v2623
    %3809 = vmatprep.subr.bf16.mxu0 %v2620
    %3810 = vmatpush1.bf16.msra.mxu0 %v2619
    %3811 = vmatprep.subr.bf16.mxu0 %v2616
    %3812 = vmatpush1.bf16.msra.mxu0 %v2615
    %3813 = vmatprep.subr.bf16.mxu0 %v2612
    %3814 = vmatpush1.bf16.msra.mxu0 %v2611
    %3815 = vmatprep.subr.bf16.mxu0 %v2608
    %3816 = vmatpush1.bf16.msra.mxu0 %v2607
    %3817 = vmatprep.subr.bf16.mxu0 %v2604
    %3818 = vmatpush1.bf16.msra.mxu0 %v2603
    %3819 = vmatprep.subr.bf16.mxu0 %v2600
    %3820 = vmatpush1.bf16.msra.mxu0 %v2599
    %3821 = vmatprep.subr.bf16.mxu0 %v2596
    %3822 = vmatpush1.bf16.msra.mxu0 %v2595
    %3823 = vmatprep.subr.bf16.mxu0 %v2656
    %3824 = vmatpush2.bf16.msra.mxu0 %v2655
    %3825 = vmatprep.subr.bf16.mxu0 %v2652
    %3826 = vmatpush2.bf16.msra.mxu0 %v2651
    %3827 = vmatprep.subr.bf16.mxu0 %v2648
    %3828 = vmatpush2.bf16.msra.mxu0 %v2647
    %3829 = vmatprep.subr.bf16.mxu0 %v2644
    %3830 = vmatpush2.bf16.msra.mxu0 %v2643
    %3831 = vmatprep.subr.bf16.mxu0 %v2640
    %3832 = vmatpush2.bf16.msra.mxu0 %v2639
    %3833 = vmatprep.subr.bf16.mxu0 %v2636
    %3834 = vmatpush2.bf16.msra.mxu0 %v2635
    %3835 = vmatprep.subr.bf16.mxu0 %v2632
    %3836 = vmatpush2.bf16.msra.mxu0 %v2631
    %3837 = vmatprep.subr.bf16.mxu0 %v2628
    %3838 = vmatpush2.bf16.msra.mxu0 %v2627
    %3839 = vmatprep.mubr.bf16.mxu0 %v652
    %3840 = vmatmul.mubr.bf16.gmra.mxu0 %v638
    %v3841 = vpop.f32.mrf.mxu0
    %v3842 = vadd.f32 %v3801, %v3841
    %v3843 = vpop.f32.mrf.mxu0
    %v3844 = vadd.f32 %v3803, %v3843
    %v3845 = vpop.f32.mrf.mxu0
    %v3846 = vpop.f32.mrf.mxu0
    %3847 = vdwg.mxu0
    %3848 = vmatprep.subr.bf16.mxu0 %v2688
    %3849 = vmatpush1.bf16.msra.mxu0 %v2687
    %3850 = vmatprep.subr.bf16.mxu0 %v2684
    %3851 = vmatpush1.bf16.msra.mxu0 %v2683
    %3852 = vmatprep.subr.bf16.mxu0 %v2680
    %3853 = vmatpush1.bf16.msra.mxu0 %v2679
    %3854 = vmatprep.subr.bf16.mxu0 %v2676
    %3855 = vmatpush1.bf16.msra.mxu0 %v2675
    %3856 = vmatprep.subr.bf16.mxu0 %v2672
    %3857 = vmatpush1.bf16.msra.mxu0 %v2671
    %3858 = vmatprep.subr.bf16.mxu0 %v2668
    %3859 = vmatpush1.bf16.msra.mxu0 %v2667
    %3860 = vmatprep.subr.bf16.mxu0 %v2664
    %3861 = vmatpush1.bf16.msra.mxu0 %v2663
    %3862 = vmatprep.subr.bf16.mxu0 %v2660
    %3863 = vmatpush1.bf16.msra.mxu0 %v2659
    %3864 = vmatprep.subr.bf16.mxu0 %v2720
    %3865 = vmatpush2.bf16.msra.mxu0 %v2719
    %3866 = vmatprep.subr.bf16.mxu0 %v2716
    %3867 = vmatpush2.bf16.msra.mxu0 %v2715
    %3868 = vmatprep.subr.bf16.mxu0 %v2712
    %3869 = vmatpush2.bf16.msra.mxu0 %v2711
    %3870 = vmatprep.subr.bf16.mxu0 %v2708
    %3871 = vmatpush2.bf16.msra.mxu0 %v2707
    %3872 = vmatprep.subr.bf16.mxu0 %v2704
    %3873 = vmatpush2.bf16.msra.mxu0 %v2703
    %3874 = vmatprep.subr.bf16.mxu0 %v2700
    %3875 = vmatpush2.bf16.msra.mxu0 %v2699
    %3876 = vmatprep.subr.bf16.mxu0 %v2696
    %3877 = vmatpush2.bf16.msra.mxu0 %v2695
    %3878 = vmatprep.subr.bf16.mxu0 %v2692
    %3879 = vmatpush2.bf16.msra.mxu0 %v2691
    %3880 = vmatprep.mubr.bf16.mxu0 %v656
    %3881 = vmatmul.mubr.bf16.gmra.mxu0 %v654
    %v3882 = vpop.f32.mrf.mxu0
    %v3883 = vadd.f32 %v3842, %v3882
    %v3884 = vpop.f32.mrf.mxu0
    %v3885 = vadd.f32 %v3844, %v3884
    %v3886 = vpop.f32.mrf.mxu0
    %v3887 = vpop.f32.mrf.mxu0
    %3888 = vdwg.mxu0
    %v3889 = vmax.f32 %v3555, 0.0
    %v3890 = vmax.f32 %v3557, 0.0
    %v3891 = vmax.f32 %v3883, 0.0
    %v3892 = vmax.f32 %v3885, 0.0
    %v3893 = vld [vmem:[%s3] sm:$0xff]
    %v3894 = vld [vmem:[%s3 + $0x8] sm:$0xff]
    %v3895 = vld [vmem:[%s3 + $0x10] sm:$0xff]
    %v3896 = vld [vmem:[%s3 + $0x18] sm:$0xff]
    %v3897 = vld [vmem:[%s3 + $0x20] sm:$0xff]
    %v3898 = vld [vmem:[%s3 + $0x28] sm:$0xff]
    %v3899 = vld [vmem:[%s3 + $0x30] sm:$0xff]
    %v3900 = vld [vmem:[%s3 + $0x38] sm:$0xff]
    %v3901 = vld [vmem:[%s3 + $0x40] sm:$0xff]
    %v3902 = vld [vmem:[%s3 + $0x48] sm:$0xff]
    %v3903 = vld [vmem:[%s3 + $0x50] sm:$0xff]
    %v3904 = vld [vmem:[%s3 + $0x58] sm:$0xff]
    %v3905 = vld [vmem:[%s3 + $0x60] sm:$0xff]
    %v3906 = vld [vmem:[%s3 + $0x68] sm:$0xff]
    %v3907 = vld [vmem:[%s3 + $0x70] sm:$0xff]
    %v3908 = vld [vmem:[%s3 + $0x78] sm:$0xff]
    %v3909 = vld [vmem:[%s3 + $0x80] sm:$0xff]
    %v3910 = vld [vmem:[%s3 + $0x88] sm:$0xff]
    %v3911 = vld [vmem:[%s3 + $0x90] sm:$0xff]
    %v3912 = vld [vmem:[%s3 + $0x98] sm:$0xff]
    %v3913 = vld [vmem:[%s3 + $0xa0] sm:$0xff]
    %v3914 = vld [vmem:[%s3 + $0xa8] sm:$0xff]
    %v3915 = vld [vmem:[%s3 + $0xb0] sm:$0xff]
    %v3916 = vld [vmem:[%s3 + $0xb8] sm:$0xff]
    %v3917 = vld [vmem:[%s3 + $0xc0] sm:$0xff]
    %v3918 = vld [vmem:[%s3 + $0xc8] sm:$0xff]
    %v3919 = vld [vmem:[%s3 + $0xd0] sm:$0xff]
    %v3920 = vld [vmem:[%s3 + $0xd8] sm:$0xff]
    %v3921 = vld [vmem:[%s3 + $0xe0] sm:$0xff]
    %v3922 = vld [vmem:[%s3 + $0xe8] sm:$0xff]
    %v3923 = vld [vmem:[%s3 + $0xf0] sm:$0xff]
    %v3924 = vld [vmem:[%s3 + $0xf8] sm:$0xff]
    %v3925 = vld [vmem:[%s3 + $0x100] sm:$0xff]
    %v3926 = vld [vmem:[%s3 + $0x108] sm:$0xff]
    %v3927 = vld [vmem:[%s3 + $0x110] sm:$0xff]
    %v3928 = vld [vmem:[%s3 + $0x118] sm:$0xff]
    %v3929 = vld [vmem:[%s3 + $0x120] sm:$0xff]
    %v3930 = vld [vmem:[%s3 + $0x128] sm:$0xff]
    %v3931 = vld [vmem:[%s3 + $0x130] sm:$0xff]
    %v3932 = vld [vmem:[%s3 + $0x138] sm:$0xff]
    %v3933 = vld [vmem:[%s3 + $0x140] sm:$0xff]
    %v3934 = vld [vmem:[%s3 + $0x148] sm:$0xff]
    %v3935 = vld [vmem:[%s3 + $0x150] sm:$0xff]
    %v3936 = vld [vmem:[%s3 + $0x158] sm:$0xff]
    %v3937 = vld [vmem:[%s3 + $0x160] sm:$0xff]
    %v3938 = vld [vmem:[%s3 + $0x168] sm:$0xff]
    %v3939 = vld [vmem:[%s3 + $0x170] sm:$0xff]
    %v3940 = vld [vmem:[%s3 + $0x178] sm:$0xff]
    %v3941 = vld [vmem:[%s3 + $0x180] sm:$0xff]
    %v3942 = vld [vmem:[%s3 + $0x188] sm:$0xff]
    %v3943 = vld [vmem:[%s3 + $0x190] sm:$0xff]
    %v3944 = vld [vmem:[%s3 + $0x198] sm:$0xff]
    %v3945 = vld [vmem:[%s3 + $0x1a0] sm:$0xff]
    %v3946 = vld [vmem:[%s3 + $0x1a8] sm:$0xff]
    %v3947 = vld [vmem:[%s3 + $0x1b0] sm:$0xff]
    %v3948 = vld [vmem:[%s3 + $0x1b8] sm:$0xff]
    %v3949 = vld [vmem:[%s3 + $0x1c0] sm:$0xff]
    %v3950 = vld [vmem:[%s3 + $0x1c8] sm:$0xff]
    %v3951 = vld [vmem:[%s3 + $0x1d0] sm:$0xff]
    %v3952 = vld [vmem:[%s3 + $0x1d8] sm:$0xff]
    %v3953 = vld [vmem:[%s3 + $0x1e0] sm:$0xff]
    %v3954 = vld [vmem:[%s3 + $0x1e8] sm:$0xff]
    %v3955 = vld [vmem:[%s3 + $0x1f0] sm:$0xff]
    %v3956 = vld [vmem:[%s3 + $0x1f8] sm:$0xff]
    %v3957 = vld [vmem:[%s4] sm:$0x1]
    %v3959 = vlaneseq
    %v3960 = vshrl.u32 %v3959, 7
    %v3961 = vsub.s32 0, %v3960
    %v3962 = vrot.slane %v3957, %v3961
    %3964 = vmatprep.subr.mxu0 0.0
    %3965 = vmatpush1.msra.mxu0 %v3908
    %3966 = vmatprep.subr.mxu0 0.0
    %3967 = vmatpush1.msra.mxu0 %v3907
    %3968 = vmatprep.subr.mxu0 0.0
    %3969 = vmatpush1.msra.mxu0 %v3906
    %3970 = vmatprep.subr.mxu0 0.0
    %3971 = vmatpush1.msra.mxu0 %v3905
    %3972 = vmatprep.subr.mxu0 0.0
    %3973 = vmatpush1.msra.mxu0 %v3904
    %3974 = vmatprep.subr.mxu0 0.0
    %3975 = vmatpush1.msra.mxu0 %v3903
    %3976 = vmatprep.subr.mxu0 0.0
    %3977 = vmatpush1.msra.mxu0 %v3902
    %3978 = vmatprep.subr.mxu0 0.0
    %3979 = vmatpush1.msra.mxu0 %v3901
    %3980 = vmatprep.subr.mxu0 0.0
    %3981 = vmatpush1.msra.mxu0 %v3900
    %3982 = vmatprep.subr.mxu0 0.0
    %3983 = vmatpush1.msra.mxu0 %v3899
    %3984 = vmatprep.subr.mxu0 0.0
    %3985 = vmatpush1.msra.mxu0 %v3898
    %3986 = vmatprep.subr.mxu0 0.0
    %3987 = vmatpush1.msra.mxu0 %v3897
    %3988 = vmatprep.subr.mxu0 0.0
    %3989 = vmatpush1.msra.mxu0 %v3896
    %3990 = vmatprep.subr.mxu0 0.0
    %3991 = vmatpush1.msra.mxu0 %v3895
    %3992 = vmatprep.subr.mxu0 0.0
    %3993 = vmatpush1.msra.mxu0 %v3894
    %3994 = vmatprep.subr.mxu0 0.0
    %3995 = vmatpush1.msra.mxu0 %v3893
    %3996 = vmatprep.subr.mxu0 0.0
    %3997 = vmatpush2.msra.mxu0 %v3924
    %3998 = vmatprep.subr.mxu0 0.0
    %3999 = vmatpush2.msra.mxu0 %v3923
    %4000 = vmatprep.subr.mxu0 0.0
    %4001 = vmatpush2.msra.mxu0 %v3922
    %4002 = vmatprep.subr.mxu0 0.0
    %4003 = vmatpush2.msra.mxu0 %v3921
    %4004 = vmatprep.subr.mxu0 0.0
    %4005 = vmatpush2.msra.mxu0 %v3920
    %4006 = vmatprep.subr.mxu0 0.0
    %4007 = vmatpush2.msra.mxu0 %v3919
    %4008 = vmatprep.subr.mxu0 0.0
    %4009 = vmatpush2.msra.mxu0 %v3918
    %4010 = vmatprep.subr.mxu0 0.0
    %4011 = vmatpush2.msra.mxu0 %v3917
    %4012 = vmatprep.subr.mxu0 0.0
    %4013 = vmatpush2.msra.mxu0 %v3916
    %4014 = vmatprep.subr.mxu0 0.0
    %4015 = vmatpush2.msra.mxu0 %v3915
    %4016 = vmatprep.subr.mxu0 0.0
    %4017 = vmatpush2.msra.mxu0 %v3914
    %4018 = vmatprep.subr.mxu0 0.0
    %4019 = vmatpush2.msra.mxu0 %v3913
    %4020 = vmatprep.subr.mxu0 0.0
    %4021 = vmatpush2.msra.mxu0 %v3912
    %4022 = vmatprep.subr.mxu0 0.0
    %4023 = vmatpush2.msra.mxu0 %v3911
    %4024 = vmatprep.subr.mxu0 0.0
    %4025 = vmatpush2.msra.mxu0 %v3910
    %4026 = vmatprep.subr.mxu0 0.0
    %4027 = vmatpush2.msra.mxu0 %v3909
    %4028 = vmatprep.mubr.f32.mxu0 %v3890
    %4029 = vmatmul.mubr.f32.gmra.mxu0 %v3889
    %v4030 = vpop.f32.mrf.mxu0
    %v4031 = vadd.f32 %v3962, %v4030
    %v4032 = vpop.f32.mrf.mxu0
    %4033 = vdwg.mxu0
    %4034 = vmatprep.subr.mxu0 0.0
    %4035 = vmatpush1.msra.mxu0 %v3940
    %4036 = vmatprep.subr.mxu0 0.0
    %4037 = vmatpush1.msra.mxu0 %v3939
    %4038 = vmatprep.subr.mxu0 0.0
    %4039 = vmatpush1.msra.mxu0 %v3938
    %4040 = vmatprep.subr.mxu0 0.0
    %4041 = vmatpush1.msra.mxu0 %v3937
    %4042 = vmatprep.subr.mxu0 0.0
    %4043 = vmatpush1.msra.mxu0 %v3936
    %4044 = vmatprep.subr.mxu0 0.0
    %4045 = vmatpush1.msra.mxu0 %v3935
    %4046 = vmatprep.subr.mxu0 0.0
    %4047 = vmatpush1.msra.mxu0 %v3934
    %4048 = vmatprep.subr.mxu0 0.0
    %4049 = vmatpush1.msra.mxu0 %v3933
    %4050 = vmatprep.subr.mxu0 0.0
    %4051 = vmatpush1.msra.mxu0 %v3932
    %4052 = vmatprep.subr.mxu0 0.0
    %4053 = vmatpush1.msra.mxu0 %v3931
    %4054 = vmatprep.subr.mxu0 0.0
    %4055 = vmatpush1.msra.mxu0 %v3930
    %4056 = vmatprep.subr.mxu0 0.0
    %4057 = vmatpush1.msra.mxu0 %v3929
    %4058 = vmatprep.subr.mxu0 0.0
    %4059 = vmatpush1.msra.mxu0 %v3928
    %4060 = vmatprep.subr.mxu0 0.0
    %4061 = vmatpush1.msra.mxu0 %v3927
    %4062 = vmatprep.subr.mxu0 0.0
    %4063 = vmatpush1.msra.mxu0 %v3926
    %4064 = vmatprep.subr.mxu0 0.0
    %4065 = vmatpush1.msra.mxu0 %v3925
    %4066 = vmatprep.subr.mxu0 0.0
    %4067 = vmatpush2.msra.mxu0 %v3956
    %4068 = vmatprep.subr.mxu0 0.0
    %4069 = vmatpush2.msra.mxu0 %v3955
    %4070 = vmatprep.subr.mxu0 0.0
    %4071 = vmatpush2.msra.mxu0 %v3954
    %4072 = vmatprep.subr.mxu0 0.0
    %4073 = vmatpush2.msra.mxu0 %v3953
    %4074 = vmatprep.subr.mxu0 0.0
    %4075 = vmatpush2.msra.mxu0 %v3952
    %4076 = vmatprep.subr.mxu0 0.0
    %4077 = vmatpush2.msra.mxu0 %v3951
    %4078 = vmatprep.subr.mxu0 0.0
    %4079 = vmatpush2.msra.mxu0 %v3950
    %4080 = vmatprep.subr.mxu0 0.0
    %4081 = vmatpush2.msra.mxu0 %v3949
    %4082 = vmatprep.subr.mxu0 0.0
    %4083 = vmatpush2.msra.mxu0 %v3948
    %4084 = vmatprep.subr.mxu0 0.0
    %4085 = vmatpush2.msra.mxu0 %v3947
    %4086 = vmatprep.subr.mxu0 0.0
    %4087 = vmatpush2.msra.mxu0 %v3946
    %4088 = vmatprep.subr.mxu0 0.0
    %4089 = vmatpush2.msra.mxu0 %v3945
    %4090 = vmatprep.subr.mxu0 0.0
    %4091 = vmatpush2.msra.mxu0 %v3944
    %4092 = vmatprep.subr.mxu0 0.0
    %4093 = vmatpush2.msra.mxu0 %v3943
    %4094 = vmatprep.subr.mxu0 0.0
    %4095 = vmatpush2.msra.mxu0 %v3942
    %4096 = vmatprep.subr.mxu0 0.0
    %4097 = vmatpush2.msra.mxu0 %v3941
    %4098 = vmatprep.mubr.f32.mxu0 %v3892
    %4099 = vmatmul.mubr.f32.gmra.mxu0 %v3891
    %v4100 = vpop.f32.mrf.mxu0
    %v4101 = vadd.f32 %v4031, %v4100
    %v4102 = vpop.f32.mrf.mxu0
    %4103 = vdwg.mxu0
    %vm4104 = vcmask 17408
    %v4105 = vsel %vm4104, %v4101, -inf
    %4106 = vmax.xlane.f32.xlu0 %v4105
    %v4107 = vpop.xlane.xlu0 %4106
    %v4108 = vsub.f32 %v4101, %v4107
    %v4109 = vmul.f32 %v4108, 1.442695
    %v4110 = vpow.pop %v4109
    %v4111 = vsel %vm4104, %v4110, 0.0
    %4112 = vadd.xlane.f32.xlu0 %v4111
    %v4113 = vpop.xlane.xlu0 %4112
    %v4114 = vrcp.pop %v4113
    %v4115 = vmul.f32 %v4110, %v4114
    %4116 = vst.msk [vmem:[#allocation2] sm:$0x3] %vm4104, %v4115
    // Predicated region
    $region22: #{forward.3} parent=1 // pred_check
      _
    $region23: #{forward.3} parent=1 // pred_check_branch
      %4118 = sbr.rel (0) target = $region25
    $region24: #{forward.3} parent=1 // pred_region
      %s4120 = ssub.s32 32, 32
      %4121 = vsyncadd [#allocation3], %s4120
      %s4123 = sshll.u32 [#allocation2], 4
      %s4124 = int_to_ptr.vmem [resolvable:$true] %s4123
      %4126 = dma.vmem_to_hbm [thread:$0]  %s4124, 32, %s5, [#allocation3]
    $region25: #{forward.3} parent=1 // pred_fallthru
      _
    // Predicated region
    $region26: #{forward.3} parent=1 // pred_check
      _
    $region27: #{forward.3} parent=1 // pred_check_branch
      %4128 = sbr.rel (0) target = $region29
    $region28: #{forward.3} parent=1 // pred_region
      %4129 = dma.done [#allocation3], 32
    $region29: #{forward.3} parent=1 // pred_fallthru
      _
    %4130 = vsyncpa [#allocation3], 1

// kernel: forward.2
$region0: #{forward.2}
  #allocation0 [shape = 'u32[]', space=smem, size = 0x4, offset = 0x4, fixed_abs, tag = 'smem constant byte address 0x4 - core index']
  #allocation1 [shape = 'u32[144,128]{1,0:T(1,128)}', space=vmem, size = 0x12000, scoped, tag = 'internal scratch']
  %s0 = inlined_call_operand.vmem [shape: bf16[2,3968], index: 0, kind: input, shape index: {}]
  %s1 = inlined_call_operand.hbm [shape: bf16[4,3968,512], index: 1, kind: input, shape index: {}]
  %s2 = inlined_call_operand.hbm [shape: f32[1,2048], index: 2, kind: input, shape index: {}]
  %s3 = inlined_call_operand.vmem [shape: bf16[2,2048], index: 3, kind: output, shape index: {}]
  %s4 = sld [smem:[#allocation0]]
  $region53: #{forward.2} parent=0
    _
  %s6 = ssub.s32 1, %s4
  %s7 = scalar_select 0, %s6, %s4
  $region1: #{forward.2} parent=0
    #allocation2 [shape = 'u8[8126464]{0}', space=vmem, size = 0x7c0000, scoped, tag = 'input window, operand 1']
    #allocation3 [shape = 's32[2]{0}', space=sflag, size = 0x8, scoped, tag = 'scoped memory for forward.2']
    #allocation4 [shape = 'u8[4096]{0}', space=vmem, size = 0x1000, scoped, tag = 'input window, operand 2']
    #allocation5 [shape = 's32[2]{0}', space=sflag, size = 0x8, scoped, tag = 'scoped memory for forward.2']
    %8 = vsyncpa [#allocation3], 0
    %s9 = scalar_lea.sflag [#allocation3], 1
    %10 = vsyncpa %s9, 0
    %11 = vsyncpa [#allocation5], 0
    %s12 = scalar_lea.sflag [#allocation5], 1
    %13 = vsyncpa %s12, 0
    loop: start=0, step=1, limit=6
    $region2: #{forward.2} parent=1 // loop_pre_header
      _
    $region3: #{forward.2} parent=1 // loop_header
      %s15 = sphi 0, %s19
      %p16 = scmp.ge.s32.totalorder %s15, 6
      %s23 = sphi 0, %s23
      %s25 = sphi 0, %s23
      %s26 = sphi 0, %s25
      %s40 = sphi 0, %s26
      %s46 = sphi 0, %s48
      %s49 = sphi 0, %s46
      %s50 = sphi 0, %s49
      %s66 = sphi 0, %s50
      %s72 = sphi 0, %s74
      %s75 = sphi 0, %s72
      %s76 = sphi 0, %s75
      %s92 = sphi 0, %s76
      %s98 = sphi 0, %s100
      %s101 = sphi 0, %s98
      %s102 = sphi 0, %s101
      %s118 = sphi 0, %s102
    $region4: #{forward.2} parent=1 // loop_header_branch
      %18 = sbr.rel (%p16) target = $region8
    $region5: #{forward.2} parent=1 // loop_body
      %s20 = ssub.s32 %s15, 1
      %s21 = ssub.s32 %s15, 2
      %s22 = sadd.s32 %s15, 1
      %s24 = sadd.s32 %s23, 1
      %p27 = scmp.eq.s32.totalorder %s15, 3
      %p28 = scmp.ne.s32.totalorder %s23, %s25
      %p29 = scmp.eq.s32.totalorder %s15, 0
      %p30 = por %p28, %p29
      %p31 = scmp.ne.s32.totalorder %s23, %s25
      %p32 = scmp.eq.s32.totalorder %s20, 3
      %p33 = por %p31, %p32
      %p34 = scmp.ne.s32.totalorder %s25, %s26
      %p35 = scmp.eq.s32.totalorder %s20, 0
      %p36 = por %p34, %p35
      %p37 = scmp.ne.s32.totalorder %s25, %s26
      %p38 = scmp.eq.s32.totalorder %s21, 3
      %p39 = por %p37, %p38
      %p41 = scmp.ne.s32.totalorder %s26, %s40
      %p42 = scmp.eq.s32.totalorder %s21, 0
      %p43 = por %p41, %p42
      %s44 = ssub.s32 %s15, %s22
      %p45 = scmp.eq.s32.totalorder %s44, 0
      %s47 = sadd.s32 %s46, 1
      %s48 = scalar_select %p45, %s46, %s47
      %p51 = pneg %p45
      %p52 = scmp.eq.s32.totalorder %s15, 3
      %p53 = por %p51, %p52
      %p54 = scmp.ne.s32.totalorder %s46, %s49
      %p55 = scmp.eq.s32.totalorder %s15, 0
      %p56 = por %p54, %p55
      %p57 = scmp.ne.s32.totalorder %s46, %s49
      %p58 = scmp.eq.s32.totalorder %s20, 3
      %p59 = por %p57, %p58
      %p60 = scmp.ne.s32.totalorder %s49, %s50
      %p61 = scmp.eq.s32.totalorder %s20, 0
      %p62 = por %p60, %p61
      %p63 = scmp.ne.s32.totalorder %s49, %s50
      %p64 = scmp.eq.s32.totalorder %s21, 3
      %p65 = por %p63, %p64
      %p67 = scmp.ne.s32.totalorder %s50, %s66
      %p68 = scmp.eq.s32.totalorder %s21, 0
      %p69 = por %p67, %p68
      %s70 = ssub.s32 %s15, %s22
      %p71 = scmp.eq.s32.totalorder %s70, 0
      %s73 = sadd.s32 %s72, 1
      %s74 = scalar_select %p71, %s72, %s73
      %p77 = pneg %p71
      %p78 = scmp.eq.s32.totalorder %s15, 3
      %p79 = por %p77, %p78
      %p80 = scmp.ne.s32.totalorder %s72, %s75
      %p81 = scmp.eq.s32.totalorder %s15, 0
      %p82 = por %p80, %p81
      %p83 = scmp.ne.s32.totalorder %s72, %s75
      %p84 = scmp.eq.s32.totalorder %s20, 3
      %p85 = por %p83, %p84
      %p86 = scmp.ne.s32.totalorder %s75, %s76
      %p87 = scmp.eq.s32.totalorder %s20, 0
      %p88 = por %p86, %p87
      %p89 = scmp.ne.s32.totalorder %s75, %s76
      %p90 = scmp.eq.s32.totalorder %s21, 3
      %p91 = por %p89, %p90
      %p93 = scmp.ne.s32.totalorder %s76, %s92
      %p94 = scmp.eq.s32.totalorder %s21, 0
      %p95 = por %p93, %p94
      %s96 = ssub.s32 %s15, %s22
      %p97 = scmp.eq.s32.totalorder %s96, 0
      %s99 = sadd.s32 %s98, 1
      %s100 = scalar_select %p97, %s98, %s99
      %p103 = pneg %p97
      %p104 = scmp.eq.s32.totalorder %s15, 3
      %p105 = por %p103, %p104
      %p106 = scmp.ne.s32.totalorder %s98, %s101
      %p107 = scmp.eq.s32.totalorder %s15, 0
      %p108 = por %p106, %p107
      %p109 = scmp.ne.s32.totalorder %s98, %s101
      %p110 = scmp.eq.s32.totalorder %s20, 3
      %p111 = por %p109, %p110
      %p112 = scmp.ne.s32.totalorder %s101, %s102
      %p113 = scmp.eq.s32.totalorder %s20, 0
      %p114 = por %p112, %p113
      %p115 = scmp.ne.s32.totalorder %s101, %s102
      %p116 = scmp.eq.s32.totalorder %s21, 3
      %p117 = por %p115, %p116
      %p119 = scmp.ne.s32.totalorder %s102, %s118
      %p120 = scmp.eq.s32.totalorder %s21, 0
      %p121 = por %p119, %p120
      %p122 = scmp.le.s32.totalorder 1, %s15
      %p123 = scmp.lt.s32.totalorder %s15, 5
      %p124 = pnand %p122, %p123
      %p125 = pneg %p124
      // Predicated region
      $region9: #{forward.2} parent=5 // pred_check
        _
      $region10: #{forward.2} parent=5 // pred_check_branch
        %127 = sbr.rel (%p124) target = $region12
      $region11: #{forward.2} parent=5 // pred_region
        %s128 = ssub.s32 %s15, 1
        // Predicated region
        $region13: #{forward.2} parent=11 // pred_check
          %p129 = pneg %p36
        $region14: #{forward.2} parent=11 // pred_check_branch
          %131 = sbr.rel (%p129) target = $region16
        $region15: #{forward.2} parent=11 // pred_region
          _
        $region16: #{forward.2} parent=11 // pred_fallthru
          _
      $region12: #{forward.2} parent=5 // pred_fallthru
        _
      %p132 = scmp.lt.s32.totalorder %s15, 4
      // Predicated region
      $region17: #{forward.2} parent=5 // pred_check
        %p133 = pneg %p132
      $region18: #{forward.2} parent=5 // pred_check_branch
        %135 = sbr.rel (%p133) target = $region20
      $region19: #{forward.2} parent=5 // pred_region
        // Predicated region
        $region21: #{forward.2} parent=19 // pred_check
          %p136 = pneg %p56
        $region22: #{forward.2} parent=19 // pred_check_branch
          %138 = sbr.rel (%p136) target = $region24
        $region23: #{forward.2} parent=19 // pred_region
          %s139 = sand.u32 %s46, 1
          %s140 = scalar_lea.sflag [#allocation3], %s139
          %s141 = sand.u32 %s46, 1
          %s142 = smul.addr %s141, 7936
          %s143 = scalar_lea.vmem [#allocation2], %s142
          %s145 = ssub.s32 126976, 126976
          %146 = vsyncadd %s140, %s145
          %s147 = smul.addr %s15, 1984
          %s148 = smul.addr %s147, 64
          %s149 = scalar_lea.hbm %s1, %s148
          %s150 = sshll.u32 %s143, 4
          %s151 = int_to_ptr.vmem [resolvable:$true] %s150
          %156 = dma.hbm_to_vmem [thread:$0]  %s149, 126976, %s151, %s140, 256, 256, 16
        $region24: #{forward.2} parent=19 // pred_fallthru
          _
        // Predicated region
        $region25: #{forward.2} parent=19 // pred_check
          %p157 = pneg %p82
        $region26: #{forward.2} parent=19 // pred_check_branch
          %159 = sbr.rel (%p157) target = $region28
        $region27: #{forward.2} parent=19 // pred_region
          %s160 = sand.u32 %s72, 1
          %s161 = scalar_lea.sflag [#allocation5], %s160
          %s162 = sand.u32 %s72, 1
          %s163 = smul.addr %s162, 4
          %s164 = scalar_lea.vmem [#allocation4], %s163
          %s165 = smul.u32 4, %s15
          %s167 = ssub.s32 64, 64
          %168 = vsyncadd %s161, %s167
          %s169 = smul.addr %s165, 16
          %s170 = scalar_lea.hbm %s2, %s169
          %s172 = sshll.u32 %s164, 4
          %s173 = int_to_ptr.vmem [resolvable:$true] %s172
          %175 = dma.hbm_to_vmem [thread:$0]  %s170, 64, %s173, %s161
        $region28: #{forward.2} parent=19 // pred_fallthru
          _
      $region20: #{forward.2} parent=5 // pred_fallthru
        _
      %p176 = scmp.le.s32.totalorder 1, %s15
      %p177 = scmp.lt.s32.totalorder %s15, 5
      %p178 = pnand %p176, %p177
      %p179 = pneg %p178
      // Predicated region
      $region29: #{forward.2} parent=5 // pred_check
        _
      $region30: #{forward.2} parent=5 // pred_check_branch
        %181 = sbr.rel (%p178) target = $region32
      $region31: #{forward.2} parent=5 // pred_region
        %s182 = ssub.s32 %s15, 1
        %s183 = sand.u32 %s49, 1
        %s184 = scalar_lea.sflag [#allocation3], %s183
        %s185 = sand.u32 %s49, 1
        %s186 = smul.addr %s185, 7936
        %s187 = scalar_lea.vmem [#allocation2], %s186
        // Predicated region
        $region33: #{forward.2} parent=31 // pred_check
          %p188 = pneg %p62
        $region34: #{forward.2} parent=31 // pred_check_branch
          %190 = sbr.rel (%p188) target = $region36
        $region35: #{forward.2} parent=31 // pred_region
          %191 = dma.done %s184, 126976
        $region36: #{forward.2} parent=31 // pred_fallthru
          _
        %s192 = sand.u32 %s75, 1
        %s193 = scalar_lea.sflag [#allocation5], %s192
        %s194 = sand.u32 %s75, 1
        %s195 = smul.addr %s194, 4
        %s196 = scalar_lea.vmem [#allocation4], %s195
        // Predicated region
        $region37: #{forward.2} parent=31 // pred_check
          %p197 = pneg %p88
        $region38: #{forward.2} parent=31 // pred_check_branch
          %199 = sbr.rel (%p197) target = $region40
        $region39: #{forward.2} parent=31 // pred_region
          %200 = dma.done %s193, 64
        $region40: #{forward.2} parent=31 // pred_fallthru
          _
        %p201 = pneg %p36
        %p202 = pneg %p33
        %s203 = sand.u32 %s49, 1
        %s204 = scalar_lea.sflag [#allocation3], %s203
        %s205 = sand.u32 %s49, 1
        %s206 = smul.addr %s205, 7936
        %s207 = scalar_lea.vmem [#allocation2], %s206
        %p208 = pneg %p62
        %p209 = pneg %p59
        %s210 = sand.u32 %s75, 1
        %s211 = scalar_lea.sflag [#allocation5], %s210
        %s212 = sand.u32 %s75, 1
        %s213 = smul.addr %s212, 4
        %s214 = scalar_lea.vmem [#allocation4], %s213
        %p215 = pneg %p88
        %p216 = pneg %p85
        %p217 = pneg %p114
        %p218 = pneg %p111
        %s219 = smul.u32 4, %s20
        %p220 = scmp.lt.s32.totalorder %s219, 15
        %s221 = scalar_select %p220, %s219, 15
        %s222 = scalar_lea.vmem %s3, %s221
        %s223 = smul.u32 4, %s20
        %s224 = smul.u32 4, %s20
        %p225 = scmp.lt.s32.totalorder %s224, 15
        %s226 = scalar_select %p225, %s224, 15
        %s227 = scalar_lea.vmem %s3, %s226
        %s228 = smul.u32 4, %s20
        %v230 = vld [vmem:[%s0] sm:$0xff]
        %v231 = vld [vmem:[%s0 + $0x8] sm:$0xff]
        %v232 = vld [vmem:[%s0 + $0x10] sm:$0xff]
        %v233 = vld [vmem:[%s0 + $0x18] sm:$0x7f]
        %v234 = vld [vmem:[%s187] sm:$0xff]
        %v235 = vld [vmem:[%s187 + $0x8] sm:$0xff]
        %v236 = vld [vmem:[%s187 + $0x10] sm:$0xff]
        %v237 = vld [vmem:[%s187 + $0x18] sm:$0xff]
        %v238 = vld [vmem:[%s187 + $0x20] sm:$0xff]
        %v239 = vld [vmem:[%s187 + $0x28] sm:$0xff]
        %v240 = vld [vmem:[%s187 + $0x30] sm:$0xff]
        %v241 = vld [vmem:[%s187 + $0x38] sm:$0xff]
        %v242 = vld [vmem:[%s187 + $0x40] sm:$0xff]
        %v243 = vld [vmem:[%s187 + $0x48] sm:$0xff]
        %v244 = vld [vmem:[%s187 + $0x50] sm:$0xff]
        %v245 = vld [vmem:[%s187 + $0x58] sm:$0xff]
        %v246 = vld [vmem:[%s187 + $0x60] sm:$0xff]
        %v247 = vld [vmem:[%s187 + $0x68] sm:$0xff]
        %v248 = vld [vmem:[%s187 + $0x70] sm:$0xff]
        %v249 = vld [vmem:[%s187 + $0x78] sm:$0xff]
        %v250 = vld [vmem:[%s187 + $0x80] sm:$0xff]
        %v251 = vld [vmem:[%s187 + $0x88] sm:$0xff]
        %v252 = vld [vmem:[%s187 + $0x90] sm:$0xff]
        %v253 = vld [vmem:[%s187 + $0x98] sm:$0xff]
        %v254 = vld [vmem:[%s187 + $0xa0] sm:$0xff]
        %v255 = vld [vmem:[%s187 + $0xa8] sm:$0xff]
        %v256 = vld [vmem:[%s187 + $0xb0] sm:$0xff]
        %v257 = vld [vmem:[%s187 + $0xb8] sm:$0xff]
        %v258 = vld [vmem:[%s187 + $0xc0] sm:$0xff]
        %v259 = vld [vmem:[%s187 + $0xc8] sm:$0xff]
        %v260 = vld [vmem:[%s187 + $0xd0] sm:$0xff]
        %v261 = vld [vmem:[%s187 + $0xd8] sm:$0xff]
        %v262 = vld [vmem:[%s187 + $0xe0] sm:$0xff]
        %v263 = vld [vmem:[%s187 + $0xe8] sm:$0xff]
        %v264 = vld [vmem:[%s187 + $0xf0] sm:$0xff]
        %v265 = vld [vmem:[%s187 + $0xf8] sm:$0xff]
        %v266 = vld [vmem:[%s187 + $0x100] sm:$0xff]
        %v267 = vld [vmem:[%s187 + $0x108] sm:$0xff]
        %v268 = vld [vmem:[%s187 + $0x110] sm:$0xff]
        %v269 = vld [vmem:[%s187 + $0x118] sm:$0xff]
        %v270 = vld [vmem:[%s187 + $0x120] sm:$0xff]
        %v271 = vld [vmem:[%s187 + $0x128] sm:$0xff]
        %v272 = vld [vmem:[%s187 + $0x130] sm:$0xff]
        %v273 = vld [vmem:[%s187 + $0x138] sm:$0xff]
        %v274 = vld [vmem:[%s187 + $0x140] sm:$0xff]
        %v275 = vld [vmem:[%s187 + $0x148] sm:$0xff]
        %v276 = vld [vmem:[%s187 + $0x150] sm:$0xff]
        %v277 = vld [vmem:[%s187 + $0x158] sm:$0xff]
        %v278 = vld [vmem:[%s187 + $0x160] sm:$0xff]
        %v279 = vld [vmem:[%s187 + $0x168] sm:$0xff]
        %v280 = vld [vmem:[%s187 + $0x170] sm:$0xff]
        %v281 = vld [vmem:[%s187 + $0x178] sm:$0xff]
        %v282 = vld [vmem:[%s187 + $0x180] sm:$0xff]
        %v283 = vld [vmem:[%s187 + $0x188] sm:$0xff]
        %v284 = vld [vmem:[%s187 + $0x190] sm:$0xff]
        %v285 = vld [vmem:[%s187 + $0x198] sm:$0xff]
        %v286 = vld [vmem:[%s187 + $0x1a0] sm:$0xff]
        %v287 = vld [vmem:[%s187 + $0x1a8] sm:$0xff]
        %v288 = vld [vmem:[%s187 + $0x1b0] sm:$0xff]
        %v289 = vld [vmem:[%s187 + $0x1b8] sm:$0xff]
        %v290 = vld [vmem:[%s187 + $0x1c0] sm:$0xff]
        %v291 = vld [vmem:[%s187 + $0x1c8] sm:$0xff]
        %v292 = vld [vmem:[%s187 + $0x1d0] sm:$0xff]
        %v293 = vld [vmem:[%s187 + $0x1d8] sm:$0xff]
        %v294 = vld [vmem:[%s187 + $0x1e0] sm:$0xff]
        %v295 = vld [vmem:[%s187 + $0x1e8] sm:$0xff]
        %v296 = vld [vmem:[%s187 + $0x1f0] sm:$0xff]
        %v297 = vld [vmem:[%s187 + $0x1f8] sm:$0xff]
        %v298 = vld [vmem:[%s187 + $0x200] sm:$0xff]
        %v299 = vld [vmem:[%s187 + $0x208] sm:$0xff]
        %v300 = vld [vmem:[%s187 + $0x210] sm:$0xff]
        %v301 = vld [vmem:[%s187 + $0x218] sm:$0xff]
        %v302 = vld [vmem:[%s187 + $0x220] sm:$0xff]
        %v303 = vld [vmem:[%s187 + $0x228] sm:$0xff]
        %v304 = vld [vmem:[%s187 + $0x230] sm:$0xff]
        %v305 = vld [vmem:[%s187 + $0x238] sm:$0xff]
        %v306 = vld [vmem:[%s187 + $0x240] sm:$0xff]
        %v307 = vld [vmem:[%s187 + $0x248] sm:$0xff]
        %v308 = vld [vmem:[%s187 + $0x250] sm:$0xff]
        %v309 = vld [vmem:[%s187 + $0x258] sm:$0xff]
        %v310 = vld [vmem:[%s187 + $0x260] sm:$0xff]
        %v311 = vld [vmem:[%s187 + $0x268] sm:$0xff]
        %v312 = vld [vmem:[%s187 + $0x270] sm:$0xff]
        %v313 = vld [vmem:[%s187 + $0x278] sm:$0xff]
        %v314 = vld [vmem:[%s187 + $0x280] sm:$0xff]
        %v315 = vld [vmem:[%s187 + $0x288] sm:$0xff]
        %v316 = vld [vmem:[%s187 + $0x290] sm:$0xff]
        %v317 = vld [vmem:[%s187 + $0x298] sm:$0xff]
        %v318 = vld [vmem:[%s187 + $0x2a0] sm:$0xff]
        %v319 = vld [vmem:[%s187 + $0x2a8] sm:$0xff]
        %v320 = vld [vmem:[%s187 + $0x2b0] sm:$0xff]
        %v321 = vld [vmem:[%s187 + $0x2b8] sm:$0xff]
        %v322 = vld [vmem:[%s187 + $0x2c0] sm:$0xff]
        %v323 = vld [vmem:[%s187 + $0x2c8] sm:$0xff]
        %v324 = vld [vmem:[%s187 + $0x2d0] sm:$0xff]
        %v325 = vld [vmem:[%s187 + $0x2d8] sm:$0xff]
        %v326 = vld [vmem:[%s187 + $0x2e0] sm:$0xff]
        %v327 = vld [vmem:[%s187 + $0x2e8] sm:$0xff]
        %v328 = vld [vmem:[%s187 + $0x2f0] sm:$0xff]
        %v329 = vld [vmem:[%s187 + $0x2f8] sm:$0xff]
        %v330 = vld [vmem:[%s187 + $0x300] sm:$0xff]
        %v331 = vld [vmem:[%s187 + $0x308] sm:$0xff]
        %v332 = vld [vmem:[%s187 + $0x310] sm:$0xff]
        %v333 = vld [vmem:[%s187 + $0x318] sm:$0xff]
        %v334 = vld [vmem:[%s187 + $0x320] sm:$0xff]
        %v335 = vld [vmem:[%s187 + $0x328] sm:$0xff]
        %v336 = vld [vmem:[%s187 + $0x330] sm:$0xff]
        %v337 = vld [vmem:[%s187 + $0x338] sm:$0xff]
        %v338 = vld [vmem:[%s187 + $0x340] sm:$0xff]
        %v339 = vld [vmem:[%s187 + $0x348] sm:$0xff]
        %v340 = vld [vmem:[%s187 + $0x350] sm:$0xff]
        %v341 = vld [vmem:[%s187 + $0x358] sm:$0xff]
        %v342 = vld [vmem:[%s187 + $0x360] sm:$0xff]
        %v343 = vld [vmem:[%s187 + $0x368] sm:$0xff]
        %v344 = vld [vmem:[%s187 + $0x370] sm:$0xff]
        %v345 = vld [vmem:[%s187 + $0x378] sm:$0xff]
        %v346 = vld [vmem:[%s187 + $0x380] sm:$0xff]
        %v347 = vld [vmem:[%s187 + $0x388] sm:$0xff]
        %v348 = vld [vmem:[%s187 + $0x390] sm:$0xff]
        %v349 = vld [vmem:[%s187 + $0x398] sm:$0xff]
        %v350 = vld [vmem:[%s187 + $0x3a0] sm:$0xff]
        %v351 = vld [vmem:[%s187 + $0x3a8] sm:$0xff]
        %v352 = vld [vmem:[%s187 + $0x3b0] sm:$0xff]
        %v353 = vld [vmem:[%s187 + $0x3b8] sm:$0xff]
        %v354 = vld [vmem:[%s187 + $0x3c0] sm:$0xff]
        %v355 = vld [vmem:[%s187 + $0x3c8] sm:$0xff]
        %v356 = vld [vmem:[%s187 + $0x3d0] sm:$0xff]
        %v357 = vld [vmem:[%s187 + $0x3d8] sm:$0xff]
        %v358 = vld [vmem:[%s187 + $0x3e0] sm:$0xff]
        %v359 = vld [vmem:[%s187 + $0x3e8] sm:$0xff]
        %v360 = vld [vmem:[%s187 + $0x3f0] sm:$0xff]
        %v361 = vld [vmem:[%s187 + $0x3f8] sm:$0xff]
        %v362 = vld [vmem:[%s187 + $0x400] sm:$0xff]
        %v363 = vld [vmem:[%s187 + $0x408] sm:$0xff]
        %v364 = vld [vmem:[%s187 + $0x410] sm:$0xff]
        %v365 = vld [vmem:[%s187 + $0x418] sm:$0xff]
        %v366 = vld [vmem:[%s187 + $0x420] sm:$0xff]
        %v367 = vld [vmem:[%s187 + $0x428] sm:$0xff]
        %v368 = vld [vmem:[%s187 + $0x430] sm:$0xff]
        %v369 = vld [vmem:[%s187 + $0x438] sm:$0xff]
        %v370 = vld [vmem:[%s187 + $0x440] sm:$0xff]
        %v371 = vld [vmem:[%s187 + $0x448] sm:$0xff]
        %v372 = vld [vmem:[%s187 + $0x450] sm:$0xff]
        %v373 = vld [vmem:[%s187 + $0x458] sm:$0xff]
        %v374 = vld [vmem:[%s187 + $0x460] sm:$0xff]
        %v375 = vld [vmem:[%s187 + $0x468] sm:$0xff]
        %v376 = vld [vmem:[%s187 + $0x470] sm:$0xff]
        %v377 = vld [vmem:[%s187 + $0x478] sm:$0xff]
        %v378 = vld [vmem:[%s187 + $0x480] sm:$0xff]
        %v379 = vld [vmem:[%s187 + $0x488] sm:$0xff]
        %v380 = vld [vmem:[%s187 + $0x490] sm:$0xff]
        %v381 = vld [vmem:[%s187 + $0x498] sm:$0xff]
        %v382 = vld [vmem:[%s187 + $0x4a0] sm:$0xff]
        %v383 = vld [vmem:[%s187 + $0x4a8] sm:$0xff]
        %v384 = vld [vmem:[%s187 + $0x4b0] sm:$0xff]
        %v385 = vld [vmem:[%s187 + $0x4b8] sm:$0xff]
        %v386 = vld [vmem:[%s187 + $0x4c0] sm:$0xff]
        %v387 = vld [vmem:[%s187 + $0x4c8] sm:$0xff]
        %v388 = vld [vmem:[%s187 + $0x4d0] sm:$0xff]
        %v389 = vld [vmem:[%s187 + $0x4d8] sm:$0xff]
        %v390 = vld [vmem:[%s187 + $0x4e0] sm:$0xff]
        %v391 = vld [vmem:[%s187 + $0x4e8] sm:$0xff]
        %v392 = vld [vmem:[%s187 + $0x4f0] sm:$0xff]
        %v393 = vld [vmem:[%s187 + $0x4f8] sm:$0xff]
        %v394 = vld [vmem:[%s187 + $0x500] sm:$0xff]
        %v395 = vld [vmem:[%s187 + $0x508] sm:$0xff]
        %v396 = vld [vmem:[%s187 + $0x510] sm:$0xff]
        %v397 = vld [vmem:[%s187 + $0x518] sm:$0xff]
        %v398 = vld [vmem:[%s187 + $0x520] sm:$0xff]
        %v399 = vld [vmem:[%s187 + $0x528] sm:$0xff]
        %v400 = vld [vmem:[%s187 + $0x530] sm:$0xff]
        %v401 = vld [vmem:[%s187 + $0x538] sm:$0xff]
        %v402 = vld [vmem:[%s187 + $0x540] sm:$0xff]
        %v403 = vld [vmem:[%s187 + $0x548] sm:$0xff]
        %v404 = vld [vmem:[%s187 + $0x550] sm:$0xff]
        %v405 = vld [vmem:[%s187 + $0x558] sm:$0xff]
        %v406 = vld [vmem:[%s187 + $0x560] sm:$0xff]
        %v407 = vld [vmem:[%s187 + $0x568] sm:$0xff]
        %v408 = vld [vmem:[%s187 + $0x570] sm:$0xff]
        %v409 = vld [vmem:[%s187 + $0x578] sm:$0xff]
        %v410 = vld [vmem:[%s187 + $0x580] sm:$0xff]
        %v411 = vld [vmem:[%s187 + $0x588] sm:$0xff]
        %v412 = vld [vmem:[%s187 + $0x590] sm:$0xff]
        %v413 = vld [vmem:[%s187 + $0x598] sm:$0xff]
        %v414 = vld [vmem:[%s187 + $0x5a0] sm:$0xff]
        %v415 = vld [vmem:[%s187 + $0x5a8] sm:$0xff]
        %v416 = vld [vmem:[%s187 + $0x5b0] sm:$0xff]
        %v417 = vld [vmem:[%s187 + $0x5b8] sm:$0xff]
        %v418 = vld [vmem:[%s187 + $0x5c0] sm:$0xff]
        %v419 = vld [vmem:[%s187 + $0x5c8] sm:$0xff]
        %v420 = vld [vmem:[%s187 + $0x5d0] sm:$0xff]
        %v421 = vld [vmem:[%s187 + $0x5d8] sm:$0xff]
        %v422 = vld [vmem:[%s187 + $0x5e0] sm:$0xff]
        %v423 = vld [vmem:[%s187 + $0x5e8] sm:$0xff]
        %v424 = vld [vmem:[%s187 + $0x5f0] sm:$0xff]
        %v425 = vld [vmem:[%s187 + $0x5f8] sm:$0xff]
        %v426 = vld [vmem:[%s187 + $0x600] sm:$0xff]
        %v427 = vld [vmem:[%s187 + $0x608] sm:$0xff]
        %v428 = vld [vmem:[%s187 + $0x610] sm:$0xff]
        %v429 = vld [vmem:[%s187 + $0x618] sm:$0xff]
        %v430 = vld [vmem:[%s187 + $0x620] sm:$0xff]
        %v431 = vld [vmem:[%s187 + $0x628] sm:$0xff]
        %v432 = vld [vmem:[%s187 + $0x630] sm:$0xff]
        %v433 = vld [vmem:[%s187 + $0x638] sm:$0xff]
        %v434 = vld [vmem:[%s187 + $0x640] sm:$0xff]
        %v435 = vld [vmem:[%s187 + $0x648] sm:$0xff]
        %v436 = vld [vmem:[%s187 + $0x650] sm:$0xff]
        %v437 = vld [vmem:[%s187 + $0x658] sm:$0xff]
        %v438 = vld [vmem:[%s187 + $0x660] sm:$0xff]
        %v439 = vld [vmem:[%s187 + $0x668] sm:$0xff]
        %v440 = vld [vmem:[%s187 + $0x670] sm:$0xff]
        %v441 = vld [vmem:[%s187 + $0x678] sm:$0xff]
        %v442 = vld [vmem:[%s187 + $0x680] sm:$0xff]
        %v443 = vld [vmem:[%s187 + $0x688] sm:$0xff]
        %v444 = vld [vmem:[%s187 + $0x690] sm:$0xff]
        %v445 = vld [vmem:[%s187 + $0x698] sm:$0xff]
        %v446 = vld [vmem:[%s187 + $0x6a0] sm:$0xff]
        %v447 = vld [vmem:[%s187 + $0x6a8] sm:$0xff]
        %v448 = vld [vmem:[%s187 + $0x6b0] sm:$0xff]
        %v449 = vld [vmem:[%s187 + $0x6b8] sm:$0xff]
        %v450 = vld [vmem:[%s187 + $0x6c0] sm:$0xff]
        %v451 = vld [vmem:[%s187 + $0x6c8] sm:$0xff]
        %v452 = vld [vmem:[%s187 + $0x6d0] sm:$0xff]
        %v453 = vld [vmem:[%s187 + $0x6d8] sm:$0xff]
        %v454 = vld [vmem:[%s187 + $0x6e0] sm:$0xff]
        %v455 = vld [vmem:[%s187 + $0x6e8] sm:$0xff]
        %v456 = vld [vmem:[%s187 + $0x6f0] sm:$0xff]
        %v457 = vld [vmem:[%s187 + $0x6f8] sm:$0xff]
        %v458 = vld [vmem:[%s187 + $0x700] sm:$0xff]
        %v459 = vld [vmem:[%s187 + $0x708] sm:$0xff]
        %v460 = vld [vmem:[%s187 + $0x710] sm:$0xff]
        %v461 = vld [vmem:[%s187 + $0x718] sm:$0xff]
        %v462 = vld [vmem:[%s187 + $0x720] sm:$0xff]
        %v463 = vld [vmem:[%s187 + $0x728] sm:$0xff]
        %v464 = vld [vmem:[%s187 + $0x730] sm:$0xff]
        %v465 = vld [vmem:[%s187 + $0x738] sm:$0xff]
        %v466 = vld [vmem:[%s187 + $0x740] sm:$0xff]
        %v467 = vld [vmem:[%s187 + $0x748] sm:$0xff]
        %v468 = vld [vmem:[%s187 + $0x750] sm:$0xff]
        %v469 = vld [vmem:[%s187 + $0x758] sm:$0xff]
        %v470 = vld [vmem:[%s187 + $0x760] sm:$0xff]
        %v471 = vld [vmem:[%s187 + $0x768] sm:$0xff]
        %v472 = vld [vmem:[%s187 + $0x770] sm:$0xff]
        %v473 = vld [vmem:[%s187 + $0x778] sm:$0xff]
        %v474 = vld [vmem:[%s187 + $0x780] sm:$0xff]
        %v475 = vld [vmem:[%s187 + $0x788] sm:$0xff]
        %v476 = vld [vmem:[%s187 + $0x790] sm:$0xff]
        %v477 = vld [vmem:[%s187 + $0x798] sm:$0xff]
        %v478 = vld [vmem:[%s187 + $0x7a0] sm:$0xff]
        %v479 = vld [vmem:[%s187 + $0x7a8] sm:$0xff]
        %v480 = vld [vmem:[%s187 + $0x7b0] sm:$0xff]
        %v481 = vld [vmem:[%s187 + $0x7b8] sm:$0xff]
        %v482 = vld [vmem:[%s187 + $0x7c0] sm:$0xff]
        %v483 = vld [vmem:[%s187 + $0x7c8] sm:$0xff]
        %v484 = vld [vmem:[%s187 + $0x7d0] sm:$0xff]
        %v485 = vld [vmem:[%s187 + $0x7d8] sm:$0xff]
        %v486 = vld [vmem:[%s187 + $0x7e0] sm:$0xff]
        %v487 = vld [vmem:[%s187 + $0x7e8] sm:$0xff]
        %v488 = vld [vmem:[%s187 + $0x7f0] sm:$0xff]
        %v489 = vld [vmem:[%s187 + $0x7f8] sm:$0xff]
        %v490 = vld [vmem:[%s187 + $0x800] sm:$0xff]
        %v491 = vld [vmem:[%s187 + $0x808] sm:$0xff]
        %v492 = vld [vmem:[%s187 + $0x810] sm:$0xff]
        %v493 = vld [vmem:[%s187 + $0x818] sm:$0xff]
        %v494 = vld [vmem:[%s187 + $0x820] sm:$0xff]
        %v495 = vld [vmem:[%s187 + $0x828] sm:$0xff]
        %v496 = vld [vmem:[%s187 + $0x830] sm:$0xff]
        %v497 = vld [vmem:[%s187 + $0x838] sm:$0xff]
        %v498 = vld [vmem:[%s187 + $0x840] sm:$0xff]
        %v499 = vld [vmem:[%s187 + $0x848] sm:$0xff]
        %v500 = vld [vmem:[%s187 + $0x850] sm:$0xff]
        %v501 = vld [vmem:[%s187 + $0x858] sm:$0xff]
        %v502 = vld [vmem:[%s187 + $0x860] sm:$0xff]
        %v503 = vld [vmem:[%s187 + $0x868] sm:$0xff]
        %v504 = vld [vmem:[%s187 + $0x870] sm:$0xff]
        %v505 = vld [vmem:[%s187 + $0x878] sm:$0xff]
        %v506 = vld [vmem:[%s187 + $0x880] sm:$0xff]
        %v507 = vld [vmem:[%s187 + $0x888] sm:$0xff]
        %v508 = vld [vmem:[%s187 + $0x890] sm:$0xff]
        %v509 = vld [vmem:[%s187 + $0x898] sm:$0xff]
        %v510 = vld [vmem:[%s187 + $0x8a0] sm:$0xff]
        %v511 = vld [vmem:[%s187 + $0x8a8] sm:$0xff]
        %v512 = vld [vmem:[%s187 + $0x8b0] sm:$0xff]
        %v513 = vld [vmem:[%s187 + $0x8b8] sm:$0xff]
        %v514 = vld [vmem:[%s187 + $0x8c0] sm:$0xff]
        %v515 = vld [vmem:[%s187 + $0x8c8] sm:$0xff]
        %v516 = vld [vmem:[%s187 + $0x8d0] sm:$0xff]
        %v517 = vld [vmem:[%s187 + $0x8d8] sm:$0xff]
        %v518 = vld [vmem:[%s187 + $0x8e0] sm:$0xff]
        %v519 = vld [vmem:[%s187 + $0x8e8] sm:$0xff]
        %v520 = vld [vmem:[%s187 + $0x8f0] sm:$0xff]
        %v521 = vld [vmem:[%s187 + $0x8f8] sm:$0xff]
        %v522 = vld [vmem:[%s187 + $0x900] sm:$0xff]
        %v523 = vld [vmem:[%s187 + $0x908] sm:$0xff]
        %v524 = vld [vmem:[%s187 + $0x910] sm:$0xff]
        %v525 = vld [vmem:[%s187 + $0x918] sm:$0xff]
        %v526 = vld [vmem:[%s187 + $0x920] sm:$0xff]
        %v527 = vld [vmem:[%s187 + $0x928] sm:$0xff]
        %v528 = vld [vmem:[%s187 + $0x930] sm:$0xff]
        %v529 = vld [vmem:[%s187 + $0x938] sm:$0xff]
        %v530 = vld [vmem:[%s187 + $0x940] sm:$0xff]
        %v531 = vld [vmem:[%s187 + $0x948] sm:$0xff]
        %v532 = vld [vmem:[%s187 + $0x950] sm:$0xff]
        %v533 = vld [vmem:[%s187 + $0x958] sm:$0xff]
        %v534 = vld [vmem:[%s187 + $0x960] sm:$0xff]
        %v535 = vld [vmem:[%s187 + $0x968] sm:$0xff]
        %v536 = vld [vmem:[%s187 + $0x970] sm:$0xff]
        %v537 = vld [vmem:[%s187 + $0x978] sm:$0xff]
        %v538 = vld [vmem:[%s187 + $0x980] sm:$0xff]
        %v539 = vld [vmem:[%s187 + $0x988] sm:$0xff]
        %v540 = vld [vmem:[%s187 + $0x990] sm:$0xff]
        %v541 = vld [vmem:[%s187 + $0x998] sm:$0xff]
        %v542 = vld [vmem:[%s187 + $0x9a0] sm:$0xff]
        %v543 = vld [vmem:[%s187 + $0x9a8] sm:$0xff]
        %v544 = vld [vmem:[%s187 + $0x9b0] sm:$0xff]
        %v545 = vld [vmem:[%s187 + $0x9b8] sm:$0xff]
        %v546 = vld [vmem:[%s187 + $0x9c0] sm:$0xff]
        %v547 = vld [vmem:[%s187 + $0x9c8] sm:$0xff]
        %v548 = vld [vmem:[%s187 + $0x9d0] sm:$0xff]
        %v549 = vld [vmem:[%s187 + $0x9d8] sm:$0xff]
        %v550 = vld [vmem:[%s187 + $0x9e0] sm:$0xff]
        %v551 = vld [vmem:[%s187 + $0x9e8] sm:$0xff]
        %v552 = vld [vmem:[%s187 + $0x9f0] sm:$0xff]
        %v553 = vld [vmem:[%s187 + $0x9f8] sm:$0xff]
        %v554 = vld [vmem:[%s187 + $0xa00] sm:$0xff]
        %v555 = vld [vmem:[%s187 + $0xa08] sm:$0xff]
        %v556 = vld [vmem:[%s187 + $0xa10] sm:$0xff]
        %v557 = vld [vmem:[%s187 + $0xa18] sm:$0xff]
        %v558 = vld [vmem:[%s187 + $0xa20] sm:$0xff]
        %v559 = vld [vmem:[%s187 + $0xa28] sm:$0xff]
        %v560 = vld [vmem:[%s187 + $0xa30] sm:$0xff]
        %v561 = vld [vmem:[%s187 + $0xa38] sm:$0xff]
        %v562 = vld [vmem:[%s187 + $0xa40] sm:$0xff]
        %v563 = vld [vmem:[%s187 + $0xa48] sm:$0xff]
        %v564 = vld [vmem:[%s187 + $0xa50] sm:$0xff]
        %v565 = vld [vmem:[%s187 + $0xa58] sm:$0xff]
        %v566 = vld [vmem:[%s187 + $0xa60] sm:$0xff]
        %v567 = vld [vmem:[%s187 + $0xa68] sm:$0xff]
        %v568 = vld [vmem:[%s187 + $0xa70] sm:$0xff]
        %v569 = vld [vmem:[%s187 + $0xa78] sm:$0xff]
        %v570 = vld [vmem:[%s187 + $0xa80] sm:$0xff]
        %v571 = vld [vmem:[%s187 + $0xa88] sm:$0xff]
        %v572 = vld [vmem:[%s187 + $0xa90] sm:$0xff]
        %v573 = vld [vmem:[%s187 + $0xa98] sm:$0xff]
        %v574 = vld [vmem:[%s187 + $0xaa0] sm:$0xff]
        %v575 = vld [vmem:[%s187 + $0xaa8] sm:$0xff]
        %v576 = vld [vmem:[%s187 + $0xab0] sm:$0xff]
        %v577 = vld [vmem:[%s187 + $0xab8] sm:$0xff]
        %v578 = vld [vmem:[%s187 + $0xac0] sm:$0xff]
        %v579 = vld [vmem:[%s187 + $0xac8] sm:$0xff]
        %v580 = vld [vmem:[%s187 + $0xad0] sm:$0xff]
        %v581 = vld [vmem:[%s187 + $0xad8] sm:$0xff]
        %v582 = vld [vmem:[%s187 + $0xae0] sm:$0xff]
        %v583 = vld [vmem:[%s187 + $0xae8] sm:$0xff]
        %v584 = vld [vmem:[%s187 + $0xaf0] sm:$0xff]
        %v585 = vld [vmem:[%s187 + $0xaf8] sm:$0xff]
        %v586 = vld [vmem:[%s187 + $0xb00] sm:$0xff]
        %v587 = vld [vmem:[%s187 + $0xb08] sm:$0xff]
        %v588 = vld [vmem:[%s187 + $0xb10] sm:$0xff]
        %v589 = vld [vmem:[%s187 + $0xb18] sm:$0xff]
        %v590 = vld [vmem:[%s187 + $0xb20] sm:$0xff]
        %v591 = vld [vmem:[%s187 + $0xb28] sm:$0xff]
        %v592 = vld [vmem:[%s187 + $0xb30] sm:$0xff]
        %v593 = vld [vmem:[%s187 + $0xb38] sm:$0xff]
        %v594 = vld [vmem:[%s187 + $0xb40] sm:$0xff]
        %v595 = vld [vmem:[%s187 + $0xb48] sm:$0xff]
        %v596 = vld [vmem:[%s187 + $0xb50] sm:$0xff]
        %v597 = vld [vmem:[%s187 + $0xb58] sm:$0xff]
        %v598 = vld [vmem:[%s187 + $0xb60] sm:$0xff]
        %v599 = vld [vmem:[%s187 + $0xb68] sm:$0xff]
        %v600 = vld [vmem:[%s187 + $0xb70] sm:$0xff]
        %v601 = vld [vmem:[%s187 + $0xb78] sm:$0xff]
        %v602 = vld [vmem:[%s187 + $0xb80] sm:$0xff]
        %v603 = vld [vmem:[%s187 + $0xb88] sm:$0xff]
        %v604 = vld [vmem:[%s187 + $0xb90] sm:$0xff]
        %v605 = vld [vmem:[%s187 + $0xb98] sm:$0xff]
        %v606 = vld [vmem:[%s187 + $0xba0] sm:$0xff]
        %v607 = vld [vmem:[%s187 + $0xba8] sm:$0xff]
        %v608 = vld [vmem:[%s187 + $0xbb0] sm:$0xff]
        %v609 = vld [vmem:[%s187 + $0xbb8] sm:$0xff]
        %v610 = vld [vmem:[%s187 + $0xbc0] sm:$0xff]
        %v611 = vld [vmem:[%s187 + $0xbc8] sm:$0xff]
        %v612 = vld [vmem:[%s187 + $0xbd0] sm:$0xff]
        %v613 = vld [vmem:[%s187 + $0xbd8] sm:$0xff]
        %v614 = vld [vmem:[%s187 + $0xbe0] sm:$0xff]
        %v615 = vld [vmem:[%s187 + $0xbe8] sm:$0xff]
        %v616 = vld [vmem:[%s187 + $0xbf0] sm:$0xff]
        %v617 = vld [vmem:[%s187 + $0xbf8] sm:$0xff]
        %v618 = vld [vmem:[%s187 + $0xc00] sm:$0xff]
        %v619 = vld [vmem:[%s187 + $0xc08] sm:$0xff]
        %v620 = vld [vmem:[%s187 + $0xc10] sm:$0xff]
        %v621 = vld [vmem:[%s187 + $0xc18] sm:$0xff]
        %v622 = vld [vmem:[%s187 + $0xc20] sm:$0xff]
        %v623 = vld [vmem:[%s187 + $0xc28] sm:$0xff]
        %v624 = vld [vmem:[%s187 + $0xc30] sm:$0xff]
        %v625 = vld [vmem:[%s187 + $0xc38] sm:$0xff]
        %v626 = vld [vmem:[%s187 + $0xc40] sm:$0xff]
        %v627 = vld [vmem:[%s187 + $0xc48] sm:$0xff]
        %v628 = vld [vmem:[%s187 + $0xc50] sm:$0xff]
        %v629 = vld [vmem:[%s187 + $0xc58] sm:$0xff]
        %v630 = vld [vmem:[%s187 + $0xc60] sm:$0xff]
        %v631 = vld [vmem:[%s187 + $0xc68] sm:$0xff]
        %v632 = vld [vmem:[%s187 + $0xc70] sm:$0xff]
        %v633 = vld [vmem:[%s187 + $0xc78] sm:$0xff]
        %v634 = vld [vmem:[%s187 + $0xc80] sm:$0xff]
        %v635 = vld [vmem:[%s187 + $0xc88] sm:$0xff]
        %v636 = vld [vmem:[%s187 + $0xc90] sm:$0xff]
        %v637 = vld [vmem:[%s187 + $0xc98] sm:$0xff]
        %v638 = vld [vmem:[%s187 + $0xca0] sm:$0xff]
        %v639 = vld [vmem:[%s187 + $0xca8] sm:$0xff]
        %v640 = vld [vmem:[%s187 + $0xcb0] sm:$0xff]
        %v641 = vld [vmem:[%s187 + $0xcb8] sm:$0xff]
        %v642 = vld [vmem:[%s187 + $0xcc0] sm:$0xff]
        %v643 = vld [vmem:[%s187 + $0xcc8] sm:$0xff]
        %v644 = vld [vmem:[%s187 + $0xcd0] sm:$0xff]
        %v645 = vld [vmem:[%s187 + $0xcd8] sm:$0xff]
        %v646 = vld [vmem:[%s187 + $0xce0] sm:$0xff]
        %v647 = vld [vmem:[%s187 + $0xce8] sm:$0xff]
        %v648 = vld [vmem:[%s187 + $0xcf0] sm:$0xff]
        %v649 = vld [vmem:[%s187 + $0xcf8] sm:$0xff]
        %v650 = vld [vmem:[%s187 + $0xd00] sm:$0xff]
        %v651 = vld [vmem:[%s187 + $0xd08] sm:$0xff]
        %v652 = vld [vmem:[%s187 + $0xd10] sm:$0xff]
        %v653 = vld [vmem:[%s187 + $0xd18] sm:$0xff]
        %v654 = vld [vmem:[%s187 + $0xd20] sm:$0xff]
        %v655 = vld [vmem:[%s187 + $0xd28] sm:$0xff]
        %v656 = vld [vmem:[%s187 + $0xd30] sm:$0xff]
        %v657 = vld [vmem:[%s187 + $0xd38] sm:$0xff]
        %v658 = vld [vmem:[%s187 + $0xd40] sm:$0xff]
        %v659 = vld [vmem:[%s187 + $0xd48] sm:$0xff]
        %v660 = vld [vmem:[%s187 + $0xd50] sm:$0xff]
        %v661 = vld [vmem:[%s187 + $0xd58] sm:$0xff]
        %v662 = vld [vmem:[%s187 + $0xd60] sm:$0xff]
        %v663 = vld [vmem:[%s187 + $0xd68] sm:$0xff]
        %v664 = vld [vmem:[%s187 + $0xd70] sm:$0xff]
        %v665 = vld [vmem:[%s187 + $0xd78] sm:$0xff]
        %v666 = vld [vmem:[%s187 + $0xd80] sm:$0xff]
        %v667 = vld [vmem:[%s187 + $0xd88] sm:$0xff]
        %v668 = vld [vmem:[%s187 + $0xd90] sm:$0xff]
        %v669 = vld [vmem:[%s187 + $0xd98] sm:$0xff]
        %v670 = vld [vmem:[%s187 + $0xda0] sm:$0xff]
        %v671 = vld [vmem:[%s187 + $0xda8] sm:$0xff]
        %v672 = vld [vmem:[%s187 + $0xdb0] sm:$0xff]
        %v673 = vld [vmem:[%s187 + $0xdb8] sm:$0xff]
        %v674 = vld [vmem:[%s187 + $0xdc0] sm:$0xff]
        %v675 = vld [vmem:[%s187 + $0xdc8] sm:$0xff]
        %v676 = vld [vmem:[%s187 + $0xdd0] sm:$0xff]
        %v677 = vld [vmem:[%s187 + $0xdd8] sm:$0xff]
        %v678 = vld [vmem:[%s187 + $0xde0] sm:$0xff]
        %v679 = vld [vmem:[%s187 + $0xde8] sm:$0xff]
        %v680 = vld [vmem:[%s187 + $0xdf0] sm:$0xff]
        %v681 = vld [vmem:[%s187 + $0xdf8] sm:$0xff]
        %v682 = vld [vmem:[%s187 + $0xe00] sm:$0xff]
        %v683 = vld [vmem:[%s187 + $0xe08] sm:$0xff]
        %v684 = vld [vmem:[%s187 + $0xe10] sm:$0xff]
        %v685 = vld [vmem:[%s187 + $0xe18] sm:$0xff]
        %v686 = vld [vmem:[%s187 + $0xe20] sm:$0xff]
        %v687 = vld [vmem:[%s187 + $0xe28] sm:$0xff]
        %v688 = vld [vmem:[%s187 + $0xe30] sm:$0xff]
        %v689 = vld [vmem:[%s187 + $0xe38] sm:$0xff]
        %v690 = vld [vmem:[%s187 + $0xe40] sm:$0xff]
        %v691 = vld [vmem:[%s187 + $0xe48] sm:$0xff]
        %v692 = vld [vmem:[%s187 + $0xe50] sm:$0xff]
        %v693 = vld [vmem:[%s187 + $0xe58] sm:$0xff]
        %v694 = vld [vmem:[%s187 + $0xe60] sm:$0xff]
        %v695 = vld [vmem:[%s187 + $0xe68] sm:$0xff]
        %v696 = vld [vmem:[%s187 + $0xe70] sm:$0xff]
        %v697 = vld [vmem:[%s187 + $0xe78] sm:$0xff]
        %v698 = vld [vmem:[%s187 + $0xe80] sm:$0xff]
        %v699 = vld [vmem:[%s187 + $0xe88] sm:$0xff]
        %v700 = vld [vmem:[%s187 + $0xe90] sm:$0xff]
        %v701 = vld [vmem:[%s187 + $0xe98] sm:$0xff]
        %v702 = vld [vmem:[%s187 + $0xea0] sm:$0xff]
        %v703 = vld [vmem:[%s187 + $0xea8] sm:$0xff]
        %v704 = vld [vmem:[%s187 + $0xeb0] sm:$0xff]
        %v705 = vld [vmem:[%s187 + $0xeb8] sm:$0xff]
        %v706 = vld [vmem:[%s187 + $0xec0] sm:$0xff]
        %v707 = vld [vmem:[%s187 + $0xec8] sm:$0xff]
        %v708 = vld [vmem:[%s187 + $0xed0] sm:$0xff]
        %v709 = vld [vmem:[%s187 + $0xed8] sm:$0xff]
        %v710 = vld [vmem:[%s187 + $0xee0] sm:$0xff]
        %v711 = vld [vmem:[%s187 + $0xee8] sm:$0xff]
        %v712 = vld [vmem:[%s187 + $0xef0] sm:$0xff]
        %v713 = vld [vmem:[%s187 + $0xef8] sm:$0xff]
        %v714 = vld [vmem:[%s187 + $0xf00] sm:$0xff]
        %v715 = vld [vmem:[%s187 + $0xf08] sm:$0xff]
        %v716 = vld [vmem:[%s187 + $0xf10] sm:$0xff]
        %v717 = vld [vmem:[%s187 + $0xf18] sm:$0xff]
        %v718 = vld [vmem:[%s187 + $0xf20] sm:$0xff]
        %v719 = vld [vmem:[%s187 + $0xf28] sm:$0xff]
        %v720 = vld [vmem:[%s187 + $0xf30] sm:$0xff]
        %v721 = vld [vmem:[%s187 + $0xf38] sm:$0xff]
        %v722 = vld [vmem:[%s187 + $0xf40] sm:$0xff]
        %v723 = vld [vmem:[%s187 + $0xf48] sm:$0xff]
        %v724 = vld [vmem:[%s187 + $0xf50] sm:$0xff]
        %v725 = vld [vmem:[%s187 + $0xf58] sm:$0xff]
        %v726 = vld [vmem:[%s187 + $0xf60] sm:$0xff]
        %v727 = vld [vmem:[%s187 + $0xf68] sm:$0xff]
        %v728 = vld [vmem:[%s187 + $0xf70] sm:$0xff]
        %v729 = vld [vmem:[%s187 + $0xf78] sm:$0xff]
        %v730 = vld [vmem:[%s187 + $0xf80] sm:$0xff]
        %v731 = vld [vmem:[%s187 + $0xf88] sm:$0xff]
        %v732 = vld [vmem:[%s187 + $0xf90] sm:$0xff]
        %v733 = vld [vmem:[%s187 + $0xf98] sm:$0xff]
        %v734 = vld [vmem:[%s187 + $0xfa0] sm:$0xff]
        %v735 = vld [vmem:[%s187 + $0xfa8] sm:$0xff]
        %v736 = vld [vmem:[%s187 + $0xfb0] sm:$0xff]
        %v737 = vld [vmem:[%s187 + $0xfb8] sm:$0xff]
        %v738 = vld [vmem:[%s187 + $0xfc0] sm:$0xff]
        %v739 = vld [vmem:[%s187 + $0xfc8] sm:$0xff]
        %v740 = vld [vmem:[%s187 + $0xfd0] sm:$0xff]
        %v741 = vld [vmem:[%s187 + $0xfd8] sm:$0xff]
        %v742 = vld [vmem:[%s187 + $0xfe0] sm:$0xff]
        %v743 = vld [vmem:[%s187 + $0xfe8] sm:$0xff]
        %v744 = vld [vmem:[%s187 + $0xff0] sm:$0xff]
        %v745 = vld [vmem:[%s187 + $0xff8] sm:$0xff]
        %v746 = vld [vmem:[%s187 + $0x1000] sm:$0xff]
        %v747 = vld [vmem:[%s187 + $0x1008] sm:$0xff]
        %v748 = vld [vmem:[%s187 + $0x1010] sm:$0xff]
        %v749 = vld [vmem:[%s187 + $0x1018] sm:$0xff]
        %v750 = vld [vmem:[%s187 + $0x1020] sm:$0xff]
        %v751 = vld [vmem:[%s187 + $0x1028] sm:$0xff]
        %v752 = vld [vmem:[%s187 + $0x1030] sm:$0xff]
        %v753 = vld [vmem:[%s187 + $0x1038] sm:$0xff]
        %v754 = vld [vmem:[%s187 + $0x1040] sm:$0xff]
        %v755 = vld [vmem:[%s187 + $0x1048] sm:$0xff]
        %v756 = vld [vmem:[%s187 + $0x1050] sm:$0xff]
        %v757 = vld [vmem:[%s187 + $0x1058] sm:$0xff]
        %v758 = vld [vmem:[%s187 + $0x1060] sm:$0xff]
        %v759 = vld [vmem:[%s187 + $0x1068] sm:$0xff]
        %v760 = vld [vmem:[%s187 + $0x1070] sm:$0xff]
        %v761 = vld [vmem:[%s187 + $0x1078] sm:$0xff]
        %v762 = vld [vmem:[%s187 + $0x1080] sm:$0xff]
        %v763 = vld [vmem:[%s187 + $0x1088] sm:$0xff]
        %v764 = vld [vmem:[%s187 + $0x1090] sm:$0xff]
        %v765 = vld [vmem:[%s187 + $0x1098] sm:$0xff]
        %v766 = vld [vmem:[%s187 + $0x10a0] sm:$0xff]
        %v767 = vld [vmem:[%s187 + $0x10a8] sm:$0xff]
        %v768 = vld [vmem:[%s187 + $0x10b0] sm:$0xff]
        %v769 = vld [vmem:[%s187 + $0x10b8] sm:$0xff]
        %v770 = vld [vmem:[%s187 + $0x10c0] sm:$0xff]
        %v771 = vld [vmem:[%s187 + $0x10c8] sm:$0xff]
        %v772 = vld [vmem:[%s187 + $0x10d0] sm:$0xff]
        %v773 = vld [vmem:[%s187 + $0x10d8] sm:$0xff]
        %v774 = vld [vmem:[%s187 + $0x10e0] sm:$0xff]
        %v775 = vld [vmem:[%s187 + $0x10e8] sm:$0xff]
        %v776 = vld [vmem:[%s187 + $0x10f0] sm:$0xff]
        %v777 = vld [vmem:[%s187 + $0x10f8] sm:$0xff]
        %v778 = vld [vmem:[%s187 + $0x1100] sm:$0xff]
        %v779 = vld [vmem:[%s187 + $0x1108] sm:$0xff]
        %v780 = vld [vmem:[%s187 + $0x1110] sm:$0xff]
        %v781 = vld [vmem:[%s187 + $0x1118] sm:$0xff]
        %v782 = vld [vmem:[%s187 + $0x1120] sm:$0xff]
        %v783 = vld [vmem:[%s187 + $0x1128] sm:$0xff]
        %v784 = vld [vmem:[%s187 + $0x1130] sm:$0xff]
        %v785 = vld [vmem:[%s187 + $0x1138] sm:$0xff]
        %v786 = vld [vmem:[%s187 + $0x1140] sm:$0xff]
        %v787 = vld [vmem:[%s187 + $0x1148] sm:$0xff]
        %v788 = vld [vmem:[%s187 + $0x1150] sm:$0xff]
        %v789 = vld [vmem:[%s187 + $0x1158] sm:$0xff]
        %v790 = vld [vmem:[%s187 + $0x1160] sm:$0xff]
        %v791 = vld [vmem:[%s187 + $0x1168] sm:$0xff]
        %v792 = vld [vmem:[%s187 + $0x1170] sm:$0xff]
        %v793 = vld [vmem:[%s187 + $0x1178] sm:$0xff]
        %v794 = vld [vmem:[%s187 + $0x1180] sm:$0xff]
        %v795 = vld [vmem:[%s187 + $0x1188] sm:$0xff]
        %v796 = vld [vmem:[%s187 + $0x1190] sm:$0xff]
        %v797 = vld [vmem:[%s187 + $0x1198] sm:$0xff]
        %v798 = vld [vmem:[%s187 + $0x11a0] sm:$0xff]
        %v799 = vld [vmem:[%s187 + $0x11a8] sm:$0xff]
        %v800 = vld [vmem:[%s187 + $0x11b0] sm:$0xff]
        %v801 = vld [vmem:[%s187 + $0x11b8] sm:$0xff]
        %v802 = vld [vmem:[%s187 + $0x11c0] sm:$0xff]
        %v803 = vld [vmem:[%s187 + $0x11c8] sm:$0xff]
        %v804 = vld [vmem:[%s187 + $0x11d0] sm:$0xff]
        %v805 = vld [vmem:[%s187 + $0x11d8] sm:$0xff]
        %v806 = vld [vmem:[%s187 + $0x11e0] sm:$0xff]
        %v807 = vld [vmem:[%s187 + $0x11e8] sm:$0xff]
        %v808 = vld [vmem:[%s187 + $0x11f0] sm:$0xff]
        %v809 = vld [vmem:[%s187 + $0x11f8] sm:$0xff]
        %v810 = vld [vmem:[%s187 + $0x1200] sm:$0xff]
        %v811 = vld [vmem:[%s187 + $0x1208] sm:$0xff]
        %v812 = vld [vmem:[%s187 + $0x1210] sm:$0xff]
        %v813 = vld [vmem:[%s187 + $0x1218] sm:$0xff]
        %v814 = vld [vmem:[%s187 + $0x1220] sm:$0xff]
        %v815 = vld [vmem:[%s187 + $0x1228] sm:$0xff]
        %v816 = vld [vmem:[%s187 + $0x1230] sm:$0xff]
        %v817 = vld [vmem:[%s187 + $0x1238] sm:$0xff]
        %v818 = vld [vmem:[%s187 + $0x1240] sm:$0xff]
        %v819 = vld [vmem:[%s187 + $0x1248] sm:$0xff]
        %v820 = vld [vmem:[%s187 + $0x1250] sm:$0xff]
        %v821 = vld [vmem:[%s187 + $0x1258] sm:$0xff]
        %v822 = vld [vmem:[%s187 + $0x1260] sm:$0xff]
        %v823 = vld [vmem:[%s187 + $0x1268] sm:$0xff]
        %v824 = vld [vmem:[%s187 + $0x1270] sm:$0xff]
        %v825 = vld [vmem:[%s187 + $0x1278] sm:$0xff]
        %v826 = vld [vmem:[%s187 + $0x1280] sm:$0xff]
        %v827 = vld [vmem:[%s187 + $0x1288] sm:$0xff]
        %v828 = vld [vmem:[%s187 + $0x1290] sm:$0xff]
        %v829 = vld [vmem:[%s187 + $0x1298] sm:$0xff]
        %v830 = vld [vmem:[%s187 + $0x12a0] sm:$0xff]
        %v831 = vld [vmem:[%s187 + $0x12a8] sm:$0xff]
        %v832 = vld [vmem:[%s187 + $0x12b0] sm:$0xff]
        %v833 = vld [vmem:[%s187 + $0x12b8] sm:$0xff]
        %v834 = vld [vmem:[%s187 + $0x12c0] sm:$0xff]
        %v835 = vld [vmem:[%s187 + $0x12c8] sm:$0xff]
        %v836 = vld [vmem:[%s187 + $0x12d0] sm:$0xff]
        %v837 = vld [vmem:[%s187 + $0x12d8] sm:$0xff]
        %v838 = vld [vmem:[%s187 + $0x12e0] sm:$0xff]
        %v839 = vld [vmem:[%s187 + $0x12e8] sm:$0xff]
        %v840 = vld [vmem:[%s187 + $0x12f0] sm:$0xff]
        %v841 = vld [vmem:[%s187 + $0x12f8] sm:$0xff]
        %v842 = vld [vmem:[%s187 + $0x1300] sm:$0xff]
        %v843 = vld [vmem:[%s187 + $0x1308] sm:$0xff]
        %v844 = vld [vmem:[%s187 + $0x1310] sm:$0xff]
        %v845 = vld [vmem:[%s187 + $0x1318] sm:$0xff]
        %v846 = vld [vmem:[%s187 + $0x1320] sm:$0xff]
        %v847 = vld [vmem:[%s187 + $0x1328] sm:$0xff]
        %v848 = vld [vmem:[%s187 + $0x1330] sm:$0xff]
        %v849 = vld [vmem:[%s187 + $0x1338] sm:$0xff]
        %v850 = vld [vmem:[%s187 + $0x1340] sm:$0xff]
        %v851 = vld [vmem:[%s187 + $0x1348] sm:$0xff]
        %v852 = vld [vmem:[%s187 + $0x1350] sm:$0xff]
        %v853 = vld [vmem:[%s187 + $0x1358] sm:$0xff]
        %v854 = vld [vmem:[%s187 + $0x1360] sm:$0xff]
        %v855 = vld [vmem:[%s187 + $0x1368] sm:$0xff]
        %v856 = vld [vmem:[%s187 + $0x1370] sm:$0xff]
        %v857 = vld [vmem:[%s187 + $0x1378] sm:$0xff]
        %v858 = vld [vmem:[%s187 + $0x1380] sm:$0xff]
        %v859 = vld [vmem:[%s187 + $0x1388] sm:$0xff]
        %v860 = vld [vmem:[%s187 + $0x1390] sm:$0xff]
        %v861 = vld [vmem:[%s187 + $0x1398] sm:$0xff]
        %v862 = vld [vmem:[%s187 + $0x13a0] sm:$0xff]
        %v863 = vld [vmem:[%s187 + $0x13a8] sm:$0xff]
        %v864 = vld [vmem:[%s187 + $0x13b0] sm:$0xff]
        %v865 = vld [vmem:[%s187 + $0x13b8] sm:$0xff]
        %v866 = vld [vmem:[%s187 + $0x13c0] sm:$0xff]
        %v867 = vld [vmem:[%s187 + $0x13c8] sm:$0xff]
        %v868 = vld [vmem:[%s187 + $0x13d0] sm:$0xff]
        %v869 = vld [vmem:[%s187 + $0x13d8] sm:$0xff]
        %v870 = vld [vmem:[%s187 + $0x13e0] sm:$0xff]
        %v871 = vld [vmem:[%s187 + $0x13e8] sm:$0xff]
        %v872 = vld [vmem:[%s187 + $0x13f0] sm:$0xff]
        %v873 = vld [vmem:[%s187 + $0x13f8] sm:$0xff]
        %v874 = vld [vmem:[%s187 + $0x1400] sm:$0xff]
        %v875 = vld [vmem:[%s187 + $0x1408] sm:$0xff]
        %v876 = vld [vmem:[%s187 + $0x1410] sm:$0xff]
        %v877 = vld [vmem:[%s187 + $0x1418] sm:$0xff]
        %v878 = vld [vmem:[%s187 + $0x1420] sm:$0xff]
        %v879 = vld [vmem:[%s187 + $0x1428] sm:$0xff]
        %v880 = vld [vmem:[%s187 + $0x1430] sm:$0xff]
        %v881 = vld [vmem:[%s187 + $0x1438] sm:$0xff]
        %v882 = vld [vmem:[%s187 + $0x1440] sm:$0xff]
        %v883 = vld [vmem:[%s187 + $0x1448] sm:$0xff]
        %v884 = vld [vmem:[%s187 + $0x1450] sm:$0xff]
        %v885 = vld [vmem:[%s187 + $0x1458] sm:$0xff]
        %v886 = vld [vmem:[%s187 + $0x1460] sm:$0xff]
        %v887 = vld [vmem:[%s187 + $0x1468] sm:$0xff]
        %v888 = vld [vmem:[%s187 + $0x1470] sm:$0xff]
        %v889 = vld [vmem:[%s187 + $0x1478] sm:$0xff]
        %v890 = vld [vmem:[%s187 + $0x1480] sm:$0xff]
        %v891 = vld [vmem:[%s187 + $0x1488] sm:$0xff]
        %v892 = vld [vmem:[%s187 + $0x1490] sm:$0xff]
        %v893 = vld [vmem:[%s187 + $0x1498] sm:$0xff]
        %v894 = vld [vmem:[%s187 + $0x14a0] sm:$0xff]
        %v895 = vld [vmem:[%s187 + $0x14a8] sm:$0xff]
        %v896 = vld [vmem:[%s187 + $0x14b0] sm:$0xff]
        %v897 = vld [vmem:[%s187 + $0x14b8] sm:$0xff]
        %v898 = vld [vmem:[%s187 + $0x14c0] sm:$0xff]
        %v899 = vld [vmem:[%s187 + $0x14c8] sm:$0xff]
        %v900 = vld [vmem:[%s187 + $0x14d0] sm:$0xff]
        %v901 = vld [vmem:[%s187 + $0x14d8] sm:$0xff]
        %v902 = vld [vmem:[%s187 + $0x14e0] sm:$0xff]
        %v903 = vld [vmem:[%s187 + $0x14e8] sm:$0xff]
        %v904 = vld [vmem:[%s187 + $0x14f0] sm:$0xff]
        %v905 = vld [vmem:[%s187 + $0x14f8] sm:$0xff]
        %v906 = vld [vmem:[%s187 + $0x1500] sm:$0xff]
        %v907 = vld [vmem:[%s187 + $0x1508] sm:$0xff]
        %v908 = vld [vmem:[%s187 + $0x1510] sm:$0xff]
        %v909 = vld [vmem:[%s187 + $0x1518] sm:$0xff]
        %v910 = vld [vmem:[%s187 + $0x1520] sm:$0xff]
        %v911 = vld [vmem:[%s187 + $0x1528] sm:$0xff]
        %v912 = vld [vmem:[%s187 + $0x1530] sm:$0xff]
        %v913 = vld [vmem:[%s187 + $0x1538] sm:$0xff]
        %v914 = vld [vmem:[%s187 + $0x1540] sm:$0xff]
        %v915 = vld [vmem:[%s187 + $0x1548] sm:$0xff]
        %v916 = vld [vmem:[%s187 + $0x1550] sm:$0xff]
        %v917 = vld [vmem:[%s187 + $0x1558] sm:$0xff]
        %v918 = vld [vmem:[%s187 + $0x1560] sm:$0xff]
        %v919 = vld [vmem:[%s187 + $0x1568] sm:$0xff]
        %v920 = vld [vmem:[%s187 + $0x1570] sm:$0xff]
        %v921 = vld [vmem:[%s187 + $0x1578] sm:$0xff]
        %v922 = vld [vmem:[%s187 + $0x1580] sm:$0xff]
        %v923 = vld [vmem:[%s187 + $0x1588] sm:$0xff]
        %v924 = vld [vmem:[%s187 + $0x1590] sm:$0xff]
        %v925 = vld [vmem:[%s187 + $0x1598] sm:$0xff]
        %v926 = vld [vmem:[%s187 + $0x15a0] sm:$0xff]
        %v927 = vld [vmem:[%s187 + $0x15a8] sm:$0xff]
        %v928 = vld [vmem:[%s187 + $0x15b0] sm:$0xff]
        %v929 = vld [vmem:[%s187 + $0x15b8] sm:$0xff]
        %v930 = vld [vmem:[%s187 + $0x15c0] sm:$0xff]
        %v931 = vld [vmem:[%s187 + $0x15c8] sm:$0xff]
        %v932 = vld [vmem:[%s187 + $0x15d0] sm:$0xff]
        %v933 = vld [vmem:[%s187 + $0x15d8] sm:$0xff]
        %v934 = vld [vmem:[%s187 + $0x15e0] sm:$0xff]
        %v935 = vld [vmem:[%s187 + $0x15e8] sm:$0xff]
        %v936 = vld [vmem:[%s187 + $0x15f0] sm:$0xff]
        %v937 = vld [vmem:[%s187 + $0x15f8] sm:$0xff]
        %v938 = vld [vmem:[%s187 + $0x1600] sm:$0xff]
        %v939 = vld [vmem:[%s187 + $0x1608] sm:$0xff]
        %v940 = vld [vmem:[%s187 + $0x1610] sm:$0xff]
        %v941 = vld [vmem:[%s187 + $0x1618] sm:$0xff]
        %v942 = vld [vmem:[%s187 + $0x1620] sm:$0xff]
        %v943 = vld [vmem:[%s187 + $0x1628] sm:$0xff]
        %v944 = vld [vmem:[%s187 + $0x1630] sm:$0xff]
        %v945 = vld [vmem:[%s187 + $0x1638] sm:$0xff]
        %v946 = vld [vmem:[%s187 + $0x1640] sm:$0xff]
        %v947 = vld [vmem:[%s187 + $0x1648] sm:$0xff]
        %v948 = vld [vmem:[%s187 + $0x1650] sm:$0xff]
        %v949 = vld [vmem:[%s187 + $0x1658] sm:$0xff]
        %v950 = vld [vmem:[%s187 + $0x1660] sm:$0xff]
        %v951 = vld [vmem:[%s187 + $0x1668] sm:$0xff]
        %v952 = vld [vmem:[%s187 + $0x1670] sm:$0xff]
        %v953 = vld [vmem:[%s187 + $0x1678] sm:$0xff]
        %v954 = vld [vmem:[%s187 + $0x1680] sm:$0xff]
        %v955 = vld [vmem:[%s187 + $0x1688] sm:$0xff]
        %v956 = vld [vmem:[%s187 + $0x1690] sm:$0xff]
        %v957 = vld [vmem:[%s187 + $0x1698] sm:$0xff]
        %v958 = vld [vmem:[%s187 + $0x16a0] sm:$0xff]
        %v959 = vld [vmem:[%s187 + $0x16a8] sm:$0xff]
        %v960 = vld [vmem:[%s187 + $0x16b0] sm:$0xff]
        %v961 = vld [vmem:[%s187 + $0x16b8] sm:$0xff]
        %v962 = vld [vmem:[%s187 + $0x16c0] sm:$0xff]
        %v963 = vld [vmem:[%s187 + $0x16c8] sm:$0xff]
        %v964 = vld [vmem:[%s187 + $0x16d0] sm:$0xff]
        %v965 = vld [vmem:[%s187 + $0x16d8] sm:$0xff]
        %v966 = vld [vmem:[%s187 + $0x16e0] sm:$0xff]
        %v967 = vld [vmem:[%s187 + $0x16e8] sm:$0xff]
        %v968 = vld [vmem:[%s187 + $0x16f0] sm:$0xff]
        %v969 = vld [vmem:[%s187 + $0x16f8] sm:$0xff]
        %v970 = vld [vmem:[%s187 + $0x1700] sm:$0xff]
        %v971 = vld [vmem:[%s187 + $0x1708] sm:$0xff]
        %v972 = vld [vmem:[%s187 + $0x1710] sm:$0xff]
        %v973 = vld [vmem:[%s187 + $0x1718] sm:$0xff]
        %v974 = vld [vmem:[%s187 + $0x1720] sm:$0xff]
        %v975 = vld [vmem:[%s187 + $0x1728] sm:$0xff]
        %v976 = vld [vmem:[%s187 + $0x1730] sm:$0xff]
        %v977 = vld [vmem:[%s187 + $0x1738] sm:$0xff]
        %v978 = vld [vmem:[%s187 + $0x1740] sm:$0xff]
        %v979 = vld [vmem:[%s187 + $0x1748] sm:$0xff]
        %v980 = vld [vmem:[%s187 + $0x1750] sm:$0xff]
        %v981 = vld [vmem:[%s187 + $0x1758] sm:$0xff]
        %v982 = vld [vmem:[%s187 + $0x1760] sm:$0xff]
        %v983 = vld [vmem:[%s187 + $0x1768] sm:$0xff]
        %v984 = vld [vmem:[%s187 + $0x1770] sm:$0xff]
        %v985 = vld [vmem:[%s187 + $0x1778] sm:$0xff]
        %v986 = vld [vmem:[%s187 + $0x1780] sm:$0xff]
        %v987 = vld [vmem:[%s187 + $0x1788] sm:$0xff]
        %v988 = vld [vmem:[%s187 + $0x1790] sm:$0xff]
        %v989 = vld [vmem:[%s187 + $0x1798] sm:$0xff]
        %v990 = vld [vmem:[%s187 + $0x17a0] sm:$0xff]
        %v991 = vld [vmem:[%s187 + $0x17a8] sm:$0xff]
        %v992 = vld [vmem:[%s187 + $0x17b0] sm:$0xff]
        %v993 = vld [vmem:[%s187 + $0x17b8] sm:$0xff]
        %v994 = vld [vmem:[%s187 + $0x17c0] sm:$0xff]
        %v995 = vld [vmem:[%s187 + $0x17c8] sm:$0xff]
        %v996 = vld [vmem:[%s187 + $0x17d0] sm:$0xff]
        %v997 = vld [vmem:[%s187 + $0x17d8] sm:$0xff]
        %v998 = vld [vmem:[%s187 + $0x17e0] sm:$0xff]
        %v999 = vld [vmem:[%s187 + $0x17e8] sm:$0xff]
        %v1000 = vld [vmem:[%s187 + $0x17f0] sm:$0xff]
        %v1001 = vld [vmem:[%s187 + $0x17f8] sm:$0xff]
        %v1002 = vld [vmem:[%s187 + $0x1800] sm:$0xff]
        %v1003 = vld [vmem:[%s187 + $0x1808] sm:$0xff]
        %v1004 = vld [vmem:[%s187 + $0x1810] sm:$0xff]
        %v1005 = vld [vmem:[%s187 + $0x1818] sm:$0xff]
        %v1006 = vld [vmem:[%s187 + $0x1820] sm:$0xff]
        %v1007 = vld [vmem:[%s187 + $0x1828] sm:$0xff]
        %v1008 = vld [vmem:[%s187 + $0x1830] sm:$0xff]
        %v1009 = vld [vmem:[%s187 + $0x1838] sm:$0xff]
        %v1010 = vld [vmem:[%s187 + $0x1840] sm:$0xff]
        %v1011 = vld [vmem:[%s187 + $0x1848] sm:$0xff]
        %v1012 = vld [vmem:[%s187 + $0x1850] sm:$0xff]
        %v1013 = vld [vmem:[%s187 + $0x1858] sm:$0xff]
        %v1014 = vld [vmem:[%s187 + $0x1860] sm:$0xff]
        %v1015 = vld [vmem:[%s187 + $0x1868] sm:$0xff]
        %v1016 = vld [vmem:[%s187 + $0x1870] sm:$0xff]
        %v1017 = vld [vmem:[%s187 + $0x1878] sm:$0xff]
        %v1018 = vld [vmem:[%s187 + $0x1880] sm:$0xff]
        %v1019 = vld [vmem:[%s187 + $0x1888] sm:$0xff]
        %v1020 = vld [vmem:[%s187 + $0x1890] sm:$0xff]
        %v1021 = vld [vmem:[%s187 + $0x1898] sm:$0xff]
        %v1022 = vld [vmem:[%s187 + $0x18a0] sm:$0xff]
        %v1023 = vld [vmem:[%s187 + $0x18a8] sm:$0xff]
        %v1024 = vld [vmem:[%s187 + $0x18b0] sm:$0xff]
        %v1025 = vld [vmem:[%s187 + $0x18b8] sm:$0xff]
        %v1026 = vld [vmem:[%s187 + $0x18c0] sm:$0xff]
        %v1027 = vld [vmem:[%s187 + $0x18c8] sm:$0xff]
        %v1028 = vld [vmem:[%s187 + $0x18d0] sm:$0xff]
        %v1029 = vld [vmem:[%s187 + $0x18d8] sm:$0xff]
        %v1030 = vld [vmem:[%s187 + $0x18e0] sm:$0xff]
        %v1031 = vld [vmem:[%s187 + $0x18e8] sm:$0xff]
        %v1032 = vld [vmem:[%s187 + $0x18f0] sm:$0xff]
        %v1033 = vld [vmem:[%s187 + $0x18f8] sm:$0xff]
        %v1034 = vld [vmem:[%s187 + $0x1900] sm:$0xff]
        %v1035 = vld [vmem:[%s187 + $0x1908] sm:$0xff]
        %v1036 = vld [vmem:[%s187 + $0x1910] sm:$0xff]
        %v1037 = vld [vmem:[%s187 + $0x1918] sm:$0xff]
        %v1038 = vld [vmem:[%s187 + $0x1920] sm:$0xff]
        %v1039 = vld [vmem:[%s187 + $0x1928] sm:$0xff]
        %v1040 = vld [vmem:[%s187 + $0x1930] sm:$0xff]
        %v1041 = vld [vmem:[%s187 + $0x1938] sm:$0xff]
        %v1042 = vld [vmem:[%s187 + $0x1940] sm:$0xff]
        %v1043 = vld [vmem:[%s187 + $0x1948] sm:$0xff]
        %v1044 = vld [vmem:[%s187 + $0x1950] sm:$0xff]
        %v1045 = vld [vmem:[%s187 + $0x1958] sm:$0xff]
        %v1046 = vld [vmem:[%s187 + $0x1960] sm:$0xff]
        %v1047 = vld [vmem:[%s187 + $0x1968] sm:$0xff]
        %v1048 = vld [vmem:[%s187 + $0x1970] sm:$0xff]
        %v1049 = vld [vmem:[%s187 + $0x1978] sm:$0xff]
        %v1050 = vld [vmem:[%s187 + $0x1980] sm:$0xff]
        %v1051 = vld [vmem:[%s187 + $0x1988] sm:$0xff]
        %v1052 = vld [vmem:[%s187 + $0x1990] sm:$0xff]
        %v1053 = vld [vmem:[%s187 + $0x1998] sm:$0xff]
        %v1054 = vld [vmem:[%s187 + $0x19a0] sm:$0xff]
        %v1055 = vld [vmem:[%s187 + $0x19a8] sm:$0xff]
        %v1056 = vld [vmem:[%s187 + $0x19b0] sm:$0xff]
        %v1057 = vld [vmem:[%s187 + $0x19b8] sm:$0xff]
        %v1058 = vld [vmem:[%s187 + $0x19c0] sm:$0xff]
        %v1059 = vld [vmem:[%s187 + $0x19c8] sm:$0xff]
        %v1060 = vld [vmem:[%s187 + $0x19d0] sm:$0xff]
        %v1061 = vld [vmem:[%s187 + $0x19d8] sm:$0xff]
        %v1062 = vld [vmem:[%s187 + $0x19e0] sm:$0xff]
        %v1063 = vld [vmem:[%s187 + $0x19e8] sm:$0xff]
        %v1064 = vld [vmem:[%s187 + $0x19f0] sm:$0xff]
        %v1065 = vld [vmem:[%s187 + $0x19f8] sm:$0xff]
        %v1066 = vld [vmem:[%s187 + $0x1a00] sm:$0xff]
        %v1067 = vld [vmem:[%s187 + $0x1a08] sm:$0xff]
        %v1068 = vld [vmem:[%s187 + $0x1a10] sm:$0xff]
        %v1069 = vld [vmem:[%s187 + $0x1a18] sm:$0xff]
        %v1070 = vld [vmem:[%s187 + $0x1a20] sm:$0xff]
        %v1071 = vld [vmem:[%s187 + $0x1a28] sm:$0xff]
        %v1072 = vld [vmem:[%s187 + $0x1a30] sm:$0xff]
        %v1073 = vld [vmem:[%s187 + $0x1a38] sm:$0xff]
        %v1074 = vld [vmem:[%s187 + $0x1a40] sm:$0xff]
        %v1075 = vld [vmem:[%s187 + $0x1a48] sm:$0xff]
        %v1076 = vld [vmem:[%s187 + $0x1a50] sm:$0xff]
        %v1077 = vld [vmem:[%s187 + $0x1a58] sm:$0xff]
        %v1078 = vld [vmem:[%s187 + $0x1a60] sm:$0xff]
        %v1079 = vld [vmem:[%s187 + $0x1a68] sm:$0xff]
        %v1080 = vld [vmem:[%s187 + $0x1a70] sm:$0xff]
        %v1081 = vld [vmem:[%s187 + $0x1a78] sm:$0xff]
        %v1082 = vld [vmem:[%s187 + $0x1a80] sm:$0xff]
        %v1083 = vld [vmem:[%s187 + $0x1a88] sm:$0xff]
        %v1084 = vld [vmem:[%s187 + $0x1a90] sm:$0xff]
        %v1085 = vld [vmem:[%s187 + $0x1a98] sm:$0xff]
        %v1086 = vld [vmem:[%s187 + $0x1aa0] sm:$0xff]
        %v1087 = vld [vmem:[%s187 + $0x1aa8] sm:$0xff]
        %v1088 = vld [vmem:[%s187 + $0x1ab0] sm:$0xff]
        %v1089 = vld [vmem:[%s187 + $0x1ab8] sm:$0xff]
        %v1090 = vld [vmem:[%s187 + $0x1ac0] sm:$0xff]
        %v1091 = vld [vmem:[%s187 + $0x1ac8] sm:$0xff]
        %v1092 = vld [vmem:[%s187 + $0x1ad0] sm:$0xff]
        %v1093 = vld [vmem:[%s187 + $0x1ad8] sm:$0xff]
        %v1094 = vld [vmem:[%s187 + $0x1ae0] sm:$0xff]
        %v1095 = vld [vmem:[%s187 + $0x1ae8] sm:$0xff]
        %v1096 = vld [vmem:[%s187 + $0x1af0] sm:$0xff]
        %v1097 = vld [vmem:[%s187 + $0x1af8] sm:$0xff]
        %v1098 = vld [vmem:[%s187 + $0x1b00] sm:$0xff]
        %v1099 = vld [vmem:[%s187 + $0x1b08] sm:$0xff]
        %v1100 = vld [vmem:[%s187 + $0x1b10] sm:$0xff]
        %v1101 = vld [vmem:[%s187 + $0x1b18] sm:$0xff]
        %v1102 = vld [vmem:[%s187 + $0x1b20] sm:$0xff]
        %v1103 = vld [vmem:[%s187 + $0x1b28] sm:$0xff]
        %v1104 = vld [vmem:[%s187 + $0x1b30] sm:$0xff]
        %v1105 = vld [vmem:[%s187 + $0x1b38] sm:$0xff]
        %v1106 = vld [vmem:[%s187 + $0x1b40] sm:$0xff]
        %v1107 = vld [vmem:[%s187 + $0x1b48] sm:$0xff]
        %v1108 = vld [vmem:[%s187 + $0x1b50] sm:$0xff]
        %v1109 = vld [vmem:[%s187 + $0x1b58] sm:$0xff]
        %v1110 = vld [vmem:[%s187 + $0x1b60] sm:$0xff]
        %v1111 = vld [vmem:[%s187 + $0x1b68] sm:$0xff]
        %v1112 = vld [vmem:[%s187 + $0x1b70] sm:$0xff]
        %v1113 = vld [vmem:[%s187 + $0x1b78] sm:$0xff]
        %v1114 = vld [vmem:[%s187 + $0x1b80] sm:$0xff]
        %v1115 = vld [vmem:[%s187 + $0x1b88] sm:$0xff]
        %v1116 = vld [vmem:[%s187 + $0x1b90] sm:$0xff]
        %v1117 = vld [vmem:[%s187 + $0x1b98] sm:$0xff]
        %v1118 = vld [vmem:[%s187 + $0x1ba0] sm:$0xff]
        %v1119 = vld [vmem:[%s187 + $0x1ba8] sm:$0xff]
        %v1120 = vld [vmem:[%s187 + $0x1bb0] sm:$0xff]
        %v1121 = vld [vmem:[%s187 + $0x1bb8] sm:$0xff]
        %v1122 = vld [vmem:[%s187 + $0x1bc0] sm:$0xff]
        %v1123 = vld [vmem:[%s187 + $0x1bc8] sm:$0xff]
        %v1124 = vld [vmem:[%s187 + $0x1bd0] sm:$0xff]
        %v1125 = vld [vmem:[%s187 + $0x1bd8] sm:$0xff]
        %v1126 = vld [vmem:[%s187 + $0x1be0] sm:$0xff]
        %v1127 = vld [vmem:[%s187 + $0x1be8] sm:$0xff]
        %v1128 = vld [vmem:[%s187 + $0x1bf0] sm:$0xff]
        %v1129 = vld [vmem:[%s187 + $0x1bf8] sm:$0xff]
        %v1130 = vld [vmem:[%s187 + $0x1c00] sm:$0xff]
        %v1131 = vld [vmem:[%s187 + $0x1c08] sm:$0xff]
        %v1132 = vld [vmem:[%s187 + $0x1c10] sm:$0xff]
        %v1133 = vld [vmem:[%s187 + $0x1c18] sm:$0xff]
        %v1134 = vld [vmem:[%s187 + $0x1c20] sm:$0xff]
        %v1135 = vld [vmem:[%s187 + $0x1c28] sm:$0xff]
        %v1136 = vld [vmem:[%s187 + $0x1c30] sm:$0xff]
        %v1137 = vld [vmem:[%s187 + $0x1c38] sm:$0xff]
        %v1138 = vld [vmem:[%s187 + $0x1c40] sm:$0xff]
        %v1139 = vld [vmem:[%s187 + $0x1c48] sm:$0xff]
        %v1140 = vld [vmem:[%s187 + $0x1c50] sm:$0xff]
        %v1141 = vld [vmem:[%s187 + $0x1c58] sm:$0xff]
        %v1142 = vld [vmem:[%s187 + $0x1c60] sm:$0xff]
        %v1143 = vld [vmem:[%s187 + $0x1c68] sm:$0xff]
        %v1144 = vld [vmem:[%s187 + $0x1c70] sm:$0xff]
        %v1145 = vld [vmem:[%s187 + $0x1c78] sm:$0xff]
        %v1146 = vld [vmem:[%s187 + $0x1c80] sm:$0xff]
        %v1147 = vld [vmem:[%s187 + $0x1c88] sm:$0xff]
        %v1148 = vld [vmem:[%s187 + $0x1c90] sm:$0xff]
        %v1149 = vld [vmem:[%s187 + $0x1c98] sm:$0xff]
        %v1150 = vld [vmem:[%s187 + $0x1ca0] sm:$0xff]
        %v1151 = vld [vmem:[%s187 + $0x1ca8] sm:$0xff]
        %v1152 = vld [vmem:[%s187 + $0x1cb0] sm:$0xff]
        %v1153 = vld [vmem:[%s187 + $0x1cb8] sm:$0xff]
        %v1154 = vld [vmem:[%s187 + $0x1cc0] sm:$0xff]
        %v1155 = vld [vmem:[%s187 + $0x1cc8] sm:$0xff]
        %v1156 = vld [vmem:[%s187 + $0x1cd0] sm:$0xff]
        %v1157 = vld [vmem:[%s187 + $0x1cd8] sm:$0xff]
        %v1158 = vld [vmem:[%s187 + $0x1ce0] sm:$0xff]
        %v1159 = vld [vmem:[%s187 + $0x1ce8] sm:$0xff]
        %v1160 = vld [vmem:[%s187 + $0x1cf0] sm:$0xff]
        %v1161 = vld [vmem:[%s187 + $0x1cf8] sm:$0xff]
        %v1162 = vld [vmem:[%s187 + $0x1d00] sm:$0xff]
        %v1163 = vld [vmem:[%s187 + $0x1d08] sm:$0xff]
        %v1164 = vld [vmem:[%s187 + $0x1d10] sm:$0xff]
        %v1165 = vld [vmem:[%s187 + $0x1d18] sm:$0xff]
        %v1166 = vld [vmem:[%s187 + $0x1d20] sm:$0xff]
        %v1167 = vld [vmem:[%s187 + $0x1d28] sm:$0xff]
        %v1168 = vld [vmem:[%s187 + $0x1d30] sm:$0xff]
        %v1169 = vld [vmem:[%s187 + $0x1d38] sm:$0xff]
        %v1170 = vld [vmem:[%s187 + $0x1d40] sm:$0xff]
        %v1171 = vld [vmem:[%s187 + $0x1d48] sm:$0xff]
        %v1172 = vld [vmem:[%s187 + $0x1d50] sm:$0xff]
        %v1173 = vld [vmem:[%s187 + $0x1d58] sm:$0xff]
        %v1174 = vld [vmem:[%s187 + $0x1d60] sm:$0xff]
        %v1175 = vld [vmem:[%s187 + $0x1d68] sm:$0xff]
        %v1176 = vld [vmem:[%s187 + $0x1d70] sm:$0xff]
        %v1177 = vld [vmem:[%s187 + $0x1d78] sm:$0xff]
        %v1178 = vld [vmem:[%s187 + $0x1d80] sm:$0xff]
        %v1179 = vld [vmem:[%s187 + $0x1d88] sm:$0xff]
        %v1180 = vld [vmem:[%s187 + $0x1d90] sm:$0xff]
        %v1181 = vld [vmem:[%s187 + $0x1d98] sm:$0xff]
        %v1182 = vld [vmem:[%s187 + $0x1da0] sm:$0xff]
        %v1183 = vld [vmem:[%s187 + $0x1da8] sm:$0xff]
        %v1184 = vld [vmem:[%s187 + $0x1db0] sm:$0xff]
        %v1185 = vld [vmem:[%s187 + $0x1db8] sm:$0xff]
        %v1186 = vld [vmem:[%s187 + $0x1dc0] sm:$0xff]
        %v1187 = vld [vmem:[%s187 + $0x1dc8] sm:$0xff]
        %v1188 = vld [vmem:[%s187 + $0x1dd0] sm:$0xff]
        %v1189 = vld [vmem:[%s187 + $0x1dd8] sm:$0xff]
        %v1190 = vld [vmem:[%s187 + $0x1de0] sm:$0xff]
        %v1191 = vld [vmem:[%s187 + $0x1de8] sm:$0xff]
        %v1192 = vld [vmem:[%s187 + $0x1df0] sm:$0xff]
        %v1193 = vld [vmem:[%s187 + $0x1df8] sm:$0xff]
        %v1194 = vld [vmem:[%s187 + $0x1e00] sm:$0xff]
        %v1195 = vld [vmem:[%s187 + $0x1e08] sm:$0xff]
        %v1196 = vld [vmem:[%s187 + $0x1e10] sm:$0xff]
        %v1197 = vld [vmem:[%s187 + $0x1e18] sm:$0xff]
        %v1198 = vld [vmem:[%s187 + $0x1e20] sm:$0xff]
        %v1199 = vld [vmem:[%s187 + $0x1e28] sm:$0xff]
        %v1200 = vld [vmem:[%s187 + $0x1e30] sm:$0xff]
        %v1201 = vld [vmem:[%s187 + $0x1e38] sm:$0xff]
        %v1202 = vld [vmem:[%s187 + $0x1e40] sm:$0xff]
        %v1203 = vld [vmem:[%s187 + $0x1e48] sm:$0xff]
        %v1204 = vld [vmem:[%s187 + $0x1e50] sm:$0xff]
        %v1205 = vld [vmem:[%s187 + $0x1e58] sm:$0xff]
        %v1206 = vld [vmem:[%s187 + $0x1e60] sm:$0xff]
        %v1207 = vld [vmem:[%s187 + $0x1e68] sm:$0xff]
        %v1208 = vld [vmem:[%s187 + $0x1e70] sm:$0xff]
        %v1209 = vld [vmem:[%s187 + $0x1e78] sm:$0xff]
        %v1210 = vld [vmem:[%s187 + $0x1e80] sm:$0xff]
        %v1211 = vld [vmem:[%s187 + $0x1e88] sm:$0xff]
        %v1212 = vld [vmem:[%s187 + $0x1e90] sm:$0xff]
        %v1213 = vld [vmem:[%s187 + $0x1e98] sm:$0xff]
        %v1214 = vld [vmem:[%s187 + $0x1ea0] sm:$0xff]
        %v1215 = vld [vmem:[%s187 + $0x1ea8] sm:$0xff]
        %v1216 = vld [vmem:[%s187 + $0x1eb0] sm:$0xff]
        %v1217 = vld [vmem:[%s187 + $0x1eb8] sm:$0xff]
        %v1218 = vld [vmem:[%s187 + $0x1ec0] sm:$0xff]
        %v1219 = vld [vmem:[%s187 + $0x1ec8] sm:$0xff]
        %v1220 = vld [vmem:[%s187 + $0x1ed0] sm:$0xff]
        %v1221 = vld [vmem:[%s187 + $0x1ed8] sm:$0xff]
        %v1222 = vld [vmem:[%s187 + $0x1ee0] sm:$0xff]
        %v1223 = vld [vmem:[%s187 + $0x1ee8] sm:$0xff]
        %v1224 = vld [vmem:[%s187 + $0x1ef0] sm:$0xff]
        %v1225 = vld [vmem:[%s187 + $0x1ef8] sm:$0xff]
        %v1226 = vld [vmem:[%s196] sm:$0xf]
        %v1228 = vlaneseq
        %v1229 = vshrl.u32 %v1228, 7
        %v1230 = vsub.s32 0, %v1229
        %v1231 = vrot.slane %v1226, %v1230
        %v1232 = vlaneseq
        %v1233 = vshrl.u32 %v1232, 7
        %v1234 = vsub.s32 1, %v1233
        %v1235 = vrot.slane %v1226, %v1234
        %v1236 = vlaneseq
        %v1237 = vshrl.u32 %v1236, 7
        %v1238 = vsub.s32 2, %v1237
        %v1239 = vrot.slane %v1226, %v1238
        %v1240 = vlaneseq
        %v1241 = vshrl.u32 %v1240, 7
        %v1242 = vsub.s32 3, %v1241
        %v1243 = vrot.slane %v1226, %v1242
        %v1252 = vcombine.high %v230, %v230
        %v1254 = vunpack.c.l.s4 1966171168
        %v1255 = vunpack.c.0.s8 %v1254
        %v1256 = vlaneseq
        %v1257 = vshrl.u32 %v1256, 7
        %v1258 = vsub.s32 %v1255, %v1257
        %v1259 = vrot.slane %v230, %v1258
        %v1261 = vunpack.c.l.s4 1966171168
        %v1262 = vunpack.c.0.s8 %v1261
        %v1263 = vlaneseq
        %v1264 = vshrl.u32 %v1263, 7
        %v1265 = vsub.s32 %v1262, %v1264
        %v1266 = vrot.slane %v1252, %v1265
        %v1267 = vcombine.high %v1259, %v1259
        %v1268 = vcombine.high %v1266, %v1266
        %v1270 = vunpack.c.l.s4 1966171168
        %v1271 = vunpack.c.0.s8 %v1270
        %v1272 = vlaneseq
        %v1273 = vshrl.u32 %v1272, 7
        %v1274 = vsub.s32 %v1271, %v1273
        %v1275 = vrot.slane %v1259, %v1274
        %v1277 = vunpack.c.l.s4 1966171168
        %v1278 = vunpack.c.0.s8 %v1277
        %v1279 = vlaneseq
        %v1280 = vshrl.u32 %v1279, 7
        %v1281 = vsub.s32 %v1278, %v1280
        %v1282 = vrot.slane %v1266, %v1281
        %v1284 = vunpack.c.l.s4 1966171168
        %v1285 = vunpack.c.0.s8 %v1284
        %v1286 = vlaneseq
        %v1287 = vshrl.u32 %v1286, 7
        %v1288 = vsub.s32 %v1285, %v1287
        %v1289 = vrot.slane %v1267, %v1288
        %v1291 = vunpack.c.l.s4 1966171168
        %v1292 = vunpack.c.0.s8 %v1291
        %v1293 = vlaneseq
        %v1294 = vshrl.u32 %v1293, 7
        %v1295 = vsub.s32 %v1292, %v1294
        %v1296 = vrot.slane %v1268, %v1295
        %v1297 = vcombine.high %v1275, %v1275
        %v1298 = vcombine.high %v1282, %v1282
        %v1299 = vcombine.high %v1289, %v1289
        %v1300 = vcombine.high %v1296, %v1296
        %v1301 = vcombine.high %v231, %v231
        %v1303 = vunpack.c.l.s4 1966171168
        %v1304 = vunpack.c.0.s8 %v1303
        %v1305 = vlaneseq
        %v1306 = vshrl.u32 %v1305, 7
        %v1307 = vsub.s32 %v1304, %v1306
        %v1308 = vrot.slane %v231, %v1307
        %v1310 = vunpack.c.l.s4 1966171168
        %v1311 = vunpack.c.0.s8 %v1310
        %v1312 = vlaneseq
        %v1313 = vshrl.u32 %v1312, 7
        %v1314 = vsub.s32 %v1311, %v1313
        %v1315 = vrot.slane %v1301, %v1314
        %v1316 = vcombine.high %v1308, %v1308
        %v1317 = vcombine.high %v1315, %v1315
        %v1319 = vunpack.c.l.s4 1966171168
        %v1320 = vunpack.c.0.s8 %v1319
        %v1321 = vlaneseq
        %v1322 = vshrl.u32 %v1321, 7
        %v1323 = vsub.s32 %v1320, %v1322
        %v1324 = vrot.slane %v1308, %v1323
        %v1326 = vunpack.c.l.s4 1966171168
        %v1327 = vunpack.c.0.s8 %v1326
        %v1328 = vlaneseq
        %v1329 = vshrl.u32 %v1328, 7
        %v1330 = vsub.s32 %v1327, %v1329
        %v1331 = vrot.slane %v1315, %v1330
        %v1333 = vunpack.c.l.s4 1966171168
        %v1334 = vunpack.c.0.s8 %v1333
        %v1335 = vlaneseq
        %v1336 = vshrl.u32 %v1335, 7
        %v1337 = vsub.s32 %v1334, %v1336
        %v1338 = vrot.slane %v1316, %v1337
        %v1340 = vunpack.c.l.s4 1966171168
        %v1341 = vunpack.c.0.s8 %v1340
        %v1342 = vlaneseq
        %v1343 = vshrl.u32 %v1342, 7
        %v1344 = vsub.s32 %v1341, %v1343
        %v1345 = vrot.slane %v1317, %v1344
        %v1346 = vcombine.high %v1324, %v1324
        %v1347 = vcombine.high %v1331, %v1331
        %v1348 = vcombine.high %v1338, %v1338
        %v1349 = vcombine.high %v1345, %v1345
        %v1350 = vcombine.high %v232, %v232
        %v1352 = vunpack.c.l.s4 1966171168
        %v1353 = vunpack.c.0.s8 %v1352
        %v1354 = vlaneseq
        %v1355 = vshrl.u32 %v1354, 7
        %v1356 = vsub.s32 %v1353, %v1355
        %v1357 = vrot.slane %v232, %v1356
        %v1359 = vunpack.c.l.s4 1966171168
        %v1360 = vunpack.c.0.s8 %v1359
        %v1361 = vlaneseq
        %v1362 = vshrl.u32 %v1361, 7
        %v1363 = vsub.s32 %v1360, %v1362
        %v1364 = vrot.slane %v1350, %v1363
        %v1365 = vcombine.high %v1357, %v1357
        %v1366 = vcombine.high %v1364, %v1364
        %v1368 = vunpack.c.l.s4 1966171168
        %v1369 = vunpack.c.0.s8 %v1368
        %v1370 = vlaneseq
        %v1371 = vshrl.u32 %v1370, 7
        %v1372 = vsub.s32 %v1369, %v1371
        %v1373 = vrot.slane %v1357, %v1372
        %v1375 = vunpack.c.l.s4 1966171168
        %v1376 = vunpack.c.0.s8 %v1375
        %v1377 = vlaneseq
        %v1378 = vshrl.u32 %v1377, 7
        %v1379 = vsub.s32 %v1376, %v1378
        %v1380 = vrot.slane %v1364, %v1379
        %v1382 = vunpack.c.l.s4 1966171168
        %v1383 = vunpack.c.0.s8 %v1382
        %v1384 = vlaneseq
        %v1385 = vshrl.u32 %v1384, 7
        %v1386 = vsub.s32 %v1383, %v1385
        %v1387 = vrot.slane %v1365, %v1386
        %v1389 = vunpack.c.l.s4 1966171168
        %v1390 = vunpack.c.0.s8 %v1389
        %v1391 = vlaneseq
        %v1392 = vshrl.u32 %v1391, 7
        %v1393 = vsub.s32 %v1390, %v1392
        %v1394 = vrot.slane %v1366, %v1393
        %v1395 = vcombine.high %v1373, %v1373
        %v1396 = vcombine.high %v1380, %v1380
        %v1397 = vcombine.high %v1387, %v1387
        %v1398 = vcombine.high %v1394, %v1394
        %v1399 = vcombine.high %v233, %v233
        %v1401 = vunpack.c.l.s4 1966171168
        %v1402 = vunpack.c.0.s8 %v1401
        %v1403 = vlaneseq
        %v1404 = vshrl.u32 %v1403, 7
        %v1405 = vsub.s32 %v1402, %v1404
        %v1406 = vrot.slane %v233, %v1405
        %v1408 = vunpack.c.l.s4 1966171168
        %v1409 = vunpack.c.0.s8 %v1408
        %v1410 = vlaneseq
        %v1411 = vshrl.u32 %v1410, 7
        %v1412 = vsub.s32 %v1409, %v1411
        %v1413 = vrot.slane %v1399, %v1412
        %v1414 = vcombine.high %v1406, %v1406
        %v1415 = vcombine.high %v1413, %v1413
        %v1417 = vunpack.c.l.s4 1966171168
        %v1418 = vunpack.c.0.s8 %v1417
        %v1419 = vlaneseq
        %v1420 = vshrl.u32 %v1419, 7
        %v1421 = vsub.s32 %v1418, %v1420
        %v1422 = vrot.slane %v1406, %v1421
        %v1424 = vunpack.c.l.s4 1966171168
        %v1425 = vunpack.c.0.s8 %v1424
        %v1426 = vlaneseq
        %v1427 = vshrl.u32 %v1426, 7
        %v1428 = vsub.s32 %v1425, %v1427
        %v1429 = vrot.slane %v1413, %v1428
        %v1431 = vunpack.c.l.s4 1966171168
        %v1432 = vunpack.c.0.s8 %v1431
        %v1433 = vlaneseq
        %v1434 = vshrl.u32 %v1433, 7
        %v1435 = vsub.s32 %v1432, %v1434
        %v1436 = vrot.slane %v1414, %v1435
        %v1438 = vunpack.c.l.s4 1966171168
        %v1439 = vunpack.c.0.s8 %v1438
        %v1440 = vlaneseq
        %v1441 = vshrl.u32 %v1440, 7
        %v1442 = vsub.s32 %v1439, %v1441
        %v1443 = vrot.slane %v1415, %v1442
        %v1444 = vcombine.high %v1422, %v1422
        %v1445 = vcombine.high %v1429, %v1429
        %v1446 = vcombine.high %v1436, %v1436
        %v2470 = vunpack.c.l.b16 %v234
        %v2471 = vunpack.c.h.b16 %v234
        %v2472 = vunpack.c.l.b16 %v235
        %v2473 = vunpack.c.h.b16 %v235
        %v2474 = vunpack.c.l.b16 %v236
        %v2475 = vunpack.c.h.b16 %v236
        %v2476 = vunpack.c.l.b16 %v237
        %v2477 = vunpack.c.h.b16 %v237
        %v2478 = vunpack.c.l.b16 %v238
        %v2479 = vunpack.c.h.b16 %v238
        %v2480 = vunpack.c.l.b16 %v239
        %v2481 = vunpack.c.h.b16 %v239
        %v2482 = vunpack.c.l.b16 %v240
        %v2483 = vunpack.c.h.b16 %v240
        %v2484 = vunpack.c.l.b16 %v241
        %v2485 = vunpack.c.h.b16 %v241
        %v2486 = vunpack.c.l.b16 %v242
        %v2487 = vunpack.c.h.b16 %v242
        %v2488 = vunpack.c.l.b16 %v243
        %v2489 = vunpack.c.h.b16 %v243
        %v2490 = vunpack.c.l.b16 %v244
        %v2491 = vunpack.c.h.b16 %v244
        %v2492 = vunpack.c.l.b16 %v245
        %v2493 = vunpack.c.h.b16 %v245
        %v2494 = vunpack.c.l.b16 %v246
        %v2495 = vunpack.c.h.b16 %v246
        %v2496 = vunpack.c.l.b16 %v247
        %v2497 = vunpack.c.h.b16 %v247
        %v2498 = vunpack.c.l.b16 %v248
        %v2499 = vunpack.c.h.b16 %v248
        %v2500 = vunpack.c.l.b16 %v249
        %v2501 = vunpack.c.h.b16 %v249
        %v2502 = vunpack.c.l.b16 %v250
        %v2503 = vunpack.c.h.b16 %v250
        %v2504 = vunpack.c.l.b16 %v251
        %v2505 = vunpack.c.h.b16 %v251
        %v2506 = vunpack.c.l.b16 %v252
        %v2507 = vunpack.c.h.b16 %v252
        %v2508 = vunpack.c.l.b16 %v253
        %v2509 = vunpack.c.h.b16 %v253
        %v2510 = vunpack.c.l.b16 %v254
        %v2511 = vunpack.c.h.b16 %v254
        %v2512 = vunpack.c.l.b16 %v255
        %v2513 = vunpack.c.h.b16 %v255
        %v2514 = vunpack.c.l.b16 %v256
        %v2515 = vunpack.c.h.b16 %v256
        %v2516 = vunpack.c.l.b16 %v257
        %v2517 = vunpack.c.h.b16 %v257
        %v2518 = vunpack.c.l.b16 %v258
        %v2519 = vunpack.c.h.b16 %v258
        %v2520 = vunpack.c.l.b16 %v259
        %v2521 = vunpack.c.h.b16 %v259
        %v2522 = vunpack.c.l.b16 %v260
        %v2523 = vunpack.c.h.b16 %v260
        %v2524 = vunpack.c.l.b16 %v261
        %v2525 = vunpack.c.h.b16 %v261
        %v2526 = vunpack.c.l.b16 %v262
        %v2527 = vunpack.c.h.b16 %v262
        %v2528 = vunpack.c.l.b16 %v263
        %v2529 = vunpack.c.h.b16 %v263
        %v2530 = vunpack.c.l.b16 %v264
        %v2531 = vunpack.c.h.b16 %v264
        %v2532 = vunpack.c.l.b16 %v265
        %v2533 = vunpack.c.h.b16 %v265
        %v2534 = vunpack.c.l.b16 %v266
        %v2535 = vunpack.c.h.b16 %v266
        %v2536 = vunpack.c.l.b16 %v267
        %v2537 = vunpack.c.h.b16 %v267
        %v2538 = vunpack.c.l.b16 %v268
        %v2539 = vunpack.c.h.b16 %v268
        %v2540 = vunpack.c.l.b16 %v269
        %v2541 = vunpack.c.h.b16 %v269
        %v2542 = vunpack.c.l.b16 %v270
        %v2543 = vunpack.c.h.b16 %v270
        %v2544 = vunpack.c.l.b16 %v271
        %v2545 = vunpack.c.h.b16 %v271
        %v2546 = vunpack.c.l.b16 %v272
        %v2547 = vunpack.c.h.b16 %v272
        %v2548 = vunpack.c.l.b16 %v273
        %v2549 = vunpack.c.h.b16 %v273
        %v2550 = vunpack.c.l.b16 %v274
        %v2551 = vunpack.c.h.b16 %v274
        %v2552 = vunpack.c.l.b16 %v275
        %v2553 = vunpack.c.h.b16 %v275
        %v2554 = vunpack.c.l.b16 %v276
        %v2555 = vunpack.c.h.b16 %v276
        %v2556 = vunpack.c.l.b16 %v277
        %v2557 = vunpack.c.h.b16 %v277
        %v2558 = vunpack.c.l.b16 %v278
        %v2559 = vunpack.c.h.b16 %v278
        %v2560 = vunpack.c.l.b16 %v279
        %v2561 = vunpack.c.h.b16 %v279
        %v2562 = vunpack.c.l.b16 %v280
        %v2563 = vunpack.c.h.b16 %v280
        %v2564 = vunpack.c.l.b16 %v281
        %v2565 = vunpack.c.h.b16 %v281
        %v2566 = vunpack.c.l.b16 %v282
        %v2567 = vunpack.c.h.b16 %v282
        %v2568 = vunpack.c.l.b16 %v283
        %v2569 = vunpack.c.h.b16 %v283
        %v2570 = vunpack.c.l.b16 %v284
        %v2571 = vunpack.c.h.b16 %v284
        %v2572 = vunpack.c.l.b16 %v285
        %v2573 = vunpack.c.h.b16 %v285
        %v2574 = vunpack.c.l.b16 %v286
        %v2575 = vunpack.c.h.b16 %v286
        %v2576 = vunpack.c.l.b16 %v287
        %v2577 = vunpack.c.h.b16 %v287
        %v2578 = vunpack.c.l.b16 %v288
        %v2579 = vunpack.c.h.b16 %v288
        %v2580 = vunpack.c.l.b16 %v289
        %v2581 = vunpack.c.h.b16 %v289
        %v2582 = vunpack.c.l.b16 %v290
        %v2583 = vunpack.c.h.b16 %v290
        %v2584 = vunpack.c.l.b16 %v291
        %v2585 = vunpack.c.h.b16 %v291
        %v2586 = vunpack.c.l.b16 %v292
        %v2587 = vunpack.c.h.b16 %v292
        %v2588 = vunpack.c.l.b16 %v293
        %v2589 = vunpack.c.h.b16 %v293
        %v2590 = vunpack.c.l.b16 %v294
        %v2591 = vunpack.c.h.b16 %v294
        %v2592 = vunpack.c.l.b16 %v295
        %v2593 = vunpack.c.h.b16 %v295
        %v2594 = vunpack.c.l.b16 %v296
        %v2595 = vunpack.c.h.b16 %v296
        %v2596 = vunpack.c.l.b16 %v297
        %v2597 = vunpack.c.h.b16 %v297
        %v2598 = vunpack.c.l.b16 %v298
        %v2599 = vunpack.c.h.b16 %v298
        %v2600 = vunpack.c.l.b16 %v299
        %v2601 = vunpack.c.h.b16 %v299
        %v2602 = vunpack.c.l.b16 %v300
        %v2603 = vunpack.c.h.b16 %v300
        %v2604 = vunpack.c.l.b16 %v301
        %v2605 = vunpack.c.h.b16 %v301
        %v2606 = vunpack.c.l.b16 %v302
        %v2607 = vunpack.c.h.b16 %v302
        %v2608 = vunpack.c.l.b16 %v303
        %v2609 = vunpack.c.h.b16 %v303
        %v2610 = vunpack.c.l.b16 %v304
        %v2611 = vunpack.c.h.b16 %v304
        %v2612 = vunpack.c.l.b16 %v305
        %v2613 = vunpack.c.h.b16 %v305
        %v2614 = vunpack.c.l.b16 %v306
        %v2615 = vunpack.c.h.b16 %v306
        %v2616 = vunpack.c.l.b16 %v307
        %v2617 = vunpack.c.h.b16 %v307
        %v2618 = vunpack.c.l.b16 %v308
        %v2619 = vunpack.c.h.b16 %v308
        %v2620 = vunpack.c.l.b16 %v309
        %v2621 = vunpack.c.h.b16 %v309
        %v2622 = vunpack.c.l.b16 %v310
        %v2623 = vunpack.c.h.b16 %v310
        %v2624 = vunpack.c.l.b16 %v311
        %v2625 = vunpack.c.h.b16 %v311
        %v2626 = vunpack.c.l.b16 %v312
        %v2627 = vunpack.c.h.b16 %v312
        %v2628 = vunpack.c.l.b16 %v313
        %v2629 = vunpack.c.h.b16 %v313
        %v2630 = vunpack.c.l.b16 %v314
        %v2631 = vunpack.c.h.b16 %v314
        %v2632 = vunpack.c.l.b16 %v315
        %v2633 = vunpack.c.h.b16 %v315
        %v2634 = vunpack.c.l.b16 %v316
        %v2635 = vunpack.c.h.b16 %v316
        %v2636 = vunpack.c.l.b16 %v317
        %v2637 = vunpack.c.h.b16 %v317
        %v2638 = vunpack.c.l.b16 %v318
        %v2639 = vunpack.c.h.b16 %v318
        %v2640 = vunpack.c.l.b16 %v319
        %v2641 = vunpack.c.h.b16 %v319
        %v2642 = vunpack.c.l.b16 %v320
        %v2643 = vunpack.c.h.b16 %v320
        %v2644 = vunpack.c.l.b16 %v321
        %v2645 = vunpack.c.h.b16 %v321
        %v2646 = vunpack.c.l.b16 %v322
        %v2647 = vunpack.c.h.b16 %v322
        %v2648 = vunpack.c.l.b16 %v323
        %v2649 = vunpack.c.h.b16 %v323
        %v2650 = vunpack.c.l.b16 %v324
        %v2651 = vunpack.c.h.b16 %v324
        %v2652 = vunpack.c.l.b16 %v325
        %v2653 = vunpack.c.h.b16 %v325
        %v2654 = vunpack.c.l.b16 %v326
        %v2655 = vunpack.c.h.b16 %v326
        %v2656 = vunpack.c.l.b16 %v327
        %v2657 = vunpack.c.h.b16 %v327
        %v2658 = vunpack.c.l.b16 %v328
        %v2659 = vunpack.c.h.b16 %v328
        %v2660 = vunpack.c.l.b16 %v329
        %v2661 = vunpack.c.h.b16 %v329
        %v2662 = vunpack.c.l.b16 %v330
        %v2663 = vunpack.c.h.b16 %v330
        %v2664 = vunpack.c.l.b16 %v331
        %v2665 = vunpack.c.h.b16 %v331
        %v2666 = vunpack.c.l.b16 %v332
        %v2667 = vunpack.c.h.b16 %v332
        %v2668 = vunpack.c.l.b16 %v333
        %v2669 = vunpack.c.h.b16 %v333
        %v2670 = vunpack.c.l.b16 %v334
        %v2671 = vunpack.c.h.b16 %v334
        %v2672 = vunpack.c.l.b16 %v335
        %v2673 = vunpack.c.h.b16 %v335
        %v2674 = vunpack.c.l.b16 %v336
        %v2675 = vunpack.c.h.b16 %v336
        %v2676 = vunpack.c.l.b16 %v337
        %v2677 = vunpack.c.h.b16 %v337
        %v2678 = vunpack.c.l.b16 %v338
        %v2679 = vunpack.c.h.b16 %v338
        %v2680 = vunpack.c.l.b16 %v339
        %v2681 = vunpack.c.h.b16 %v339
        %v2682 = vunpack.c.l.b16 %v340
        %v2683 = vunpack.c.h.b16 %v340
        %v2684 = vunpack.c.l.b16 %v341
        %v2685 = vunpack.c.h.b16 %v341
        %v2686 = vunpack.c.l.b16 %v342
        %v2687 = vunpack.c.h.b16 %v342
        %v2688 = vunpack.c.l.b16 %v343
        %v2689 = vunpack.c.h.b16 %v343
        %v2690 = vunpack.c.l.b16 %v344
        %v2691 = vunpack.c.h.b16 %v344
        %v2692 = vunpack.c.l.b16 %v345
        %v2693 = vunpack.c.h.b16 %v345
        %v2694 = vunpack.c.l.b16 %v346
        %v2695 = vunpack.c.h.b16 %v346
        %v2696 = vunpack.c.l.b16 %v347
        %v2697 = vunpack.c.h.b16 %v347
        %v2698 = vunpack.c.l.b16 %v348
        %v2699 = vunpack.c.h.b16 %v348
        %v2700 = vunpack.c.l.b16 %v349
        %v2701 = vunpack.c.h.b16 %v349
        %v2702 = vunpack.c.l.b16 %v350
        %v2703 = vunpack.c.h.b16 %v350
        %v2704 = vunpack.c.l.b16 %v351
        %v2705 = vunpack.c.h.b16 %v351
        %v2706 = vunpack.c.l.b16 %v352
        %v2707 = vunpack.c.h.b16 %v352
        %v2708 = vunpack.c.l.b16 %v353
        %v2709 = vunpack.c.h.b16 %v353
        %v2710 = vunpack.c.l.b16 %v354
        %v2711 = vunpack.c.h.b16 %v354
        %v2712 = vunpack.c.l.b16 %v355
        %v2713 = vunpack.c.h.b16 %v355
        %v2714 = vunpack.c.l.b16 %v356
        %v2715 = vunpack.c.h.b16 %v356
        %v2716 = vunpack.c.l.b16 %v357
        %v2717 = vunpack.c.h.b16 %v357
        %v2718 = vunpack.c.l.b16 %v358
        %v2719 = vunpack.c.h.b16 %v358
        %v2720 = vunpack.c.l.b16 %v359
        %v2721 = vunpack.c.h.b16 %v359
        %v2722 = vunpack.c.l.b16 %v360
        %v2723 = vunpack.c.h.b16 %v360
        %v2724 = vunpack.c.l.b16 %v361
        %v2725 = vunpack.c.h.b16 %v361
        %v2726 = vunpack.c.l.b16 %v362
        %v2727 = vunpack.c.h.b16 %v362
        %v2728 = vunpack.c.l.b16 %v363
        %v2729 = vunpack.c.h.b16 %v363
        %v2730 = vunpack.c.l.b16 %v364
        %v2731 = vunpack.c.h.b16 %v364
        %v2732 = vunpack.c.l.b16 %v365
        %v2733 = vunpack.c.h.b16 %v365
        %v2734 = vunpack.c.l.b16 %v366
        %v2735 = vunpack.c.h.b16 %v366
        %v2736 = vunpack.c.l.b16 %v367
        %v2737 = vunpack.c.h.b16 %v367
        %v2738 = vunpack.c.l.b16 %v368
        %v2739 = vunpack.c.h.b16 %v368
        %v2740 = vunpack.c.l.b16 %v369
        %v2741 = vunpack.c.h.b16 %v369
        %v2742 = vunpack.c.l.b16 %v370
        %v2743 = vunpack.c.h.b16 %v370
        %v2744 = vunpack.c.l.b16 %v371
        %v2745 = vunpack.c.h.b16 %v371
        %v2746 = vunpack.c.l.b16 %v372
        %v2747 = vunpack.c.h.b16 %v372
        %v2748 = vunpack.c.l.b16 %v373
        %v2749 = vunpack.c.h.b16 %v373
        %v2750 = vunpack.c.l.b16 %v374
        %v2751 = vunpack.c.h.b16 %v374
        %v2752 = vunpack.c.l.b16 %v375
        %v2753 = vunpack.c.h.b16 %v375
        %v2754 = vunpack.c.l.b16 %v376
        %v2755 = vunpack.c.h.b16 %v376
        %v2756 = vunpack.c.l.b16 %v377
        %v2757 = vunpack.c.h.b16 %v377
        %v2758 = vunpack.c.l.b16 %v378
        %v2759 = vunpack.c.h.b16 %v378
        %v2760 = vunpack.c.l.b16 %v379
        %v2761 = vunpack.c.h.b16 %v379
        %v2762 = vunpack.c.l.b16 %v380
        %v2763 = vunpack.c.h.b16 %v380
        %v2764 = vunpack.c.l.b16 %v381
        %v2765 = vunpack.c.h.b16 %v381
        %v2766 = vunpack.c.l.b16 %v382
        %v2767 = vunpack.c.h.b16 %v382
        %v2768 = vunpack.c.l.b16 %v383
        %v2769 = vunpack.c.h.b16 %v383
        %v2770 = vunpack.c.l.b16 %v384
        %v2771 = vunpack.c.h.b16 %v384
        %v2772 = vunpack.c.l.b16 %v385
        %v2773 = vunpack.c.h.b16 %v385
        %v2774 = vunpack.c.l.b16 %v386
        %v2775 = vunpack.c.h.b16 %v386
        %v2776 = vunpack.c.l.b16 %v387
        %v2777 = vunpack.c.h.b16 %v387
        %v2778 = vunpack.c.l.b16 %v388
        %v2779 = vunpack.c.h.b16 %v388
        %v2780 = vunpack.c.l.b16 %v389
        %v2781 = vunpack.c.h.b16 %v389
        %v2782 = vunpack.c.l.b16 %v390
        %v2783 = vunpack.c.h.b16 %v390
        %v2784 = vunpack.c.l.b16 %v391
        %v2785 = vunpack.c.h.b16 %v391
        %v2786 = vunpack.c.l.b16 %v392
        %v2787 = vunpack.c.h.b16 %v392
        %v2788 = vunpack.c.l.b16 %v393
        %v2789 = vunpack.c.h.b16 %v393
        %v2790 = vunpack.c.l.b16 %v394
        %v2791 = vunpack.c.h.b16 %v394
        %v2792 = vunpack.c.l.b16 %v395
        %v2793 = vunpack.c.h.b16 %v395
        %v2794 = vunpack.c.l.b16 %v396
        %v2795 = vunpack.c.h.b16 %v396
        %v2796 = vunpack.c.l.b16 %v397
        %v2797 = vunpack.c.h.b16 %v397
        %v2798 = vunpack.c.l.b16 %v398
        %v2799 = vunpack.c.h.b16 %v398
        %v2800 = vunpack.c.l.b16 %v399
        %v2801 = vunpack.c.h.b16 %v399
        %v2802 = vunpack.c.l.b16 %v400
        %v2803 = vunpack.c.h.b16 %v400
        %v2804 = vunpack.c.l.b16 %v401
        %v2805 = vunpack.c.h.b16 %v401
        %v2806 = vunpack.c.l.b16 %v402
        %v2807 = vunpack.c.h.b16 %v402
        %v2808 = vunpack.c.l.b16 %v403
        %v2809 = vunpack.c.h.b16 %v403
        %v2810 = vunpack.c.l.b16 %v404
        %v2811 = vunpack.c.h.b16 %v404
        %v2812 = vunpack.c.l.b16 %v405
        %v2813 = vunpack.c.h.b16 %v405
        %v2814 = vunpack.c.l.b16 %v406
        %v2815 = vunpack.c.h.b16 %v406
        %v2816 = vunpack.c.l.b16 %v407
        %v2817 = vunpack.c.h.b16 %v407
        %v2818 = vunpack.c.l.b16 %v408
        %v2819 = vunpack.c.h.b16 %v408
        %v2820 = vunpack.c.l.b16 %v409
        %v2821 = vunpack.c.h.b16 %v409
        %v2822 = vunpack.c.l.b16 %v410
        %v2823 = vunpack.c.h.b16 %v410
        %v2824 = vunpack.c.l.b16 %v411
        %v2825 = vunpack.c.h.b16 %v411
        %v2826 = vunpack.c.l.b16 %v412
        %v2827 = vunpack.c.h.b16 %v412
        %v2828 = vunpack.c.l.b16 %v413
        %v2829 = vunpack.c.h.b16 %v413
        %v2830 = vunpack.c.l.b16 %v414
        %v2831 = vunpack.c.h.b16 %v414
        %v2832 = vunpack.c.l.b16 %v415
        %v2833 = vunpack.c.h.b16 %v415
        %v2834 = vunpack.c.l.b16 %v416
        %v2835 = vunpack.c.h.b16 %v416
        %v2836 = vunpack.c.l.b16 %v417
        %v2837 = vunpack.c.h.b16 %v417
        %v2838 = vunpack.c.l.b16 %v418
        %v2839 = vunpack.c.h.b16 %v418
        %v2840 = vunpack.c.l.b16 %v419
        %v2841 = vunpack.c.h.b16 %v419
        %v2842 = vunpack.c.l.b16 %v420
        %v2843 = vunpack.c.h.b16 %v420
        %v2844 = vunpack.c.l.b16 %v421
        %v2845 = vunpack.c.h.b16 %v421
        %v2846 = vunpack.c.l.b16 %v422
        %v2847 = vunpack.c.h.b16 %v422
        %v2848 = vunpack.c.l.b16 %v423
        %v2849 = vunpack.c.h.b16 %v423
        %v2850 = vunpack.c.l.b16 %v424
        %v2851 = vunpack.c.h.b16 %v424
        %v2852 = vunpack.c.l.b16 %v425
        %v2853 = vunpack.c.h.b16 %v425
        %v2854 = vunpack.c.l.b16 %v426
        %v2855 = vunpack.c.h.b16 %v426
        %v2856 = vunpack.c.l.b16 %v427
        %v2857 = vunpack.c.h.b16 %v427
        %v2858 = vunpack.c.l.b16 %v428
        %v2859 = vunpack.c.h.b16 %v428
        %v2860 = vunpack.c.l.b16 %v429
        %v2861 = vunpack.c.h.b16 %v429
        %v2862 = vunpack.c.l.b16 %v430
        %v2863 = vunpack.c.h.b16 %v430
        %v2864 = vunpack.c.l.b16 %v431
        %v2865 = vunpack.c.h.b16 %v431
        %v2866 = vunpack.c.l.b16 %v432
        %v2867 = vunpack.c.h.b16 %v432
        %v2868 = vunpack.c.l.b16 %v433
        %v2869 = vunpack.c.h.b16 %v433
        %v2870 = vunpack.c.l.b16 %v434
        %v2871 = vunpack.c.h.b16 %v434
        %v2872 = vunpack.c.l.b16 %v435
        %v2873 = vunpack.c.h.b16 %v435
        %v2874 = vunpack.c.l.b16 %v436
        %v2875 = vunpack.c.h.b16 %v436
        %v2876 = vunpack.c.l.b16 %v437
        %v2877 = vunpack.c.h.b16 %v437
        %v2878 = vunpack.c.l.b16 %v438
        %v2879 = vunpack.c.h.b16 %v438
        %v2880 = vunpack.c.l.b16 %v439
        %v2881 = vunpack.c.h.b16 %v439
        %v2882 = vunpack.c.l.b16 %v440
        %v2883 = vunpack.c.h.b16 %v440
        %v2884 = vunpack.c.l.b16 %v441
        %v2885 = vunpack.c.h.b16 %v441
        %v2886 = vunpack.c.l.b16 %v442
        %v2887 = vunpack.c.h.b16 %v442
        %v2888 = vunpack.c.l.b16 %v443
        %v2889 = vunpack.c.h.b16 %v443
        %v2890 = vunpack.c.l.b16 %v444
        %v2891 = vunpack.c.h.b16 %v444
        %v2892 = vunpack.c.l.b16 %v445
        %v2893 = vunpack.c.h.b16 %v445
        %v2894 = vunpack.c.l.b16 %v446
        %v2895 = vunpack.c.h.b16 %v446
        %v2896 = vunpack.c.l.b16 %v447
        %v2897 = vunpack.c.h.b16 %v447
        %v2898 = vunpack.c.l.b16 %v448
        %v2899 = vunpack.c.h.b16 %v448
        %v2900 = vunpack.c.l.b16 %v449
        %v2901 = vunpack.c.h.b16 %v449
        %v2902 = vunpack.c.l.b16 %v450
        %v2903 = vunpack.c.h.b16 %v450
        %v2904 = vunpack.c.l.b16 %v451
        %v2905 = vunpack.c.h.b16 %v451
        %v2906 = vunpack.c.l.b16 %v452
        %v2907 = vunpack.c.h.b16 %v452
        %v2908 = vunpack.c.l.b16 %v453
        %v2909 = vunpack.c.h.b16 %v453
        %v2910 = vunpack.c.l.b16 %v454
        %v2911 = vunpack.c.h.b16 %v454
        %v2912 = vunpack.c.l.b16 %v455
        %v2913 = vunpack.c.h.b16 %v455
        %v2914 = vunpack.c.l.b16 %v456
        %v2915 = vunpack.c.h.b16 %v456
        %v2916 = vunpack.c.l.b16 %v457
        %v2917 = vunpack.c.h.b16 %v457
        %v2918 = vunpack.c.l.b16 %v458
        %v2919 = vunpack.c.h.b16 %v458
        %v2920 = vunpack.c.l.b16 %v459
        %v2921 = vunpack.c.h.b16 %v459
        %v2922 = vunpack.c.l.b16 %v460
        %v2923 = vunpack.c.h.b16 %v460
        %v2924 = vunpack.c.l.b16 %v461
        %v2925 = vunpack.c.h.b16 %v461
        %v2926 = vunpack.c.l.b16 %v462
        %v2927 = vunpack.c.h.b16 %v462
        %v2928 = vunpack.c.l.b16 %v463
        %v2929 = vunpack.c.h.b16 %v463
        %v2930 = vunpack.c.l.b16 %v464
        %v2931 = vunpack.c.h.b16 %v464
        %v2932 = vunpack.c.l.b16 %v465
        %v2933 = vunpack.c.h.b16 %v465
        %v2934 = vunpack.c.l.b16 %v466
        %v2935 = vunpack.c.h.b16 %v466
        %v2936 = vunpack.c.l.b16 %v467
        %v2937 = vunpack.c.h.b16 %v467
        %v2938 = vunpack.c.l.b16 %v468
        %v2939 = vunpack.c.h.b16 %v468
        %v2940 = vunpack.c.l.b16 %v469
        %v2941 = vunpack.c.h.b16 %v469
        %v2942 = vunpack.c.l.b16 %v470
        %v2943 = vunpack.c.h.b16 %v470
        %v2944 = vunpack.c.l.b16 %v471
        %v2945 = vunpack.c.h.b16 %v471
        %v2946 = vunpack.c.l.b16 %v472
        %v2947 = vunpack.c.h.b16 %v472
        %v2948 = vunpack.c.l.b16 %v473
        %v2949 = vunpack.c.h.b16 %v473
        %v2950 = vunpack.c.l.b16 %v474
        %v2951 = vunpack.c.h.b16 %v474
        %v2952 = vunpack.c.l.b16 %v475
        %v2953 = vunpack.c.h.b16 %v475
        %v2954 = vunpack.c.l.b16 %v476
        %v2955 = vunpack.c.h.b16 %v476
        %v2956 = vunpack.c.l.b16 %v477
        %v2957 = vunpack.c.h.b16 %v477
        %v2958 = vunpack.c.l.b16 %v478
        %v2959 = vunpack.c.h.b16 %v478
        %v2960 = vunpack.c.l.b16 %v479
        %v2961 = vunpack.c.h.b16 %v479
        %v2962 = vunpack.c.l.b16 %v480
        %v2963 = vunpack.c.h.b16 %v480
        %v2964 = vunpack.c.l.b16 %v481
        %v2965 = vunpack.c.h.b16 %v481
        %v2966 = vunpack.c.l.b16 %v482
        %v2967 = vunpack.c.h.b16 %v482
        %v2968 = vunpack.c.l.b16 %v483
        %v2969 = vunpack.c.h.b16 %v483
        %v2970 = vunpack.c.l.b16 %v484
        %v2971 = vunpack.c.h.b16 %v484
        %v2972 = vunpack.c.l.b16 %v485
        %v2973 = vunpack.c.h.b16 %v485
        %v2974 = vunpack.c.l.b16 %v486
        %v2975 = vunpack.c.h.b16 %v486
        %v2976 = vunpack.c.l.b16 %v487
        %v2977 = vunpack.c.h.b16 %v487
        %v2978 = vunpack.c.l.b16 %v488
        %v2979 = vunpack.c.h.b16 %v488
        %v2980 = vunpack.c.l.b16 %v489
        %v2981 = vunpack.c.h.b16 %v489
        %v2982 = vunpack.c.l.b16 %v490
        %v2983 = vunpack.c.h.b16 %v490
        %v2984 = vunpack.c.l.b16 %v491
        %v2985 = vunpack.c.h.b16 %v491
        %v2986 = vunpack.c.l.b16 %v492
        %v2987 = vunpack.c.h.b16 %v492
        %v2988 = vunpack.c.l.b16 %v493
        %v2989 = vunpack.c.h.b16 %v493
        %v2990 = vunpack.c.l.b16 %v494
        %v2991 = vunpack.c.h.b16 %v494
        %v2992 = vunpack.c.l.b16 %v495
        %v2993 = vunpack.c.h.b16 %v495
        %v2994 = vunpack.c.l.b16 %v496
        %v2995 = vunpack.c.h.b16 %v496
        %v2996 = vunpack.c.l.b16 %v497
        %v2997 = vunpack.c.h.b16 %v497
        %v2998 = vunpack.c.l.b16 %v498
        %v2999 = vunpack.c.h.b16 %v498
        %v3000 = vunpack.c.l.b16 %v499
        %v3001 = vunpack.c.h.b16 %v499
        %v3002 = vunpack.c.l.b16 %v500
        %v3003 = vunpack.c.h.b16 %v500
        %v3004 = vunpack.c.l.b16 %v501
        %v3005 = vunpack.c.h.b16 %v501
        %v3006 = vunpack.c.l.b16 %v502
        %v3007 = vunpack.c.h.b16 %v502
        %v3008 = vunpack.c.l.b16 %v503
        %v3009 = vunpack.c.h.b16 %v503
        %v3010 = vunpack.c.l.b16 %v504
        %v3011 = vunpack.c.h.b16 %v504
        %v3012 = vunpack.c.l.b16 %v505
        %v3013 = vunpack.c.h.b16 %v505
        %v3014 = vunpack.c.l.b16 %v506
        %v3015 = vunpack.c.h.b16 %v506
        %v3016 = vunpack.c.l.b16 %v507
        %v3017 = vunpack.c.h.b16 %v507
        %v3018 = vunpack.c.l.b16 %v508
        %v3019 = vunpack.c.h.b16 %v508
        %v3020 = vunpack.c.l.b16 %v509
        %v3021 = vunpack.c.h.b16 %v509
        %v3022 = vunpack.c.l.b16 %v510
        %v3023 = vunpack.c.h.b16 %v510
        %v3024 = vunpack.c.l.b16 %v511
        %v3025 = vunpack.c.h.b16 %v511
        %v3026 = vunpack.c.l.b16 %v512
        %v3027 = vunpack.c.h.b16 %v512
        %v3028 = vunpack.c.l.b16 %v513
        %v3029 = vunpack.c.h.b16 %v513
        %v3030 = vunpack.c.l.b16 %v514
        %v3031 = vunpack.c.h.b16 %v514
        %v3032 = vunpack.c.l.b16 %v515
        %v3033 = vunpack.c.h.b16 %v515
        %v3034 = vunpack.c.l.b16 %v516
        %v3035 = vunpack.c.h.b16 %v516
        %v3036 = vunpack.c.l.b16 %v517
        %v3037 = vunpack.c.h.b16 %v517
        %v3038 = vunpack.c.l.b16 %v518
        %v3039 = vunpack.c.h.b16 %v518
        %v3040 = vunpack.c.l.b16 %v519
        %v3041 = vunpack.c.h.b16 %v519
        %v3042 = vunpack.c.l.b16 %v520
        %v3043 = vunpack.c.h.b16 %v520
        %v3044 = vunpack.c.l.b16 %v521
        %v3045 = vunpack.c.h.b16 %v521
        %v3046 = vunpack.c.l.b16 %v522
        %v3047 = vunpack.c.h.b16 %v522
        %v3048 = vunpack.c.l.b16 %v523
        %v3049 = vunpack.c.h.b16 %v523
        %v3050 = vunpack.c.l.b16 %v524
        %v3051 = vunpack.c.h.b16 %v524
        %v3052 = vunpack.c.l.b16 %v525
        %v3053 = vunpack.c.h.b16 %v525
        %v3054 = vunpack.c.l.b16 %v526
        %v3055 = vunpack.c.h.b16 %v526
        %v3056 = vunpack.c.l.b16 %v527
        %v3057 = vunpack.c.h.b16 %v527
        %v3058 = vunpack.c.l.b16 %v528
        %v3059 = vunpack.c.h.b16 %v528
        %v3060 = vunpack.c.l.b16 %v529
        %v3061 = vunpack.c.h.b16 %v529
        %v3062 = vunpack.c.l.b16 %v530
        %v3063 = vunpack.c.h.b16 %v530
        %v3064 = vunpack.c.l.b16 %v531
        %v3065 = vunpack.c.h.b16 %v531
        %v3066 = vunpack.c.l.b16 %v532
        %v3067 = vunpack.c.h.b16 %v532
        %v3068 = vunpack.c.l.b16 %v533
        %v3069 = vunpack.c.h.b16 %v533
        %v3070 = vunpack.c.l.b16 %v534
        %v3071 = vunpack.c.h.b16 %v534
        %v3072 = vunpack.c.l.b16 %v535
        %v3073 = vunpack.c.h.b16 %v535
        %v3074 = vunpack.c.l.b16 %v536
        %v3075 = vunpack.c.h.b16 %v536
        %v3076 = vunpack.c.l.b16 %v537
        %v3077 = vunpack.c.h.b16 %v537
        %v3078 = vunpack.c.l.b16 %v538
        %v3079 = vunpack.c.h.b16 %v538
        %v3080 = vunpack.c.l.b16 %v539
        %v3081 = vunpack.c.h.b16 %v539
        %v3082 = vunpack.c.l.b16 %v540
        %v3083 = vunpack.c.h.b16 %v540
        %v3084 = vunpack.c.l.b16 %v541
        %v3085 = vunpack.c.h.b16 %v541
        %v3086 = vunpack.c.l.b16 %v542
        %v3087 = vunpack.c.h.b16 %v542
        %v3088 = vunpack.c.l.b16 %v543
        %v3089 = vunpack.c.h.b16 %v543
        %v3090 = vunpack.c.l.b16 %v544
        %v3091 = vunpack.c.h.b16 %v544
        %v3092 = vunpack.c.l.b16 %v545
        %v3093 = vunpack.c.h.b16 %v545
        %v3094 = vunpack.c.l.b16 %v546
        %v3095 = vunpack.c.h.b16 %v546
        %v3096 = vunpack.c.l.b16 %v547
        %v3097 = vunpack.c.h.b16 %v547
        %v3098 = vunpack.c.l.b16 %v548
        %v3099 = vunpack.c.h.b16 %v548
        %v3100 = vunpack.c.l.b16 %v549
        %v3101 = vunpack.c.h.b16 %v549
        %v3102 = vunpack.c.l.b16 %v550
        %v3103 = vunpack.c.h.b16 %v550
        %v3104 = vunpack.c.l.b16 %v551
        %v3105 = vunpack.c.h.b16 %v551
        %v3106 = vunpack.c.l.b16 %v552
        %v3107 = vunpack.c.h.b16 %v552
        %v3108 = vunpack.c.l.b16 %v553
        %v3109 = vunpack.c.h.b16 %v553
        %v3110 = vunpack.c.l.b16 %v554
        %v3111 = vunpack.c.h.b16 %v554
        %v3112 = vunpack.c.l.b16 %v555
        %v3113 = vunpack.c.h.b16 %v555
        %v3114 = vunpack.c.l.b16 %v556
        %v3115 = vunpack.c.h.b16 %v556
        %v3116 = vunpack.c.l.b16 %v557
        %v3117 = vunpack.c.h.b16 %v557
        %v3118 = vunpack.c.l.b16 %v558
        %v3119 = vunpack.c.h.b16 %v558
        %v3120 = vunpack.c.l.b16 %v559
        %v3121 = vunpack.c.h.b16 %v559
        %v3122 = vunpack.c.l.b16 %v560
        %v3123 = vunpack.c.h.b16 %v560
        %v3124 = vunpack.c.l.b16 %v561
        %v3125 = vunpack.c.h.b16 %v561
        %v3126 = vunpack.c.l.b16 %v562
        %v3127 = vunpack.c.h.b16 %v562
        %v3128 = vunpack.c.l.b16 %v563
        %v3129 = vunpack.c.h.b16 %v563
        %v3130 = vunpack.c.l.b16 %v564
        %v3131 = vunpack.c.h.b16 %v564
        %v3132 = vunpack.c.l.b16 %v565
        %v3133 = vunpack.c.h.b16 %v565
        %v3134 = vunpack.c.l.b16 %v566
        %v3135 = vunpack.c.h.b16 %v566
        %v3136 = vunpack.c.l.b16 %v567
        %v3137 = vunpack.c.h.b16 %v567
        %v3138 = vunpack.c.l.b16 %v568
        %v3139 = vunpack.c.h.b16 %v568
        %v3140 = vunpack.c.l.b16 %v569
        %v3141 = vunpack.c.h.b16 %v569
        %v3142 = vunpack.c.l.b16 %v570
        %v3143 = vunpack.c.h.b16 %v570
        %v3144 = vunpack.c.l.b16 %v571
        %v3145 = vunpack.c.h.b16 %v571
        %v3146 = vunpack.c.l.b16 %v572
        %v3147 = vunpack.c.h.b16 %v572
        %v3148 = vunpack.c.l.b16 %v573
        %v3149 = vunpack.c.h.b16 %v573
        %v3150 = vunpack.c.l.b16 %v574
        %v3151 = vunpack.c.h.b16 %v574
        %v3152 = vunpack.c.l.b16 %v575
        %v3153 = vunpack.c.h.b16 %v575
        %v3154 = vunpack.c.l.b16 %v576
        %v3155 = vunpack.c.h.b16 %v576
        %v3156 = vunpack.c.l.b16 %v577
        %v3157 = vunpack.c.h.b16 %v577
        %v3158 = vunpack.c.l.b16 %v578
        %v3159 = vunpack.c.h.b16 %v578
        %v3160 = vunpack.c.l.b16 %v579
        %v3161 = vunpack.c.h.b16 %v579
        %v3162 = vunpack.c.l.b16 %v580
        %v3163 = vunpack.c.h.b16 %v580
        %v3164 = vunpack.c.l.b16 %v581
        %v3165 = vunpack.c.h.b16 %v581
        %v3166 = vunpack.c.l.b16 %v582
        %v3167 = vunpack.c.h.b16 %v582
        %v3168 = vunpack.c.l.b16 %v583
        %v3169 = vunpack.c.h.b16 %v583
        %v3170 = vunpack.c.l.b16 %v584
        %v3171 = vunpack.c.h.b16 %v584
        %v3172 = vunpack.c.l.b16 %v585
        %v3173 = vunpack.c.h.b16 %v585
        %v3174 = vunpack.c.l.b16 %v586
        %v3175 = vunpack.c.h.b16 %v586
        %v3176 = vunpack.c.l.b16 %v587
        %v3177 = vunpack.c.h.b16 %v587
        %v3178 = vunpack.c.l.b16 %v588
        %v3179 = vunpack.c.h.b16 %v588
        %v3180 = vunpack.c.l.b16 %v589
        %v3181 = vunpack.c.h.b16 %v589
        %v3182 = vunpack.c.l.b16 %v590
        %v3183 = vunpack.c.h.b16 %v590
        %v3184 = vunpack.c.l.b16 %v591
        %v3185 = vunpack.c.h.b16 %v591
        %v3186 = vunpack.c.l.b16 %v592
        %v3187 = vunpack.c.h.b16 %v592
        %v3188 = vunpack.c.l.b16 %v593
        %v3189 = vunpack.c.h.b16 %v593
        %v3190 = vunpack.c.l.b16 %v594
        %v3191 = vunpack.c.h.b16 %v594
        %v3192 = vunpack.c.l.b16 %v595
        %v3193 = vunpack.c.h.b16 %v595
        %v3194 = vunpack.c.l.b16 %v596
        %v3195 = vunpack.c.h.b16 %v596
        %v3196 = vunpack.c.l.b16 %v597
        %v3197 = vunpack.c.h.b16 %v597
        %v3198 = vunpack.c.l.b16 %v598
        %v3199 = vunpack.c.h.b16 %v598
        %v3200 = vunpack.c.l.b16 %v599
        %v3201 = vunpack.c.h.b16 %v599
        %v3202 = vunpack.c.l.b16 %v600
        %v3203 = vunpack.c.h.b16 %v600
        %v3204 = vunpack.c.l.b16 %v601
        %v3205 = vunpack.c.h.b16 %v601
        %v3206 = vunpack.c.l.b16 %v602
        %v3207 = vunpack.c.h.b16 %v602
        %v3208 = vunpack.c.l.b16 %v603
        %v3209 = vunpack.c.h.b16 %v603
        %v3210 = vunpack.c.l.b16 %v604
        %v3211 = vunpack.c.h.b16 %v604
        %v3212 = vunpack.c.l.b16 %v605
        %v3213 = vunpack.c.h.b16 %v605
        %v3214 = vunpack.c.l.b16 %v606
        %v3215 = vunpack.c.h.b16 %v606
        %v3216 = vunpack.c.l.b16 %v607
        %v3217 = vunpack.c.h.b16 %v607
        %v3218 = vunpack.c.l.b16 %v608
        %v3219 = vunpack.c.h.b16 %v608
        %v3220 = vunpack.c.l.b16 %v609
        %v3221 = vunpack.c.h.b16 %v609
        %v3222 = vunpack.c.l.b16 %v610
        %v3223 = vunpack.c.h.b16 %v610
        %v3224 = vunpack.c.l.b16 %v611
        %v3225 = vunpack.c.h.b16 %v611
        %v3226 = vunpack.c.l.b16 %v612
        %v3227 = vunpack.c.h.b16 %v612
        %v3228 = vunpack.c.l.b16 %v613
        %v3229 = vunpack.c.h.b16 %v613
        %v3230 = vunpack.c.l.b16 %v614
        %v3231 = vunpack.c.h.b16 %v614
        %v3232 = vunpack.c.l.b16 %v615
        %v3233 = vunpack.c.h.b16 %v615
        %v3234 = vunpack.c.l.b16 %v616
        %v3235 = vunpack.c.h.b16 %v616
        %v3236 = vunpack.c.l.b16 %v617
        %v3237 = vunpack.c.h.b16 %v617
        %v3238 = vunpack.c.l.b16 %v618
        %v3239 = vunpack.c.h.b16 %v618
        %v3240 = vunpack.c.l.b16 %v619
        %v3241 = vunpack.c.h.b16 %v619
        %v3242 = vunpack.c.l.b16 %v620
        %v3243 = vunpack.c.h.b16 %v620
        %v3244 = vunpack.c.l.b16 %v621
        %v3245 = vunpack.c.h.b16 %v621
        %v3246 = vunpack.c.l.b16 %v622
        %v3247 = vunpack.c.h.b16 %v622
        %v3248 = vunpack.c.l.b16 %v623
        %v3249 = vunpack.c.h.b16 %v623
        %v3250 = vunpack.c.l.b16 %v624
        %v3251 = vunpack.c.h.b16 %v624
        %v3252 = vunpack.c.l.b16 %v625
        %v3253 = vunpack.c.h.b16 %v625
        %v3254 = vunpack.c.l.b16 %v626
        %v3255 = vunpack.c.h.b16 %v626
        %v3256 = vunpack.c.l.b16 %v627
        %v3257 = vunpack.c.h.b16 %v627
        %v3258 = vunpack.c.l.b16 %v628
        %v3259 = vunpack.c.h.b16 %v628
        %v3260 = vunpack.c.l.b16 %v629
        %v3261 = vunpack.c.h.b16 %v629
        %v3262 = vunpack.c.l.b16 %v630
        %v3263 = vunpack.c.h.b16 %v630
        %v3264 = vunpack.c.l.b16 %v631
        %v3265 = vunpack.c.h.b16 %v631
        %v3266 = vunpack.c.l.b16 %v632
        %v3267 = vunpack.c.h.b16 %v632
        %v3268 = vunpack.c.l.b16 %v633
        %v3269 = vunpack.c.h.b16 %v633
        %v3270 = vunpack.c.l.b16 %v634
        %v3271 = vunpack.c.h.b16 %v634
        %v3272 = vunpack.c.l.b16 %v635
        %v3273 = vunpack.c.h.b16 %v635
        %v3274 = vunpack.c.l.b16 %v636
        %v3275 = vunpack.c.h.b16 %v636
        %v3276 = vunpack.c.l.b16 %v637
        %v3277 = vunpack.c.h.b16 %v637
        %v3278 = vunpack.c.l.b16 %v638
        %v3279 = vunpack.c.h.b16 %v638
        %v3280 = vunpack.c.l.b16 %v639
        %v3281 = vunpack.c.h.b16 %v639
        %v3282 = vunpack.c.l.b16 %v640
        %v3283 = vunpack.c.h.b16 %v640
        %v3284 = vunpack.c.l.b16 %v641
        %v3285 = vunpack.c.h.b16 %v641
        %v3286 = vunpack.c.l.b16 %v642
        %v3287 = vunpack.c.h.b16 %v642
        %v3288 = vunpack.c.l.b16 %v643
        %v3289 = vunpack.c.h.b16 %v643
        %v3290 = vunpack.c.l.b16 %v644
        %v3291 = vunpack.c.h.b16 %v644
        %v3292 = vunpack.c.l.b16 %v645
        %v3293 = vunpack.c.h.b16 %v645
        %v3294 = vunpack.c.l.b16 %v646
        %v3295 = vunpack.c.h.b16 %v646
        %v3296 = vunpack.c.l.b16 %v647
        %v3297 = vunpack.c.h.b16 %v647
        %v3298 = vunpack.c.l.b16 %v648
        %v3299 = vunpack.c.h.b16 %v648
        %v3300 = vunpack.c.l.b16 %v649
        %v3301 = vunpack.c.h.b16 %v649
        %v3302 = vunpack.c.l.b16 %v650
        %v3303 = vunpack.c.h.b16 %v650
        %v3304 = vunpack.c.l.b16 %v651
        %v3305 = vunpack.c.h.b16 %v651
        %v3306 = vunpack.c.l.b16 %v652
        %v3307 = vunpack.c.h.b16 %v652
        %v3308 = vunpack.c.l.b16 %v653
        %v3309 = vunpack.c.h.b16 %v653
        %v3310 = vunpack.c.l.b16 %v654
        %v3311 = vunpack.c.h.b16 %v654
        %v3312 = vunpack.c.l.b16 %v655
        %v3313 = vunpack.c.h.b16 %v655
        %v3314 = vunpack.c.l.b16 %v656
        %v3315 = vunpack.c.h.b16 %v656
        %v3316 = vunpack.c.l.b16 %v657
        %v3317 = vunpack.c.h.b16 %v657
        %v3318 = vunpack.c.l.b16 %v658
        %v3319 = vunpack.c.h.b16 %v658
        %v3320 = vunpack.c.l.b16 %v659
        %v3321 = vunpack.c.h.b16 %v659
        %v3322 = vunpack.c.l.b16 %v660
        %v3323 = vunpack.c.h.b16 %v660
        %v3324 = vunpack.c.l.b16 %v661
        %v3325 = vunpack.c.h.b16 %v661
        %v3326 = vunpack.c.l.b16 %v662
        %v3327 = vunpack.c.h.b16 %v662
        %v3328 = vunpack.c.l.b16 %v663
        %v3329 = vunpack.c.h.b16 %v663
        %v3330 = vunpack.c.l.b16 %v664
        %v3331 = vunpack.c.h.b16 %v664
        %v3332 = vunpack.c.l.b16 %v665
        %v3333 = vunpack.c.h.b16 %v665
        %v3334 = vunpack.c.l.b16 %v666
        %v3335 = vunpack.c.h.b16 %v666
        %v3336 = vunpack.c.l.b16 %v667
        %v3337 = vunpack.c.h.b16 %v667
        %v3338 = vunpack.c.l.b16 %v668
        %v3339 = vunpack.c.h.b16 %v668
        %v3340 = vunpack.c.l.b16 %v669
        %v3341 = vunpack.c.h.b16 %v669
        %v3342 = vunpack.c.l.b16 %v670
        %v3343 = vunpack.c.h.b16 %v670
        %v3344 = vunpack.c.l.b16 %v671
        %v3345 = vunpack.c.h.b16 %v671
        %v3346 = vunpack.c.l.b16 %v672
        %v3347 = vunpack.c.h.b16 %v672
        %v3348 = vunpack.c.l.b16 %v673
        %v3349 = vunpack.c.h.b16 %v673
        %v3350 = vunpack.c.l.b16 %v674
        %v3351 = vunpack.c.h.b16 %v674
        %v3352 = vunpack.c.l.b16 %v675
        %v3353 = vunpack.c.h.b16 %v675
        %v3354 = vunpack.c.l.b16 %v676
        %v3355 = vunpack.c.h.b16 %v676
        %v3356 = vunpack.c.l.b16 %v677
        %v3357 = vunpack.c.h.b16 %v677
        %v3358 = vunpack.c.l.b16 %v678
        %v3359 = vunpack.c.h.b16 %v678
        %v3360 = vunpack.c.l.b16 %v679
        %v3361 = vunpack.c.h.b16 %v679
        %v3362 = vunpack.c.l.b16 %v680
        %v3363 = vunpack.c.h.b16 %v680
        %v3364 = vunpack.c.l.b16 %v681
        %v3365 = vunpack.c.h.b16 %v681
        %v3366 = vunpack.c.l.b16 %v682
        %v3367 = vunpack.c.h.b16 %v682
        %v3368 = vunpack.c.l.b16 %v683
        %v3369 = vunpack.c.h.b16 %v683
        %v3370 = vunpack.c.l.b16 %v684
        %v3371 = vunpack.c.h.b16 %v684
        %v3372 = vunpack.c.l.b16 %v685
        %v3373 = vunpack.c.h.b16 %v685
        %v3374 = vunpack.c.l.b16 %v686
        %v3375 = vunpack.c.h.b16 %v686
        %v3376 = vunpack.c.l.b16 %v687
        %v3377 = vunpack.c.h.b16 %v687
        %v3378 = vunpack.c.l.b16 %v688
        %v3379 = vunpack.c.h.b16 %v688
        %v3380 = vunpack.c.l.b16 %v689
        %v3381 = vunpack.c.h.b16 %v689
        %v3382 = vunpack.c.l.b16 %v690
        %v3383 = vunpack.c.h.b16 %v690
        %v3384 = vunpack.c.l.b16 %v691
        %v3385 = vunpack.c.h.b16 %v691
        %v3386 = vunpack.c.l.b16 %v692
        %v3387 = vunpack.c.h.b16 %v692
        %v3388 = vunpack.c.l.b16 %v693
        %v3389 = vunpack.c.h.b16 %v693
        %v3390 = vunpack.c.l.b16 %v694
        %v3391 = vunpack.c.h.b16 %v694
        %v3392 = vunpack.c.l.b16 %v695
        %v3393 = vunpack.c.h.b16 %v695
        %v3394 = vunpack.c.l.b16 %v696
        %v3395 = vunpack.c.h.b16 %v696
        %v3396 = vunpack.c.l.b16 %v697
        %v3397 = vunpack.c.h.b16 %v697
        %v3398 = vunpack.c.l.b16 %v698
        %v3399 = vunpack.c.h.b16 %v698
        %v3400 = vunpack.c.l.b16 %v699
        %v3401 = vunpack.c.h.b16 %v699
        %v3402 = vunpack.c.l.b16 %v700
        %v3403 = vunpack.c.h.b16 %v700
        %v3404 = vunpack.c.l.b16 %v701
        %v3405 = vunpack.c.h.b16 %v701
        %v3406 = vunpack.c.l.b16 %v702
        %v3407 = vunpack.c.h.b16 %v702
        %v3408 = vunpack.c.l.b16 %v703
        %v3409 = vunpack.c.h.b16 %v703
        %v3410 = vunpack.c.l.b16 %v704
        %v3411 = vunpack.c.h.b16 %v704
        %v3412 = vunpack.c.l.b16 %v705
        %v3413 = vunpack.c.h.b16 %v705
        %v3414 = vunpack.c.l.b16 %v706
        %v3415 = vunpack.c.h.b16 %v706
        %v3416 = vunpack.c.l.b16 %v707
        %v3417 = vunpack.c.h.b16 %v707
        %v3418 = vunpack.c.l.b16 %v708
        %v3419 = vunpack.c.h.b16 %v708
        %v3420 = vunpack.c.l.b16 %v709
        %v3421 = vunpack.c.h.b16 %v709
        %v3422 = vunpack.c.l.b16 %v710
        %v3423 = vunpack.c.h.b16 %v710
        %v3424 = vunpack.c.l.b16 %v711
        %v3425 = vunpack.c.h.b16 %v711
        %v3426 = vunpack.c.l.b16 %v712
        %v3427 = vunpack.c.h.b16 %v712
        %v3428 = vunpack.c.l.b16 %v713
        %v3429 = vunpack.c.h.b16 %v713
        %v3430 = vunpack.c.l.b16 %v714
        %v3431 = vunpack.c.h.b16 %v714
        %v3432 = vunpack.c.l.b16 %v715
        %v3433 = vunpack.c.h.b16 %v715
        %v3434 = vunpack.c.l.b16 %v716
        %v3435 = vunpack.c.h.b16 %v716
        %v3436 = vunpack.c.l.b16 %v717
        %v3437 = vunpack.c.h.b16 %v717
        %v3438 = vunpack.c.l.b16 %v718
        %v3439 = vunpack.c.h.b16 %v718
        %v3440 = vunpack.c.l.b16 %v719
        %v3441 = vunpack.c.h.b16 %v719
        %v3442 = vunpack.c.l.b16 %v720
        %v3443 = vunpack.c.h.b16 %v720
        %v3444 = vunpack.c.l.b16 %v721
        %v3445 = vunpack.c.h.b16 %v721
        %v3446 = vunpack.c.l.b16 %v722
        %v3447 = vunpack.c.h.b16 %v722
        %v3448 = vunpack.c.l.b16 %v723
        %v3449 = vunpack.c.h.b16 %v723
        %v3450 = vunpack.c.l.b16 %v724
        %v3451 = vunpack.c.h.b16 %v724
        %v3452 = vunpack.c.l.b16 %v725
        %v3453 = vunpack.c.h.b16 %v725
        %v3454 = vunpack.c.l.b16 %v726
        %v3455 = vunpack.c.h.b16 %v726
        %v3456 = vunpack.c.l.b16 %v727
        %v3457 = vunpack.c.h.b16 %v727
        %v3458 = vunpack.c.l.b16 %v728
        %v3459 = vunpack.c.h.b16 %v728
        %v3460 = vunpack.c.l.b16 %v729
        %v3461 = vunpack.c.h.b16 %v729
        %v3462 = vunpack.c.l.b16 %v730
        %v3463 = vunpack.c.h.b16 %v730
        %v3464 = vunpack.c.l.b16 %v731
        %v3465 = vunpack.c.h.b16 %v731
        %v3466 = vunpack.c.l.b16 %v732
        %v3467 = vunpack.c.h.b16 %v732
        %v3468 = vunpack.c.l.b16 %v733
        %v3469 = vunpack.c.h.b16 %v733
        %v3470 = vunpack.c.l.b16 %v734
        %v3471 = vunpack.c.h.b16 %v734
        %v3472 = vunpack.c.l.b16 %v735
        %v3473 = vunpack.c.h.b16 %v735
        %v3474 = vunpack.c.l.b16 %v736
        %v3475 = vunpack.c.h.b16 %v736
        %v3476 = vunpack.c.l.b16 %v737
        %v3477 = vunpack.c.h.b16 %v737
        %v3478 = vunpack.c.l.b16 %v738
        %v3479 = vunpack.c.h.b16 %v738
        %v3480 = vunpack.c.l.b16 %v739
        %v3481 = vunpack.c.h.b16 %v739
        %v3482 = vunpack.c.l.b16 %v740
        %v3483 = vunpack.c.h.b16 %v740
        %v3484 = vunpack.c.l.b16 %v741
        %v3485 = vunpack.c.h.b16 %v741
        %v3486 = vunpack.c.l.b16 %v742
        %v3487 = vunpack.c.h.b16 %v742
        %v3488 = vunpack.c.l.b16 %v743
        %v3489 = vunpack.c.h.b16 %v743
        %v3490 = vunpack.c.l.b16 %v744
        %v3491 = vunpack.c.h.b16 %v744
        %v3492 = vunpack.c.l.b16 %v745
        %v3493 = vunpack.c.h.b16 %v745
        %v3494 = vunpack.c.l.b16 %v746
        %v3495 = vunpack.c.h.b16 %v746
        %v3496 = vunpack.c.l.b16 %v747
        %v3497 = vunpack.c.h.b16 %v747
        %v3498 = vunpack.c.l.b16 %v748
        %v3499 = vunpack.c.h.b16 %v748
        %v3500 = vunpack.c.l.b16 %v749
        %v3501 = vunpack.c.h.b16 %v749
        %v3502 = vunpack.c.l.b16 %v750
        %v3503 = vunpack.c.h.b16 %v750
        %v3504 = vunpack.c.l.b16 %v751
        %v3505 = vunpack.c.h.b16 %v751
        %v3506 = vunpack.c.l.b16 %v752
        %v3507 = vunpack.c.h.b16 %v752
        %v3508 = vunpack.c.l.b16 %v753
        %v3509 = vunpack.c.h.b16 %v753
        %v3510 = vunpack.c.l.b16 %v754
        %v3511 = vunpack.c.h.b16 %v754
        %v3512 = vunpack.c.l.b16 %v755
        %v3513 = vunpack.c.h.b16 %v755
        %v3514 = vunpack.c.l.b16 %v756
        %v3515 = vunpack.c.h.b16 %v756
        %v3516 = vunpack.c.l.b16 %v757
        %v3517 = vunpack.c.h.b16 %v757
        %v3518 = vunpack.c.l.b16 %v758
        %v3519 = vunpack.c.h.b16 %v758
        %v3520 = vunpack.c.l.b16 %v759
        %v3521 = vunpack.c.h.b16 %v759
        %v3522 = vunpack.c.l.b16 %v760
        %v3523 = vunpack.c.h.b16 %v760
        %v3524 = vunpack.c.l.b16 %v761
        %v3525 = vunpack.c.h.b16 %v761
        %v3526 = vunpack.c.l.b16 %v762
        %v3527 = vunpack.c.h.b16 %v762
        %v3528 = vunpack.c.l.b16 %v763
        %v3529 = vunpack.c.h.b16 %v763
        %v3530 = vunpack.c.l.b16 %v764
        %v3531 = vunpack.c.h.b16 %v764
        %v3532 = vunpack.c.l.b16 %v765
        %v3533 = vunpack.c.h.b16 %v765
        %v3534 = vunpack.c.l.b16 %v766
        %v3535 = vunpack.c.h.b16 %v766
        %v3536 = vunpack.c.l.b16 %v767
        %v3537 = vunpack.c.h.b16 %v767
        %v3538 = vunpack.c.l.b16 %v768
        %v3539 = vunpack.c.h.b16 %v768
        %v3540 = vunpack.c.l.b16 %v769
        %v3541 = vunpack.c.h.b16 %v769
        %v3542 = vunpack.c.l.b16 %v770
        %v3543 = vunpack.c.h.b16 %v770
        %v3544 = vunpack.c.l.b16 %v771
        %v3545 = vunpack.c.h.b16 %v771
        %v3546 = vunpack.c.l.b16 %v772
        %v3547 = vunpack.c.h.b16 %v772
        %v3548 = vunpack.c.l.b16 %v773
        %v3549 = vunpack.c.h.b16 %v773
        %v3550 = vunpack.c.l.b16 %v774
        %v3551 = vunpack.c.h.b16 %v774
        %v3552 = vunpack.c.l.b16 %v775
        %v3553 = vunpack.c.h.b16 %v775
        %v3554 = vunpack.c.l.b16 %v776
        %v3555 = vunpack.c.h.b16 %v776
        %v3556 = vunpack.c.l.b16 %v777
        %v3557 = vunpack.c.h.b16 %v777
        %v3558 = vunpack.c.l.b16 %v778
        %v3559 = vunpack.c.h.b16 %v778
        %v3560 = vunpack.c.l.b16 %v779
        %v3561 = vunpack.c.h.b16 %v779
        %v3562 = vunpack.c.l.b16 %v780
        %v3563 = vunpack.c.h.b16 %v780
        %v3564 = vunpack.c.l.b16 %v781
        %v3565 = vunpack.c.h.b16 %v781
        %v3566 = vunpack.c.l.b16 %v782
        %v3567 = vunpack.c.h.b16 %v782
        %v3568 = vunpack.c.l.b16 %v783
        %v3569 = vunpack.c.h.b16 %v783
        %v3570 = vunpack.c.l.b16 %v784
        %v3571 = vunpack.c.h.b16 %v784
        %v3572 = vunpack.c.l.b16 %v785
        %v3573 = vunpack.c.h.b16 %v785
        %v3574 = vunpack.c.l.b16 %v786
        %v3575 = vunpack.c.h.b16 %v786
        %v3576 = vunpack.c.l.b16 %v787
        %v3577 = vunpack.c.h.b16 %v787
        %v3578 = vunpack.c.l.b16 %v788
        %v3579 = vunpack.c.h.b16 %v788
        %v3580 = vunpack.c.l.b16 %v789
        %v3581 = vunpack.c.h.b16 %v789
        %v3582 = vunpack.c.l.b16 %v790
        %v3583 = vunpack.c.h.b16 %v790
        %v3584 = vunpack.c.l.b16 %v791
        %v3585 = vunpack.c.h.b16 %v791
        %v3586 = vunpack.c.l.b16 %v792
        %v3587 = vunpack.c.h.b16 %v792
        %v3588 = vunpack.c.l.b16 %v793
        %v3589 = vunpack.c.h.b16 %v793
        %v3590 = vunpack.c.l.b16 %v794
        %v3591 = vunpack.c.h.b16 %v794
        %v3592 = vunpack.c.l.b16 %v795
        %v3593 = vunpack.c.h.b16 %v795
        %v3594 = vunpack.c.l.b16 %v796
        %v3595 = vunpack.c.h.b16 %v796
        %v3596 = vunpack.c.l.b16 %v797
        %v3597 = vunpack.c.h.b16 %v797
        %v3598 = vunpack.c.l.b16 %v798
        %v3599 = vunpack.c.h.b16 %v798
        %v3600 = vunpack.c.l.b16 %v799
        %v3601 = vunpack.c.h.b16 %v799
        %v3602 = vunpack.c.l.b16 %v800
        %v3603 = vunpack.c.h.b16 %v800
        %v3604 = vunpack.c.l.b16 %v801
        %v3605 = vunpack.c.h.b16 %v801
        %v3606 = vunpack.c.l.b16 %v802
        %v3607 = vunpack.c.h.b16 %v802
        %v3608 = vunpack.c.l.b16 %v803
        %v3609 = vunpack.c.h.b16 %v803
        %v3610 = vunpack.c.l.b16 %v804
        %v3611 = vunpack.c.h.b16 %v804
        %v3612 = vunpack.c.l.b16 %v805
        %v3613 = vunpack.c.h.b16 %v805
        %v3614 = vunpack.c.l.b16 %v806
        %v3615 = vunpack.c.h.b16 %v806
        %v3616 = vunpack.c.l.b16 %v807
        %v3617 = vunpack.c.h.b16 %v807
        %v3618 = vunpack.c.l.b16 %v808
        %v3619 = vunpack.c.h.b16 %v808
        %v3620 = vunpack.c.l.b16 %v809
        %v3621 = vunpack.c.h.b16 %v809
        %v3622 = vunpack.c.l.b16 %v810
        %v3623 = vunpack.c.h.b16 %v810
        %v3624 = vunpack.c.l.b16 %v811
        %v3625 = vunpack.c.h.b16 %v811
        %v3626 = vunpack.c.l.b16 %v812
        %v3627 = vunpack.c.h.b16 %v812
        %v3628 = vunpack.c.l.b16 %v813
        %v3629 = vunpack.c.h.b16 %v813
        %v3630 = vunpack.c.l.b16 %v814
        %v3631 = vunpack.c.h.b16 %v814
        %v3632 = vunpack.c.l.b16 %v815
        %v3633 = vunpack.c.h.b16 %v815
        %v3634 = vunpack.c.l.b16 %v816
        %v3635 = vunpack.c.h.b16 %v816
        %v3636 = vunpack.c.l.b16 %v817
        %v3637 = vunpack.c.h.b16 %v817
        %v3638 = vunpack.c.l.b16 %v818
        %v3639 = vunpack.c.h.b16 %v818
        %v3640 = vunpack.c.l.b16 %v819
        %v3641 = vunpack.c.h.b16 %v819
        %v3642 = vunpack.c.l.b16 %v820
        %v3643 = vunpack.c.h.b16 %v820
        %v3644 = vunpack.c.l.b16 %v821
        %v3645 = vunpack.c.h.b16 %v821
        %v3646 = vunpack.c.l.b16 %v822
        %v3647 = vunpack.c.h.b16 %v822
        %v3648 = vunpack.c.l.b16 %v823
        %v3649 = vunpack.c.h.b16 %v823
        %v3650 = vunpack.c.l.b16 %v824
        %v3651 = vunpack.c.h.b16 %v824
        %v3652 = vunpack.c.l.b16 %v825
        %v3653 = vunpack.c.h.b16 %v825
        %v3654 = vunpack.c.l.b16 %v826
        %v3655 = vunpack.c.h.b16 %v826
        %v3656 = vunpack.c.l.b16 %v827
        %v3657 = vunpack.c.h.b16 %v827
        %v3658 = vunpack.c.l.b16 %v828
        %v3659 = vunpack.c.h.b16 %v828
        %v3660 = vunpack.c.l.b16 %v829
        %v3661 = vunpack.c.h.b16 %v829
        %v3662 = vunpack.c.l.b16 %v830
        %v3663 = vunpack.c.h.b16 %v830
        %v3664 = vunpack.c.l.b16 %v831
        %v3665 = vunpack.c.h.b16 %v831
        %v3666 = vunpack.c.l.b16 %v832
        %v3667 = vunpack.c.h.b16 %v832
        %v3668 = vunpack.c.l.b16 %v833
        %v3669 = vunpack.c.h.b16 %v833
        %v3670 = vunpack.c.l.b16 %v834
        %v3671 = vunpack.c.h.b16 %v834
        %v3672 = vunpack.c.l.b16 %v835
        %v3673 = vunpack.c.h.b16 %v835
        %v3674 = vunpack.c.l.b16 %v836
        %v3675 = vunpack.c.h.b16 %v836
        %v3676 = vunpack.c.l.b16 %v837
        %v3677 = vunpack.c.h.b16 %v837
        %v3678 = vunpack.c.l.b16 %v838
        %v3679 = vunpack.c.h.b16 %v838
        %v3680 = vunpack.c.l.b16 %v839
        %v3681 = vunpack.c.h.b16 %v839
        %v3682 = vunpack.c.l.b16 %v840
        %v3683 = vunpack.c.h.b16 %v840
        %v3684 = vunpack.c.l.b16 %v841
        %v3685 = vunpack.c.h.b16 %v841
        %v3686 = vunpack.c.l.b16 %v842
        %v3687 = vunpack.c.h.b16 %v842
        %v3688 = vunpack.c.l.b16 %v843
        %v3689 = vunpack.c.h.b16 %v843
        %v3690 = vunpack.c.l.b16 %v844
        %v3691 = vunpack.c.h.b16 %v844
        %v3692 = vunpack.c.l.b16 %v845
        %v3693 = vunpack.c.h.b16 %v845
        %v3694 = vunpack.c.l.b16 %v846
        %v3695 = vunpack.c.h.b16 %v846
        %v3696 = vunpack.c.l.b16 %v847
        %v3697 = vunpack.c.h.b16 %v847
        %v3698 = vunpack.c.l.b16 %v848
        %v3699 = vunpack.c.h.b16 %v848
        %v3700 = vunpack.c.l.b16 %v849
        %v3701 = vunpack.c.h.b16 %v849
        %v3702 = vunpack.c.l.b16 %v850
        %v3703 = vunpack.c.h.b16 %v850
        %v3704 = vunpack.c.l.b16 %v851
        %v3705 = vunpack.c.h.b16 %v851
        %v3706 = vunpack.c.l.b16 %v852
        %v3707 = vunpack.c.h.b16 %v852
        %v3708 = vunpack.c.l.b16 %v853
        %v3709 = vunpack.c.h.b16 %v853
        %v3710 = vunpack.c.l.b16 %v854
        %v3711 = vunpack.c.h.b16 %v854
        %v3712 = vunpack.c.l.b16 %v855
        %v3713 = vunpack.c.h.b16 %v855
        %v3714 = vunpack.c.l.b16 %v856
        %v3715 = vunpack.c.h.b16 %v856
        %v3716 = vunpack.c.l.b16 %v857
        %v3717 = vunpack.c.h.b16 %v857
        %v3718 = vunpack.c.l.b16 %v858
        %v3719 = vunpack.c.h.b16 %v858
        %v3720 = vunpack.c.l.b16 %v859
        %v3721 = vunpack.c.h.b16 %v859
        %v3722 = vunpack.c.l.b16 %v860
        %v3723 = vunpack.c.h.b16 %v860
        %v3724 = vunpack.c.l.b16 %v861
        %v3725 = vunpack.c.h.b16 %v861
        %v3726 = vunpack.c.l.b16 %v862
        %v3727 = vunpack.c.h.b16 %v862
        %v3728 = vunpack.c.l.b16 %v863
        %v3729 = vunpack.c.h.b16 %v863
        %v3730 = vunpack.c.l.b16 %v864
        %v3731 = vunpack.c.h.b16 %v864
        %v3732 = vunpack.c.l.b16 %v865
        %v3733 = vunpack.c.h.b16 %v865
        %v3734 = vunpack.c.l.b16 %v866
        %v3735 = vunpack.c.h.b16 %v866
        %v3736 = vunpack.c.l.b16 %v867
        %v3737 = vunpack.c.h.b16 %v867
        %v3738 = vunpack.c.l.b16 %v868
        %v3739 = vunpack.c.h.b16 %v868
        %v3740 = vunpack.c.l.b16 %v869
        %v3741 = vunpack.c.h.b16 %v869
        %v3742 = vunpack.c.l.b16 %v870
        %v3743 = vunpack.c.h.b16 %v870
        %v3744 = vunpack.c.l.b16 %v871
        %v3745 = vunpack.c.h.b16 %v871
        %v3746 = vunpack.c.l.b16 %v872
        %v3747 = vunpack.c.h.b16 %v872
        %v3748 = vunpack.c.l.b16 %v873
        %v3749 = vunpack.c.h.b16 %v873
        %v3750 = vunpack.c.l.b16 %v874
        %v3751 = vunpack.c.h.b16 %v874
        %v3752 = vunpack.c.l.b16 %v875
        %v3753 = vunpack.c.h.b16 %v875
        %v3754 = vunpack.c.l.b16 %v876
        %v3755 = vunpack.c.h.b16 %v876
        %v3756 = vunpack.c.l.b16 %v877
        %v3757 = vunpack.c.h.b16 %v877
        %v3758 = vunpack.c.l.b16 %v878
        %v3759 = vunpack.c.h.b16 %v878
        %v3760 = vunpack.c.l.b16 %v879
        %v3761 = vunpack.c.h.b16 %v879
        %v3762 = vunpack.c.l.b16 %v880
        %v3763 = vunpack.c.h.b16 %v880
        %v3764 = vunpack.c.l.b16 %v881
        %v3765 = vunpack.c.h.b16 %v881
        %v3766 = vunpack.c.l.b16 %v882
        %v3767 = vunpack.c.h.b16 %v882
        %v3768 = vunpack.c.l.b16 %v883
        %v3769 = vunpack.c.h.b16 %v883
        %v3770 = vunpack.c.l.b16 %v884
        %v3771 = vunpack.c.h.b16 %v884
        %v3772 = vunpack.c.l.b16 %v885
        %v3773 = vunpack.c.h.b16 %v885
        %v3774 = vunpack.c.l.b16 %v886
        %v3775 = vunpack.c.h.b16 %v886
        %v3776 = vunpack.c.l.b16 %v887
        %v3777 = vunpack.c.h.b16 %v887
        %v3778 = vunpack.c.l.b16 %v888
        %v3779 = vunpack.c.h.b16 %v888
        %v3780 = vunpack.c.l.b16 %v889
        %v3781 = vunpack.c.h.b16 %v889
        %v3782 = vunpack.c.l.b16 %v890
        %v3783 = vunpack.c.h.b16 %v890
        %v3784 = vunpack.c.l.b16 %v891
        %v3785 = vunpack.c.h.b16 %v891
        %v3786 = vunpack.c.l.b16 %v892
        %v3787 = vunpack.c.h.b16 %v892
        %v3788 = vunpack.c.l.b16 %v893
        %v3789 = vunpack.c.h.b16 %v893
        %v3790 = vunpack.c.l.b16 %v894
        %v3791 = vunpack.c.h.b16 %v894
        %v3792 = vunpack.c.l.b16 %v895
        %v3793 = vunpack.c.h.b16 %v895
        %v3794 = vunpack.c.l.b16 %v896
        %v3795 = vunpack.c.h.b16 %v896
        %v3796 = vunpack.c.l.b16 %v897
        %v3797 = vunpack.c.h.b16 %v897
        %v3798 = vunpack.c.l.b16 %v898
        %v3799 = vunpack.c.h.b16 %v898
        %v3800 = vunpack.c.l.b16 %v899
        %v3801 = vunpack.c.h.b16 %v899
        %v3802 = vunpack.c.l.b16 %v900
        %v3803 = vunpack.c.h.b16 %v900
        %v3804 = vunpack.c.l.b16 %v901
        %v3805 = vunpack.c.h.b16 %v901
        %v3806 = vunpack.c.l.b16 %v902
        %v3807 = vunpack.c.h.b16 %v902
        %v3808 = vunpack.c.l.b16 %v903
        %v3809 = vunpack.c.h.b16 %v903
        %v3810 = vunpack.c.l.b16 %v904
        %v3811 = vunpack.c.h.b16 %v904
        %v3812 = vunpack.c.l.b16 %v905
        %v3813 = vunpack.c.h.b16 %v905
        %v3814 = vunpack.c.l.b16 %v906
        %v3815 = vunpack.c.h.b16 %v906
        %v3816 = vunpack.c.l.b16 %v907
        %v3817 = vunpack.c.h.b16 %v907
        %v3818 = vunpack.c.l.b16 %v908
        %v3819 = vunpack.c.h.b16 %v908
        %v3820 = vunpack.c.l.b16 %v909
        %v3821 = vunpack.c.h.b16 %v909
        %v3822 = vunpack.c.l.b16 %v910
        %v3823 = vunpack.c.h.b16 %v910
        %v3824 = vunpack.c.l.b16 %v911
        %v3825 = vunpack.c.h.b16 %v911
        %v3826 = vunpack.c.l.b16 %v912
        %v3827 = vunpack.c.h.b16 %v912
        %v3828 = vunpack.c.l.b16 %v913
        %v3829 = vunpack.c.h.b16 %v913
        %v3830 = vunpack.c.l.b16 %v914
        %v3831 = vunpack.c.h.b16 %v914
        %v3832 = vunpack.c.l.b16 %v915
        %v3833 = vunpack.c.h.b16 %v915
        %v3834 = vunpack.c.l.b16 %v916
        %v3835 = vunpack.c.h.b16 %v916
        %v3836 = vunpack.c.l.b16 %v917
        %v3837 = vunpack.c.h.b16 %v917
        %v3838 = vunpack.c.l.b16 %v918
        %v3839 = vunpack.c.h.b16 %v918
        %v3840 = vunpack.c.l.b16 %v919
        %v3841 = vunpack.c.h.b16 %v919
        %v3842 = vunpack.c.l.b16 %v920
        %v3843 = vunpack.c.h.b16 %v920
        %v3844 = vunpack.c.l.b16 %v921
        %v3845 = vunpack.c.h.b16 %v921
        %v3846 = vunpack.c.l.b16 %v922
        %v3847 = vunpack.c.h.b16 %v922
        %v3848 = vunpack.c.l.b16 %v923
        %v3849 = vunpack.c.h.b16 %v923
        %v3850 = vunpack.c.l.b16 %v924
        %v3851 = vunpack.c.h.b16 %v924
        %v3852 = vunpack.c.l.b16 %v925
        %v3853 = vunpack.c.h.b16 %v925
        %v3854 = vunpack.c.l.b16 %v926
        %v3855 = vunpack.c.h.b16 %v926
        %v3856 = vunpack.c.l.b16 %v927
        %v3857 = vunpack.c.h.b16 %v927
        %v3858 = vunpack.c.l.b16 %v928
        %v3859 = vunpack.c.h.b16 %v928
        %v3860 = vunpack.c.l.b16 %v929
        %v3861 = vunpack.c.h.b16 %v929
        %v3862 = vunpack.c.l.b16 %v930
        %v3863 = vunpack.c.h.b16 %v930
        %v3864 = vunpack.c.l.b16 %v931
        %v3865 = vunpack.c.h.b16 %v931
        %v3866 = vunpack.c.l.b16 %v932
        %v3867 = vunpack.c.h.b16 %v932
        %v3868 = vunpack.c.l.b16 %v933
        %v3869 = vunpack.c.h.b16 %v933
        %v3870 = vunpack.c.l.b16 %v934
        %v3871 = vunpack.c.h.b16 %v934
        %v3872 = vunpack.c.l.b16 %v935
        %v3873 = vunpack.c.h.b16 %v935
        %v3874 = vunpack.c.l.b16 %v936
        %v3875 = vunpack.c.h.b16 %v936
        %v3876 = vunpack.c.l.b16 %v937
        %v3877 = vunpack.c.h.b16 %v937
        %v3878 = vunpack.c.l.b16 %v938
        %v3879 = vunpack.c.h.b16 %v938
        %v3880 = vunpack.c.l.b16 %v939
        %v3881 = vunpack.c.h.b16 %v939
        %v3882 = vunpack.c.l.b16 %v940
        %v3883 = vunpack.c.h.b16 %v940
        %v3884 = vunpack.c.l.b16 %v941
        %v3885 = vunpack.c.h.b16 %v941
        %v3886 = vunpack.c.l.b16 %v942
        %v3887 = vunpack.c.h.b16 %v942
        %v3888 = vunpack.c.l.b16 %v943
        %v3889 = vunpack.c.h.b16 %v943
        %v3890 = vunpack.c.l.b16 %v944
        %v3891 = vunpack.c.h.b16 %v944
        %v3892 = vunpack.c.l.b16 %v945
        %v3893 = vunpack.c.h.b16 %v945
        %v3894 = vunpack.c.l.b16 %v946
        %v3895 = vunpack.c.h.b16 %v946
        %v3896 = vunpack.c.l.b16 %v947
        %v3897 = vunpack.c.h.b16 %v947
        %v3898 = vunpack.c.l.b16 %v948
        %v3899 = vunpack.c.h.b16 %v948
        %v3900 = vunpack.c.l.b16 %v949
        %v3901 = vunpack.c.h.b16 %v949
        %v3902 = vunpack.c.l.b16 %v950
        %v3903 = vunpack.c.h.b16 %v950
        %v3904 = vunpack.c.l.b16 %v951
        %v3905 = vunpack.c.h.b16 %v951
        %v3906 = vunpack.c.l.b16 %v952
        %v3907 = vunpack.c.h.b16 %v952
        %v3908 = vunpack.c.l.b16 %v953
        %v3909 = vunpack.c.h.b16 %v953
        %v3910 = vunpack.c.l.b16 %v954
        %v3911 = vunpack.c.h.b16 %v954
        %v3912 = vunpack.c.l.b16 %v955
        %v3913 = vunpack.c.h.b16 %v955
        %v3914 = vunpack.c.l.b16 %v956
        %v3915 = vunpack.c.h.b16 %v956
        %v3916 = vunpack.c.l.b16 %v957
        %v3917 = vunpack.c.h.b16 %v957
        %v3918 = vunpack.c.l.b16 %v958
        %v3919 = vunpack.c.h.b16 %v958
        %v3920 = vunpack.c.l.b16 %v959
        %v3921 = vunpack.c.h.b16 %v959
        %v3922 = vunpack.c.l.b16 %v960
        %v3923 = vunpack.c.h.b16 %v960
        %v3924 = vunpack.c.l.b16 %v961
        %v3925 = vunpack.c.h.b16 %v961
        %v3926 = vunpack.c.l.b16 %v962
        %v3927 = vunpack.c.h.b16 %v962
        %v3928 = vunpack.c.l.b16 %v963
        %v3929 = vunpack.c.h.b16 %v963
        %v3930 = vunpack.c.l.b16 %v964
        %v3931 = vunpack.c.h.b16 %v964
        %v3932 = vunpack.c.l.b16 %v965
        %v3933 = vunpack.c.h.b16 %v965
        %v3934 = vunpack.c.l.b16 %v966
        %v3935 = vunpack.c.h.b16 %v966
        %v3936 = vunpack.c.l.b16 %v967
        %v3937 = vunpack.c.h.b16 %v967
        %v3938 = vunpack.c.l.b16 %v968
        %v3939 = vunpack.c.h.b16 %v968
        %v3940 = vunpack.c.l.b16 %v969
        %v3941 = vunpack.c.h.b16 %v969
        %v3942 = vunpack.c.l.b16 %v970
        %v3943 = vunpack.c.h.b16 %v970
        %v3944 = vunpack.c.l.b16 %v971
        %v3945 = vunpack.c.h.b16 %v971
        %v3946 = vunpack.c.l.b16 %v972
        %v3947 = vunpack.c.h.b16 %v972
        %v3948 = vunpack.c.l.b16 %v973
        %v3949 = vunpack.c.h.b16 %v973
        %v3950 = vunpack.c.l.b16 %v974
        %v3951 = vunpack.c.h.b16 %v974
        %v3952 = vunpack.c.l.b16 %v975
        %v3953 = vunpack.c.h.b16 %v975
        %v3954 = vunpack.c.l.b16 %v976
        %v3955 = vunpack.c.h.b16 %v976
        %v3956 = vunpack.c.l.b16 %v977
        %v3957 = vunpack.c.h.b16 %v977
        %v3958 = vunpack.c.l.b16 %v978
        %v3959 = vunpack.c.h.b16 %v978
        %v3960 = vunpack.c.l.b16 %v979
        %v3961 = vunpack.c.h.b16 %v979
        %v3962 = vunpack.c.l.b16 %v980
        %v3963 = vunpack.c.h.b16 %v980
        %v3964 = vunpack.c.l.b16 %v981
        %v3965 = vunpack.c.h.b16 %v981
        %v3966 = vunpack.c.l.b16 %v982
        %v3967 = vunpack.c.h.b16 %v982
        %v3968 = vunpack.c.l.b16 %v983
        %v3969 = vunpack.c.h.b16 %v983
        %v3970 = vunpack.c.l.b16 %v984
        %v3971 = vunpack.c.h.b16 %v984
        %v3972 = vunpack.c.l.b16 %v985
        %v3973 = vunpack.c.h.b16 %v985
        %v3974 = vunpack.c.l.b16 %v986
        %v3975 = vunpack.c.h.b16 %v986
        %v3976 = vunpack.c.l.b16 %v987
        %v3977 = vunpack.c.h.b16 %v987
        %v3978 = vunpack.c.l.b16 %v988
        %v3979 = vunpack.c.h.b16 %v988
        %v3980 = vunpack.c.l.b16 %v989
        %v3981 = vunpack.c.h.b16 %v989
        %v3982 = vunpack.c.l.b16 %v990
        %v3983 = vunpack.c.h.b16 %v990
        %v3984 = vunpack.c.l.b16 %v991
        %v3985 = vunpack.c.h.b16 %v991
        %v3986 = vunpack.c.l.b16 %v992
        %v3987 = vunpack.c.h.b16 %v992
        %v3988 = vunpack.c.l.b16 %v993
        %v3989 = vunpack.c.h.b16 %v993
        %v3990 = vunpack.c.l.b16 %v994
        %v3991 = vunpack.c.h.b16 %v994
        %v3992 = vunpack.c.l.b16 %v995
        %v3993 = vunpack.c.h.b16 %v995
        %v3994 = vunpack.c.l.b16 %v996
        %v3995 = vunpack.c.h.b16 %v996
        %v3996 = vunpack.c.l.b16 %v997
        %v3997 = vunpack.c.h.b16 %v997
        %v3998 = vunpack.c.l.b16 %v998
        %v3999 = vunpack.c.h.b16 %v998
        %v4000 = vunpack.c.l.b16 %v999
        %v4001 = vunpack.c.h.b16 %v999
        %v4002 = vunpack.c.l.b16 %v1000
        %v4003 = vunpack.c.h.b16 %v1000
        %v4004 = vunpack.c.l.b16 %v1001
        %v4005 = vunpack.c.h.b16 %v1001
        %v4006 = vunpack.c.l.b16 %v1002
        %v4007 = vunpack.c.h.b16 %v1002
        %v4008 = vunpack.c.l.b16 %v1003
        %v4009 = vunpack.c.h.b16 %v1003
        %v4010 = vunpack.c.l.b16 %v1004
        %v4011 = vunpack.c.h.b16 %v1004
        %v4012 = vunpack.c.l.b16 %v1005
        %v4013 = vunpack.c.h.b16 %v1005
        %v4014 = vunpack.c.l.b16 %v1006
        %v4015 = vunpack.c.h.b16 %v1006
        %v4016 = vunpack.c.l.b16 %v1007
        %v4017 = vunpack.c.h.b16 %v1007
        %v4018 = vunpack.c.l.b16 %v1008
        %v4019 = vunpack.c.h.b16 %v1008
        %v4020 = vunpack.c.l.b16 %v1009
        %v4021 = vunpack.c.h.b16 %v1009
        %v4022 = vunpack.c.l.b16 %v1010
        %v4023 = vunpack.c.h.b16 %v1010
        %v4024 = vunpack.c.l.b16 %v1011
        %v4025 = vunpack.c.h.b16 %v1011
        %v4026 = vunpack.c.l.b16 %v1012
        %v4027 = vunpack.c.h.b16 %v1012
        %v4028 = vunpack.c.l.b16 %v1013
        %v4029 = vunpack.c.h.b16 %v1013
        %v4030 = vunpack.c.l.b16 %v1014
        %v4031 = vunpack.c.h.b16 %v1014
        %v4032 = vunpack.c.l.b16 %v1015
        %v4033 = vunpack.c.h.b16 %v1015
        %v4034 = vunpack.c.l.b16 %v1016
        %v4035 = vunpack.c.h.b16 %v1016
        %v4036 = vunpack.c.l.b16 %v1017
        %v4037 = vunpack.c.h.b16 %v1017
        %v4038 = vunpack.c.l.b16 %v1018
        %v4039 = vunpack.c.h.b16 %v1018
        %v4040 = vunpack.c.l.b16 %v1019
        %v4041 = vunpack.c.h.b16 %v1019
        %v4042 = vunpack.c.l.b16 %v1020
        %v4043 = vunpack.c.h.b16 %v1020
        %v4044 = vunpack.c.l.b16 %v1021
        %v4045 = vunpack.c.h.b16 %v1021
        %v4046 = vunpack.c.l.b16 %v1022
        %v4047 = vunpack.c.h.b16 %v1022
        %v4048 = vunpack.c.l.b16 %v1023
        %v4049 = vunpack.c.h.b16 %v1023
        %v4050 = vunpack.c.l.b16 %v1024
        %v4051 = vunpack.c.h.b16 %v1024
        %v4052 = vunpack.c.l.b16 %v1025
        %v4053 = vunpack.c.h.b16 %v1025
        %v4054 = vunpack.c.l.b16 %v1026
        %v4055 = vunpack.c.h.b16 %v1026
        %v4056 = vunpack.c.l.b16 %v1027
        %v4057 = vunpack.c.h.b16 %v1027
        %v4058 = vunpack.c.l.b16 %v1028
        %v4059 = vunpack.c.h.b16 %v1028
        %v4060 = vunpack.c.l.b16 %v1029
        %v4061 = vunpack.c.h.b16 %v1029
        %v4062 = vunpack.c.l.b16 %v1030
        %v4063 = vunpack.c.h.b16 %v1030
        %v4064 = vunpack.c.l.b16 %v1031
        %v4065 = vunpack.c.h.b16 %v1031
        %v4066 = vunpack.c.l.b16 %v1032
        %v4067 = vunpack.c.h.b16 %v1032
        %v4068 = vunpack.c.l.b16 %v1033
        %v4069 = vunpack.c.h.b16 %v1033
        %v4070 = vunpack.c.l.b16 %v1034
        %v4071 = vunpack.c.h.b16 %v1034
        %v4072 = vunpack.c.l.b16 %v1035
        %v4073 = vunpack.c.h.b16 %v1035
        %v4074 = vunpack.c.l.b16 %v1036
        %v4075 = vunpack.c.h.b16 %v1036
        %v4076 = vunpack.c.l.b16 %v1037
        %v4077 = vunpack.c.h.b16 %v1037
        %v4078 = vunpack.c.l.b16 %v1038
        %v4079 = vunpack.c.h.b16 %v1038
        %v4080 = vunpack.c.l.b16 %v1039
        %v4081 = vunpack.c.h.b16 %v1039
        %v4082 = vunpack.c.l.b16 %v1040
        %v4083 = vunpack.c.h.b16 %v1040
        %v4084 = vunpack.c.l.b16 %v1041
        %v4085 = vunpack.c.h.b16 %v1041
        %v4086 = vunpack.c.l.b16 %v1042
        %v4087 = vunpack.c.h.b16 %v1042
        %v4088 = vunpack.c.l.b16 %v1043
        %v4089 = vunpack.c.h.b16 %v1043
        %v4090 = vunpack.c.l.b16 %v1044
        %v4091 = vunpack.c.h.b16 %v1044
        %v4092 = vunpack.c.l.b16 %v1045
        %v4093 = vunpack.c.h.b16 %v1045
        %v4094 = vunpack.c.l.b16 %v1046
        %v4095 = vunpack.c.h.b16 %v1046
        %v4096 = vunpack.c.l.b16 %v1047
        %v4097 = vunpack.c.h.b16 %v1047
        %v4098 = vunpack.c.l.b16 %v1048
        %v4099 = vunpack.c.h.b16 %v1048
        %v4100 = vunpack.c.l.b16 %v1049
        %v4101 = vunpack.c.h.b16 %v1049
        %v4102 = vunpack.c.l.b16 %v1050
        %v4103 = vunpack.c.h.b16 %v1050
        %v4104 = vunpack.c.l.b16 %v1051
        %v4105 = vunpack.c.h.b16 %v1051
        %v4106 = vunpack.c.l.b16 %v1052
        %v4107 = vunpack.c.h.b16 %v1052
        %v4108 = vunpack.c.l.b16 %v1053
        %v4109 = vunpack.c.h.b16 %v1053
        %v4110 = vunpack.c.l.b16 %v1054
        %v4111 = vunpack.c.h.b16 %v1054
        %v4112 = vunpack.c.l.b16 %v1055
        %v4113 = vunpack.c.h.b16 %v1055
        %v4114 = vunpack.c.l.b16 %v1056
        %v4115 = vunpack.c.h.b16 %v1056
        %v4116 = vunpack.c.l.b16 %v1057
        %v4117 = vunpack.c.h.b16 %v1057
        %v4118 = vunpack.c.l.b16 %v1058
        %v4119 = vunpack.c.h.b16 %v1058
        %v4120 = vunpack.c.l.b16 %v1059
        %v4121 = vunpack.c.h.b16 %v1059
        %v4122 = vunpack.c.l.b16 %v1060
        %v4123 = vunpack.c.h.b16 %v1060
        %v4124 = vunpack.c.l.b16 %v1061
        %v4125 = vunpack.c.h.b16 %v1061
        %v4126 = vunpack.c.l.b16 %v1062
        %v4127 = vunpack.c.h.b16 %v1062
        %v4128 = vunpack.c.l.b16 %v1063
        %v4129 = vunpack.c.h.b16 %v1063
        %v4130 = vunpack.c.l.b16 %v1064
        %v4131 = vunpack.c.h.b16 %v1064
        %v4132 = vunpack.c.l.b16 %v1065
        %v4133 = vunpack.c.h.b16 %v1065
        %v4134 = vunpack.c.l.b16 %v1066
        %v4135 = vunpack.c.h.b16 %v1066
        %v4136 = vunpack.c.l.b16 %v1067
        %v4137 = vunpack.c.h.b16 %v1067
        %v4138 = vunpack.c.l.b16 %v1068
        %v4139 = vunpack.c.h.b16 %v1068
        %v4140 = vunpack.c.l.b16 %v1069
        %v4141 = vunpack.c.h.b16 %v1069
        %v4142 = vunpack.c.l.b16 %v1070
        %v4143 = vunpack.c.h.b16 %v1070
        %v4144 = vunpack.c.l.b16 %v1071
        %v4145 = vunpack.c.h.b16 %v1071
        %v4146 = vunpack.c.l.b16 %v1072
        %v4147 = vunpack.c.h.b16 %v1072
        %v4148 = vunpack.c.l.b16 %v1073
        %v4149 = vunpack.c.h.b16 %v1073
        %v4150 = vunpack.c.l.b16 %v1074
        %v4151 = vunpack.c.h.b16 %v1074
        %v4152 = vunpack.c.l.b16 %v1075
        %v4153 = vunpack.c.h.b16 %v1075
        %v4154 = vunpack.c.l.b16 %v1076
        %v4155 = vunpack.c.h.b16 %v1076
        %v4156 = vunpack.c.l.b16 %v1077
        %v4157 = vunpack.c.h.b16 %v1077
        %v4158 = vunpack.c.l.b16 %v1078
        %v4159 = vunpack.c.h.b16 %v1078
        %v4160 = vunpack.c.l.b16 %v1079
        %v4161 = vunpack.c.h.b16 %v1079
        %v4162 = vunpack.c.l.b16 %v1080
        %v4163 = vunpack.c.h.b16 %v1080
        %v4164 = vunpack.c.l.b16 %v1081
        %v4165 = vunpack.c.h.b16 %v1081
        %v4166 = vunpack.c.l.b16 %v1082
        %v4167 = vunpack.c.h.b16 %v1082
        %v4168 = vunpack.c.l.b16 %v1083
        %v4169 = vunpack.c.h.b16 %v1083
        %v4170 = vunpack.c.l.b16 %v1084
        %v4171 = vunpack.c.h.b16 %v1084
        %v4172 = vunpack.c.l.b16 %v1085
        %v4173 = vunpack.c.h.b16 %v1085
        %v4174 = vunpack.c.l.b16 %v1086
        %v4175 = vunpack.c.h.b16 %v1086
        %v4176 = vunpack.c.l.b16 %v1087
        %v4177 = vunpack.c.h.b16 %v1087
        %v4178 = vunpack.c.l.b16 %v1088
        %v4179 = vunpack.c.h.b16 %v1088
        %v4180 = vunpack.c.l.b16 %v1089
        %v4181 = vunpack.c.h.b16 %v1089
        %v4182 = vunpack.c.l.b16 %v1090
        %v4183 = vunpack.c.h.b16 %v1090
        %v4184 = vunpack.c.l.b16 %v1091
        %v4185 = vunpack.c.h.b16 %v1091
        %v4186 = vunpack.c.l.b16 %v1092
        %v4187 = vunpack.c.h.b16 %v1092
        %v4188 = vunpack.c.l.b16 %v1093
        %v4189 = vunpack.c.h.b16 %v1093
        %v4190 = vunpack.c.l.b16 %v1094
        %v4191 = vunpack.c.h.b16 %v1094
        %v4192 = vunpack.c.l.b16 %v1095
        %v4193 = vunpack.c.h.b16 %v1095
        %v4194 = vunpack.c.l.b16 %v1096
        %v4195 = vunpack.c.h.b16 %v1096
        %v4196 = vunpack.c.l.b16 %v1097
        %v4197 = vunpack.c.h.b16 %v1097
        %v4198 = vunpack.c.l.b16 %v1098
        %v4199 = vunpack.c.h.b16 %v1098
        %v4200 = vunpack.c.l.b16 %v1099
        %v4201 = vunpack.c.h.b16 %v1099
        %v4202 = vunpack.c.l.b16 %v1100
        %v4203 = vunpack.c.h.b16 %v1100
        %v4204 = vunpack.c.l.b16 %v1101
        %v4205 = vunpack.c.h.b16 %v1101
        %v4206 = vunpack.c.l.b16 %v1102
        %v4207 = vunpack.c.h.b16 %v1102
        %v4208 = vunpack.c.l.b16 %v1103
        %v4209 = vunpack.c.h.b16 %v1103
        %v4210 = vunpack.c.l.b16 %v1104
        %v4211 = vunpack.c.h.b16 %v1104
        %v4212 = vunpack.c.l.b16 %v1105
        %v4213 = vunpack.c.h.b16 %v1105
        %v4214 = vunpack.c.l.b16 %v1106
        %v4215 = vunpack.c.h.b16 %v1106
        %v4216 = vunpack.c.l.b16 %v1107
        %v4217 = vunpack.c.h.b16 %v1107
        %v4218 = vunpack.c.l.b16 %v1108
        %v4219 = vunpack.c.h.b16 %v1108
        %v4220 = vunpack.c.l.b16 %v1109
        %v4221 = vunpack.c.h.b16 %v1109
        %v4222 = vunpack.c.l.b16 %v1110
        %v4223 = vunpack.c.h.b16 %v1110
        %v4224 = vunpack.c.l.b16 %v1111
        %v4225 = vunpack.c.h.b16 %v1111
        %v4226 = vunpack.c.l.b16 %v1112
        %v4227 = vunpack.c.h.b16 %v1112
        %v4228 = vunpack.c.l.b16 %v1113
        %v4229 = vunpack.c.h.b16 %v1113
        %v4230 = vunpack.c.l.b16 %v1114
        %v4231 = vunpack.c.h.b16 %v1114
        %v4232 = vunpack.c.l.b16 %v1115
        %v4233 = vunpack.c.h.b16 %v1115
        %v4234 = vunpack.c.l.b16 %v1116
        %v4235 = vunpack.c.h.b16 %v1116
        %v4236 = vunpack.c.l.b16 %v1117
        %v4237 = vunpack.c.h.b16 %v1117
        %v4238 = vunpack.c.l.b16 %v1118
        %v4239 = vunpack.c.h.b16 %v1118
        %v4240 = vunpack.c.l.b16 %v1119
        %v4241 = vunpack.c.h.b16 %v1119
        %v4242 = vunpack.c.l.b16 %v1120
        %v4243 = vunpack.c.h.b16 %v1120
        %v4244 = vunpack.c.l.b16 %v1121
        %v4245 = vunpack.c.h.b16 %v1121
        %v4246 = vunpack.c.l.b16 %v1122
        %v4247 = vunpack.c.h.b16 %v1122
        %v4248 = vunpack.c.l.b16 %v1123
        %v4249 = vunpack.c.h.b16 %v1123
        %v4250 = vunpack.c.l.b16 %v1124
        %v4251 = vunpack.c.h.b16 %v1124
        %v4252 = vunpack.c.l.b16 %v1125
        %v4253 = vunpack.c.h.b16 %v1125
        %v4254 = vunpack.c.l.b16 %v1126
        %v4255 = vunpack.c.h.b16 %v1126
        %v4256 = vunpack.c.l.b16 %v1127
        %v4257 = vunpack.c.h.b16 %v1127
        %v4258 = vunpack.c.l.b16 %v1128
        %v4259 = vunpack.c.h.b16 %v1128
        %v4260 = vunpack.c.l.b16 %v1129
        %v4261 = vunpack.c.h.b16 %v1129
        %v4262 = vunpack.c.l.b16 %v1130
        %v4263 = vunpack.c.h.b16 %v1130
        %v4264 = vunpack.c.l.b16 %v1131
        %v4265 = vunpack.c.h.b16 %v1131
        %v4266 = vunpack.c.l.b16 %v1132
        %v4267 = vunpack.c.h.b16 %v1132
        %v4268 = vunpack.c.l.b16 %v1133
        %v4269 = vunpack.c.h.b16 %v1133
        %v4270 = vunpack.c.l.b16 %v1134
        %v4271 = vunpack.c.h.b16 %v1134
        %v4272 = vunpack.c.l.b16 %v1135
        %v4273 = vunpack.c.h.b16 %v1135
        %v4274 = vunpack.c.l.b16 %v1136
        %v4275 = vunpack.c.h.b16 %v1136
        %v4276 = vunpack.c.l.b16 %v1137
        %v4277 = vunpack.c.h.b16 %v1137
        %v4278 = vunpack.c.l.b16 %v1138
        %v4279 = vunpack.c.h.b16 %v1138
        %v4280 = vunpack.c.l.b16 %v1139
        %v4281 = vunpack.c.h.b16 %v1139
        %v4282 = vunpack.c.l.b16 %v1140
        %v4283 = vunpack.c.h.b16 %v1140
        %v4284 = vunpack.c.l.b16 %v1141
        %v4285 = vunpack.c.h.b16 %v1141
        %v4286 = vunpack.c.l.b16 %v1142
        %v4287 = vunpack.c.h.b16 %v1142
        %v4288 = vunpack.c.l.b16 %v1143
        %v4289 = vunpack.c.h.b16 %v1143
        %v4290 = vunpack.c.l.b16 %v1144
        %v4291 = vunpack.c.h.b16 %v1144
        %v4292 = vunpack.c.l.b16 %v1145
        %v4293 = vunpack.c.h.b16 %v1145
        %v4294 = vunpack.c.l.b16 %v1146
        %v4295 = vunpack.c.h.b16 %v1146
        %v4296 = vunpack.c.l.b16 %v1147
        %v4297 = vunpack.c.h.b16 %v1147
        %v4298 = vunpack.c.l.b16 %v1148
        %v4299 = vunpack.c.h.b16 %v1148
        %v4300 = vunpack.c.l.b16 %v1149
        %v4301 = vunpack.c.h.b16 %v1149
        %v4302 = vunpack.c.l.b16 %v1150
        %v4303 = vunpack.c.h.b16 %v1150
        %v4304 = vunpack.c.l.b16 %v1151
        %v4305 = vunpack.c.h.b16 %v1151
        %v4306 = vunpack.c.l.b16 %v1152
        %v4307 = vunpack.c.h.b16 %v1152
        %v4308 = vunpack.c.l.b16 %v1153
        %v4309 = vunpack.c.h.b16 %v1153
        %v4310 = vunpack.c.l.b16 %v1154
        %v4311 = vunpack.c.h.b16 %v1154
        %v4312 = vunpack.c.l.b16 %v1155
        %v4313 = vunpack.c.h.b16 %v1155
        %v4314 = vunpack.c.l.b16 %v1156
        %v4315 = vunpack.c.h.b16 %v1156
        %v4316 = vunpack.c.l.b16 %v1157
        %v4317 = vunpack.c.h.b16 %v1157
        %v4318 = vunpack.c.l.b16 %v1158
        %v4319 = vunpack.c.h.b16 %v1158
        %v4320 = vunpack.c.l.b16 %v1159
        %v4321 = vunpack.c.h.b16 %v1159
        %v4322 = vunpack.c.l.b16 %v1160
        %v4323 = vunpack.c.h.b16 %v1160
        %v4324 = vunpack.c.l.b16 %v1161
        %v4325 = vunpack.c.h.b16 %v1161
        %v4326 = vunpack.c.l.b16 %v1162
        %v4327 = vunpack.c.h.b16 %v1162
        %v4328 = vunpack.c.l.b16 %v1163
        %v4329 = vunpack.c.h.b16 %v1163
        %v4330 = vunpack.c.l.b16 %v1164
        %v4331 = vunpack.c.h.b16 %v1164
        %v4332 = vunpack.c.l.b16 %v1165
        %v4333 = vunpack.c.h.b16 %v1165
        %v4334 = vunpack.c.l.b16 %v1166
        %v4335 = vunpack.c.h.b16 %v1166
        %v4336 = vunpack.c.l.b16 %v1167
        %v4337 = vunpack.c.h.b16 %v1167
        %v4338 = vunpack.c.l.b16 %v1168
        %v4339 = vunpack.c.h.b16 %v1168
        %v4340 = vunpack.c.l.b16 %v1169
        %v4341 = vunpack.c.h.b16 %v1169
        %v4342 = vunpack.c.l.b16 %v1170
        %v4343 = vunpack.c.h.b16 %v1170
        %v4344 = vunpack.c.l.b16 %v1171
        %v4345 = vunpack.c.h.b16 %v1171
        %v4346 = vunpack.c.l.b16 %v1172
        %v4347 = vunpack.c.h.b16 %v1172
        %v4348 = vunpack.c.l.b16 %v1173
        %v4349 = vunpack.c.h.b16 %v1173
        %v4350 = vunpack.c.l.b16 %v1174
        %v4351 = vunpack.c.h.b16 %v1174
        %v4352 = vunpack.c.l.b16 %v1175
        %v4353 = vunpack.c.h.b16 %v1175
        %v4354 = vunpack.c.l.b16 %v1176
        %v4355 = vunpack.c.h.b16 %v1176
        %v4356 = vunpack.c.l.b16 %v1177
        %v4357 = vunpack.c.h.b16 %v1177
        %v4358 = vunpack.c.l.b16 %v1178
        %v4359 = vunpack.c.h.b16 %v1178
        %v4360 = vunpack.c.l.b16 %v1179
        %v4361 = vunpack.c.h.b16 %v1179
        %v4362 = vunpack.c.l.b16 %v1180
        %v4363 = vunpack.c.h.b16 %v1180
        %v4364 = vunpack.c.l.b16 %v1181
        %v4365 = vunpack.c.h.b16 %v1181
        %v4366 = vunpack.c.l.b16 %v1182
        %v4367 = vunpack.c.h.b16 %v1182
        %v4368 = vunpack.c.l.b16 %v1183
        %v4369 = vunpack.c.h.b16 %v1183
        %v4370 = vunpack.c.l.b16 %v1184
        %v4371 = vunpack.c.h.b16 %v1184
        %v4372 = vunpack.c.l.b16 %v1185
        %v4373 = vunpack.c.h.b16 %v1185
        %v4374 = vunpack.c.l.b16 %v1186
        %v4375 = vunpack.c.h.b16 %v1186
        %v4376 = vunpack.c.l.b16 %v1187
        %v4377 = vunpack.c.h.b16 %v1187
        %v4378 = vunpack.c.l.b16 %v1188
        %v4379 = vunpack.c.h.b16 %v1188
        %v4380 = vunpack.c.l.b16 %v1189
        %v4381 = vunpack.c.h.b16 %v1189
        %v4382 = vunpack.c.l.b16 %v1190
        %v4383 = vunpack.c.h.b16 %v1190
        %v4384 = vunpack.c.l.b16 %v1191
        %v4385 = vunpack.c.h.b16 %v1191
        %v4386 = vunpack.c.l.b16 %v1192
        %v4387 = vunpack.c.h.b16 %v1192
        %v4388 = vunpack.c.l.b16 %v1193
        %v4389 = vunpack.c.h.b16 %v1193
        %v4390 = vunpack.c.l.b16 %v1194
        %v4391 = vunpack.c.h.b16 %v1194
        %v4392 = vunpack.c.l.b16 %v1195
        %v4393 = vunpack.c.h.b16 %v1195
        %v4394 = vunpack.c.l.b16 %v1196
        %v4395 = vunpack.c.h.b16 %v1196
        %v4396 = vunpack.c.l.b16 %v1197
        %v4397 = vunpack.c.h.b16 %v1197
        %v4398 = vunpack.c.l.b16 %v1198
        %v4399 = vunpack.c.h.b16 %v1198
        %v4400 = vunpack.c.l.b16 %v1199
        %v4401 = vunpack.c.h.b16 %v1199
        %v4402 = vunpack.c.l.b16 %v1200
        %v4403 = vunpack.c.h.b16 %v1200
        %v4404 = vunpack.c.l.b16 %v1201
        %v4405 = vunpack.c.h.b16 %v1201
        %v4406 = vunpack.c.l.b16 %v1202
        %v4407 = vunpack.c.h.b16 %v1202
        %v4408 = vunpack.c.l.b16 %v1203
        %v4409 = vunpack.c.h.b16 %v1203
        %v4410 = vunpack.c.l.b16 %v1204
        %v4411 = vunpack.c.h.b16 %v1204
        %v4412 = vunpack.c.l.b16 %v1205
        %v4413 = vunpack.c.h.b16 %v1205
        %v4414 = vunpack.c.l.b16 %v1206
        %v4415 = vunpack.c.h.b16 %v1206
        %v4416 = vunpack.c.l.b16 %v1207
        %v4417 = vunpack.c.h.b16 %v1207
        %v4418 = vunpack.c.l.b16 %v1208
        %v4419 = vunpack.c.h.b16 %v1208
        %v4420 = vunpack.c.l.b16 %v1209
        %v4421 = vunpack.c.h.b16 %v1209
        %v4422 = vunpack.c.l.b16 %v1210
        %v4423 = vunpack.c.h.b16 %v1210
        %v4424 = vunpack.c.l.b16 %v1211
        %v4425 = vunpack.c.h.b16 %v1211
        %v4426 = vunpack.c.l.b16 %v1212
        %v4427 = vunpack.c.h.b16 %v1212
        %v4428 = vunpack.c.l.b16 %v1213
        %v4429 = vunpack.c.h.b16 %v1213
        %v4430 = vunpack.c.l.b16 %v1214
        %v4431 = vunpack.c.h.b16 %v1214
        %v4432 = vunpack.c.l.b16 %v1215
        %v4433 = vunpack.c.h.b16 %v1215
        %v4434 = vunpack.c.l.b16 %v1216
        %v4435 = vunpack.c.h.b16 %v1216
        %v4436 = vunpack.c.l.b16 %v1217
        %v4437 = vunpack.c.h.b16 %v1217
        %v4438 = vunpack.c.l.b16 %v1218
        %v4439 = vunpack.c.h.b16 %v1218
        %v4440 = vunpack.c.l.b16 %v1219
        %v4441 = vunpack.c.h.b16 %v1219
        %v4442 = vunpack.c.l.b16 %v1220
        %v4443 = vunpack.c.h.b16 %v1220
        %v4444 = vunpack.c.l.b16 %v1221
        %v4445 = vunpack.c.h.b16 %v1221
        %v4446 = vunpack.c.l.b16 %v1222
        %v4447 = vunpack.c.h.b16 %v1222
        %v4448 = vunpack.c.l.b16 %v1223
        %v4449 = vunpack.c.h.b16 %v1223
        %v4450 = vunpack.c.l.b16 %v1224
        %v4451 = vunpack.c.h.b16 %v1224
        %v4452 = vunpack.c.l.b16 %v1225
        %v4453 = vunpack.c.h.b16 %v1225
        %v4454 = vpack.c.b16 %v2474, %v2470
        %v4455 = vpack.c.b16 %v2475, %v2471
        %v4456 = vpack.c.b16 %v2476, %v2472
        %v4457 = vpack.c.b16 %v2477, %v2473
        %v4458 = vpack.c.b16 %v2482, %v2478
        %v4459 = vpack.c.b16 %v2483, %v2479
        %v4460 = vpack.c.b16 %v2484, %v2480
        %v4461 = vpack.c.b16 %v2485, %v2481
        %v4462 = vpack.c.b16 %v2490, %v2486
        %v4463 = vpack.c.b16 %v2491, %v2487
        %v4464 = vpack.c.b16 %v2492, %v2488
        %v4465 = vpack.c.b16 %v2493, %v2489
        %v4466 = vpack.c.b16 %v2498, %v2494
        %v4467 = vpack.c.b16 %v2499, %v2495
        %v4468 = vpack.c.b16 %v2500, %v2496
        %v4469 = vpack.c.b16 %v2501, %v2497
        %v4470 = vpack.c.b16 %v2506, %v2502
        %v4471 = vpack.c.b16 %v2507, %v2503
        %v4472 = vpack.c.b16 %v2508, %v2504
        %v4473 = vpack.c.b16 %v2509, %v2505
        %v4474 = vpack.c.b16 %v2514, %v2510
        %v4475 = vpack.c.b16 %v2515, %v2511
        %v4476 = vpack.c.b16 %v2516, %v2512
        %v4477 = vpack.c.b16 %v2517, %v2513
        %v4478 = vpack.c.b16 %v2522, %v2518
        %v4479 = vpack.c.b16 %v2523, %v2519
        %v4480 = vpack.c.b16 %v2524, %v2520
        %v4481 = vpack.c.b16 %v2525, %v2521
        %v4482 = vpack.c.b16 %v2530, %v2526
        %v4483 = vpack.c.b16 %v2531, %v2527
        %v4484 = vpack.c.b16 %v2532, %v2528
        %v4485 = vpack.c.b16 %v2533, %v2529
        %v4486 = vpack.c.b16 %v2538, %v2534
        %v4487 = vpack.c.b16 %v2539, %v2535
        %v4488 = vpack.c.b16 %v2540, %v2536
        %v4489 = vpack.c.b16 %v2541, %v2537
        %v4490 = vpack.c.b16 %v2546, %v2542
        %v4491 = vpack.c.b16 %v2547, %v2543
        %v4492 = vpack.c.b16 %v2548, %v2544
        %v4493 = vpack.c.b16 %v2549, %v2545
        %v4494 = vpack.c.b16 %v2554, %v2550
        %v4495 = vpack.c.b16 %v2555, %v2551
        %v4496 = vpack.c.b16 %v2556, %v2552
        %v4497 = vpack.c.b16 %v2557, %v2553
        %v4498 = vpack.c.b16 %v2562, %v2558
        %v4499 = vpack.c.b16 %v2563, %v2559
        %v4500 = vpack.c.b16 %v2564, %v2560
        %v4501 = vpack.c.b16 %v2565, %v2561
        %v4502 = vpack.c.b16 %v2570, %v2566
        %v4503 = vpack.c.b16 %v2571, %v2567
        %v4504 = vpack.c.b16 %v2572, %v2568
        %v4505 = vpack.c.b16 %v2573, %v2569
        %v4506 = vpack.c.b16 %v2578, %v2574
        %v4507 = vpack.c.b16 %v2579, %v2575
        %v4508 = vpack.c.b16 %v2580, %v2576
        %v4509 = vpack.c.b16 %v2581, %v2577
        %v4510 = vpack.c.b16 %v2586, %v2582
        %v4511 = vpack.c.b16 %v2587, %v2583
        %v4512 = vpack.c.b16 %v2588, %v2584
        %v4513 = vpack.c.b16 %v2589, %v2585
        %v4514 = vpack.c.b16 %v2594, %v2590
        %v4515 = vpack.c.b16 %v2595, %v2591
        %v4516 = vpack.c.b16 %v2596, %v2592
        %v4517 = vpack.c.b16 %v2597, %v2593
        %v4518 = vpack.c.b16 %v2602, %v2598
        %v4519 = vpack.c.b16 %v2603, %v2599
        %v4520 = vpack.c.b16 %v2604, %v2600
        %v4521 = vpack.c.b16 %v2605, %v2601
        %v4522 = vpack.c.b16 %v2610, %v2606
        %v4523 = vpack.c.b16 %v2611, %v2607
        %v4524 = vpack.c.b16 %v2612, %v2608
        %v4525 = vpack.c.b16 %v2613, %v2609
        %v4526 = vpack.c.b16 %v2618, %v2614
        %v4527 = vpack.c.b16 %v2619, %v2615
        %v4528 = vpack.c.b16 %v2620, %v2616
        %v4529 = vpack.c.b16 %v2621, %v2617
        %v4530 = vpack.c.b16 %v2626, %v2622
        %v4531 = vpack.c.b16 %v2627, %v2623
        %v4532 = vpack.c.b16 %v2628, %v2624
        %v4533 = vpack.c.b16 %v2629, %v2625
        %v4534 = vpack.c.b16 %v2634, %v2630
        %v4535 = vpack.c.b16 %v2635, %v2631
        %v4536 = vpack.c.b16 %v2636, %v2632
        %v4537 = vpack.c.b16 %v2637, %v2633
        %v4538 = vpack.c.b16 %v2642, %v2638
        %v4539 = vpack.c.b16 %v2643, %v2639
        %v4540 = vpack.c.b16 %v2644, %v2640
        %v4541 = vpack.c.b16 %v2645, %v2641
        %v4542 = vpack.c.b16 %v2650, %v2646
        %v4543 = vpack.c.b16 %v2651, %v2647
        %v4544 = vpack.c.b16 %v2652, %v2648
        %v4545 = vpack.c.b16 %v2653, %v2649
        %v4546 = vpack.c.b16 %v2658, %v2654
        %v4547 = vpack.c.b16 %v2659, %v2655
        %v4548 = vpack.c.b16 %v2660, %v2656
        %v4549 = vpack.c.b16 %v2661, %v2657
        %v4550 = vpack.c.b16 %v2666, %v2662
        %v4551 = vpack.c.b16 %v2667, %v2663
        %v4552 = vpack.c.b16 %v2668, %v2664
        %v4553 = vpack.c.b16 %v2669, %v2665
        %v4554 = vpack.c.b16 %v2674, %v2670
        %v4555 = vpack.c.b16 %v2675, %v2671
        %v4556 = vpack.c.b16 %v2676, %v2672
        %v4557 = vpack.c.b16 %v2677, %v2673
        %v4558 = vpack.c.b16 %v2682, %v2678
        %v4559 = vpack.c.b16 %v2683, %v2679
        %v4560 = vpack.c.b16 %v2684, %v2680
        %v4561 = vpack.c.b16 %v2685, %v2681
        %v4562 = vpack.c.b16 %v2690, %v2686
        %v4563 = vpack.c.b16 %v2691, %v2687
        %v4564 = vpack.c.b16 %v2692, %v2688
        %v4565 = vpack.c.b16 %v2693, %v2689
        %v4566 = vpack.c.b16 %v2698, %v2694
        %v4567 = vpack.c.b16 %v2699, %v2695
        %v4568 = vpack.c.b16 %v2700, %v2696
        %v4569 = vpack.c.b16 %v2701, %v2697
        %v4570 = vpack.c.b16 %v2706, %v2702
        %v4571 = vpack.c.b16 %v2707, %v2703
        %v4572 = vpack.c.b16 %v2708, %v2704
        %v4573 = vpack.c.b16 %v2709, %v2705
        %v4574 = vpack.c.b16 %v2714, %v2710
        %v4575 = vpack.c.b16 %v2715, %v2711
        %v4576 = vpack.c.b16 %v2716, %v2712
        %v4577 = vpack.c.b16 %v2717, %v2713
        %v4578 = vpack.c.b16 %v2722, %v2718
        %v4579 = vpack.c.b16 %v2723, %v2719
        %v4580 = vpack.c.b16 %v2724, %v2720
        %v4581 = vpack.c.b16 %v2725, %v2721
        %v4582 = vpack.c.b16 %v2730, %v2726
        %v4583 = vpack.c.b16 %v2731, %v2727
        %v4584 = vpack.c.b16 %v2732, %v2728
        %v4585 = vpack.c.b16 %v2733, %v2729
        %v4586 = vpack.c.b16 %v2738, %v2734
        %v4587 = vpack.c.b16 %v2739, %v2735
        %v4588 = vpack.c.b16 %v2740, %v2736
        %v4589 = vpack.c.b16 %v2741, %v2737
        %v4590 = vpack.c.b16 %v2746, %v2742
        %v4591 = vpack.c.b16 %v2747, %v2743
        %v4592 = vpack.c.b16 %v2748, %v2744
        %v4593 = vpack.c.b16 %v2749, %v2745
        %v4594 = vpack.c.b16 %v2754, %v2750
        %v4595 = vpack.c.b16 %v2755, %v2751
        %v4596 = vpack.c.b16 %v2756, %v2752
        %v4597 = vpack.c.b16 %v2757, %v2753
        %v4598 = vpack.c.b16 %v2762, %v2758
        %v4599 = vpack.c.b16 %v2763, %v2759
        %v4600 = vpack.c.b16 %v2764, %v2760
        %v4601 = vpack.c.b16 %v2765, %v2761
        %v4602 = vpack.c.b16 %v2770, %v2766
        %v4603 = vpack.c.b16 %v2771, %v2767
        %v4604 = vpack.c.b16 %v2772, %v2768
        %v4605 = vpack.c.b16 %v2773, %v2769
        %v4606 = vpack.c.b16 %v2778, %v2774
        %v4607 = vpack.c.b16 %v2779, %v2775
        %v4608 = vpack.c.b16 %v2780, %v2776
        %v4609 = vpack.c.b16 %v2781, %v2777
        %v4610 = vpack.c.b16 %v2786, %v2782
        %v4611 = vpack.c.b16 %v2787, %v2783
        %v4612 = vpack.c.b16 %v2788, %v2784
        %v4613 = vpack.c.b16 %v2789, %v2785
        %v4614 = vpack.c.b16 %v2794, %v2790
        %v4615 = vpack.c.b16 %v2795, %v2791
        %v4616 = vpack.c.b16 %v2796, %v2792
        %v4617 = vpack.c.b16 %v2797, %v2793
        %v4618 = vpack.c.b16 %v2802, %v2798
        %v4619 = vpack.c.b16 %v2803, %v2799
        %v4620 = vpack.c.b16 %v2804, %v2800
        %v4621 = vpack.c.b16 %v2805, %v2801
        %v4622 = vpack.c.b16 %v2810, %v2806
        %v4623 = vpack.c.b16 %v2811, %v2807
        %v4624 = vpack.c.b16 %v2812, %v2808
        %v4625 = vpack.c.b16 %v2813, %v2809
        %v4626 = vpack.c.b16 %v2818, %v2814
        %v4627 = vpack.c.b16 %v2819, %v2815
        %v4628 = vpack.c.b16 %v2820, %v2816
        %v4629 = vpack.c.b16 %v2821, %v2817
        %v4630 = vpack.c.b16 %v2826, %v2822
        %v4631 = vpack.c.b16 %v2827, %v2823
        %v4632 = vpack.c.b16 %v2828, %v2824
        %v4633 = vpack.c.b16 %v2829, %v2825
        %v4634 = vpack.c.b16 %v2834, %v2830
        %v4635 = vpack.c.b16 %v2835, %v2831
        %v4636 = vpack.c.b16 %v2836, %v2832
        %v4637 = vpack.c.b16 %v2837, %v2833
        %v4638 = vpack.c.b16 %v2842, %v2838
        %v4639 = vpack.c.b16 %v2843, %v2839
        %v4640 = vpack.c.b16 %v2844, %v2840
        %v4641 = vpack.c.b16 %v2845, %v2841
        %v4642 = vpack.c.b16 %v2850, %v2846
        %v4643 = vpack.c.b16 %v2851, %v2847
        %v4644 = vpack.c.b16 %v2852, %v2848
        %v4645 = vpack.c.b16 %v2853, %v2849
        %v4646 = vpack.c.b16 %v2858, %v2854
        %v4647 = vpack.c.b16 %v2859, %v2855
        %v4648 = vpack.c.b16 %v2860, %v2856
        %v4649 = vpack.c.b16 %v2861, %v2857
        %v4650 = vpack.c.b16 %v2866, %v2862
        %v4651 = vpack.c.b16 %v2867, %v2863
        %v4652 = vpack.c.b16 %v2868, %v2864
        %v4653 = vpack.c.b16 %v2869, %v2865
        %v4654 = vpack.c.b16 %v2874, %v2870
        %v4655 = vpack.c.b16 %v2875, %v2871
        %v4656 = vpack.c.b16 %v2876, %v2872
        %v4657 = vpack.c.b16 %v2877, %v2873
        %v4658 = vpack.c.b16 %v2882, %v2878
        %v4659 = vpack.c.b16 %v2883, %v2879
        %v4660 = vpack.c.b16 %v2884, %v2880
        %v4661 = vpack.c.b16 %v2885, %v2881
        %v4662 = vpack.c.b16 %v2890, %v2886
        %v4663 = vpack.c.b16 %v2891, %v2887
        %v4664 = vpack.c.b16 %v2892, %v2888
        %v4665 = vpack.c.b16 %v2893, %v2889
        %v4666 = vpack.c.b16 %v2898, %v2894
        %v4667 = vpack.c.b16 %v2899, %v2895
        %v4668 = vpack.c.b16 %v2900, %v2896
        %v4669 = vpack.c.b16 %v2901, %v2897
        %v4670 = vpack.c.b16 %v2906, %v2902
        %v4671 = vpack.c.b16 %v2907, %v2903
        %v4672 = vpack.c.b16 %v2908, %v2904
        %v4673 = vpack.c.b16 %v2909, %v2905
        %v4674 = vpack.c.b16 %v2914, %v2910
        %v4675 = vpack.c.b16 %v2915, %v2911
        %v4676 = vpack.c.b16 %v2916, %v2912
        %v4677 = vpack.c.b16 %v2917, %v2913
        %v4678 = vpack.c.b16 %v2922, %v2918
        %v4679 = vpack.c.b16 %v2923, %v2919
        %v4680 = vpack.c.b16 %v2924, %v2920
        %v4681 = vpack.c.b16 %v2925, %v2921
        %v4682 = vpack.c.b16 %v2930, %v2926
        %v4683 = vpack.c.b16 %v2931, %v2927
        %v4684 = vpack.c.b16 %v2932, %v2928
        %v4685 = vpack.c.b16 %v2933, %v2929
        %v4686 = vpack.c.b16 %v2938, %v2934
        %v4687 = vpack.c.b16 %v2939, %v2935
        %v4688 = vpack.c.b16 %v2940, %v2936
        %v4689 = vpack.c.b16 %v2941, %v2937
        %v4690 = vpack.c.b16 %v2946, %v2942
        %v4691 = vpack.c.b16 %v2947, %v2943
        %v4692 = vpack.c.b16 %v2948, %v2944
        %v4693 = vpack.c.b16 %v2949, %v2945
        %v4694 = vpack.c.b16 %v2954, %v2950
        %v4695 = vpack.c.b16 %v2955, %v2951
        %v4696 = vpack.c.b16 %v2956, %v2952
        %v4697 = vpack.c.b16 %v2957, %v2953
        %v4698 = vpack.c.b16 %v2962, %v2958
        %v4699 = vpack.c.b16 %v2963, %v2959
        %v4700 = vpack.c.b16 %v2964, %v2960
        %v4701 = vpack.c.b16 %v2965, %v2961
        %v4702 = vpack.c.b16 %v2970, %v2966
        %v4703 = vpack.c.b16 %v2971, %v2967
        %v4704 = vpack.c.b16 %v2972, %v2968
        %v4705 = vpack.c.b16 %v2973, %v2969
        %v4706 = vpack.c.b16 %v2978, %v2974
        %v4707 = vpack.c.b16 %v2979, %v2975
        %v4708 = vpack.c.b16 %v2980, %v2976
        %v4709 = vpack.c.b16 %v2981, %v2977
        %v4710 = vpack.c.b16 %v2986, %v2982
        %v4711 = vpack.c.b16 %v2987, %v2983
        %v4712 = vpack.c.b16 %v2988, %v2984
        %v4713 = vpack.c.b16 %v2989, %v2985
        %v4714 = vpack.c.b16 %v2994, %v2990
        %v4715 = vpack.c.b16 %v2995, %v2991
        %v4716 = vpack.c.b16 %v2996, %v2992
        %v4717 = vpack.c.b16 %v2997, %v2993
        %v4718 = vpack.c.b16 %v3002, %v2998
        %v4719 = vpack.c.b16 %v3003, %v2999
        %v4720 = vpack.c.b16 %v3004, %v3000
        %v4721 = vpack.c.b16 %v3005, %v3001
        %v4722 = vpack.c.b16 %v3010, %v3006
        %v4723 = vpack.c.b16 %v3011, %v3007
        %v4724 = vpack.c.b16 %v3012, %v3008
        %v4725 = vpack.c.b16 %v3013, %v3009
        %v4726 = vpack.c.b16 %v3018, %v3014
        %v4727 = vpack.c.b16 %v3019, %v3015
        %v4728 = vpack.c.b16 %v3020, %v3016
        %v4729 = vpack.c.b16 %v3021, %v3017
        %v4730 = vpack.c.b16 %v3026, %v3022
        %v4731 = vpack.c.b16 %v3027, %v3023
        %v4732 = vpack.c.b16 %v3028, %v3024
        %v4733 = vpack.c.b16 %v3029, %v3025
        %v4734 = vpack.c.b16 %v3034, %v3030
        %v4735 = vpack.c.b16 %v3035, %v3031
        %v4736 = vpack.c.b16 %v3036, %v3032
        %v4737 = vpack.c.b16 %v3037, %v3033
        %v4738 = vpack.c.b16 %v3042, %v3038
        %v4739 = vpack.c.b16 %v3043, %v3039
        %v4740 = vpack.c.b16 %v3044, %v3040
        %v4741 = vpack.c.b16 %v3045, %v3041
        %v4742 = vpack.c.b16 %v3050, %v3046
        %v4743 = vpack.c.b16 %v3051, %v3047
        %v4744 = vpack.c.b16 %v3052, %v3048
        %v4745 = vpack.c.b16 %v3053, %v3049
        %v4746 = vpack.c.b16 %v3058, %v3054
        %v4747 = vpack.c.b16 %v3059, %v3055
        %v4748 = vpack.c.b16 %v3060, %v3056
        %v4749 = vpack.c.b16 %v3061, %v3057
        %v4750 = vpack.c.b16 %v3066, %v3062
        %v4751 = vpack.c.b16 %v3067, %v3063
        %v4752 = vpack.c.b16 %v3068, %v3064
        %v4753 = vpack.c.b16 %v3069, %v3065
        %v4754 = vpack.c.b16 %v3074, %v3070
        %v4755 = vpack.c.b16 %v3075, %v3071
        %v4756 = vpack.c.b16 %v3076, %v3072
        %v4757 = vpack.c.b16 %v3077, %v3073
        %v4758 = vpack.c.b16 %v3082, %v3078
        %v4759 = vpack.c.b16 %v3083, %v3079
        %v4760 = vpack.c.b16 %v3084, %v3080
        %v4761 = vpack.c.b16 %v3085, %v3081
        %v4762 = vpack.c.b16 %v3090, %v3086
        %v4763 = vpack.c.b16 %v3091, %v3087
        %v4764 = vpack.c.b16 %v3092, %v3088
        %v4765 = vpack.c.b16 %v3093, %v3089
        %v4766 = vpack.c.b16 %v3098, %v3094
        %v4767 = vpack.c.b16 %v3099, %v3095
        %v4768 = vpack.c.b16 %v3100, %v3096
        %v4769 = vpack.c.b16 %v3101, %v3097
        %v4770 = vpack.c.b16 %v3106, %v3102
        %v4771 = vpack.c.b16 %v3107, %v3103
        %v4772 = vpack.c.b16 %v3108, %v3104
        %v4773 = vpack.c.b16 %v3109, %v3105
        %v4774 = vpack.c.b16 %v3114, %v3110
        %v4775 = vpack.c.b16 %v3115, %v3111
        %v4776 = vpack.c.b16 %v3116, %v3112
        %v4777 = vpack.c.b16 %v3117, %v3113
        %v4778 = vpack.c.b16 %v3122, %v3118
        %v4779 = vpack.c.b16 %v3123, %v3119
        %v4780 = vpack.c.b16 %v3124, %v3120
        %v4781 = vpack.c.b16 %v3125, %v3121
        %v4782 = vpack.c.b16 %v3130, %v3126
        %v4783 = vpack.c.b16 %v3131, %v3127
        %v4784 = vpack.c.b16 %v3132, %v3128
        %v4785 = vpack.c.b16 %v3133, %v3129
        %v4786 = vpack.c.b16 %v3138, %v3134
        %v4787 = vpack.c.b16 %v3139, %v3135
        %v4788 = vpack.c.b16 %v3140, %v3136
        %v4789 = vpack.c.b16 %v3141, %v3137
        %v4790 = vpack.c.b16 %v3146, %v3142
        %v4791 = vpack.c.b16 %v3147, %v3143
        %v4792 = vpack.c.b16 %v3148, %v3144
        %v4793 = vpack.c.b16 %v3149, %v3145
        %v4794 = vpack.c.b16 %v3154, %v3150
        %v4795 = vpack.c.b16 %v3155, %v3151
        %v4796 = vpack.c.b16 %v3156, %v3152
        %v4797 = vpack.c.b16 %v3157, %v3153
        %v4798 = vpack.c.b16 %v3162, %v3158
        %v4799 = vpack.c.b16 %v3163, %v3159
        %v4800 = vpack.c.b16 %v3164, %v3160
        %v4801 = vpack.c.b16 %v3165, %v3161
        %v4802 = vpack.c.b16 %v3170, %v3166
        %v4803 = vpack.c.b16 %v3171, %v3167
        %v4804 = vpack.c.b16 %v3172, %v3168
        %v4805 = vpack.c.b16 %v3173, %v3169
        %v4806 = vpack.c.b16 %v3178, %v3174
        %v4807 = vpack.c.b16 %v3179, %v3175
        %v4808 = vpack.c.b16 %v3180, %v3176
        %v4809 = vpack.c.b16 %v3181, %v3177
        %v4810 = vpack.c.b16 %v3186, %v3182
        %v4811 = vpack.c.b16 %v3187, %v3183
        %v4812 = vpack.c.b16 %v3188, %v3184
        %v4813 = vpack.c.b16 %v3189, %v3185
        %v4814 = vpack.c.b16 %v3194, %v3190
        %v4815 = vpack.c.b16 %v3195, %v3191
        %v4816 = vpack.c.b16 %v3196, %v3192
        %v4817 = vpack.c.b16 %v3197, %v3193
        %v4818 = vpack.c.b16 %v3202, %v3198
        %v4819 = vpack.c.b16 %v3203, %v3199
        %v4820 = vpack.c.b16 %v3204, %v3200
        %v4821 = vpack.c.b16 %v3205, %v3201
        %v4822 = vpack.c.b16 %v3210, %v3206
        %v4823 = vpack.c.b16 %v3211, %v3207
        %v4824 = vpack.c.b16 %v3212, %v3208
        %v4825 = vpack.c.b16 %v3213, %v3209
        %v4826 = vpack.c.b16 %v3218, %v3214
        %v4827 = vpack.c.b16 %v3219, %v3215
        %v4828 = vpack.c.b16 %v3220, %v3216
        %v4829 = vpack.c.b16 %v3221, %v3217
        %v4830 = vpack.c.b16 %v3226, %v3222
        %v4831 = vpack.c.b16 %v3227, %v3223
        %v4832 = vpack.c.b16 %v3228, %v3224
        %v4833 = vpack.c.b16 %v3229, %v3225
        %v4834 = vpack.c.b16 %v3234, %v3230
        %v4835 = vpack.c.b16 %v3235, %v3231
        %v4836 = vpack.c.b16 %v3236, %v3232
        %v4837 = vpack.c.b16 %v3237, %v3233
        %v4838 = vpack.c.b16 %v3242, %v3238
        %v4839 = vpack.c.b16 %v3243, %v3239
        %v4840 = vpack.c.b16 %v3244, %v3240
        %v4841 = vpack.c.b16 %v3245, %v3241
        %v4842 = vpack.c.b16 %v3250, %v3246
        %v4843 = vpack.c.b16 %v3251, %v3247
        %v4844 = vpack.c.b16 %v3252, %v3248
        %v4845 = vpack.c.b16 %v3253, %v3249
        %v4846 = vpack.c.b16 %v3258, %v3254
        %v4847 = vpack.c.b16 %v3259, %v3255
        %v4848 = vpack.c.b16 %v3260, %v3256
        %v4849 = vpack.c.b16 %v3261, %v3257
        %v4850 = vpack.c.b16 %v3266, %v3262
        %v4851 = vpack.c.b16 %v3267, %v3263
        %v4852 = vpack.c.b16 %v3268, %v3264
        %v4853 = vpack.c.b16 %v3269, %v3265
        %v4854 = vpack.c.b16 %v3274, %v3270
        %v4855 = vpack.c.b16 %v3275, %v3271
        %v4856 = vpack.c.b16 %v3276, %v3272
        %v4857 = vpack.c.b16 %v3277, %v3273
        %v4858 = vpack.c.b16 %v3282, %v3278
        %v4859 = vpack.c.b16 %v3283, %v3279
        %v4860 = vpack.c.b16 %v3284, %v3280
        %v4861 = vpack.c.b16 %v3285, %v3281
        %v4862 = vpack.c.b16 %v3290, %v3286
        %v4863 = vpack.c.b16 %v3291, %v3287
        %v4864 = vpack.c.b16 %v3292, %v3288
        %v4865 = vpack.c.b16 %v3293, %v3289
        %v4866 = vpack.c.b16 %v3298, %v3294
        %v4867 = vpack.c.b16 %v3299, %v3295
        %v4868 = vpack.c.b16 %v3300, %v3296
        %v4869 = vpack.c.b16 %v3301, %v3297
        %v4870 = vpack.c.b16 %v3306, %v3302
        %v4871 = vpack.c.b16 %v3307, %v3303
        %v4872 = vpack.c.b16 %v3308, %v3304
        %v4873 = vpack.c.b16 %v3309, %v3305
        %v4874 = vpack.c.b16 %v3314, %v3310
        %v4875 = vpack.c.b16 %v3315, %v3311
        %v4876 = vpack.c.b16 %v3316, %v3312
        %v4877 = vpack.c.b16 %v3317, %v3313
        %v4878 = vpack.c.b16 %v3322, %v3318
        %v4879 = vpack.c.b16 %v3323, %v3319
        %v4880 = vpack.c.b16 %v3324, %v3320
        %v4881 = vpack.c.b16 %v3325, %v3321
        %v4882 = vpack.c.b16 %v3330, %v3326
        %v4883 = vpack.c.b16 %v3331, %v3327
        %v4884 = vpack.c.b16 %v3332, %v3328
        %v4885 = vpack.c.b16 %v3333, %v3329
        %v4886 = vpack.c.b16 %v3338, %v3334
        %v4887 = vpack.c.b16 %v3339, %v3335
        %v4888 = vpack.c.b16 %v3340, %v3336
        %v4889 = vpack.c.b16 %v3341, %v3337
        %v4890 = vpack.c.b16 %v3346, %v3342
        %v4891 = vpack.c.b16 %v3347, %v3343
        %v4892 = vpack.c.b16 %v3348, %v3344
        %v4893 = vpack.c.b16 %v3349, %v3345
        %v4894 = vpack.c.b16 %v3354, %v3350
        %v4895 = vpack.c.b16 %v3355, %v3351
        %v4896 = vpack.c.b16 %v3356, %v3352
        %v4897 = vpack.c.b16 %v3357, %v3353
        %v4898 = vpack.c.b16 %v3362, %v3358
        %v4899 = vpack.c.b16 %v3363, %v3359
        %v4900 = vpack.c.b16 %v3364, %v3360
        %v4901 = vpack.c.b16 %v3365, %v3361
        %v4902 = vpack.c.b16 %v3370, %v3366
        %v4903 = vpack.c.b16 %v3371, %v3367
        %v4904 = vpack.c.b16 %v3372, %v3368
        %v4905 = vpack.c.b16 %v3373, %v3369
        %v4906 = vpack.c.b16 %v3378, %v3374
        %v4907 = vpack.c.b16 %v3379, %v3375
        %v4908 = vpack.c.b16 %v3380, %v3376
        %v4909 = vpack.c.b16 %v3381, %v3377
        %v4910 = vpack.c.b16 %v3386, %v3382
        %v4911 = vpack.c.b16 %v3387, %v3383
        %v4912 = vpack.c.b16 %v3388, %v3384
        %v4913 = vpack.c.b16 %v3389, %v3385
        %v4914 = vpack.c.b16 %v3394, %v3390
        %v4915 = vpack.c.b16 %v3395, %v3391
        %v4916 = vpack.c.b16 %v3396, %v3392
        %v4917 = vpack.c.b16 %v3397, %v3393
        %v4918 = vpack.c.b16 %v3402, %v3398
        %v4919 = vpack.c.b16 %v3403, %v3399
        %v4920 = vpack.c.b16 %v3404, %v3400
        %v4921 = vpack.c.b16 %v3405, %v3401
        %v4922 = vpack.c.b16 %v3410, %v3406
        %v4923 = vpack.c.b16 %v3411, %v3407
        %v4924 = vpack.c.b16 %v3412, %v3408
        %v4925 = vpack.c.b16 %v3413, %v3409
        %v4926 = vpack.c.b16 %v3418, %v3414
        %v4927 = vpack.c.b16 %v3419, %v3415
        %v4928 = vpack.c.b16 %v3420, %v3416
        %v4929 = vpack.c.b16 %v3421, %v3417
        %v4930 = vpack.c.b16 %v3426, %v3422
        %v4931 = vpack.c.b16 %v3427, %v3423
        %v4932 = vpack.c.b16 %v3428, %v3424
        %v4933 = vpack.c.b16 %v3429, %v3425
        %v4934 = vpack.c.b16 %v3434, %v3430
        %v4935 = vpack.c.b16 %v3435, %v3431
        %v4936 = vpack.c.b16 %v3436, %v3432
        %v4937 = vpack.c.b16 %v3437, %v3433
        %v4938 = vpack.c.b16 %v3442, %v3438
        %v4939 = vpack.c.b16 %v3443, %v3439
        %v4940 = vpack.c.b16 %v3444, %v3440
        %v4941 = vpack.c.b16 %v3445, %v3441
        %v4942 = vpack.c.b16 %v3450, %v3446
        %v4943 = vpack.c.b16 %v3451, %v3447
        %v4944 = vpack.c.b16 %v3452, %v3448
        %v4945 = vpack.c.b16 %v3453, %v3449
        %v4946 = vpack.c.b16 %v3458, %v3454
        %v4947 = vpack.c.b16 %v3459, %v3455
        %v4948 = vpack.c.b16 %v3460, %v3456
        %v4949 = vpack.c.b16 %v3461, %v3457
        %v4950 = vpack.c.b16 %v3466, %v3462
        %v4951 = vpack.c.b16 %v3467, %v3463
        %v4952 = vpack.c.b16 %v3468, %v3464
        %v4953 = vpack.c.b16 %v3469, %v3465
        %v4954 = vpack.c.b16 %v3474, %v3470
        %v4955 = vpack.c.b16 %v3475, %v3471
        %v4956 = vpack.c.b16 %v3476, %v3472
        %v4957 = vpack.c.b16 %v3477, %v3473
        %v4958 = vpack.c.b16 %v3482, %v3478
        %v4959 = vpack.c.b16 %v3483, %v3479
        %v4960 = vpack.c.b16 %v3484, %v3480
        %v4961 = vpack.c.b16 %v3485, %v3481
        %v4962 = vpack.c.b16 %v3490, %v3486
        %v4963 = vpack.c.b16 %v3491, %v3487
        %v4964 = vpack.c.b16 %v3492, %v3488
        %v4965 = vpack.c.b16 %v3493, %v3489
        %v4966 = vpack.c.b16 %v3498, %v3494
        %v4967 = vpack.c.b16 %v3499, %v3495
        %v4968 = vpack.c.b16 %v3500, %v3496
        %v4969 = vpack.c.b16 %v3501, %v3497
        %v4970 = vpack.c.b16 %v3506, %v3502
        %v4971 = vpack.c.b16 %v3507, %v3503
        %v4972 = vpack.c.b16 %v3508, %v3504
        %v4973 = vpack.c.b16 %v3509, %v3505
        %v4974 = vpack.c.b16 %v3514, %v3510
        %v4975 = vpack.c.b16 %v3515, %v3511
        %v4976 = vpack.c.b16 %v3516, %v3512
        %v4977 = vpack.c.b16 %v3517, %v3513
        %v4978 = vpack.c.b16 %v3522, %v3518
        %v4979 = vpack.c.b16 %v3523, %v3519
        %v4980 = vpack.c.b16 %v3524, %v3520
        %v4981 = vpack.c.b16 %v3525, %v3521
        %v4982 = vpack.c.b16 %v3530, %v3526
        %v4983 = vpack.c.b16 %v3531, %v3527
        %v4984 = vpack.c.b16 %v3532, %v3528
        %v4985 = vpack.c.b16 %v3533, %v3529
        %v4986 = vpack.c.b16 %v3538, %v3534
        %v4987 = vpack.c.b16 %v3539, %v3535
        %v4988 = vpack.c.b16 %v3540, %v3536
        %v4989 = vpack.c.b16 %v3541, %v3537
        %v4990 = vpack.c.b16 %v3546, %v3542
        %v4991 = vpack.c.b16 %v3547, %v3543
        %v4992 = vpack.c.b16 %v3548, %v3544
        %v4993 = vpack.c.b16 %v3549, %v3545
        %v4994 = vpack.c.b16 %v3554, %v3550
        %v4995 = vpack.c.b16 %v3555, %v3551
        %v4996 = vpack.c.b16 %v3556, %v3552
        %v4997 = vpack.c.b16 %v3557, %v3553
        %v4998 = vpack.c.b16 %v3562, %v3558
        %v4999 = vpack.c.b16 %v3563, %v3559
        %v5000 = vpack.c.b16 %v3564, %v3560
        %v5001 = vpack.c.b16 %v3565, %v3561
        %v5002 = vpack.c.b16 %v3570, %v3566
        %v5003 = vpack.c.b16 %v3571, %v3567
        %v5004 = vpack.c.b16 %v3572, %v3568
        %v5005 = vpack.c.b16 %v3573, %v3569
        %v5006 = vpack.c.b16 %v3578, %v3574
        %v5007 = vpack.c.b16 %v3579, %v3575
        %v5008 = vpack.c.b16 %v3580, %v3576
        %v5009 = vpack.c.b16 %v3581, %v3577
        %v5010 = vpack.c.b16 %v3586, %v3582
        %v5011 = vpack.c.b16 %v3587, %v3583
        %v5012 = vpack.c.b16 %v3588, %v3584
        %v5013 = vpack.c.b16 %v3589, %v3585
        %v5014 = vpack.c.b16 %v3594, %v3590
        %v5015 = vpack.c.b16 %v3595, %v3591
        %v5016 = vpack.c.b16 %v3596, %v3592
        %v5017 = vpack.c.b16 %v3597, %v3593
        %v5018 = vpack.c.b16 %v3602, %v3598
        %v5019 = vpack.c.b16 %v3603, %v3599
        %v5020 = vpack.c.b16 %v3604, %v3600
        %v5021 = vpack.c.b16 %v3605, %v3601
        %v5022 = vpack.c.b16 %v3610, %v3606
        %v5023 = vpack.c.b16 %v3611, %v3607
        %v5024 = vpack.c.b16 %v3612, %v3608
        %v5025 = vpack.c.b16 %v3613, %v3609
        %v5026 = vpack.c.b16 %v3618, %v3614
        %v5027 = vpack.c.b16 %v3619, %v3615
        %v5028 = vpack.c.b16 %v3620, %v3616
        %v5029 = vpack.c.b16 %v3621, %v3617
        %v5030 = vpack.c.b16 %v3626, %v3622
        %v5031 = vpack.c.b16 %v3627, %v3623
        %v5032 = vpack.c.b16 %v3628, %v3624
        %v5033 = vpack.c.b16 %v3629, %v3625
        %v5034 = vpack.c.b16 %v3634, %v3630
        %v5035 = vpack.c.b16 %v3635, %v3631
        %v5036 = vpack.c.b16 %v3636, %v3632
        %v5037 = vpack.c.b16 %v3637, %v3633
        %v5038 = vpack.c.b16 %v3642, %v3638
        %v5039 = vpack.c.b16 %v3643, %v3639
        %v5040 = vpack.c.b16 %v3644, %v3640
        %v5041 = vpack.c.b16 %v3645, %v3641
        %v5042 = vpack.c.b16 %v3650, %v3646
        %v5043 = vpack.c.b16 %v3651, %v3647
        %v5044 = vpack.c.b16 %v3652, %v3648
        %v5045 = vpack.c.b16 %v3653, %v3649
        %v5046 = vpack.c.b16 %v3658, %v3654
        %v5047 = vpack.c.b16 %v3659, %v3655
        %v5048 = vpack.c.b16 %v3660, %v3656
        %v5049 = vpack.c.b16 %v3661, %v3657
        %v5050 = vpack.c.b16 %v3666, %v3662
        %v5051 = vpack.c.b16 %v3667, %v3663
        %v5052 = vpack.c.b16 %v3668, %v3664
        %v5053 = vpack.c.b16 %v3669, %v3665
        %v5054 = vpack.c.b16 %v3674, %v3670
        %v5055 = vpack.c.b16 %v3675, %v3671
        %v5056 = vpack.c.b16 %v3676, %v3672
        %v5057 = vpack.c.b16 %v3677, %v3673
        %v5058 = vpack.c.b16 %v3682, %v3678
        %v5059 = vpack.c.b16 %v3683, %v3679
        %v5060 = vpack.c.b16 %v3684, %v3680
        %v5061 = vpack.c.b16 %v3685, %v3681
        %v5062 = vpack.c.b16 %v3690, %v3686
        %v5063 = vpack.c.b16 %v3691, %v3687
        %v5064 = vpack.c.b16 %v3692, %v3688
        %v5065 = vpack.c.b16 %v3693, %v3689
        %v5066 = vpack.c.b16 %v3698, %v3694
        %v5067 = vpack.c.b16 %v3699, %v3695
        %v5068 = vpack.c.b16 %v3700, %v3696
        %v5069 = vpack.c.b16 %v3701, %v3697
        %v5070 = vpack.c.b16 %v3706, %v3702
        %v5071 = vpack.c.b16 %v3707, %v3703
        %v5072 = vpack.c.b16 %v3708, %v3704
        %v5073 = vpack.c.b16 %v3709, %v3705
        %v5074 = vpack.c.b16 %v3714, %v3710
        %v5075 = vpack.c.b16 %v3715, %v3711
        %v5076 = vpack.c.b16 %v3716, %v3712
        %v5077 = vpack.c.b16 %v3717, %v3713
        %v5078 = vpack.c.b16 %v3722, %v3718
        %v5079 = vpack.c.b16 %v3723, %v3719
        %v5080 = vpack.c.b16 %v3724, %v3720
        %v5081 = vpack.c.b16 %v3725, %v3721
        %v5082 = vpack.c.b16 %v3730, %v3726
        %v5083 = vpack.c.b16 %v3731, %v3727
        %v5084 = vpack.c.b16 %v3732, %v3728
        %v5085 = vpack.c.b16 %v3733, %v3729
        %v5086 = vpack.c.b16 %v3738, %v3734
        %v5087 = vpack.c.b16 %v3739, %v3735
        %v5088 = vpack.c.b16 %v3740, %v3736
        %v5089 = vpack.c.b16 %v3741, %v3737
        %v5090 = vpack.c.b16 %v3746, %v3742
        %v5091 = vpack.c.b16 %v3747, %v3743
        %v5092 = vpack.c.b16 %v3748, %v3744
        %v5093 = vpack.c.b16 %v3749, %v3745
        %v5094 = vpack.c.b16 %v3754, %v3750
        %v5095 = vpack.c.b16 %v3755, %v3751
        %v5096 = vpack.c.b16 %v3756, %v3752
        %v5097 = vpack.c.b16 %v3757, %v3753
        %v5098 = vpack.c.b16 %v3762, %v3758
        %v5099 = vpack.c.b16 %v3763, %v3759
        %v5100 = vpack.c.b16 %v3764, %v3760
        %v5101 = vpack.c.b16 %v3765, %v3761
        %v5102 = vpack.c.b16 %v3770, %v3766
        %v5103 = vpack.c.b16 %v3771, %v3767
        %v5104 = vpack.c.b16 %v3772, %v3768
        %v5105 = vpack.c.b16 %v3773, %v3769
        %v5106 = vpack.c.b16 %v3778, %v3774
        %v5107 = vpack.c.b16 %v3779, %v3775
        %v5108 = vpack.c.b16 %v3780, %v3776
        %v5109 = vpack.c.b16 %v3781, %v3777
        %v5110 = vpack.c.b16 %v3786, %v3782
        %v5111 = vpack.c.b16 %v3787, %v3783
        %v5112 = vpack.c.b16 %v3788, %v3784
        %v5113 = vpack.c.b16 %v3789, %v3785
        %v5114 = vpack.c.b16 %v3794, %v3790
        %v5115 = vpack.c.b16 %v3795, %v3791
        %v5116 = vpack.c.b16 %v3796, %v3792
        %v5117 = vpack.c.b16 %v3797, %v3793
        %v5118 = vpack.c.b16 %v3802, %v3798
        %v5119 = vpack.c.b16 %v3803, %v3799
        %v5120 = vpack.c.b16 %v3804, %v3800
        %v5121 = vpack.c.b16 %v3805, %v3801
        %v5122 = vpack.c.b16 %v3810, %v3806
        %v5123 = vpack.c.b16 %v3811, %v3807
        %v5124 = vpack.c.b16 %v3812, %v3808
        %v5125 = vpack.c.b16 %v3813, %v3809
        %v5126 = vpack.c.b16 %v3818, %v3814
        %v5127 = vpack.c.b16 %v3819, %v3815
        %v5128 = vpack.c.b16 %v3820, %v3816
        %v5129 = vpack.c.b16 %v3821, %v3817
        %v5130 = vpack.c.b16 %v3826, %v3822
        %v5131 = vpack.c.b16 %v3827, %v3823
        %v5132 = vpack.c.b16 %v3828, %v3824
        %v5133 = vpack.c.b16 %v3829, %v3825
        %v5134 = vpack.c.b16 %v3834, %v3830
        %v5135 = vpack.c.b16 %v3835, %v3831
        %v5136 = vpack.c.b16 %v3836, %v3832
        %v5137 = vpack.c.b16 %v3837, %v3833
        %v5138 = vpack.c.b16 %v3842, %v3838
        %v5139 = vpack.c.b16 %v3843, %v3839
        %v5140 = vpack.c.b16 %v3844, %v3840
        %v5141 = vpack.c.b16 %v3845, %v3841
        %v5142 = vpack.c.b16 %v3850, %v3846
        %v5143 = vpack.c.b16 %v3851, %v3847
        %v5144 = vpack.c.b16 %v3852, %v3848
        %v5145 = vpack.c.b16 %v3853, %v3849
        %v5146 = vpack.c.b16 %v3858, %v3854
        %v5147 = vpack.c.b16 %v3859, %v3855
        %v5148 = vpack.c.b16 %v3860, %v3856
        %v5149 = vpack.c.b16 %v3861, %v3857
        %v5150 = vpack.c.b16 %v3866, %v3862
        %v5151 = vpack.c.b16 %v3867, %v3863
        %v5152 = vpack.c.b16 %v3868, %v3864
        %v5153 = vpack.c.b16 %v3869, %v3865
        %v5154 = vpack.c.b16 %v3874, %v3870
        %v5155 = vpack.c.b16 %v3875, %v3871
        %v5156 = vpack.c.b16 %v3876, %v3872
        %v5157 = vpack.c.b16 %v3877, %v3873
        %v5158 = vpack.c.b16 %v3882, %v3878
        %v5159 = vpack.c.b16 %v3883, %v3879
        %v5160 = vpack.c.b16 %v3884, %v3880
        %v5161 = vpack.c.b16 %v3885, %v3881
        %v5162 = vpack.c.b16 %v3890, %v3886
        %v5163 = vpack.c.b16 %v3891, %v3887
        %v5164 = vpack.c.b16 %v3892, %v3888
        %v5165 = vpack.c.b16 %v3893, %v3889
        %v5166 = vpack.c.b16 %v3898, %v3894
        %v5167 = vpack.c.b16 %v3899, %v3895
        %v5168 = vpack.c.b16 %v3900, %v3896
        %v5169 = vpack.c.b16 %v3901, %v3897
        %v5170 = vpack.c.b16 %v3906, %v3902
        %v5171 = vpack.c.b16 %v3907, %v3903
        %v5172 = vpack.c.b16 %v3908, %v3904
        %v5173 = vpack.c.b16 %v3909, %v3905
        %v5174 = vpack.c.b16 %v3914, %v3910
        %v5175 = vpack.c.b16 %v3915, %v3911
        %v5176 = vpack.c.b16 %v3916, %v3912
        %v5177 = vpack.c.b16 %v3917, %v3913
        %v5178 = vpack.c.b16 %v3922, %v3918
        %v5179 = vpack.c.b16 %v3923, %v3919
        %v5180 = vpack.c.b16 %v3924, %v3920
        %v5181 = vpack.c.b16 %v3925, %v3921
        %v5182 = vpack.c.b16 %v3930, %v3926
        %v5183 = vpack.c.b16 %v3931, %v3927
        %v5184 = vpack.c.b16 %v3932, %v3928
        %v5185 = vpack.c.b16 %v3933, %v3929
        %v5186 = vpack.c.b16 %v3938, %v3934
        %v5187 = vpack.c.b16 %v3939, %v3935
        %v5188 = vpack.c.b16 %v3940, %v3936
        %v5189 = vpack.c.b16 %v3941, %v3937
        %v5190 = vpack.c.b16 %v3946, %v3942
        %v5191 = vpack.c.b16 %v3947, %v3943
        %v5192 = vpack.c.b16 %v3948, %v3944
        %v5193 = vpack.c.b16 %v3949, %v3945
        %v5194 = vpack.c.b16 %v3954, %v3950
        %v5195 = vpack.c.b16 %v3955, %v3951
        %v5196 = vpack.c.b16 %v3956, %v3952
        %v5197 = vpack.c.b16 %v3957, %v3953
        %v5198 = vpack.c.b16 %v3962, %v3958
        %v5199 = vpack.c.b16 %v3963, %v3959
        %v5200 = vpack.c.b16 %v3964, %v3960
        %v5201 = vpack.c.b16 %v3965, %v3961
        %v5202 = vpack.c.b16 %v3970, %v3966
        %v5203 = vpack.c.b16 %v3971, %v3967
        %v5204 = vpack.c.b16 %v3972, %v3968
        %v5205 = vpack.c.b16 %v3973, %v3969
        %v5206 = vpack.c.b16 %v3978, %v3974
        %v5207 = vpack.c.b16 %v3979, %v3975
        %v5208 = vpack.c.b16 %v3980, %v3976
        %v5209 = vpack.c.b16 %v3981, %v3977
        %v5210 = vpack.c.b16 %v3986, %v3982
        %v5211 = vpack.c.b16 %v3987, %v3983
        %v5212 = vpack.c.b16 %v3988, %v3984
        %v5213 = vpack.c.b16 %v3989, %v3985
        %v5214 = vpack.c.b16 %v3994, %v3990
        %v5215 = vpack.c.b16 %v3995, %v3991
        %v5216 = vpack.c.b16 %v3996, %v3992
        %v5217 = vpack.c.b16 %v3997, %v3993
        %v5218 = vpack.c.b16 %v4002, %v3998
        %v5219 = vpack.c.b16 %v4003, %v3999
        %v5220 = vpack.c.b16 %v4004, %v4000
        %v5221 = vpack.c.b16 %v4005, %v4001
        %v5222 = vpack.c.b16 %v4010, %v4006
        %v5223 = vpack.c.b16 %v4011, %v4007
        %v5224 = vpack.c.b16 %v4012, %v4008
        %v5225 = vpack.c.b16 %v4013, %v4009
        %v5226 = vpack.c.b16 %v4018, %v4014
        %v5227 = vpack.c.b16 %v4019, %v4015
        %v5228 = vpack.c.b16 %v4020, %v4016
        %v5229 = vpack.c.b16 %v4021, %v4017
        %v5230 = vpack.c.b16 %v4026, %v4022
        %v5231 = vpack.c.b16 %v4027, %v4023
        %v5232 = vpack.c.b16 %v4028, %v4024
        %v5233 = vpack.c.b16 %v4029, %v4025
        %v5234 = vpack.c.b16 %v4034, %v4030
        %v5235 = vpack.c.b16 %v4035, %v4031
        %v5236 = vpack.c.b16 %v4036, %v4032
        %v5237 = vpack.c.b16 %v4037, %v4033
        %v5238 = vpack.c.b16 %v4042, %v4038
        %v5239 = vpack.c.b16 %v4043, %v4039
        %v5240 = vpack.c.b16 %v4044, %v4040
        %v5241 = vpack.c.b16 %v4045, %v4041
        %v5242 = vpack.c.b16 %v4050, %v4046
        %v5243 = vpack.c.b16 %v4051, %v4047
        %v5244 = vpack.c.b16 %v4052, %v4048
        %v5245 = vpack.c.b16 %v4053, %v4049
        %v5246 = vpack.c.b16 %v4058, %v4054
        %v5247 = vpack.c.b16 %v4059, %v4055
        %v5248 = vpack.c.b16 %v4060, %v4056
        %v5249 = vpack.c.b16 %v4061, %v4057
        %v5250 = vpack.c.b16 %v4066, %v4062
        %v5251 = vpack.c.b16 %v4067, %v4063
        %v5252 = vpack.c.b16 %v4068, %v4064
        %v5253 = vpack.c.b16 %v4069, %v4065
        %v5254 = vpack.c.b16 %v4074, %v4070
        %v5255 = vpack.c.b16 %v4075, %v4071
        %v5256 = vpack.c.b16 %v4076, %v4072
        %v5257 = vpack.c.b16 %v4077, %v4073
        %v5258 = vpack.c.b16 %v4082, %v4078
        %v5259 = vpack.c.b16 %v4083, %v4079
        %v5260 = vpack.c.b16 %v4084, %v4080
        %v5261 = vpack.c.b16 %v4085, %v4081
        %v5262 = vpack.c.b16 %v4090, %v4086
        %v5263 = vpack.c.b16 %v4091, %v4087
        %v5264 = vpack.c.b16 %v4092, %v4088
        %v5265 = vpack.c.b16 %v4093, %v4089
        %v5266 = vpack.c.b16 %v4098, %v4094
        %v5267 = vpack.c.b16 %v4099, %v4095
        %v5268 = vpack.c.b16 %v4100, %v4096
        %v5269 = vpack.c.b16 %v4101, %v4097
        %v5270 = vpack.c.b16 %v4106, %v4102
        %v5271 = vpack.c.b16 %v4107, %v4103
        %v5272 = vpack.c.b16 %v4108, %v4104
        %v5273 = vpack.c.b16 %v4109, %v4105
        %v5274 = vpack.c.b16 %v4114, %v4110
        %v5275 = vpack.c.b16 %v4115, %v4111
        %v5276 = vpack.c.b16 %v4116, %v4112
        %v5277 = vpack.c.b16 %v4117, %v4113
        %v5278 = vpack.c.b16 %v4122, %v4118
        %v5279 = vpack.c.b16 %v4123, %v4119
        %v5280 = vpack.c.b16 %v4124, %v4120
        %v5281 = vpack.c.b16 %v4125, %v4121
        %v5282 = vpack.c.b16 %v4130, %v4126
        %v5283 = vpack.c.b16 %v4131, %v4127
        %v5284 = vpack.c.b16 %v4132, %v4128
        %v5285 = vpack.c.b16 %v4133, %v4129
        %v5286 = vpack.c.b16 %v4138, %v4134
        %v5287 = vpack.c.b16 %v4139, %v4135
        %v5288 = vpack.c.b16 %v4140, %v4136
        %v5289 = vpack.c.b16 %v4141, %v4137
        %v5290 = vpack.c.b16 %v4146, %v4142
        %v5291 = vpack.c.b16 %v4147, %v4143
        %v5292 = vpack.c.b16 %v4148, %v4144
        %v5293 = vpack.c.b16 %v4149, %v4145
        %v5294 = vpack.c.b16 %v4154, %v4150
        %v5295 = vpack.c.b16 %v4155, %v4151
        %v5296 = vpack.c.b16 %v4156, %v4152
        %v5297 = vpack.c.b16 %v4157, %v4153
        %v5298 = vpack.c.b16 %v4162, %v4158
        %v5299 = vpack.c.b16 %v4163, %v4159
        %v5300 = vpack.c.b16 %v4164, %v4160
        %v5301 = vpack.c.b16 %v4165, %v4161
        %v5302 = vpack.c.b16 %v4170, %v4166
        %v5303 = vpack.c.b16 %v4171, %v4167
        %v5304 = vpack.c.b16 %v4172, %v4168
        %v5305 = vpack.c.b16 %v4173, %v4169
        %v5306 = vpack.c.b16 %v4178, %v4174
        %v5307 = vpack.c.b16 %v4179, %v4175
        %v5308 = vpack.c.b16 %v4180, %v4176
        %v5309 = vpack.c.b16 %v4181, %v4177
        %v5310 = vpack.c.b16 %v4186, %v4182
        %v5311 = vpack.c.b16 %v4187, %v4183
        %v5312 = vpack.c.b16 %v4188, %v4184
        %v5313 = vpack.c.b16 %v4189, %v4185
        %v5314 = vpack.c.b16 %v4194, %v4190
        %v5315 = vpack.c.b16 %v4195, %v4191
        %v5316 = vpack.c.b16 %v4196, %v4192
        %v5317 = vpack.c.b16 %v4197, %v4193
        %v5318 = vpack.c.b16 %v4202, %v4198
        %v5319 = vpack.c.b16 %v4203, %v4199
        %v5320 = vpack.c.b16 %v4204, %v4200
        %v5321 = vpack.c.b16 %v4205, %v4201
        %v5322 = vpack.c.b16 %v4210, %v4206
        %v5323 = vpack.c.b16 %v4211, %v4207
        %v5324 = vpack.c.b16 %v4212, %v4208
        %v5325 = vpack.c.b16 %v4213, %v4209
        %v5326 = vpack.c.b16 %v4218, %v4214
        %v5327 = vpack.c.b16 %v4219, %v4215
        %v5328 = vpack.c.b16 %v4220, %v4216
        %v5329 = vpack.c.b16 %v4221, %v4217
        %v5330 = vpack.c.b16 %v4226, %v4222
        %v5331 = vpack.c.b16 %v4227, %v4223
        %v5332 = vpack.c.b16 %v4228, %v4224
        %v5333 = vpack.c.b16 %v4229, %v4225
        %v5334 = vpack.c.b16 %v4234, %v4230
        %v5335 = vpack.c.b16 %v4235, %v4231
        %v5336 = vpack.c.b16 %v4236, %v4232
        %v5337 = vpack.c.b16 %v4237, %v4233
        %v5338 = vpack.c.b16 %v4242, %v4238
        %v5339 = vpack.c.b16 %v4243, %v4239
        %v5340 = vpack.c.b16 %v4244, %v4240
        %v5341 = vpack.c.b16 %v4245, %v4241
        %v5342 = vpack.c.b16 %v4250, %v4246
        %v5343 = vpack.c.b16 %v4251, %v4247
        %v5344 = vpack.c.b16 %v4252, %v4248
        %v5345 = vpack.c.b16 %v4253, %v4249
        %v5346 = vpack.c.b16 %v4258, %v4254
        %v5347 = vpack.c.b16 %v4259, %v4255
        %v5348 = vpack.c.b16 %v4260, %v4256
        %v5349 = vpack.c.b16 %v4261, %v4257
        %v5350 = vpack.c.b16 %v4266, %v4262
        %v5351 = vpack.c.b16 %v4267, %v4263
        %v5352 = vpack.c.b16 %v4268, %v4264
        %v5353 = vpack.c.b16 %v4269, %v4265
        %v5354 = vpack.c.b16 %v4274, %v4270
        %v5355 = vpack.c.b16 %v4275, %v4271
        %v5356 = vpack.c.b16 %v4276, %v4272
        %v5357 = vpack.c.b16 %v4277, %v4273
        %v5358 = vpack.c.b16 %v4282, %v4278
        %v5359 = vpack.c.b16 %v4283, %v4279
        %v5360 = vpack.c.b16 %v4284, %v4280
        %v5361 = vpack.c.b16 %v4285, %v4281
        %v5362 = vpack.c.b16 %v4290, %v4286
        %v5363 = vpack.c.b16 %v4291, %v4287
        %v5364 = vpack.c.b16 %v4292, %v4288
        %v5365 = vpack.c.b16 %v4293, %v4289
        %v5366 = vpack.c.b16 %v4298, %v4294
        %v5367 = vpack.c.b16 %v4299, %v4295
        %v5368 = vpack.c.b16 %v4300, %v4296
        %v5369 = vpack.c.b16 %v4301, %v4297
        %v5370 = vpack.c.b16 %v4306, %v4302
        %v5371 = vpack.c.b16 %v4307, %v4303
        %v5372 = vpack.c.b16 %v4308, %v4304
        %v5373 = vpack.c.b16 %v4309, %v4305
        %v5374 = vpack.c.b16 %v4314, %v4310
        %v5375 = vpack.c.b16 %v4315, %v4311
        %v5376 = vpack.c.b16 %v4316, %v4312
        %v5377 = vpack.c.b16 %v4317, %v4313
        %v5378 = vpack.c.b16 %v4322, %v4318
        %v5379 = vpack.c.b16 %v4323, %v4319
        %v5380 = vpack.c.b16 %v4324, %v4320
        %v5381 = vpack.c.b16 %v4325, %v4321
        %v5382 = vpack.c.b16 %v4330, %v4326
        %v5383 = vpack.c.b16 %v4331, %v4327
        %v5384 = vpack.c.b16 %v4332, %v4328
        %v5385 = vpack.c.b16 %v4333, %v4329
        %v5386 = vpack.c.b16 %v4338, %v4334
        %v5387 = vpack.c.b16 %v4339, %v4335
        %v5388 = vpack.c.b16 %v4340, %v4336
        %v5389 = vpack.c.b16 %v4341, %v4337
        %v5390 = vpack.c.b16 %v4346, %v4342
        %v5391 = vpack.c.b16 %v4347, %v4343
        %v5392 = vpack.c.b16 %v4348, %v4344
        %v5393 = vpack.c.b16 %v4349, %v4345
        %v5394 = vpack.c.b16 %v4354, %v4350
        %v5395 = vpack.c.b16 %v4355, %v4351
        %v5396 = vpack.c.b16 %v4356, %v4352
        %v5397 = vpack.c.b16 %v4357, %v4353
        %v5398 = vpack.c.b16 %v4362, %v4358
        %v5399 = vpack.c.b16 %v4363, %v4359
        %v5400 = vpack.c.b16 %v4364, %v4360
        %v5401 = vpack.c.b16 %v4365, %v4361
        %v5402 = vpack.c.b16 %v4370, %v4366
        %v5403 = vpack.c.b16 %v4371, %v4367
        %v5404 = vpack.c.b16 %v4372, %v4368
        %v5405 = vpack.c.b16 %v4373, %v4369
        %v5406 = vpack.c.b16 %v4378, %v4374
        %v5407 = vpack.c.b16 %v4379, %v4375
        %v5408 = vpack.c.b16 %v4380, %v4376
        %v5409 = vpack.c.b16 %v4381, %v4377
        %v5410 = vpack.c.b16 %v4386, %v4382
        %v5411 = vpack.c.b16 %v4387, %v4383
        %v5412 = vpack.c.b16 %v4388, %v4384
        %v5413 = vpack.c.b16 %v4389, %v4385
        %v5414 = vpack.c.b16 %v4394, %v4390
        %v5415 = vpack.c.b16 %v4395, %v4391
        %v5416 = vpack.c.b16 %v4396, %v4392
        %v5417 = vpack.c.b16 %v4397, %v4393
        %v5418 = vpack.c.b16 %v4402, %v4398
        %v5419 = vpack.c.b16 %v4403, %v4399
        %v5420 = vpack.c.b16 %v4404, %v4400
        %v5421 = vpack.c.b16 %v4405, %v4401
        %v5422 = vpack.c.b16 %v4410, %v4406
        %v5423 = vpack.c.b16 %v4411, %v4407
        %v5424 = vpack.c.b16 %v4412, %v4408
        %v5425 = vpack.c.b16 %v4413, %v4409
        %v5426 = vpack.c.b16 %v4418, %v4414
        %v5427 = vpack.c.b16 %v4419, %v4415
        %v5428 = vpack.c.b16 %v4420, %v4416
        %v5429 = vpack.c.b16 %v4421, %v4417
        %v5430 = vpack.c.b16 %v4426, %v4422
        %v5431 = vpack.c.b16 %v4427, %v4423
        %v5432 = vpack.c.b16 %v4428, %v4424
        %v5433 = vpack.c.b16 %v4429, %v4425
        %v5434 = vpack.c.b16 %v4434, %v4430
        %v5435 = vpack.c.b16 %v4435, %v4431
        %v5436 = vpack.c.b16 %v4436, %v4432
        %v5437 = vpack.c.b16 %v4437, %v4433
        %v5438 = vpack.c.b16 %v4442, %v4438
        %v5439 = vpack.c.b16 %v4443, %v4439
        %v5440 = vpack.c.b16 %v4444, %v4440
        %v5441 = vpack.c.b16 %v4445, %v4441
        %v5442 = vpack.c.b16 %v4450, %v4446
        %v5443 = vpack.c.b16 %v4451, %v4447
        %v5444 = vpack.c.b16 %v4452, %v4448
        %v5445 = vpack.c.b16 %v4453, %v4449
        %6438 = vmatprep.subr.bf16.mxu0 %v4483
        %6439 = vmatpush1.bf16.msra.mxu0 %v4482
        %6440 = vmatprep.subr.bf16.mxu0 %v4479
        %6441 = vmatpush1.bf16.msra.mxu0 %v4478
        %6442 = vmatprep.subr.bf16.mxu0 %v4475
        %6443 = vmatpush1.bf16.msra.mxu0 %v4474
        %6444 = vmatprep.subr.bf16.mxu0 %v4471
        %6445 = vmatpush1.bf16.msra.mxu0 %v4470
        %6446 = vmatprep.subr.bf16.mxu0 %v4467
        %6447 = vmatpush1.bf16.msra.mxu0 %v4466
        %6448 = vmatprep.subr.bf16.mxu0 %v4463
        %6449 = vmatpush1.bf16.msra.mxu0 %v4462
        %6450 = vmatprep.subr.bf16.mxu0 %v4459
        %6451 = vmatpush1.bf16.msra.mxu0 %v4458
        %6452 = vmatprep.subr.bf16.mxu0 %v4455
        %6453 = vmatpush1.bf16.msra.mxu0 %v4454
        %6454 = vmatprep.subr.bf16.mxu0 %v4515
        %6455 = vmatpush2.bf16.msra.mxu0 %v4514
        %6456 = vmatprep.subr.bf16.mxu0 %v4511
        %6457 = vmatpush2.bf16.msra.mxu0 %v4510
        %6458 = vmatprep.subr.bf16.mxu0 %v4507
        %6459 = vmatpush2.bf16.msra.mxu0 %v4506
        %6460 = vmatprep.subr.bf16.mxu0 %v4503
        %6461 = vmatpush2.bf16.msra.mxu0 %v4502
        %6462 = vmatprep.subr.bf16.mxu0 %v4499
        %6463 = vmatpush2.bf16.msra.mxu0 %v4498
        %6464 = vmatprep.subr.bf16.mxu0 %v4495
        %6465 = vmatpush2.bf16.msra.mxu0 %v4494
        %6466 = vmatprep.subr.bf16.mxu0 %v4491
        %6467 = vmatpush2.bf16.msra.mxu0 %v4490
        %6468 = vmatprep.subr.bf16.mxu0 %v4487
        %6469 = vmatpush2.bf16.msra.mxu0 %v4486
        %6470 = vmatprep.mubr.bf16.mxu0 %v1289
        %6471 = vmatmul.mubr.bf16.gmra.mxu0 %v1275
        %v6472 = vpop.f32.mrf.mxu0
        %v6473 = vadd.f32 %v1231, %v6472
        %v6474 = vpop.f32.mrf.mxu0
        %v6475 = vadd.f32 %v1235, %v6474
        %v6476 = vpop.f32.mrf.mxu0
        %v6477 = vpop.f32.mrf.mxu0
        %6478 = vdwg.mxu0
        %6479 = vmatprep.subr.bf16.mxu0 %v4547
        %6480 = vmatpush1.bf16.msra.mxu0 %v4546
        %6481 = vmatprep.subr.bf16.mxu0 %v4543
        %6482 = vmatpush1.bf16.msra.mxu0 %v4542
        %6483 = vmatprep.subr.bf16.mxu0 %v4539
        %6484 = vmatpush1.bf16.msra.mxu0 %v4538
        %6485 = vmatprep.subr.bf16.mxu0 %v4535
        %6486 = vmatpush1.bf16.msra.mxu0 %v4534
        %6487 = vmatprep.subr.bf16.mxu0 %v4531
        %6488 = vmatpush1.bf16.msra.mxu0 %v4530
        %6489 = vmatprep.subr.bf16.mxu0 %v4527
        %6490 = vmatpush1.bf16.msra.mxu0 %v4526
        %6491 = vmatprep.subr.bf16.mxu0 %v4523
        %6492 = vmatpush1.bf16.msra.mxu0 %v4522
        %6493 = vmatprep.subr.bf16.mxu0 %v4519
        %6494 = vmatpush1.bf16.msra.mxu0 %v4518
        %6495 = vmatprep.subr.bf16.mxu0 %v4579
        %6496 = vmatpush2.bf16.msra.mxu0 %v4578
        %6497 = vmatprep.subr.bf16.mxu0 %v4575
        %6498 = vmatpush2.bf16.msra.mxu0 %v4574
        %6499 = vmatprep.subr.bf16.mxu0 %v4571
        %6500 = vmatpush2.bf16.msra.mxu0 %v4570
        %6501 = vmatprep.subr.bf16.mxu0 %v4567
        %6502 = vmatpush2.bf16.msra.mxu0 %v4566
        %6503 = vmatprep.subr.bf16.mxu0 %v4563
        %6504 = vmatpush2.bf16.msra.mxu0 %v4562
        %6505 = vmatprep.subr.bf16.mxu0 %v4559
        %6506 = vmatpush2.bf16.msra.mxu0 %v4558
        %6507 = vmatprep.subr.bf16.mxu0 %v4555
        %6508 = vmatpush2.bf16.msra.mxu0 %v4554
        %6509 = vmatprep.subr.bf16.mxu0 %v4551
        %6510 = vmatpush2.bf16.msra.mxu0 %v4550
        %6511 = vmatprep.mubr.bf16.mxu0 %v1299
        %6512 = vmatmul.mubr.bf16.gmra.mxu0 %v1297
        %v6513 = vpop.f32.mrf.mxu0
        %v6514 = vadd.f32 %v6473, %v6513
        %v6515 = vpop.f32.mrf.mxu0
        %v6516 = vadd.f32 %v6475, %v6515
        %v6517 = vpop.f32.mrf.mxu0
        %v6518 = vpop.f32.mrf.mxu0
        %6519 = vdwg.mxu0
        %6520 = vmatprep.subr.bf16.mxu0 %v4611
        %6521 = vmatpush1.bf16.msra.mxu0 %v4610
        %6522 = vmatprep.subr.bf16.mxu0 %v4607
        %6523 = vmatpush1.bf16.msra.mxu0 %v4606
        %6524 = vmatprep.subr.bf16.mxu0 %v4603
        %6525 = vmatpush1.bf16.msra.mxu0 %v4602
        %6526 = vmatprep.subr.bf16.mxu0 %v4599
        %6527 = vmatpush1.bf16.msra.mxu0 %v4598
        %6528 = vmatprep.subr.bf16.mxu0 %v4595
        %6529 = vmatpush1.bf16.msra.mxu0 %v4594
        %6530 = vmatprep.subr.bf16.mxu0 %v4591
        %6531 = vmatpush1.bf16.msra.mxu0 %v4590
        %6532 = vmatprep.subr.bf16.mxu0 %v4587
        %6533 = vmatpush1.bf16.msra.mxu0 %v4586
        %6534 = vmatprep.subr.bf16.mxu0 %v4583
        %6535 = vmatpush1.bf16.msra.mxu0 %v4582
        %6536 = vmatprep.subr.bf16.mxu0 %v4643
        %6537 = vmatpush2.bf16.msra.mxu0 %v4642
        %6538 = vmatprep.subr.bf16.mxu0 %v4639
        %6539 = vmatpush2.bf16.msra.mxu0 %v4638
        %6540 = vmatprep.subr.bf16.mxu0 %v4635
        %6541 = vmatpush2.bf16.msra.mxu0 %v4634
        %6542 = vmatprep.subr.bf16.mxu0 %v4631
        %6543 = vmatpush2.bf16.msra.mxu0 %v4630
        %6544 = vmatprep.subr.bf16.mxu0 %v4627
        %6545 = vmatpush2.bf16.msra.mxu0 %v4626
        %6546 = vmatprep.subr.bf16.mxu0 %v4623
        %6547 = vmatpush2.bf16.msra.mxu0 %v4622
        %6548 = vmatprep.subr.bf16.mxu0 %v4619
        %6549 = vmatpush2.bf16.msra.mxu0 %v4618
        %6550 = vmatprep.subr.bf16.mxu0 %v4615
        %6551 = vmatpush2.bf16.msra.mxu0 %v4614
        %6552 = vmatprep.mubr.bf16.mxu0 %v1296
        %6553 = vmatmul.mubr.bf16.gmra.mxu0 %v1282
        %v6554 = vpop.f32.mrf.mxu0
        %v6555 = vadd.f32 %v6514, %v6554
        %v6556 = vpop.f32.mrf.mxu0
        %v6557 = vadd.f32 %v6516, %v6556
        %v6558 = vpop.f32.mrf.mxu0
        %v6559 = vpop.f32.mrf.mxu0
        %6560 = vdwg.mxu0
        %6561 = vmatprep.subr.bf16.mxu0 %v4675
        %6562 = vmatpush1.bf16.msra.mxu0 %v4674
        %6563 = vmatprep.subr.bf16.mxu0 %v4671
        %6564 = vmatpush1.bf16.msra.mxu0 %v4670
        %6565 = vmatprep.subr.bf16.mxu0 %v4667
        %6566 = vmatpush1.bf16.msra.mxu0 %v4666
        %6567 = vmatprep.subr.bf16.mxu0 %v4663
        %6568 = vmatpush1.bf16.msra.mxu0 %v4662
        %6569 = vmatprep.subr.bf16.mxu0 %v4659
        %6570 = vmatpush1.bf16.msra.mxu0 %v4658
        %6571 = vmatprep.subr.bf16.mxu0 %v4655
        %6572 = vmatpush1.bf16.msra.mxu0 %v4654
        %6573 = vmatprep.subr.bf16.mxu0 %v4651
        %6574 = vmatpush1.bf16.msra.mxu0 %v4650
        %6575 = vmatprep.subr.bf16.mxu0 %v4647
        %6576 = vmatpush1.bf16.msra.mxu0 %v4646
        %6577 = vmatprep.subr.bf16.mxu0 %v4707
        %6578 = vmatpush2.bf16.msra.mxu0 %v4706
        %6579 = vmatprep.subr.bf16.mxu0 %v4703
        %6580 = vmatpush2.bf16.msra.mxu0 %v4702
        %6581 = vmatprep.subr.bf16.mxu0 %v4699
        %6582 = vmatpush2.bf16.msra.mxu0 %v4698
        %6583 = vmatprep.subr.bf16.mxu0 %v4695
        %6584 = vmatpush2.bf16.msra.mxu0 %v4694
        %6585 = vmatprep.subr.bf16.mxu0 %v4691
        %6586 = vmatpush2.bf16.msra.mxu0 %v4690
        %6587 = vmatprep.subr.bf16.mxu0 %v4687
        %6588 = vmatpush2.bf16.msra.mxu0 %v4686
        %6589 = vmatprep.subr.bf16.mxu0 %v4683
        %6590 = vmatpush2.bf16.msra.mxu0 %v4682
        %6591 = vmatprep.subr.bf16.mxu0 %v4679
        %6592 = vmatpush2.bf16.msra.mxu0 %v4678
        %6593 = vmatprep.mubr.bf16.mxu0 %v1300
        %6594 = vmatmul.mubr.bf16.gmra.mxu0 %v1298
        %v6595 = vpop.f32.mrf.mxu0
        %v6596 = vadd.f32 %v6555, %v6595
        %v6597 = vpop.f32.mrf.mxu0
        %v6598 = vadd.f32 %v6557, %v6597
        %v6599 = vpop.f32.mrf.mxu0
        %v6600 = vpop.f32.mrf.mxu0
        %6601 = vdwg.mxu0
        %6602 = vmatprep.subr.bf16.mxu0 %v4739
        %6603 = vmatpush1.bf16.msra.mxu0 %v4738
        %6604 = vmatprep.subr.bf16.mxu0 %v4735
        %6605 = vmatpush1.bf16.msra.mxu0 %v4734
        %6606 = vmatprep.subr.bf16.mxu0 %v4731
        %6607 = vmatpush1.bf16.msra.mxu0 %v4730
        %6608 = vmatprep.subr.bf16.mxu0 %v4727
        %6609 = vmatpush1.bf16.msra.mxu0 %v4726
        %6610 = vmatprep.subr.bf16.mxu0 %v4723
        %6611 = vmatpush1.bf16.msra.mxu0 %v4722
        %6612 = vmatprep.subr.bf16.mxu0 %v4719
        %6613 = vmatpush1.bf16.msra.mxu0 %v4718
        %6614 = vmatprep.subr.bf16.mxu0 %v4715
        %6615 = vmatpush1.bf16.msra.mxu0 %v4714
        %6616 = vmatprep.subr.bf16.mxu0 %v4711
        %6617 = vmatpush1.bf16.msra.mxu0 %v4710
        %6618 = vmatprep.subr.bf16.mxu0 %v4771
        %6619 = vmatpush2.bf16.msra.mxu0 %v4770
        %6620 = vmatprep.subr.bf16.mxu0 %v4767
        %6621 = vmatpush2.bf16.msra.mxu0 %v4766
        %6622 = vmatprep.subr.bf16.mxu0 %v4763
        %6623 = vmatpush2.bf16.msra.mxu0 %v4762
        %6624 = vmatprep.subr.bf16.mxu0 %v4759
        %6625 = vmatpush2.bf16.msra.mxu0 %v4758
        %6626 = vmatprep.subr.bf16.mxu0 %v4755
        %6627 = vmatpush2.bf16.msra.mxu0 %v4754
        %6628 = vmatprep.subr.bf16.mxu0 %v4751
        %6629 = vmatpush2.bf16.msra.mxu0 %v4750
        %6630 = vmatprep.subr.bf16.mxu0 %v4747
        %6631 = vmatpush2.bf16.msra.mxu0 %v4746
        %6632 = vmatprep.subr.bf16.mxu0 %v4743
        %6633 = vmatpush2.bf16.msra.mxu0 %v4742
        %6634 = vmatprep.mubr.bf16.mxu0 %v1338
        %6635 = vmatmul.mubr.bf16.gmra.mxu0 %v1324
        %v6636 = vpop.f32.mrf.mxu0
        %v6637 = vadd.f32 %v6596, %v6636
        %v6638 = vpop.f32.mrf.mxu0
        %v6639 = vadd.f32 %v6598, %v6638
        %v6640 = vpop.f32.mrf.mxu0
        %v6641 = vpop.f32.mrf.mxu0
        %6642 = vdwg.mxu0
        %6643 = vmatprep.subr.bf16.mxu0 %v4803
        %6644 = vmatpush1.bf16.msra.mxu0 %v4802
        %6645 = vmatprep.subr.bf16.mxu0 %v4799
        %6646 = vmatpush1.bf16.msra.mxu0 %v4798
        %6647 = vmatprep.subr.bf16.mxu0 %v4795
        %6648 = vmatpush1.bf16.msra.mxu0 %v4794
        %6649 = vmatprep.subr.bf16.mxu0 %v4791
        %6650 = vmatpush1.bf16.msra.mxu0 %v4790
        %6651 = vmatprep.subr.bf16.mxu0 %v4787
        %6652 = vmatpush1.bf16.msra.mxu0 %v4786
        %6653 = vmatprep.subr.bf16.mxu0 %v4783
        %6654 = vmatpush1.bf16.msra.mxu0 %v4782
        %6655 = vmatprep.subr.bf16.mxu0 %v4779
        %6656 = vmatpush1.bf16.msra.mxu0 %v4778
        %6657 = vmatprep.subr.bf16.mxu0 %v4775
        %6658 = vmatpush1.bf16.msra.mxu0 %v4774
        %6659 = vmatprep.subr.bf16.mxu0 %v4835
        %6660 = vmatpush2.bf16.msra.mxu0 %v4834
        %6661 = vmatprep.subr.bf16.mxu0 %v4831
        %6662 = vmatpush2.bf16.msra.mxu0 %v4830
        %6663 = vmatprep.subr.bf16.mxu0 %v4827
        %6664 = vmatpush2.bf16.msra.mxu0 %v4826
        %6665 = vmatprep.subr.bf16.mxu0 %v4823
        %6666 = vmatpush2.bf16.msra.mxu0 %v4822
        %6667 = vmatprep.subr.bf16.mxu0 %v4819
        %6668 = vmatpush2.bf16.msra.mxu0 %v4818
        %6669 = vmatprep.subr.bf16.mxu0 %v4815
        %6670 = vmatpush2.bf16.msra.mxu0 %v4814
        %6671 = vmatprep.subr.bf16.mxu0 %v4811
        %6672 = vmatpush2.bf16.msra.mxu0 %v4810
        %6673 = vmatprep.subr.bf16.mxu0 %v4807
        %6674 = vmatpush2.bf16.msra.mxu0 %v4806
        %6675 = vmatprep.mubr.bf16.mxu0 %v1348
        %6676 = vmatmul.mubr.bf16.gmra.mxu0 %v1346
        %v6677 = vpop.f32.mrf.mxu0
        %v6678 = vadd.f32 %v6637, %v6677
        %v6679 = vpop.f32.mrf.mxu0
        %v6680 = vadd.f32 %v6639, %v6679
        %v6681 = vpop.f32.mrf.mxu0
        %v6682 = vpop.f32.mrf.mxu0
        %6683 = vdwg.mxu0
        %6684 = vmatprep.subr.bf16.mxu0 %v4867
        %6685 = vmatpush1.bf16.msra.mxu0 %v4866
        %6686 = vmatprep.subr.bf16.mxu0 %v4863
        %6687 = vmatpush1.bf16.msra.mxu0 %v4862
        %6688 = vmatprep.subr.bf16.mxu0 %v4859
        %6689 = vmatpush1.bf16.msra.mxu0 %v4858
        %6690 = vmatprep.subr.bf16.mxu0 %v4855
        %6691 = vmatpush1.bf16.msra.mxu0 %v4854
        %6692 = vmatprep.subr.bf16.mxu0 %v4851
        %6693 = vmatpush1.bf16.msra.mxu0 %v4850
        %6694 = vmatprep.subr.bf16.mxu0 %v4847
        %6695 = vmatpush1.bf16.msra.mxu0 %v4846
        %6696 = vmatprep.subr.bf16.mxu0 %v4843
        %6697 = vmatpush1.bf16.msra.mxu0 %v4842
        %6698 = vmatprep.subr.bf16.mxu0 %v4839
        %6699 = vmatpush1.bf16.msra.mxu0 %v4838
        %6700 = vmatprep.subr.bf16.mxu0 %v4899
        %6701 = vmatpush2.bf16.msra.mxu0 %v4898
        %6702 = vmatprep.subr.bf16.mxu0 %v4895
        %6703 = vmatpush2.bf16.msra.mxu0 %v4894
        %6704 = vmatprep.subr.bf16.mxu0 %v4891
        %6705 = vmatpush2.bf16.msra.mxu0 %v4890
        %6706 = vmatprep.subr.bf16.mxu0 %v4887
        %6707 = vmatpush2.bf16.msra.mxu0 %v4886
        %6708 = vmatprep.subr.bf16.mxu0 %v4883
        %6709 = vmatpush2.bf16.msra.mxu0 %v4882
        %6710 = vmatprep.subr.bf16.mxu0 %v4879
        %6711 = vmatpush2.bf16.msra.mxu0 %v4878
        %6712 = vmatprep.subr.bf16.mxu0 %v4875
        %6713 = vmatpush2.bf16.msra.mxu0 %v4874
        %6714 = vmatprep.subr.bf16.mxu0 %v4871
        %6715 = vmatpush2.bf16.msra.mxu0 %v4870
        %6716 = vmatprep.mubr.bf16.mxu0 %v1345
        %6717 = vmatmul.mubr.bf16.gmra.mxu0 %v1331
        %v6718 = vpop.f32.mrf.mxu0
        %v6719 = vadd.f32 %v6678, %v6718
        %v6720 = vpop.f32.mrf.mxu0
        %v6721 = vadd.f32 %v6680, %v6720
        %v6722 = vpop.f32.mrf.mxu0
        %v6723 = vpop.f32.mrf.mxu0
        %6724 = vdwg.mxu0
        %6725 = vmatprep.subr.bf16.mxu0 %v4931
        %6726 = vmatpush1.bf16.msra.mxu0 %v4930
        %6727 = vmatprep.subr.bf16.mxu0 %v4927
        %6728 = vmatpush1.bf16.msra.mxu0 %v4926
        %6729 = vmatprep.subr.bf16.mxu0 %v4923
        %6730 = vmatpush1.bf16.msra.mxu0 %v4922
        %6731 = vmatprep.subr.bf16.mxu0 %v4919
        %6732 = vmatpush1.bf16.msra.mxu0 %v4918
        %6733 = vmatprep.subr.bf16.mxu0 %v4915
        %6734 = vmatpush1.bf16.msra.mxu0 %v4914
        %6735 = vmatprep.subr.bf16.mxu0 %v4911
        %6736 = vmatpush1.bf16.msra.mxu0 %v4910
        %6737 = vmatprep.subr.bf16.mxu0 %v4907
        %6738 = vmatpush1.bf16.msra.mxu0 %v4906
        %6739 = vmatprep.subr.bf16.mxu0 %v4903
        %6740 = vmatpush1.bf16.msra.mxu0 %v4902
        %6741 = vmatprep.subr.bf16.mxu0 %v4963
        %6742 = vmatpush2.bf16.msra.mxu0 %v4962
        %6743 = vmatprep.subr.bf16.mxu0 %v4959
        %6744 = vmatpush2.bf16.msra.mxu0 %v4958
        %6745 = vmatprep.subr.bf16.mxu0 %v4955
        %6746 = vmatpush2.bf16.msra.mxu0 %v4954
        %6747 = vmatprep.subr.bf16.mxu0 %v4951
        %6748 = vmatpush2.bf16.msra.mxu0 %v4950
        %6749 = vmatprep.subr.bf16.mxu0 %v4947
        %6750 = vmatpush2.bf16.msra.mxu0 %v4946
        %6751 = vmatprep.subr.bf16.mxu0 %v4943
        %6752 = vmatpush2.bf16.msra.mxu0 %v4942
        %6753 = vmatprep.subr.bf16.mxu0 %v4939
        %6754 = vmatpush2.bf16.msra.mxu0 %v4938
        %6755 = vmatprep.subr.bf16.mxu0 %v4935
        %6756 = vmatpush2.bf16.msra.mxu0 %v4934
        %6757 = vmatprep.mubr.bf16.mxu0 %v1349
        %6758 = vmatmul.mubr.bf16.gmra.mxu0 %v1347
        %v6759 = vpop.f32.mrf.mxu0
        %v6760 = vadd.f32 %v6719, %v6759
        %v6761 = vpop.f32.mrf.mxu0
        %v6762 = vadd.f32 %v6721, %v6761
        %v6763 = vpop.f32.mrf.mxu0
        %v6764 = vpop.f32.mrf.mxu0
        %6765 = vdwg.mxu0
        %6766 = vmatprep.subr.bf16.mxu0 %v4995
        %6767 = vmatpush1.bf16.msra.mxu0 %v4994
        %6768 = vmatprep.subr.bf16.mxu0 %v4991
        %6769 = vmatpush1.bf16.msra.mxu0 %v4990
        %6770 = vmatprep.subr.bf16.mxu0 %v4987
        %6771 = vmatpush1.bf16.msra.mxu0 %v4986
        %6772 = vmatprep.subr.bf16.mxu0 %v4983
        %6773 = vmatpush1.bf16.msra.mxu0 %v4982
        %6774 = vmatprep.subr.bf16.mxu0 %v4979
        %6775 = vmatpush1.bf16.msra.mxu0 %v4978
        %6776 = vmatprep.subr.bf16.mxu0 %v4975
        %6777 = vmatpush1.bf16.msra.mxu0 %v4974
        %6778 = vmatprep.subr.bf16.mxu0 %v4971
        %6779 = vmatpush1.bf16.msra.mxu0 %v4970
        %6780 = vmatprep.subr.bf16.mxu0 %v4967
        %6781 = vmatpush1.bf16.msra.mxu0 %v4966
        %6782 = vmatprep.subr.bf16.mxu0 %v5027
        %6783 = vmatpush2.bf16.msra.mxu0 %v5026
        %6784 = vmatprep.subr.bf16.mxu0 %v5023
        %6785 = vmatpush2.bf16.msra.mxu0 %v5022
        %6786 = vmatprep.subr.bf16.mxu0 %v5019
        %6787 = vmatpush2.bf16.msra.mxu0 %v5018
        %6788 = vmatprep.subr.bf16.mxu0 %v5015
        %6789 = vmatpush2.bf16.msra.mxu0 %v5014
        %6790 = vmatprep.subr.bf16.mxu0 %v5011
        %6791 = vmatpush2.bf16.msra.mxu0 %v5010
        %6792 = vmatprep.subr.bf16.mxu0 %v5007
        %6793 = vmatpush2.bf16.msra.mxu0 %v5006
        %6794 = vmatprep.subr.bf16.mxu0 %v5003
        %6795 = vmatpush2.bf16.msra.mxu0 %v5002
        %6796 = vmatprep.subr.bf16.mxu0 %v4999
        %6797 = vmatpush2.bf16.msra.mxu0 %v4998
        %6798 = vmatprep.mubr.bf16.mxu0 %v1387
        %6799 = vmatmul.mubr.bf16.gmra.mxu0 %v1373
        %v6800 = vpop.f32.mrf.mxu0
        %v6801 = vadd.f32 %v6760, %v6800
        %v6802 = vpop.f32.mrf.mxu0
        %v6803 = vadd.f32 %v6762, %v6802
        %v6804 = vpop.f32.mrf.mxu0
        %v6805 = vpop.f32.mrf.mxu0
        %6806 = vdwg.mxu0
        %6807 = vmatprep.subr.bf16.mxu0 %v5059
        %6808 = vmatpush1.bf16.msra.mxu0 %v5058
        %6809 = vmatprep.subr.bf16.mxu0 %v5055
        %6810 = vmatpush1.bf16.msra.mxu0 %v5054
        %6811 = vmatprep.subr.bf16.mxu0 %v5051
        %6812 = vmatpush1.bf16.msra.mxu0 %v5050
        %6813 = vmatprep.subr.bf16.mxu0 %v5047
        %6814 = vmatpush1.bf16.msra.mxu0 %v5046
        %6815 = vmatprep.subr.bf16.mxu0 %v5043
        %6816 = vmatpush1.bf16.msra.mxu0 %v5042
        %6817 = vmatprep.subr.bf16.mxu0 %v5039
        %6818 = vmatpush1.bf16.msra.mxu0 %v5038
        %6819 = vmatprep.subr.bf16.mxu0 %v5035
        %6820 = vmatpush1.bf16.msra.mxu0 %v5034
        %6821 = vmatprep.subr.bf16.mxu0 %v5031
        %6822 = vmatpush1.bf16.msra.mxu0 %v5030
        %6823 = vmatprep.subr.bf16.mxu0 %v5091
        %6824 = vmatpush2.bf16.msra.mxu0 %v5090
        %6825 = vmatprep.subr.bf16.mxu0 %v5087
        %6826 = vmatpush2.bf16.msra.mxu0 %v5086
        %6827 = vmatprep.subr.bf16.mxu0 %v5083
        %6828 = vmatpush2.bf16.msra.mxu0 %v5082
        %6829 = vmatprep.subr.bf16.mxu0 %v5079
        %6830 = vmatpush2.bf16.msra.mxu0 %v5078
        %6831 = vmatprep.subr.bf16.mxu0 %v5075
        %6832 = vmatpush2.bf16.msra.mxu0 %v5074
        %6833 = vmatprep.subr.bf16.mxu0 %v5071
        %6834 = vmatpush2.bf16.msra.mxu0 %v5070
        %6835 = vmatprep.subr.bf16.mxu0 %v5067
        %6836 = vmatpush2.bf16.msra.mxu0 %v5066
        %6837 = vmatprep.subr.bf16.mxu0 %v5063
        %6838 = vmatpush2.bf16.msra.mxu0 %v5062
        %6839 = vmatprep.mubr.bf16.mxu0 %v1397
        %6840 = vmatmul.mubr.bf16.gmra.mxu0 %v1395
        %v6841 = vpop.f32.mrf.mxu0
        %v6842 = vadd.f32 %v6801, %v6841
        %v6843 = vpop.f32.mrf.mxu0
        %v6844 = vadd.f32 %v6803, %v6843
        %v6845 = vpop.f32.mrf.mxu0
        %v6846 = vpop.f32.mrf.mxu0
        %6847 = vdwg.mxu0
        %6848 = vmatprep.subr.bf16.mxu0 %v5123
        %6849 = vmatpush1.bf16.msra.mxu0 %v5122
        %6850 = vmatprep.subr.bf16.mxu0 %v5119
        %6851 = vmatpush1.bf16.msra.mxu0 %v5118
        %6852 = vmatprep.subr.bf16.mxu0 %v5115
        %6853 = vmatpush1.bf16.msra.mxu0 %v5114
        %6854 = vmatprep.subr.bf16.mxu0 %v5111
        %6855 = vmatpush1.bf16.msra.mxu0 %v5110
        %6856 = vmatprep.subr.bf16.mxu0 %v5107
        %6857 = vmatpush1.bf16.msra.mxu0 %v5106
        %6858 = vmatprep.subr.bf16.mxu0 %v5103
        %6859 = vmatpush1.bf16.msra.mxu0 %v5102
        %6860 = vmatprep.subr.bf16.mxu0 %v5099
        %6861 = vmatpush1.bf16.msra.mxu0 %v5098
        %6862 = vmatprep.subr.bf16.mxu0 %v5095
        %6863 = vmatpush1.bf16.msra.mxu0 %v5094
        %6864 = vmatprep.subr.bf16.mxu0 %v5155
        %6865 = vmatpush2.bf16.msra.mxu0 %v5154
        %6866 = vmatprep.subr.bf16.mxu0 %v5151
        %6867 = vmatpush2.bf16.msra.mxu0 %v5150
        %6868 = vmatprep.subr.bf16.mxu0 %v5147
        %6869 = vmatpush2.bf16.msra.mxu0 %v5146
        %6870 = vmatprep.subr.bf16.mxu0 %v5143
        %6871 = vmatpush2.bf16.msra.mxu0 %v5142
        %6872 = vmatprep.subr.bf16.mxu0 %v5139
        %6873 = vmatpush2.bf16.msra.mxu0 %v5138
        %6874 = vmatprep.subr.bf16.mxu0 %v5135
        %6875 = vmatpush2.bf16.msra.mxu0 %v5134
        %6876 = vmatprep.subr.bf16.mxu0 %v5131
        %6877 = vmatpush2.bf16.msra.mxu0 %v5130
        %6878 = vmatprep.subr.bf16.mxu0 %v5127
        %6879 = vmatpush2.bf16.msra.mxu0 %v5126
        %6880 = vmatprep.mubr.bf16.mxu0 %v1394
        %6881 = vmatmul.mubr.bf16.gmra.mxu0 %v1380
        %v6882 = vpop.f32.mrf.mxu0
        %v6883 = vadd.f32 %v6842, %v6882
        %v6884 = vpop.f32.mrf.mxu0
        %v6885 = vadd.f32 %v6844, %v6884
        %v6886 = vpop.f32.mrf.mxu0
        %v6887 = vpop.f32.mrf.mxu0
        %6888 = vdwg.mxu0
        %6889 = vmatprep.subr.bf16.mxu0 %v5187
        %6890 = vmatpush1.bf16.msra.mxu0 %v5186
        %6891 = vmatprep.subr.bf16.mxu0 %v5183
        %6892 = vmatpush1.bf16.msra.mxu0 %v5182
        %6893 = vmatprep.subr.bf16.mxu0 %v5179
        %6894 = vmatpush1.bf16.msra.mxu0 %v5178
        %6895 = vmatprep.subr.bf16.mxu0 %v5175
        %6896 = vmatpush1.bf16.msra.mxu0 %v5174
        %6897 = vmatprep.subr.bf16.mxu0 %v5171
        %6898 = vmatpush1.bf16.msra.mxu0 %v5170
        %6899 = vmatprep.subr.bf16.mxu0 %v5167
        %6900 = vmatpush1.bf16.msra.mxu0 %v5166
        %6901 = vmatprep.subr.bf16.mxu0 %v5163
        %6902 = vmatpush1.bf16.msra.mxu0 %v5162
        %6903 = vmatprep.subr.bf16.mxu0 %v5159
        %6904 = vmatpush1.bf16.msra.mxu0 %v5158
        %6905 = vmatprep.subr.bf16.mxu0 %v5219
        %6906 = vmatpush2.bf16.msra.mxu0 %v5218
        %6907 = vmatprep.subr.bf16.mxu0 %v5215
        %6908 = vmatpush2.bf16.msra.mxu0 %v5214
        %6909 = vmatprep.subr.bf16.mxu0 %v5211
        %6910 = vmatpush2.bf16.msra.mxu0 %v5210
        %6911 = vmatprep.subr.bf16.mxu0 %v5207
        %6912 = vmatpush2.bf16.msra.mxu0 %v5206
        %6913 = vmatprep.subr.bf16.mxu0 %v5203
        %6914 = vmatpush2.bf16.msra.mxu0 %v5202
        %6915 = vmatprep.subr.bf16.mxu0 %v5199
        %6916 = vmatpush2.bf16.msra.mxu0 %v5198
        %6917 = vmatprep.subr.bf16.mxu0 %v5195
        %6918 = vmatpush2.bf16.msra.mxu0 %v5194
        %6919 = vmatprep.subr.bf16.mxu0 %v5191
        %6920 = vmatpush2.bf16.msra.mxu0 %v5190
        %6921 = vmatprep.mubr.bf16.mxu0 %v1398
        %6922 = vmatmul.mubr.bf16.gmra.mxu0 %v1396
        %v6923 = vpop.f32.mrf.mxu0
        %v6924 = vadd.f32 %v6883, %v6923
        %v6925 = vpop.f32.mrf.mxu0
        %v6926 = vadd.f32 %v6885, %v6925
        %v6927 = vpop.f32.mrf.mxu0
        %v6928 = vpop.f32.mrf.mxu0
        %6929 = vdwg.mxu0
        %6930 = vmatprep.subr.bf16.mxu0 %v5251
        %6931 = vmatpush1.bf16.msra.mxu0 %v5250
        %6932 = vmatprep.subr.bf16.mxu0 %v5247
        %6933 = vmatpush1.bf16.msra.mxu0 %v5246
        %6934 = vmatprep.subr.bf16.mxu0 %v5243
        %6935 = vmatpush1.bf16.msra.mxu0 %v5242
        %6936 = vmatprep.subr.bf16.mxu0 %v5239
        %6937 = vmatpush1.bf16.msra.mxu0 %v5238
        %6938 = vmatprep.subr.bf16.mxu0 %v5235
        %6939 = vmatpush1.bf16.msra.mxu0 %v5234
        %6940 = vmatprep.subr.bf16.mxu0 %v5231
        %6941 = vmatpush1.bf16.msra.mxu0 %v5230
        %6942 = vmatprep.subr.bf16.mxu0 %v5227
        %6943 = vmatpush1.bf16.msra.mxu0 %v5226
        %6944 = vmatprep.subr.bf16.mxu0 %v5223
        %6945 = vmatpush1.bf16.msra.mxu0 %v5222
        %6946 = vmatprep.subr.bf16.mxu0 %v5283
        %6947 = vmatpush2.bf16.msra.mxu0 %v5282
        %6948 = vmatprep.subr.bf16.mxu0 %v5279
        %6949 = vmatpush2.bf16.msra.mxu0 %v5278
        %6950 = vmatprep.subr.bf16.mxu0 %v5275
        %6951 = vmatpush2.bf16.msra.mxu0 %v5274
        %6952 = vmatprep.subr.bf16.mxu0 %v5271
        %6953 = vmatpush2.bf16.msra.mxu0 %v5270
        %6954 = vmatprep.subr.bf16.mxu0 %v5267
        %6955 = vmatpush2.bf16.msra.mxu0 %v5266
        %6956 = vmatprep.subr.bf16.mxu0 %v5263
        %6957 = vmatpush2.bf16.msra.mxu0 %v5262
        %6958 = vmatprep.subr.bf16.mxu0 %v5259
        %6959 = vmatpush2.bf16.msra.mxu0 %v5258
        %6960 = vmatprep.subr.bf16.mxu0 %v5255
        %6961 = vmatpush2.bf16.msra.mxu0 %v5254
        %6962 = vmatprep.mubr.bf16.mxu0 %v1436
        %6963 = vmatmul.mubr.bf16.gmra.mxu0 %v1422
        %v6964 = vpop.f32.mrf.mxu0
        %v6965 = vadd.f32 %v6924, %v6964
        %v6966 = vpop.f32.mrf.mxu0
        %v6967 = vadd.f32 %v6926, %v6966
        %v6968 = vpop.f32.mrf.mxu0
        %v6969 = vpop.f32.mrf.mxu0
        %6970 = vdwg.mxu0
        %6971 = vmatprep.subr.bf16.mxu0 %v5315
        %6972 = vmatpush1.bf16.msra.mxu0 %v5314
        %6973 = vmatprep.subr.bf16.mxu0 %v5311
        %6974 = vmatpush1.bf16.msra.mxu0 %v5310
        %6975 = vmatprep.subr.bf16.mxu0 %v5307
        %6976 = vmatpush1.bf16.msra.mxu0 %v5306
        %6977 = vmatprep.subr.bf16.mxu0 %v5303
        %6978 = vmatpush1.bf16.msra.mxu0 %v5302
        %6979 = vmatprep.subr.bf16.mxu0 %v5299
        %6980 = vmatpush1.bf16.msra.mxu0 %v5298
        %6981 = vmatprep.subr.bf16.mxu0 %v5295
        %6982 = vmatpush1.bf16.msra.mxu0 %v5294
        %6983 = vmatprep.subr.bf16.mxu0 %v5291
        %6984 = vmatpush1.bf16.msra.mxu0 %v5290
        %6985 = vmatprep.subr.bf16.mxu0 %v5287
        %6986 = vmatpush1.bf16.msra.mxu0 %v5286
        %6987 = vmatprep.subr.bf16.mxu0 %v5347
        %6988 = vmatpush2.bf16.msra.mxu0 %v5346
        %6989 = vmatprep.subr.bf16.mxu0 %v5343
        %6990 = vmatpush2.bf16.msra.mxu0 %v5342
        %6991 = vmatprep.subr.bf16.mxu0 %v5339
        %6992 = vmatpush2.bf16.msra.mxu0 %v5338
        %6993 = vmatprep.subr.bf16.mxu0 %v5335
        %6994 = vmatpush2.bf16.msra.mxu0 %v5334
        %6995 = vmatprep.subr.bf16.mxu0 %v5331
        %6996 = vmatpush2.bf16.msra.mxu0 %v5330
        %6997 = vmatprep.subr.bf16.mxu0 %v5327
        %6998 = vmatpush2.bf16.msra.mxu0 %v5326
        %6999 = vmatprep.subr.bf16.mxu0 %v5323
        %7000 = vmatpush2.bf16.msra.mxu0 %v5322
        %7001 = vmatprep.subr.bf16.mxu0 %v5319
        %7002 = vmatpush2.bf16.msra.mxu0 %v5318
        %7003 = vmatprep.mubr.bf16.mxu0 %v1446
        %7004 = vmatmul.mubr.bf16.gmra.mxu0 %v1444
        %v7005 = vpop.f32.mrf.mxu0
        %v7006 = vadd.f32 %v6965, %v7005
        %v7007 = vpop.f32.mrf.mxu0
        %v7008 = vadd.f32 %v6967, %v7007
        %v7009 = vpop.f32.mrf.mxu0
        %v7010 = vpop.f32.mrf.mxu0
        %7011 = vdwg.mxu0
        %7012 = vmatprep.subr.bf16.mxu0 %v5379
        %7013 = vmatpush1.bf16.msra.mxu0 %v5378
        %7014 = vmatprep.subr.bf16.mxu0 %v5375
        %7015 = vmatpush1.bf16.msra.mxu0 %v5374
        %7016 = vmatprep.subr.bf16.mxu0 %v5371
        %7017 = vmatpush1.bf16.msra.mxu0 %v5370
        %7018 = vmatprep.subr.bf16.mxu0 %v5367
        %7019 = vmatpush1.bf16.msra.mxu0 %v5366
        %7020 = vmatprep.subr.bf16.mxu0 %v5363
        %7021 = vmatpush1.bf16.msra.mxu0 %v5362
        %7022 = vmatprep.subr.bf16.mxu0 %v5359
        %7023 = vmatpush1.bf16.msra.mxu0 %v5358
        %7024 = vmatprep.subr.bf16.mxu0 %v5355
        %7025 = vmatpush1.bf16.msra.mxu0 %v5354
        %7026 = vmatprep.subr.bf16.mxu0 %v5351
        %7027 = vmatpush1.bf16.msra.mxu0 %v5350
        %7028 = vmatprep.subr.bf16.mxu0 %v5411
        %7029 = vmatpush2.bf16.msra.mxu0 %v5410
        %7030 = vmatprep.subr.bf16.mxu0 %v5407
        %7031 = vmatpush2.bf16.msra.mxu0 %v5406
        %7032 = vmatprep.subr.bf16.mxu0 %v5403
        %7033 = vmatpush2.bf16.msra.mxu0 %v5402
        %7034 = vmatprep.subr.bf16.mxu0 %v5399
        %7035 = vmatpush2.bf16.msra.mxu0 %v5398
        %7036 = vmatprep.subr.bf16.mxu0 %v5395
        %7037 = vmatpush2.bf16.msra.mxu0 %v5394
        %7038 = vmatprep.subr.bf16.mxu0 %v5391
        %7039 = vmatpush2.bf16.msra.mxu0 %v5390
        %7040 = vmatprep.subr.bf16.mxu0 %v5387
        %7041 = vmatpush2.bf16.msra.mxu0 %v5386
        %7042 = vmatprep.subr.bf16.mxu0 %v5383
        %7043 = vmatpush2.bf16.msra.mxu0 %v5382
        %7044 = vmatprep.mubr.bf16.mxu0 %v1443
        %7045 = vmatmul.mubr.bf16.gmra.mxu0 %v1429
        %v7046 = vpop.f32.mrf.mxu0
        %v7047 = vadd.f32 %v7006, %v7046
        %v7048 = vpop.f32.mrf.mxu0
        %v7049 = vadd.f32 %v7008, %v7048
        %v7050 = vpop.f32.mrf.mxu0
        %v7051 = vpop.f32.mrf.mxu0
        %7052 = vdwg.mxu0
        %7053 = vmatprep.subr.bf16.mxu0 %v5443
        %7054 = vmatpush1.bf16.msra.mxu0 %v5442
        %7055 = vmatprep.subr.bf16.mxu0 %v5439
        %7056 = vmatpush1.bf16.msra.mxu0 %v5438
        %7057 = vmatprep.subr.bf16.mxu0 %v5435
        %7058 = vmatpush1.bf16.msra.mxu0 %v5434
        %7059 = vmatprep.subr.bf16.mxu0 %v5431
        %7060 = vmatpush1.bf16.msra.mxu0 %v5430
        %7061 = vmatprep.subr.bf16.mxu0 %v5427
        %7062 = vmatpush1.bf16.msra.mxu0 %v5426
        %7063 = vmatprep.subr.bf16.mxu0 %v5423
        %7064 = vmatpush1.bf16.msra.mxu0 %v5422
        %7065 = vmatprep.subr.bf16.mxu0 %v5419
        %7066 = vmatpush1.bf16.msra.mxu0 %v5418
        %7067 = vmatprep.subr.bf16.mxu0 %v5415
        %7068 = vmatpush1.bf16.msra.mxu0 %v5414
        %7069 = vmatprep.subr.bf16.mxu0 0
        %7070 = vmatpush2.bf16.msra.mxu0 0
        %7071 = vmatprep.subr.bf16.mxu0 0
        %7072 = vmatpush2.bf16.msra.mxu0 0
        %7073 = vmatprep.subr.bf16.mxu0 0
        %7074 = vmatpush2.bf16.msra.mxu0 0
        %7075 = vmatprep.subr.bf16.mxu0 0
        %7076 = vmatpush2.bf16.msra.mxu0 0
        %7077 = vmatprep.subr.bf16.mxu0 0
        %7078 = vmatpush2.bf16.msra.mxu0 0
        %7079 = vmatprep.subr.bf16.mxu0 0
        %7080 = vmatpush2.bf16.msra.mxu0 0
        %7081 = vmatprep.subr.bf16.mxu0 0
        %7082 = vmatpush2.bf16.msra.mxu0 0
        %7083 = vmatprep.subr.bf16.mxu0 0
        %7084 = vmatpush2.bf16.msra.mxu0 0
        %7085 = vmatprep.mubr.bf16.mxu0 0
        %7086 = vmatmul.mubr.bf16.gmra.mxu0 %v1445
        %v7087 = vpop.f32.mrf.mxu0
        %v7088 = vadd.f32 %v7047, %v7087
        %v7089 = vpop.f32.mrf.mxu0
        %v7090 = vadd.f32 %v7049, %v7089
        %v7091 = vpop.f32.mrf.mxu0
        %v7092 = vpop.f32.mrf.mxu0
        %7093 = vdwg.mxu0
        %7094 = vmatprep.subr.bf16.mxu0 %v4485
        %7095 = vmatpush1.bf16.msra.mxu0 %v4484
        %7096 = vmatprep.subr.bf16.mxu0 %v4481
        %7097 = vmatpush1.bf16.msra.mxu0 %v4480
        %7098 = vmatprep.subr.bf16.mxu0 %v4477
        %7099 = vmatpush1.bf16.msra.mxu0 %v4476
        %7100 = vmatprep.subr.bf16.mxu0 %v4473
        %7101 = vmatpush1.bf16.msra.mxu0 %v4472
        %7102 = vmatprep.subr.bf16.mxu0 %v4469
        %7103 = vmatpush1.bf16.msra.mxu0 %v4468
        %7104 = vmatprep.subr.bf16.mxu0 %v4465
        %7105 = vmatpush1.bf16.msra.mxu0 %v4464
        %7106 = vmatprep.subr.bf16.mxu0 %v4461
        %7107 = vmatpush1.bf16.msra.mxu0 %v4460
        %7108 = vmatprep.subr.bf16.mxu0 %v4457
        %7109 = vmatpush1.bf16.msra.mxu0 %v4456
        %7110 = vmatprep.subr.bf16.mxu0 %v4517
        %7111 = vmatpush2.bf16.msra.mxu0 %v4516
        %7112 = vmatprep.subr.bf16.mxu0 %v4513
        %7113 = vmatpush2.bf16.msra.mxu0 %v4512
        %7114 = vmatprep.subr.bf16.mxu0 %v4509
        %7115 = vmatpush2.bf16.msra.mxu0 %v4508
        %7116 = vmatprep.subr.bf16.mxu0 %v4505
        %7117 = vmatpush2.bf16.msra.mxu0 %v4504
        %7118 = vmatprep.subr.bf16.mxu0 %v4501
        %7119 = vmatpush2.bf16.msra.mxu0 %v4500
        %7120 = vmatprep.subr.bf16.mxu0 %v4497
        %7121 = vmatpush2.bf16.msra.mxu0 %v4496
        %7122 = vmatprep.subr.bf16.mxu0 %v4493
        %7123 = vmatpush2.bf16.msra.mxu0 %v4492
        %7124 = vmatprep.subr.bf16.mxu0 %v4489
        %7125 = vmatpush2.bf16.msra.mxu0 %v4488
        %7126 = vmatprep.mubr.bf16.mxu0 %v1289
        %7127 = vmatmul.mubr.bf16.gmra.mxu0 %v1275
        %v7128 = vpop.f32.mrf.mxu0
        %v7129 = vadd.f32 %v1239, %v7128
        %v7130 = vpop.f32.mrf.mxu0
        %v7131 = vadd.f32 %v1243, %v7130
        %v7132 = vpop.f32.mrf.mxu0
        %v7133 = vpop.f32.mrf.mxu0
        %7134 = vdwg.mxu0
        %7135 = vmatprep.subr.bf16.mxu0 %v4549
        %7136 = vmatpush1.bf16.msra.mxu0 %v4548
        %7137 = vmatprep.subr.bf16.mxu0 %v4545
        %7138 = vmatpush1.bf16.msra.mxu0 %v4544
        %7139 = vmatprep.subr.bf16.mxu0 %v4541
        %7140 = vmatpush1.bf16.msra.mxu0 %v4540
        %7141 = vmatprep.subr.bf16.mxu0 %v4537
        %7142 = vmatpush1.bf16.msra.mxu0 %v4536
        %7143 = vmatprep.subr.bf16.mxu0 %v4533
        %7144 = vmatpush1.bf16.msra.mxu0 %v4532
        %7145 = vmatprep.subr.bf16.mxu0 %v4529
        %7146 = vmatpush1.bf16.msra.mxu0 %v4528
        %7147 = vmatprep.subr.bf16.mxu0 %v4525
        %7148 = vmatpush1.bf16.msra.mxu0 %v4524
        %7149 = vmatprep.subr.bf16.mxu0 %v4521
        %7150 = vmatpush1.bf16.msra.mxu0 %v4520
        %7151 = vmatprep.subr.bf16.mxu0 %v4581
        %7152 = vmatpush2.bf16.msra.mxu0 %v4580
        %7153 = vmatprep.subr.bf16.mxu0 %v4577
        %7154 = vmatpush2.bf16.msra.mxu0 %v4576
        %7155 = vmatprep.subr.bf16.mxu0 %v4573
        %7156 = vmatpush2.bf16.msra.mxu0 %v4572
        %7157 = vmatprep.subr.bf16.mxu0 %v4569
        %7158 = vmatpush2.bf16.msra.mxu0 %v4568
        %7159 = vmatprep.subr.bf16.mxu0 %v4565
        %7160 = vmatpush2.bf16.msra.mxu0 %v4564
        %7161 = vmatprep.subr.bf16.mxu0 %v4561
        %7162 = vmatpush2.bf16.msra.mxu0 %v4560
        %7163 = vmatprep.subr.bf16.mxu0 %v4557
        %7164 = vmatpush2.bf16.msra.mxu0 %v4556
        %7165 = vmatprep.subr.bf16.mxu0 %v4553
        %7166 = vmatpush2.bf16.msra.mxu0 %v4552
        %7167 = vmatprep.mubr.bf16.mxu0 %v1299
        %7168 = vmatmul.mubr.bf16.gmra.mxu0 %v1297
        %v7169 = vpop.f32.mrf.mxu0
        %v7170 = vadd.f32 %v7129, %v7169
        %v7171 = vpop.f32.mrf.mxu0
        %v7172 = vadd.f32 %v7131, %v7171
        %v7173 = vpop.f32.mrf.mxu0
        %v7174 = vpop.f32.mrf.mxu0
        %7175 = vdwg.mxu0
        %7176 = vmatprep.subr.bf16.mxu0 %v4613
        %7177 = vmatpush1.bf16.msra.mxu0 %v4612
        %7178 = vmatprep.subr.bf16.mxu0 %v4609
        %7179 = vmatpush1.bf16.msra.mxu0 %v4608
        %7180 = vmatprep.subr.bf16.mxu0 %v4605
        %7181 = vmatpush1.bf16.msra.mxu0 %v4604
        %7182 = vmatprep.subr.bf16.mxu0 %v4601
        %7183 = vmatpush1.bf16.msra.mxu0 %v4600
        %7184 = vmatprep.subr.bf16.mxu0 %v4597
        %7185 = vmatpush1.bf16.msra.mxu0 %v4596
        %7186 = vmatprep.subr.bf16.mxu0 %v4593
        %7187 = vmatpush1.bf16.msra.mxu0 %v4592
        %7188 = vmatprep.subr.bf16.mxu0 %v4589
        %7189 = vmatpush1.bf16.msra.mxu0 %v4588
        %7190 = vmatprep.subr.bf16.mxu0 %v4585
        %7191 = vmatpush1.bf16.msra.mxu0 %v4584
        %7192 = vmatprep.subr.bf16.mxu0 %v4645
        %7193 = vmatpush2.bf16.msra.mxu0 %v4644
        %7194 = vmatprep.subr.bf16.mxu0 %v4641
        %7195 = vmatpush2.bf16.msra.mxu0 %v4640
        %7196 = vmatprep.subr.bf16.mxu0 %v4637
        %7197 = vmatpush2.bf16.msra.mxu0 %v4636
        %7198 = vmatprep.subr.bf16.mxu0 %v4633
        %7199 = vmatpush2.bf16.msra.mxu0 %v4632
        %7200 = vmatprep.subr.bf16.mxu0 %v4629
        %7201 = vmatpush2.bf16.msra.mxu0 %v4628
        %7202 = vmatprep.subr.bf16.mxu0 %v4625
        %7203 = vmatpush2.bf16.msra.mxu0 %v4624
        %7204 = vmatprep.subr.bf16.mxu0 %v4621
        %7205 = vmatpush2.bf16.msra.mxu0 %v4620
        %7206 = vmatprep.subr.bf16.mxu0 %v4617
        %7207 = vmatpush2.bf16.msra.mxu0 %v4616
        %7208 = vmatprep.mubr.bf16.mxu0 %v1296
        %7209 = vmatmul.mubr.bf16.gmra.mxu0 %v1282
        %v7210 = vpop.f32.mrf.mxu0
        %v7211 = vadd.f32 %v7170, %v7210
        %v7212 = vpop.f32.mrf.mxu0
        %v7213 = vadd.f32 %v7172, %v7212
        %v7214 = vpop.f32.mrf.mxu0
        %v7215 = vpop.f32.mrf.mxu0
        %7216 = vdwg.mxu0
        %7217 = vmatprep.subr.bf16.mxu0 %v4677
        %7218 = vmatpush1.bf16.msra.mxu0 %v4676
        %7219 = vmatprep.subr.bf16.mxu0 %v4673
        %7220 = vmatpush1.bf16.msra.mxu0 %v4672
        %7221 = vmatprep.subr.bf16.mxu0 %v4669
        %7222 = vmatpush1.bf16.msra.mxu0 %v4668
        %7223 = vmatprep.subr.bf16.mxu0 %v4665
        %7224 = vmatpush1.bf16.msra.mxu0 %v4664
        %7225 = vmatprep.subr.bf16.mxu0 %v4661
        %7226 = vmatpush1.bf16.msra.mxu0 %v4660
        %7227 = vmatprep.subr.bf16.mxu0 %v4657
        %7228 = vmatpush1.bf16.msra.mxu0 %v4656
        %7229 = vmatprep.subr.bf16.mxu0 %v4653
        %7230 = vmatpush1.bf16.msra.mxu0 %v4652
        %7231 = vmatprep.subr.bf16.mxu0 %v4649
        %7232 = vmatpush1.bf16.msra.mxu0 %v4648
        %7233 = vmatprep.subr.bf16.mxu0 %v4709
        %7234 = vmatpush2.bf16.msra.mxu0 %v4708
        %7235 = vmatprep.subr.bf16.mxu0 %v4705
        %7236 = vmatpush2.bf16.msra.mxu0 %v4704
        %7237 = vmatprep.subr.bf16.mxu0 %v4701
        %7238 = vmatpush2.bf16.msra.mxu0 %v4700
        %7239 = vmatprep.subr.bf16.mxu0 %v4697
        %7240 = vmatpush2.bf16.msra.mxu0 %v4696
        %7241 = vmatprep.subr.bf16.mxu0 %v4693
        %7242 = vmatpush2.bf16.msra.mxu0 %v4692
        %7243 = vmatprep.subr.bf16.mxu0 %v4689
        %7244 = vmatpush2.bf16.msra.mxu0 %v4688
        %7245 = vmatprep.subr.bf16.mxu0 %v4685
        %7246 = vmatpush2.bf16.msra.mxu0 %v4684
        %7247 = vmatprep.subr.bf16.mxu0 %v4681
        %7248 = vmatpush2.bf16.msra.mxu0 %v4680
        %7249 = vmatprep.mubr.bf16.mxu0 %v1300
        %7250 = vmatmul.mubr.bf16.gmra.mxu0 %v1298
        %v7251 = vpop.f32.mrf.mxu0
        %v7252 = vadd.f32 %v7211, %v7251
        %v7253 = vpop.f32.mrf.mxu0
        %v7254 = vadd.f32 %v7213, %v7253
        %v7255 = vpop.f32.mrf.mxu0
        %v7256 = vpop.f32.mrf.mxu0
        %7257 = vdwg.mxu0
        %7258 = vmatprep.subr.bf16.mxu0 %v4741
        %7259 = vmatpush1.bf16.msra.mxu0 %v4740
        %7260 = vmatprep.subr.bf16.mxu0 %v4737
        %7261 = vmatpush1.bf16.msra.mxu0 %v4736
        %7262 = vmatprep.subr.bf16.mxu0 %v4733
        %7263 = vmatpush1.bf16.msra.mxu0 %v4732
        %7264 = vmatprep.subr.bf16.mxu0 %v4729
        %7265 = vmatpush1.bf16.msra.mxu0 %v4728
        %7266 = vmatprep.subr.bf16.mxu0 %v4725
        %7267 = vmatpush1.bf16.msra.mxu0 %v4724
        %7268 = vmatprep.subr.bf16.mxu0 %v4721
        %7269 = vmatpush1.bf16.msra.mxu0 %v4720
        %7270 = vmatprep.subr.bf16.mxu0 %v4717
        %7271 = vmatpush1.bf16.msra.mxu0 %v4716
        %7272 = vmatprep.subr.bf16.mxu0 %v4713
        %7273 = vmatpush1.bf16.msra.mxu0 %v4712
        %7274 = vmatprep.subr.bf16.mxu0 %v4773
        %7275 = vmatpush2.bf16.msra.mxu0 %v4772
        %7276 = vmatprep.subr.bf16.mxu0 %v4769
        %7277 = vmatpush2.bf16.msra.mxu0 %v4768
        %7278 = vmatprep.subr.bf16.mxu0 %v4765
        %7279 = vmatpush2.bf16.msra.mxu0 %v4764
        %7280 = vmatprep.subr.bf16.mxu0 %v4761
        %7281 = vmatpush2.bf16.msra.mxu0 %v4760
        %7282 = vmatprep.subr.bf16.mxu0 %v4757
        %7283 = vmatpush2.bf16.msra.mxu0 %v4756
        %7284 = vmatprep.subr.bf16.mxu0 %v4753
        %7285 = vmatpush2.bf16.msra.mxu0 %v4752
        %7286 = vmatprep.subr.bf16.mxu0 %v4749
        %7287 = vmatpush2.bf16.msra.mxu0 %v4748
        %7288 = vmatprep.subr.bf16.mxu0 %v4745
        %7289 = vmatpush2.bf16.msra.mxu0 %v4744
        %7290 = vmatprep.mubr.bf16.mxu0 %v1338
        %7291 = vmatmul.mubr.bf16.gmra.mxu0 %v1324
        %v7292 = vpop.f32.mrf.mxu0
        %v7293 = vadd.f32 %v7252, %v7292
        %v7294 = vpop.f32.mrf.mxu0
        %v7295 = vadd.f32 %v7254, %v7294
        %v7296 = vpop.f32.mrf.mxu0
        %v7297 = vpop.f32.mrf.mxu0
        %7298 = vdwg.mxu0
        %7299 = vmatprep.subr.bf16.mxu0 %v4805
        %7300 = vmatpush1.bf16.msra.mxu0 %v4804
        %7301 = vmatprep.subr.bf16.mxu0 %v4801
        %7302 = vmatpush1.bf16.msra.mxu0 %v4800
        %7303 = vmatprep.subr.bf16.mxu0 %v4797
        %7304 = vmatpush1.bf16.msra.mxu0 %v4796
        %7305 = vmatprep.subr.bf16.mxu0 %v4793
        %7306 = vmatpush1.bf16.msra.mxu0 %v4792
        %7307 = vmatprep.subr.bf16.mxu0 %v4789
        %7308 = vmatpush1.bf16.msra.mxu0 %v4788
        %7309 = vmatprep.subr.bf16.mxu0 %v4785
        %7310 = vmatpush1.bf16.msra.mxu0 %v4784
        %7311 = vmatprep.subr.bf16.mxu0 %v4781
        %7312 = vmatpush1.bf16.msra.mxu0 %v4780
        %7313 = vmatprep.subr.bf16.mxu0 %v4777
        %7314 = vmatpush1.bf16.msra.mxu0 %v4776
        %7315 = vmatprep.subr.bf16.mxu0 %v4837
        %7316 = vmatpush2.bf16.msra.mxu0 %v4836
        %7317 = vmatprep.subr.bf16.mxu0 %v4833
        %7318 = vmatpush2.bf16.msra.mxu0 %v4832
        %7319 = vmatprep.subr.bf16.mxu0 %v4829
        %7320 = vmatpush2.bf16.msra.mxu0 %v4828
        %7321 = vmatprep.subr.bf16.mxu0 %v4825
        %7322 = vmatpush2.bf16.msra.mxu0 %v4824
        %7323 = vmatprep.subr.bf16.mxu0 %v4821
        %7324 = vmatpush2.bf16.msra.mxu0 %v4820
        %7325 = vmatprep.subr.bf16.mxu0 %v4817
        %7326 = vmatpush2.bf16.msra.mxu0 %v4816
        %7327 = vmatprep.subr.bf16.mxu0 %v4813
        %7328 = vmatpush2.bf16.msra.mxu0 %v4812
        %7329 = vmatprep.subr.bf16.mxu0 %v4809
        %7330 = vmatpush2.bf16.msra.mxu0 %v4808
        %7331 = vmatprep.mubr.bf16.mxu0 %v1348
        %7332 = vmatmul.mubr.bf16.gmra.mxu0 %v1346
        %v7333 = vpop.f32.mrf.mxu0
        %v7334 = vadd.f32 %v7293, %v7333
        %v7335 = vpop.f32.mrf.mxu0
        %v7336 = vadd.f32 %v7295, %v7335
        %v7337 = vpop.f32.mrf.mxu0
        %v7338 = vpop.f32.mrf.mxu0
        %7339 = vdwg.mxu0
        %7340 = vmatprep.subr.bf16.mxu0 %v4869
        %7341 = vmatpush1.bf16.msra.mxu0 %v4868
        %7342 = vmatprep.subr.bf16.mxu0 %v4865
        %7343 = vmatpush1.bf16.msra.mxu0 %v4864
        %7344 = vmatprep.subr.bf16.mxu0 %v4861
        %7345 = vmatpush1.bf16.msra.mxu0 %v4860
        %7346 = vmatprep.subr.bf16.mxu0 %v4857
        %7347 = vmatpush1.bf16.msra.mxu0 %v4856
        %7348 = vmatprep.subr.bf16.mxu0 %v4853
        %7349 = vmatpush1.bf16.msra.mxu0 %v4852
        %7350 = vmatprep.subr.bf16.mxu0 %v4849
        %7351 = vmatpush1.bf16.msra.mxu0 %v4848
        %7352 = vmatprep.subr.bf16.mxu0 %v4845
        %7353 = vmatpush1.bf16.msra.mxu0 %v4844
        %7354 = vmatprep.subr.bf16.mxu0 %v4841
        %7355 = vmatpush1.bf16.msra.mxu0 %v4840
        %7356 = vmatprep.subr.bf16.mxu0 %v4901
        %7357 = vmatpush2.bf16.msra.mxu0 %v4900
        %7358 = vmatprep.subr.bf16.mxu0 %v4897
        %7359 = vmatpush2.bf16.msra.mxu0 %v4896
        %7360 = vmatprep.subr.bf16.mxu0 %v4893
        %7361 = vmatpush2.bf16.msra.mxu0 %v4892
        %7362 = vmatprep.subr.bf16.mxu0 %v4889
        %7363 = vmatpush2.bf16.msra.mxu0 %v4888
        %7364 = vmatprep.subr.bf16.mxu0 %v4885
        %7365 = vmatpush2.bf16.msra.mxu0 %v4884
        %7366 = vmatprep.subr.bf16.mxu0 %v4881
        %7367 = vmatpush2.bf16.msra.mxu0 %v4880
        %7368 = vmatprep.subr.bf16.mxu0 %v4877
        %7369 = vmatpush2.bf16.msra.mxu0 %v4876
        %7370 = vmatprep.subr.bf16.mxu0 %v4873
        %7371 = vmatpush2.bf16.msra.mxu0 %v4872
        %7372 = vmatprep.mubr.bf16.mxu0 %v1345
        %7373 = vmatmul.mubr.bf16.gmra.mxu0 %v1331
        %v7374 = vpop.f32.mrf.mxu0
        %v7375 = vadd.f32 %v7334, %v7374
        %v7376 = vpop.f32.mrf.mxu0
        %v7377 = vadd.f32 %v7336, %v7376
        %v7378 = vpop.f32.mrf.mxu0
        %v7379 = vpop.f32.mrf.mxu0
        %7380 = vdwg.mxu0
        %7381 = vmatprep.subr.bf16.mxu0 %v4933
        %7382 = vmatpush1.bf16.msra.mxu0 %v4932
        %7383 = vmatprep.subr.bf16.mxu0 %v4929
        %7384 = vmatpush1.bf16.msra.mxu0 %v4928
        %7385 = vmatprep.subr.bf16.mxu0 %v4925
        %7386 = vmatpush1.bf16.msra.mxu0 %v4924
        %7387 = vmatprep.subr.bf16.mxu0 %v4921
        %7388 = vmatpush1.bf16.msra.mxu0 %v4920
        %7389 = vmatprep.subr.bf16.mxu0 %v4917
        %7390 = vmatpush1.bf16.msra.mxu0 %v4916
        %7391 = vmatprep.subr.bf16.mxu0 %v4913
        %7392 = vmatpush1.bf16.msra.mxu0 %v4912
        %7393 = vmatprep.subr.bf16.mxu0 %v4909
        %7394 = vmatpush1.bf16.msra.mxu0 %v4908
        %7395 = vmatprep.subr.bf16.mxu0 %v4905
        %7396 = vmatpush1.bf16.msra.mxu0 %v4904
        %7397 = vmatprep.subr.bf16.mxu0 %v4965
        %7398 = vmatpush2.bf16.msra.mxu0 %v4964
        %7399 = vmatprep.subr.bf16.mxu0 %v4961
        %7400 = vmatpush2.bf16.msra.mxu0 %v4960
        %7401 = vmatprep.subr.bf16.mxu0 %v4957
        %7402 = vmatpush2.bf16.msra.mxu0 %v4956
        %7403 = vmatprep.subr.bf16.mxu0 %v4953
        %7404 = vmatpush2.bf16.msra.mxu0 %v4952
        %7405 = vmatprep.subr.bf16.mxu0 %v4949
        %7406 = vmatpush2.bf16.msra.mxu0 %v4948
        %7407 = vmatprep.subr.bf16.mxu0 %v4945
        %7408 = vmatpush2.bf16.msra.mxu0 %v4944
        %7409 = vmatprep.subr.bf16.mxu0 %v4941
        %7410 = vmatpush2.bf16.msra.mxu0 %v4940
        %7411 = vmatprep.subr.bf16.mxu0 %v4937
        %7412 = vmatpush2.bf16.msra.mxu0 %v4936
        %7413 = vmatprep.mubr.bf16.mxu0 %v1349
        %7414 = vmatmul.mubr.bf16.gmra.mxu0 %v1347
        %v7415 = vpop.f32.mrf.mxu0
        %v7416 = vadd.f32 %v7375, %v7415
        %v7417 = vpop.f32.mrf.mxu0
        %v7418 = vadd.f32 %v7377, %v7417
        %v7419 = vpop.f32.mrf.mxu0
        %v7420 = vpop.f32.mrf.mxu0
        %7421 = vdwg.mxu0
        %7422 = vmatprep.subr.bf16.mxu0 %v4997
        %7423 = vmatpush1.bf16.msra.mxu0 %v4996
        %7424 = vmatprep.subr.bf16.mxu0 %v4993
        %7425 = vmatpush1.bf16.msra.mxu0 %v4992
        %7426 = vmatprep.subr.bf16.mxu0 %v4989
        %7427 = vmatpush1.bf16.msra.mxu0 %v4988
        %7428 = vmatprep.subr.bf16.mxu0 %v4985
        %7429 = vmatpush1.bf16.msra.mxu0 %v4984
        %7430 = vmatprep.subr.bf16.mxu0 %v4981
        %7431 = vmatpush1.bf16.msra.mxu0 %v4980
        %7432 = vmatprep.subr.bf16.mxu0 %v4977
        %7433 = vmatpush1.bf16.msra.mxu0 %v4976
        %7434 = vmatprep.subr.bf16.mxu0 %v4973
        %7435 = vmatpush1.bf16.msra.mxu0 %v4972
        %7436 = vmatprep.subr.bf16.mxu0 %v4969
        %7437 = vmatpush1.bf16.msra.mxu0 %v4968
        %7438 = vmatprep.subr.bf16.mxu0 %v5029
        %7439 = vmatpush2.bf16.msra.mxu0 %v5028
        %7440 = vmatprep.subr.bf16.mxu0 %v5025
        %7441 = vmatpush2.bf16.msra.mxu0 %v5024
        %7442 = vmatprep.subr.bf16.mxu0 %v5021
        %7443 = vmatpush2.bf16.msra.mxu0 %v5020
        %7444 = vmatprep.subr.bf16.mxu0 %v5017
        %7445 = vmatpush2.bf16.msra.mxu0 %v5016
        %7446 = vmatprep.subr.bf16.mxu0 %v5013
        %7447 = vmatpush2.bf16.msra.mxu0 %v5012
        %7448 = vmatprep.subr.bf16.mxu0 %v5009
        %7449 = vmatpush2.bf16.msra.mxu0 %v5008
        %7450 = vmatprep.subr.bf16.mxu0 %v5005
        %7451 = vmatpush2.bf16.msra.mxu0 %v5004
        %7452 = vmatprep.subr.bf16.mxu0 %v5001
        %7453 = vmatpush2.bf16.msra.mxu0 %v5000
        %7454 = vmatprep.mubr.bf16.mxu0 %v1387
        %7455 = vmatmul.mubr.bf16.gmra.mxu0 %v1373
        %v7456 = vpop.f32.mrf.mxu0
        %v7457 = vadd.f32 %v7416, %v7456
        %v7458 = vpop.f32.mrf.mxu0
        %v7459 = vadd.f32 %v7418, %v7458
        %v7460 = vpop.f32.mrf.mxu0
        %v7461 = vpop.f32.mrf.mxu0
        %7462 = vdwg.mxu0
        %7463 = vmatprep.subr.bf16.mxu0 %v5061
        %7464 = vmatpush1.bf16.msra.mxu0 %v5060
        %7465 = vmatprep.subr.bf16.mxu0 %v5057
        %7466 = vmatpush1.bf16.msra.mxu0 %v5056
        %7467 = vmatprep.subr.bf16.mxu0 %v5053
        %7468 = vmatpush1.bf16.msra.mxu0 %v5052
        %7469 = vmatprep.subr.bf16.mxu0 %v5049
        %7470 = vmatpush1.bf16.msra.mxu0 %v5048
        %7471 = vmatprep.subr.bf16.mxu0 %v5045
        %7472 = vmatpush1.bf16.msra.mxu0 %v5044
        %7473 = vmatprep.subr.bf16.mxu0 %v5041
        %7474 = vmatpush1.bf16.msra.mxu0 %v5040
        %7475 = vmatprep.subr.bf16.mxu0 %v5037
        %7476 = vmatpush1.bf16.msra.mxu0 %v5036
        %7477 = vmatprep.subr.bf16.mxu0 %v5033
        %7478 = vmatpush1.bf16.msra.mxu0 %v5032
        %7479 = vmatprep.subr.bf16.mxu0 %v5093
        %7480 = vmatpush2.bf16.msra.mxu0 %v5092
        %7481 = vmatprep.subr.bf16.mxu0 %v5089
        %7482 = vmatpush2.bf16.msra.mxu0 %v5088
        %7483 = vmatprep.subr.bf16.mxu0 %v5085
        %7484 = vmatpush2.bf16.msra.mxu0 %v5084
        %7485 = vmatprep.subr.bf16.mxu0 %v5081
        %7486 = vmatpush2.bf16.msra.mxu0 %v5080
        %7487 = vmatprep.subr.bf16.mxu0 %v5077
        %7488 = vmatpush2.bf16.msra.mxu0 %v5076
        %7489 = vmatprep.subr.bf16.mxu0 %v5073
        %7490 = vmatpush2.bf16.msra.mxu0 %v5072
        %7491 = vmatprep.subr.bf16.mxu0 %v5069
        %7492 = vmatpush2.bf16.msra.mxu0 %v5068
        %7493 = vmatprep.subr.bf16.mxu0 %v5065
        %7494 = vmatpush2.bf16.msra.mxu0 %v5064
        %7495 = vmatprep.mubr.bf16.mxu0 %v1397
        %7496 = vmatmul.mubr.bf16.gmra.mxu0 %v1395
        %v7497 = vpop.f32.mrf.mxu0
        %v7498 = vadd.f32 %v7457, %v7497
        %v7499 = vpop.f32.mrf.mxu0
        %v7500 = vadd.f32 %v7459, %v7499
        %v7501 = vpop.f32.mrf.mxu0
        %v7502 = vpop.f32.mrf.mxu0
        %7503 = vdwg.mxu0
        %7504 = vmatprep.subr.bf16.mxu0 %v5125
        %7505 = vmatpush1.bf16.msra.mxu0 %v5124
        %7506 = vmatprep.subr.bf16.mxu0 %v5121
        %7507 = vmatpush1.bf16.msra.mxu0 %v5120
        %7508 = vmatprep.subr.bf16.mxu0 %v5117
        %7509 = vmatpush1.bf16.msra.mxu0 %v5116
        %7510 = vmatprep.subr.bf16.mxu0 %v5113
        %7511 = vmatpush1.bf16.msra.mxu0 %v5112
        %7512 = vmatprep.subr.bf16.mxu0 %v5109
        %7513 = vmatpush1.bf16.msra.mxu0 %v5108
        %7514 = vmatprep.subr.bf16.mxu0 %v5105
        %7515 = vmatpush1.bf16.msra.mxu0 %v5104
        %7516 = vmatprep.subr.bf16.mxu0 %v5101
        %7517 = vmatpush1.bf16.msra.mxu0 %v5100
        %7518 = vmatprep.subr.bf16.mxu0 %v5097
        %7519 = vmatpush1.bf16.msra.mxu0 %v5096
        %7520 = vmatprep.subr.bf16.mxu0 %v5157
        %7521 = vmatpush2.bf16.msra.mxu0 %v5156
        %7522 = vmatprep.subr.bf16.mxu0 %v5153
        %7523 = vmatpush2.bf16.msra.mxu0 %v5152
        %7524 = vmatprep.subr.bf16.mxu0 %v5149
        %7525 = vmatpush2.bf16.msra.mxu0 %v5148
        %7526 = vmatprep.subr.bf16.mxu0 %v5145
        %7527 = vmatpush2.bf16.msra.mxu0 %v5144
        %7528 = vmatprep.subr.bf16.mxu0 %v5141
        %7529 = vmatpush2.bf16.msra.mxu0 %v5140
        %7530 = vmatprep.subr.bf16.mxu0 %v5137
        %7531 = vmatpush2.bf16.msra.mxu0 %v5136
        %7532 = vmatprep.subr.bf16.mxu0 %v5133
        %7533 = vmatpush2.bf16.msra.mxu0 %v5132
        %7534 = vmatprep.subr.bf16.mxu0 %v5129
        %7535 = vmatpush2.bf16.msra.mxu0 %v5128
        %7536 = vmatprep.mubr.bf16.mxu0 %v1394
        %7537 = vmatmul.mubr.bf16.gmra.mxu0 %v1380
        %v7538 = vpop.f32.mrf.mxu0
        %v7539 = vadd.f32 %v7498, %v7538
        %v7540 = vpop.f32.mrf.mxu0
        %v7541 = vadd.f32 %v7500, %v7540
        %v7542 = vpop.f32.mrf.mxu0
        %v7543 = vpop.f32.mrf.mxu0
        %7544 = vdwg.mxu0
        %7545 = vmatprep.subr.bf16.mxu0 %v5189
        %7546 = vmatpush1.bf16.msra.mxu0 %v5188
        %7547 = vmatprep.subr.bf16.mxu0 %v5185
        %7548 = vmatpush1.bf16.msra.mxu0 %v5184
        %7549 = vmatprep.subr.bf16.mxu0 %v5181
        %7550 = vmatpush1.bf16.msra.mxu0 %v5180
        %7551 = vmatprep.subr.bf16.mxu0 %v5177
        %7552 = vmatpush1.bf16.msra.mxu0 %v5176
        %7553 = vmatprep.subr.bf16.mxu0 %v5173
        %7554 = vmatpush1.bf16.msra.mxu0 %v5172
        %7555 = vmatprep.subr.bf16.mxu0 %v5169
        %7556 = vmatpush1.bf16.msra.mxu0 %v5168
        %7557 = vmatprep.subr.bf16.mxu0 %v5165
        %7558 = vmatpush1.bf16.msra.mxu0 %v5164
        %7559 = vmatprep.subr.bf16.mxu0 %v5161
        %7560 = vmatpush1.bf16.msra.mxu0 %v5160
        %7561 = vmatprep.subr.bf16.mxu0 %v5221
        %7562 = vmatpush2.bf16.msra.mxu0 %v5220
        %7563 = vmatprep.subr.bf16.mxu0 %v5217
        %7564 = vmatpush2.bf16.msra.mxu0 %v5216
        %7565 = vmatprep.subr.bf16.mxu0 %v5213
        %7566 = vmatpush2.bf16.msra.mxu0 %v5212
        %7567 = vmatprep.subr.bf16.mxu0 %v5209
        %7568 = vmatpush2.bf16.msra.mxu0 %v5208
        %7569 = vmatprep.subr.bf16.mxu0 %v5205
        %7570 = vmatpush2.bf16.msra.mxu0 %v5204
        %7571 = vmatprep.subr.bf16.mxu0 %v5201
        %7572 = vmatpush2.bf16.msra.mxu0 %v5200
        %7573 = vmatprep.subr.bf16.mxu0 %v5197
        %7574 = vmatpush2.bf16.msra.mxu0 %v5196
        %7575 = vmatprep.subr.bf16.mxu0 %v5193
        %7576 = vmatpush2.bf16.msra.mxu0 %v5192
        %7577 = vmatprep.mubr.bf16.mxu0 %v1398
        %7578 = vmatmul.mubr.bf16.gmra.mxu0 %v1396
        %v7579 = vpop.f32.mrf.mxu0
        %v7580 = vadd.f32 %v7539, %v7579
        %v7581 = vpop.f32.mrf.mxu0
        %v7582 = vadd.f32 %v7541, %v7581
        %v7583 = vpop.f32.mrf.mxu0
        %v7584 = vpop.f32.mrf.mxu0
        %7585 = vdwg.mxu0
        %7586 = vmatprep.subr.bf16.mxu0 %v5253
        %7587 = vmatpush1.bf16.msra.mxu0 %v5252
        %7588 = vmatprep.subr.bf16.mxu0 %v5249
        %7589 = vmatpush1.bf16.msra.mxu0 %v5248
        %7590 = vmatprep.subr.bf16.mxu0 %v5245
        %7591 = vmatpush1.bf16.msra.mxu0 %v5244
        %7592 = vmatprep.subr.bf16.mxu0 %v5241
        %7593 = vmatpush1.bf16.msra.mxu0 %v5240
        %7594 = vmatprep.subr.bf16.mxu0 %v5237
        %7595 = vmatpush1.bf16.msra.mxu0 %v5236
        %7596 = vmatprep.subr.bf16.mxu0 %v5233
        %7597 = vmatpush1.bf16.msra.mxu0 %v5232
        %7598 = vmatprep.subr.bf16.mxu0 %v5229
        %7599 = vmatpush1.bf16.msra.mxu0 %v5228
        %7600 = vmatprep.subr.bf16.mxu0 %v5225
        %7601 = vmatpush1.bf16.msra.mxu0 %v5224
        %7602 = vmatprep.subr.bf16.mxu0 %v5285
        %7603 = vmatpush2.bf16.msra.mxu0 %v5284
        %7604 = vmatprep.subr.bf16.mxu0 %v5281
        %7605 = vmatpush2.bf16.msra.mxu0 %v5280
        %7606 = vmatprep.subr.bf16.mxu0 %v5277
        %7607 = vmatpush2.bf16.msra.mxu0 %v5276
        %7608 = vmatprep.subr.bf16.mxu0 %v5273
        %7609 = vmatpush2.bf16.msra.mxu0 %v5272
        %7610 = vmatprep.subr.bf16.mxu0 %v5269
        %7611 = vmatpush2.bf16.msra.mxu0 %v5268
        %7612 = vmatprep.subr.bf16.mxu0 %v5265
        %7613 = vmatpush2.bf16.msra.mxu0 %v5264
        %7614 = vmatprep.subr.bf16.mxu0 %v5261
        %7615 = vmatpush2.bf16.msra.mxu0 %v5260
        %7616 = vmatprep.subr.bf16.mxu0 %v5257
        %7617 = vmatpush2.bf16.msra.mxu0 %v5256
        %7618 = vmatprep.mubr.bf16.mxu0 %v1436
        %7619 = vmatmul.mubr.bf16.gmra.mxu0 %v1422
        %v7620 = vpop.f32.mrf.mxu0
        %v7621 = vadd.f32 %v7580, %v7620
        %v7622 = vpop.f32.mrf.mxu0
        %v7623 = vadd.f32 %v7582, %v7622
        %v7624 = vpop.f32.mrf.mxu0
        %v7625 = vpop.f32.mrf.mxu0
        %7626 = vdwg.mxu0
        %7627 = vmatprep.subr.bf16.mxu0 %v5317
        %7628 = vmatpush1.bf16.msra.mxu0 %v5316
        %7629 = vmatprep.subr.bf16.mxu0 %v5313
        %7630 = vmatpush1.bf16.msra.mxu0 %v5312
        %7631 = vmatprep.subr.bf16.mxu0 %v5309
        %7632 = vmatpush1.bf16.msra.mxu0 %v5308
        %7633 = vmatprep.subr.bf16.mxu0 %v5305
        %7634 = vmatpush1.bf16.msra.mxu0 %v5304
        %7635 = vmatprep.subr.bf16.mxu0 %v5301
        %7636 = vmatpush1.bf16.msra.mxu0 %v5300
        %7637 = vmatprep.subr.bf16.mxu0 %v5297
        %7638 = vmatpush1.bf16.msra.mxu0 %v5296
        %7639 = vmatprep.subr.bf16.mxu0 %v5293
        %7640 = vmatpush1.bf16.msra.mxu0 %v5292
        %7641 = vmatprep.subr.bf16.mxu0 %v5289
        %7642 = vmatpush1.bf16.msra.mxu0 %v5288
        %7643 = vmatprep.subr.bf16.mxu0 %v5349
        %7644 = vmatpush2.bf16.msra.mxu0 %v5348
        %7645 = vmatprep.subr.bf16.mxu0 %v5345
        %7646 = vmatpush2.bf16.msra.mxu0 %v5344
        %7647 = vmatprep.subr.bf16.mxu0 %v5341
        %7648 = vmatpush2.bf16.msra.mxu0 %v5340
        %7649 = vmatprep.subr.bf16.mxu0 %v5337
        %7650 = vmatpush2.bf16.msra.mxu0 %v5336
        %7651 = vmatprep.subr.bf16.mxu0 %v5333
        %7652 = vmatpush2.bf16.msra.mxu0 %v5332
        %7653 = vmatprep.subr.bf16.mxu0 %v5329
        %7654 = vmatpush2.bf16.msra.mxu0 %v5328
        %7655 = vmatprep.subr.bf16.mxu0 %v5325
        %7656 = vmatpush2.bf16.msra.mxu0 %v5324
        %7657 = vmatprep.subr.bf16.mxu0 %v5321
        %7658 = vmatpush2.bf16.msra.mxu0 %v5320
        %7659 = vmatprep.mubr.bf16.mxu0 %v1446
        %7660 = vmatmul.mubr.bf16.gmra.mxu0 %v1444
        %v7661 = vpop.f32.mrf.mxu0
        %v7662 = vadd.f32 %v7621, %v7661
        %v7663 = vpop.f32.mrf.mxu0
        %v7664 = vadd.f32 %v7623, %v7663
        %v7665 = vpop.f32.mrf.mxu0
        %v7666 = vpop.f32.mrf.mxu0
        %7667 = vdwg.mxu0
        %7668 = vmatprep.subr.bf16.mxu0 %v5381
        %7669 = vmatpush1.bf16.msra.mxu0 %v5380
        %7670 = vmatprep.subr.bf16.mxu0 %v5377
        %7671 = vmatpush1.bf16.msra.mxu0 %v5376
        %7672 = vmatprep.subr.bf16.mxu0 %v5373
        %7673 = vmatpush1.bf16.msra.mxu0 %v5372
        %7674 = vmatprep.subr.bf16.mxu0 %v5369
        %7675 = vmatpush1.bf16.msra.mxu0 %v5368
        %7676 = vmatprep.subr.bf16.mxu0 %v5365
        %7677 = vmatpush1.bf16.msra.mxu0 %v5364
        %7678 = vmatprep.subr.bf16.mxu0 %v5361
        %7679 = vmatpush1.bf16.msra.mxu0 %v5360
        %7680 = vmatprep.subr.bf16.mxu0 %v5357
        %7681 = vmatpush1.bf16.msra.mxu0 %v5356
        %7682 = vmatprep.subr.bf16.mxu0 %v5353
        %7683 = vmatpush1.bf16.msra.mxu0 %v5352
        %7684 = vmatprep.subr.bf16.mxu0 %v5413
        %7685 = vmatpush2.bf16.msra.mxu0 %v5412
        %7686 = vmatprep.subr.bf16.mxu0 %v5409
        %7687 = vmatpush2.bf16.msra.mxu0 %v5408
        %7688 = vmatprep.subr.bf16.mxu0 %v5405
        %7689 = vmatpush2.bf16.msra.mxu0 %v5404
        %7690 = vmatprep.subr.bf16.mxu0 %v5401
        %7691 = vmatpush2.bf16.msra.mxu0 %v5400
        %7692 = vmatprep.subr.bf16.mxu0 %v5397
        %7693 = vmatpush2.bf16.msra.mxu0 %v5396
        %7694 = vmatprep.subr.bf16.mxu0 %v5393
        %7695 = vmatpush2.bf16.msra.mxu0 %v5392
        %7696 = vmatprep.subr.bf16.mxu0 %v5389
        %7697 = vmatpush2.bf16.msra.mxu0 %v5388
        %7698 = vmatprep.subr.bf16.mxu0 %v5385
        %7699 = vmatpush2.bf16.msra.mxu0 %v5384
        %7700 = vmatprep.mubr.bf16.mxu0 %v1443
        %7701 = vmatmul.mubr.bf16.gmra.mxu0 %v1429
        %v7702 = vpop.f32.mrf.mxu0
        %v7703 = vadd.f32 %v7662, %v7702
        %v7704 = vpop.f32.mrf.mxu0
        %v7705 = vadd.f32 %v7664, %v7704
        %v7706 = vpop.f32.mrf.mxu0
        %v7707 = vpop.f32.mrf.mxu0
        %7708 = vdwg.mxu0
        %7709 = vmatprep.subr.bf16.mxu0 %v5445
        %7710 = vmatpush1.bf16.msra.mxu0 %v5444
        %7711 = vmatprep.subr.bf16.mxu0 %v5441
        %7712 = vmatpush1.bf16.msra.mxu0 %v5440
        %7713 = vmatprep.subr.bf16.mxu0 %v5437
        %7714 = vmatpush1.bf16.msra.mxu0 %v5436
        %7715 = vmatprep.subr.bf16.mxu0 %v5433
        %7716 = vmatpush1.bf16.msra.mxu0 %v5432
        %7717 = vmatprep.subr.bf16.mxu0 %v5429
        %7718 = vmatpush1.bf16.msra.mxu0 %v5428
        %7719 = vmatprep.subr.bf16.mxu0 %v5425
        %7720 = vmatpush1.bf16.msra.mxu0 %v5424
        %7721 = vmatprep.subr.bf16.mxu0 %v5421
        %7722 = vmatpush1.bf16.msra.mxu0 %v5420
        %7723 = vmatprep.subr.bf16.mxu0 %v5417
        %7724 = vmatpush1.bf16.msra.mxu0 %v5416
        %7725 = vmatprep.subr.bf16.mxu0 0
        %7726 = vmatpush2.bf16.msra.mxu0 0
        %7727 = vmatprep.subr.bf16.mxu0 0
        %7728 = vmatpush2.bf16.msra.mxu0 0
        %7729 = vmatprep.subr.bf16.mxu0 0
        %7730 = vmatpush2.bf16.msra.mxu0 0
        %7731 = vmatprep.subr.bf16.mxu0 0
        %7732 = vmatpush2.bf16.msra.mxu0 0
        %7733 = vmatprep.subr.bf16.mxu0 0
        %7734 = vmatpush2.bf16.msra.mxu0 0
        %7735 = vmatprep.subr.bf16.mxu0 0
        %7736 = vmatpush2.bf16.msra.mxu0 0
        %7737 = vmatprep.subr.bf16.mxu0 0
        %7738 = vmatpush2.bf16.msra.mxu0 0
        %7739 = vmatprep.subr.bf16.mxu0 0
        %7740 = vmatpush2.bf16.msra.mxu0 0
        %7741 = vmatprep.mubr.bf16.mxu0 0
        %7742 = vmatmul.mubr.bf16.gmra.mxu0 %v1445
        %v7743 = vpop.f32.mrf.mxu0
        %v7744 = vadd.f32 %v7703, %v7743
        %v7745 = vpop.f32.mrf.mxu0
        %v7746 = vadd.f32 %v7705, %v7745
        %v7747 = vpop.f32.mrf.mxu0
        %v7748 = vpop.f32.mrf.mxu0
        %7749 = vdwg.mxu0
        %v7750 = vmax.f32 %v7088, 0.0
        %v7751 = vmax.f32 %v7090, 0.0
        %v7752 = vmax.f32 %v7744, 0.0
        %v7753 = vmax.f32 %v7746, 0.0
        %v7754 = vpack.c.bf16 %v7750, %v7750
        %v7755 = vpack.c.bf16 %v7751, %v7751
        %v7756 = vpack.c.bf16 %v7752, %v7752
        %v7757 = vpack.c.bf16 %v7753, %v7753
        %v7762 = vcombine.low %v7754, %v7755
        %v7763 = vcombine.low %v7756, %v7757
        %v7765 = vunpack.c.l.s4 1966171168
        %v7766 = vunpack.c.0.s8 %v7765
        %v7767 = vlaneseq
        %v7768 = vshrl.u32 %v7767, 7
        %v7769 = vsub.s32 %v7766, %v7768
        %v7770 = vrot.slane %v7762, %v7769
        %v7772 = vunpack.c.l.s4 1966171168
        %v7773 = vunpack.c.0.s8 %v7772
        %v7774 = vlaneseq
        %v7775 = vshrl.u32 %v7774, 7
        %v7776 = vsub.s32 %v7773, %v7775
        %v7777 = vrot.slane %v7763, %v7776
        %v7778 = vcombine.low %v7770, %v7777
        %v7780 = vunpack.c.l.s4 1966171168
        %v7781 = vunpack.c.0.s8 %v7780
        %v7782 = vlaneseq
        %v7783 = vshrl.u32 %v7782, 7
        %v7784 = vsub.s32 %v7781, %v7783
        %v7785 = vrot.slane %v7778, %v7784
        %7787 = vst [vmem:[%s227] sm:$0xf] %v7785
        %s7788 = smul.u32 4, %s20
        %p7789 = scmp.lt.s32.totalorder %s7788, 15
        %s7790 = scalar_select %p7789, %s7788, 15
        %s7791 = scalar_lea.vmem %s3, %s7790
        // Predicated region
        $region41: #{forward.2} parent=31 // pred_check
          %p7792 = pneg %p111
        $region42: #{forward.2} parent=31 // pred_check_branch
          %7794 = sbr.rel (%p7792) target = $region44
        $region43: #{forward.2} parent=31 // pred_region
          %s7795 = smul.u32 4, %s20
        $region44: #{forward.2} parent=31 // pred_fallthru
          _
      $region32: #{forward.2} parent=5 // pred_fallthru
        _
      %p7796 = scmp.le.s32.totalorder 2, %s15
      // Predicated region
      $region45: #{forward.2} parent=5 // pred_check
        %p7797 = pneg %p7796
      $region46: #{forward.2} parent=5 // pred_check_branch
        %7799 = sbr.rel (%p7797) target = $region48
      $region47: #{forward.2} parent=5 // pred_region
        %s7800 = ssub.s32 %s15, 2
        // Predicated region
        $region49: #{forward.2} parent=47 // pred_check
          %p7801 = pneg %p117
        $region50: #{forward.2} parent=47 // pred_check_branch
          %7803 = sbr.rel (%p7801) target = $region52
        $region51: #{forward.2} parent=47 // pred_region
          %s7804 = smul.u32 4, %s21
          %p7805 = scmp.lt.s32.totalorder %s7804, 15
          %s7806 = scalar_select %p7805, %s7804, 15
          %s7807 = scalar_lea.vmem %s3, %s7806
        $region52: #{forward.2} parent=47 // pred_fallthru
          _
      $region48: #{forward.2} parent=5 // pred_fallthru
        _
    $region6: #{forward.2} parent=1 // loop_footer
      %s19 = sadd.s32 1, %s15
    $region7: #{forward.2} parent=1 // loop_footer_branch
      %14 = sbr.rel target = $region3
    $region8: #{forward.2} parent=1 // loop_exit
      _
    %7808 = vsyncpa [#allocation3], 1
    %s7809 = scalar_lea.sflag [#allocation3], 1
    %7810 = vsyncpa %s7809, 1
    %7811 = vsyncpa [#allocation5], 1
    %s7812 = scalar_lea.sflag [#allocation5], 1
    %7813 = vsyncpa %s7812, 1

</llo_original>
